<compile_context>
chip_gen: v5e
topology: v5e:2x2
jax: 0.10.0
libtpu: 0.0.40
codegen_flags: <defaults>
</compile_context>

<pallas_src>
import jax
import jax.numpy as jnp
from jax import lax
from jax.experimental import pallas as pl
from jax.experimental.pallas import tpu as pltpu

# ----- model hyper-parameters (from the PyTorch module) ---------------------
H = 64          # hidden_dim
NH = 8          # num_heads
HD = H // NH    # head dim = 8
FF = 64         # dim_feedforward = hidden_dim
OUT = 128       # output_dim
NL = 2          # num_layers
LN_EPS = 1e-5
SCALE = 1.0 / (HD ** 0.5)


def _layer_norm(x2d, gamma, beta):
    # x2d: (N, H) f32, gamma/beta: (1, H) f32 -- keep all elementwise math f32.
    mu = jnp.mean(x2d, axis=-1, keepdims=True)
    var = jnp.mean((x2d - mu) ** 2, axis=-1, keepdims=True)
    return (x2d - mu) * lax.rsqrt(var + LN_EPS) * gamma + beta


def transformer_kernel(x_ref, we_ref, be_ref,
                       wqkv_ref, bqkv_ref, wo_ref, bo_ref,
                       w1_ref, b1_ref, w2_ref, b2_ref,
                       g1_ref, bt1_ref, g2_ref, bt2_ref,
                       wfc_ref, bfc_ref,
                       o_ref):
    Bt, S, C = x_ref.shape
    N = Bt * S
    bf16 = jnp.bfloat16
    x = x_ref[...].reshape(N, C)

    # embedding: Linear(C -> H), bf16 MXU operands, f32 accumulate.
    h = (jnp.dot(x.astype(bf16), we_ref[...],
                 preferred_element_type=jnp.float32) + be_ref[...])     # (N, H) f32

    # TransformerEncoder: NL post-norm encoder layers
    for l in range(NL):
        # ---- multi-head self attention -------------------------------------
        # Fused QKV projection: one (N,64)x(64,192) bf16 matmul + 1 bias add.
        # (1/sqrt(HD) is already folded into the Q columns of wqkv/bqkv.)
        qkv = (jnp.dot(h.astype(bf16), wqkv_ref[l],
                       preferred_element_type=jnp.float32) + bqkv_ref[l])  # (N, 3H)
        q = qkv[:, 0:H].reshape(Bt, S, H)
        k = qkv[:, H:2 * H].reshape(Bt, S, H)
        v = qkv[:, 2 * H:3 * H].reshape(Bt, S, H)

        # Pack all heads onto one merged (head*batch) leading axis so the whole
        # attention core is two batched einsums + one softmax stream.  Only
        # static lane slices and a leading-axis concat are used (no 4-D
        # transpose / multi-batch dot_general needed).
        qh = jnp.concatenate(
            [q[:, :, hh * HD:(hh + 1) * HD] for hh in range(NH)], axis=0)  # (NH*Bt,S,HD)
        kh = jnp.concatenate(
            [k[:, :, hh * HD:(hh + 1) * HD] for hh in range(NH)], axis=0)
        vh = jnp.concatenate(
            [v[:, :, hh * HD:(hh + 1) * HD] for hh in range(NH)], axis=0)

        s = jnp.einsum('bqd,bkd->bqk', qh.astype(bf16), kh.astype(bf16),
                       preferred_element_type=jnp.float32)               # (NH*Bt,S,S)
        s = s - jnp.max(s, axis=-1, keepdims=True)                       # f32 softmax
        p = jnp.exp(s)
        p = p * pl.reciprocal(jnp.sum(p, axis=-1, keepdims=True), approx=True)
        ctx = jnp.einsum('bqk,bkd->bqd', p.astype(bf16), vh.astype(bf16),
                         preferred_element_type=jnp.float32)             # (NH*Bt,S,HD)

        # Un-pack heads back to (N, H): leading-axis static slices + one lane
        # concat (head-major columns, matching wo's head-major row ordering).
        ctx = jnp.concatenate(
            [ctx[hh * Bt:(hh + 1) * Bt].reshape(N, HD) for hh in range(NH)],
            axis=-1)                                                     # (N, H)

        # Fused output projection: one K=64 bf16 matmul + 1 bias add.
        attn = (jnp.dot(ctx.astype(bf16), wo_ref[l],
                        preferred_element_type=jnp.float32) + bo_ref[l])  # (N, H)

        # residual + LayerNorm (post-norm; dropout is identity in eval mode)
        h = _layer_norm(h + attn, g1_ref[l], bt1_ref[l])

        # ---- feed-forward ---------------------------------------------------
        ff = jnp.maximum(
            jnp.dot(h.astype(bf16), w1_ref[l],
                    preferred_element_type=jnp.float32) + b1_ref[l], 0.0)
        ff = jnp.dot(ff.astype(bf16), w2_ref[l],
                     preferred_element_type=jnp.float32) + b2_ref[l]
        h = _layer_norm(h + ff, g2_ref[l], bt2_ref[l])

    # mean over the sequence: S(=8) sits on the sublane axis -> cheap reduce,
    # no pooling-matrix iotas / extra MXU op.
    h_avg = jnp.mean(h.reshape(Bt, S, H), axis=1)                        # (Bt, H)

    # fc_1 + ReLU (lane-dense OUT=128 output)
    out = jnp.maximum(
        jnp.dot(h_avg.astype(bf16), wfc_ref[...],
                preferred_element_type=jnp.float32) + bfc_ref[...], 0.0)  # (Bt, OUT)
    o_ref[0] = out


def init_params(key, input_dim):
    ks = jax.random.split(key, 12)

    def nrm(k, shape, scale=0.05):
        return (scale * jax.random.normal(k, shape)).astype(jnp.float32)

    # packed QKV weight: columns [0:H]=Q, [H:2H]=K, [2H:3H]=V, head-major
    # (col = head*HD + d) inside each block.  Matching packed bias.
    wqkv = nrm(ks[2], (NL, H, 3 * H))
    bqkv = nrm(ks[3], (NL, 1, 3 * H))
    # fold the 1/sqrt(HD) attention scale into the Q columns (one-time init cost)
    qscale = jnp.concatenate(
        [jnp.full((H,), SCALE, jnp.float32), jnp.ones((2 * H,), jnp.float32)])
    wqkv = wqkv * qscale
    bqkv = bqkv * qscale

    mx = jnp.bfloat16  # matmul (MXU-operand) weights stored bf16; biases/LN f32
    params = dict(
        we=nrm(ks[0], (input_dim, H)).astype(mx),
        be=nrm(ks[1], (1, H)),
        wqkv=wqkv.astype(mx),
        bqkv=bqkv,
        # attention output projection, rows head-major to match the ctx concat.
        wo=nrm(ks[4], (NL, H, H)).astype(mx),
        bo=nrm(ks[5], (NL, 1, H)),
        w1=nrm(ks[6], (NL, H, FF)).astype(mx),
        b1=nrm(ks[7], (NL, 1, FF)),
        w2=nrm(ks[8], (NL, FF, H)).astype(mx),
        b2=nrm(ks[9], (NL, 1, H)),
        g1=jnp.ones((NL, 1, H), jnp.float32),
        bt1=jnp.zeros((NL, 1, H), jnp.float32),
        g2=jnp.ones((NL, 1, H), jnp.float32),
        bt2=jnp.zeros((NL, 1, H), jnp.float32),
        wfc=nrm(ks[10], (H, OUT)).astype(mx),
        bfc=nrm(ks[11], (1, OUT)),
    )
    return params


_PARAM_ORDER = ('we', 'be', 'wqkv', 'bqkv', 'wo', 'bo',
                'w1', 'b1', 'w2', 'b2', 'g1', 'bt1', 'g2', 'bt2', 'wfc', 'bfc')


def _tensorcores_per_chip() -> int:
    # v7x exposes 2 TensorCores per chip; v5e/v6e have 1.  Default to 1 on any
    # detection failure (single grid step is correct everywhere).
    try:
        kind = jax.devices()[0].device_kind.lower()
    except Exception:
        return 1
    return 2 if "7" in kind else 1


_N_TC = _tensorcores_per_chip()


@jax.jit
def transformer_forward(x, x1, x2, params):
    B, S, C = x.shape
    xs = jnp.concatenate([x, x1, x2], axis=0).astype(jnp.float32)   # (3B, S, C)
    total = 3 * B

    # Single grid step on 1-TC chips (v5e/v6e); explicit core-parallel 2-way
    # batch split only on v7x (2 TensorCores per chip).
    n_tiles = _N_TC if (_N_TC > 1 and total % _N_TC == 0) else 1
    bt = total // n_tiles
    if n_tiles > 1:
        semantics = (getattr(pltpu, "CORE_PARALLEL", "parallel"),)
    else:
        semantics = ("arbitrary",)

    args = (xs,) + tuple(params[k] for k in _PARAM_ORDER)

    out = pl.pallas_call(
        transformer_kernel,
        out_shape=jax.ShapeDtypeStruct((n_tiles, bt, OUT), jnp.float32),
        grid=(n_tiles,),
        in_specs=(
            # batch-tiled activations
            [pl.BlockSpec((bt, S, C), lambda i: (i, 0, 0))]
            # weights: full-array, resident in VMEM (total ~100 KB -> no retiling
            # needed on any generation, including v7x's 64 MiB VMEM)
            + [pl.BlockSpec(memory_space=pltpu.MemorySpace.VMEM)] * len(_PARAM_ORDER)
        ),
        out_specs=pl.BlockSpec((1, bt, OUT), lambda i: (i, 0, 0)),
        compiler_params=pltpu.CompilerParams(dimension_semantics=semantics),
    )(*args)

    out = out.reshape(total, OUT)
    return out[:B], out[B:2 * B], out[2 * B:]


if __name__ == "__main__":
    batch, seq, channel = 2, 8, 4        # channel == input_dim (argparse in original)

    key = jax.random.PRNGKey(0)
    k_p, k_x, k_x1, k_x2 = jax.random.split(key, 4)

    params = init_params(k_p, channel)
    x = jax.random.normal(k_x, (batch, seq, channel), jnp.float32)
    x1 = jax.random.normal(k_x1, (batch, seq, channel), jnp.float32)
    x2 = jax.random.normal(k_x2, (batch, seq, channel), jnp.float32)

    y, y1, y2 = transformer_forward(x, x1, x2, params)
    jax.block_until_ready((y, y1, y2))

    assert y.shape == (batch, OUT) and y1.shape == (batch, OUT) and y2.shape == (batch, OUT)
    assert bool(jnp.isfinite(y).all() & jnp.isfinite(y1).all() & jnp.isfinite(y2).all())
    print("KERNEL_OK")
</pallas_src>

<mosaic_0001>
module attributes {stable_mosaic.version = 11 : i64} {
  func.func @transformer_kernel(%arg0: i32, %arg1: memref<6x8x4xf32, #tpu.memory_space<vmem>>, %arg2: memref<4x64xbf16, #tpu.memory_space<vmem>>, %arg3: memref<1x64xf32, #tpu.memory_space<vmem>>, %arg4: memref<2x64x192xbf16, #tpu.memory_space<vmem>>, %arg5: memref<2x1x192xf32, #tpu.memory_space<vmem>>, %arg6: memref<2x64x64xbf16, #tpu.memory_space<vmem>>, %arg7: memref<2x1x64xf32, #tpu.memory_space<vmem>>, %arg8: memref<2x64x64xbf16, #tpu.memory_space<vmem>>, %arg9: memref<2x1x64xf32, #tpu.memory_space<vmem>>, %arg10: memref<2x64x64xbf16, #tpu.memory_space<vmem>>, %arg11: memref<2x1x64xf32, #tpu.memory_space<vmem>>, %arg12: memref<2x1x64xf32, #tpu.memory_space<vmem>>, %arg13: memref<2x1x64xf32, #tpu.memory_space<vmem>>, %arg14: memref<2x1x64xf32, #tpu.memory_space<vmem>>, %arg15: memref<2x1x64xf32, #tpu.memory_space<vmem>>, %arg16: memref<64x128xbf16, #tpu.memory_space<vmem>>, %arg17: memref<1x128xf32, #tpu.memory_space<vmem>>, %arg18: memref<1x6x128xf32, #tpu.memory_space<vmem>>) attributes {dimension_semantics = [#tpu.dimension_semantics<arbitrary>], iteration_bounds = array<i64: 1>, scalar_prefetch = 0 : i64, scratch_operands = 0 : i64, tpu.core_type = #tpu.core_type<tc>, window_params = [{transform_indices = @transform_0, window_bounds = array<i64: 6, 8, 4>}, {pipeline_mode = #tpu.pipeline_mode<synchronous>, transform_indices = @transform_1, window_bounds = array<i64: 4, 64>}, {pipeline_mode = #tpu.pipeline_mode<synchronous>, transform_indices = @transform_2, window_bounds = array<i64: 1, 64>}, {pipeline_mode = #tpu.pipeline_mode<synchronous>, transform_indices = @transform_3, window_bounds = array<i64: 2, 64, 192>}, {pipeline_mode = #tpu.pipeline_mode<synchronous>, transform_indices = @transform_4, window_bounds = array<i64: 2, 1, 192>}, {pipeline_mode = #tpu.pipeline_mode<synchronous>, transform_indices = @transform_5, window_bounds = array<i64: 2, 64, 64>}, {pipeline_mode = #tpu.pipeline_mode<synchronous>, transform_indices = @transform_6, window_bounds = array<i64: 2, 1, 64>}, {pipeline_mode = #tpu.pipeline_mode<synchronous>, transform_indices = @transform_7, window_bounds = array<i64: 2, 64, 64>}, {pipeline_mode = #tpu.pipeline_mode<synchronous>, transform_indices = @transform_8, window_bounds = array<i64: 2, 1, 64>}, {pipeline_mode = #tpu.pipeline_mode<synchronous>, transform_indices = @transform_9, window_bounds = array<i64: 2, 64, 64>}, {pipeline_mode = #tpu.pipeline_mode<synchronous>, transform_indices = @transform_10, window_bounds = array<i64: 2, 1, 64>}, {pipeline_mode = #tpu.pipeline_mode<synchronous>, transform_indices = @transform_11, window_bounds = array<i64: 2, 1, 64>}, {pipeline_mode = #tpu.pipeline_mode<synchronous>, transform_indices = @transform_12, window_bounds = array<i64: 2, 1, 64>}, {pipeline_mode = #tpu.pipeline_mode<synchronous>, transform_indices = @transform_13, window_bounds = array<i64: 2, 1, 64>}, {pipeline_mode = #tpu.pipeline_mode<synchronous>, transform_indices = @transform_14, window_bounds = array<i64: 2, 1, 64>}, {pipeline_mode = #tpu.pipeline_mode<synchronous>, transform_indices = @transform_15, window_bounds = array<i64: 64, 128>}, {pipeline_mode = #tpu.pipeline_mode<synchronous>, transform_indices = @transform_16, window_bounds = array<i64: 1, 128>}, {transform_indices = @transform_17, window_bounds = array<i64: 1, 6, 128>}]} {
    %c0 = arith.constant 0 : index
    %c0_0 = arith.constant 0 : index
    %c0_1 = arith.constant 0 : index
    %0 = vector.load %arg1[%c0, %c0_0, %c0_1] : memref<6x8x4xf32, #tpu.memory_space<vmem>>, vector<6x8x4xf32>
    %1 = vector.shape_cast %0 : vector<6x8x4xf32> to vector<48x4xf32>
    %2 = arith.truncf %1 : vector<48x4xf32> to vector<48x4xbf16>
    %c0_2 = arith.constant 0 : index
    %c0_3 = arith.constant 0 : index
    %3 = vector.load %arg2[%c0_2, %c0_3] : memref<4x64xbf16, #tpu.memory_space<vmem>>, vector<4x64xbf16>
    %cst = arith.constant dense<0.000000e+00> : vector<48x64xf32>
    %4 = tpu.matmul %2, %3, %cst {dimension_numbers = #tpu.dot_dimension_numbers<[1], [0], [0], [1], [0, 0, 1, 1], [], []>} : vector<48x4xbf16>, vector<4x64xbf16>, vector<48x64xf32> -> vector<48x64xf32>
    %c0_4 = arith.constant 0 : index
    %c0_5 = arith.constant 0 : index
    %5 = vector.load %arg3[%c0_4, %c0_5] : memref<1x64xf32, #tpu.memory_space<vmem>>, vector<1x64xf32>
    %6 = vector.broadcast %5 : vector<1x64xf32> to vector<48x64xf32>
    %7 = arith.addf %4, %6 : vector<48x64xf32>
    %8 = arith.truncf %7 : vector<48x64xf32> to vector<48x64xbf16>
    %c0_6 = arith.constant 0 : index
    %c0_7 = arith.constant 0 : index
    %c0_8 = arith.constant 0 : index
    %9 = vector.load %arg4[%c0_6, %c0_7, %c0_8] : memref<2x64x192xbf16, #tpu.memory_space<vmem>>, vector<1x64x192xbf16>
    %10 = vector.shape_cast %9 : vector<1x64x192xbf16> to vector<64x192xbf16>
    %cst_9 = arith.constant dense<0.000000e+00> : vector<48x192xf32>
    %11 = tpu.matmul %8, %10, %cst_9 {dimension_numbers = #tpu.dot_dimension_numbers<[1], [0], [0], [1], [0, 0, 1, 1], [], []>} : vector<48x64xbf16>, vector<64x192xbf16>, vector<48x192xf32> -> vector<48x192xf32>
    %c0_10 = arith.constant 0 : index
    %c0_11 = arith.constant 0 : index
    %c0_12 = arith.constant 0 : index
    %12 = vector.load %arg5[%c0_10, %c0_11, %c0_12] : memref<2x1x192xf32, #tpu.memory_space<vmem>>, vector<1x1x192xf32>
    %13 = vector.shape_cast %12 : vector<1x1x192xf32> to vector<1x192xf32>
    %14 = vector.broadcast %13 : vector<1x192xf32> to vector<48x192xf32>
    %15 = arith.addf %11, %14 : vector<48x192xf32>
    %16 = vector.extract_strided_slice %15 {offsets = [0, 0], sizes = [48, 64], strides = [1, 1]} : vector<48x192xf32> to vector<48x64xf32>
    %17 = vector.shape_cast %16 : vector<48x64xf32> to vector<6x8x64xf32>
    %18 = vector.extract_strided_slice %15 {offsets = [0, 64], sizes = [48, 64], strides = [1, 1]} : vector<48x192xf32> to vector<48x64xf32>
    %19 = vector.shape_cast %18 : vector<48x64xf32> to vector<6x8x64xf32>
    %20 = vector.extract_strided_slice %15 {offsets = [0, 128], sizes = [48, 64], strides = [1, 1]} : vector<48x192xf32> to vector<48x64xf32>
    %21 = vector.shape_cast %20 : vector<48x64xf32> to vector<6x8x64xf32>
    %22 = vector.extract_strided_slice %17 {offsets = [0, 0, 0], sizes = [6, 8, 8], strides = [1, 1, 1]} : vector<6x8x64xf32> to vector<6x8x8xf32>
    %23 = vector.extract_strided_slice %17 {offsets = [0, 0, 8], sizes = [6, 8, 8], strides = [1, 1, 1]} : vector<6x8x64xf32> to vector<6x8x8xf32>
    %24 = vector.extract_strided_slice %17 {offsets = [0, 0, 16], sizes = [6, 8, 8], strides = [1, 1, 1]} : vector<6x8x64xf32> to vector<6x8x8xf32>
    %25 = vector.extract_strided_slice %17 {offsets = [0, 0, 24], sizes = [6, 8, 8], strides = [1, 1, 1]} : vector<6x8x64xf32> to vector<6x8x8xf32>
    %26 = vector.extract_strided_slice %17 {offsets = [0, 0, 32], sizes = [6, 8, 8], strides = [1, 1, 1]} : vector<6x8x64xf32> to vector<6x8x8xf32>
    %27 = vector.extract_strided_slice %17 {offsets = [0, 0, 40], sizes = [6, 8, 8], strides = [1, 1, 1]} : vector<6x8x64xf32> to vector<6x8x8xf32>
    %28 = vector.extract_strided_slice %17 {offsets = [0, 0, 48], sizes = [6, 8, 8], strides = [1, 1, 1]} : vector<6x8x64xf32> to vector<6x8x8xf32>
    %29 = vector.extract_strided_slice %17 {offsets = [0, 0, 56], sizes = [6, 8, 8], strides = [1, 1, 1]} : vector<6x8x64xf32> to vector<6x8x8xf32>
    %30 = tpu.concatenate %22, %23, %24, %25, %26, %27, %28, %29 in 0 : vector<6x8x8xf32>, vector<6x8x8xf32>, vector<6x8x8xf32>, vector<6x8x8xf32>, vector<6x8x8xf32>, vector<6x8x8xf32>, vector<6x8x8xf32>, vector<6x8x8xf32> -> vector<48x8x8xf32>
    %31 = vector.extract_strided_slice %19 {offsets = [0, 0, 0], sizes = [6, 8, 8], strides = [1, 1, 1]} : vector<6x8x64xf32> to vector<6x8x8xf32>
    %32 = vector.extract_strided_slice %19 {offsets = [0, 0, 8], sizes = [6, 8, 8], strides = [1, 1, 1]} : vector<6x8x64xf32> to vector<6x8x8xf32>
    %33 = vector.extract_strided_slice %19 {offsets = [0, 0, 16], sizes = [6, 8, 8], strides = [1, 1, 1]} : vector<6x8x64xf32> to vector<6x8x8xf32>
    %34 = vector.extract_strided_slice %19 {offsets = [0, 0, 24], sizes = [6, 8, 8], strides = [1, 1, 1]} : vector<6x8x64xf32> to vector<6x8x8xf32>
    %35 = vector.extract_strided_slice %19 {offsets = [0, 0, 32], sizes = [6, 8, 8], strides = [1, 1, 1]} : vector<6x8x64xf32> to vector<6x8x8xf32>
    %36 = vector.extract_strided_slice %19 {offsets = [0, 0, 40], sizes = [6, 8, 8], strides = [1, 1, 1]} : vector<6x8x64xf32> to vector<6x8x8xf32>
    %37 = vector.extract_strided_slice %19 {offsets = [0, 0, 48], sizes = [6, 8, 8], strides = [1, 1, 1]} : vector<6x8x64xf32> to vector<6x8x8xf32>
    %38 = vector.extract_strided_slice %19 {offsets = [0, 0, 56], sizes = [6, 8, 8], strides = [1, 1, 1]} : vector<6x8x64xf32> to vector<6x8x8xf32>
    %39 = tpu.concatenate %31, %32, %33, %34, %35, %36, %37, %38 in 0 : vector<6x8x8xf32>, vector<6x8x8xf32>, vector<6x8x8xf32>, vector<6x8x8xf32>, vector<6x8x8xf32>, vector<6x8x8xf32>, vector<6x8x8xf32>, vector<6x8x8xf32> -> vector<48x8x8xf32>
    %40 = vector.extract_strided_slice %21 {offsets = [0, 0, 0], sizes = [6, 8, 8], strides = [1, 1, 1]} : vector<6x8x64xf32> to vector<6x8x8xf32>
    %41 = vector.extract_strided_slice %21 {offsets = [0, 0, 8], sizes = [6, 8, 8], strides = [1, 1, 1]} : vector<6x8x64xf32> to vector<6x8x8xf32>
    %42 = vector.extract_strided_slice %21 {offsets = [0, 0, 16], sizes = [6, 8, 8], strides = [1, 1, 1]} : vector<6x8x64xf32> to vector<6x8x8xf32>
    %43 = vector.extract_strided_slice %21 {offsets = [0, 0, 24], sizes = [6, 8, 8], strides = [1, 1, 1]} : vector<6x8x64xf32> to vector<6x8x8xf32>
    %44 = vector.extract_strided_slice %21 {offsets = [0, 0, 32], sizes = [6, 8, 8], strides = [1, 1, 1]} : vector<6x8x64xf32> to vector<6x8x8xf32>
    %45 = vector.extract_strided_slice %21 {offsets = [0, 0, 40], sizes = [6, 8, 8], strides = [1, 1, 1]} : vector<6x8x64xf32> to vector<6x8x8xf32>
    %46 = vector.extract_strided_slice %21 {offsets = [0, 0, 48], sizes = [6, 8, 8], strides = [1, 1, 1]} : vector<6x8x64xf32> to vector<6x8x8xf32>
    %47 = vector.extract_strided_slice %21 {offsets = [0, 0, 56], sizes = [6, 8, 8], strides = [1, 1, 1]} : vector<6x8x64xf32> to vector<6x8x8xf32>
    %48 = tpu.concatenate %40, %41, %42, %43, %44, %45, %46, %47 in 0 : vector<6x8x8xf32>, vector<6x8x8xf32>, vector<6x8x8xf32>, vector<6x8x8xf32>, vector<6x8x8xf32>, vector<6x8x8xf32>, vector<6x8x8xf32>, vector<6x8x8xf32> -> vector<48x8x8xf32>
    %49 = arith.truncf %30 : vector<48x8x8xf32> to vector<48x8x8xbf16>
    %50 = arith.truncf %39 : vector<48x8x8xf32> to vector<48x8x8xbf16>
    "tpu.trace_start"() <{level = 10 : i32, message = "bqd,bkd->bqk"}> : () -> ()
    %cst_13 = arith.constant dense<0.000000e+00> : vector<48x8x8xf32>
    %51 = tpu.matmul %49, %50, %cst_13 {dimension_numbers = #tpu.dot_dimension_numbers<[2], [2], [1], [1], [0, 0, 0, 1, 1, 1], [0], [0]>} : vector<48x8x8xbf16>, vector<48x8x8xbf16>, vector<48x8x8xf32> -> vector<48x8x8xf32>
    "tpu.trace_stop"() : () -> ()
    %cst_14 = arith.constant dense<0xFF800000> : vector<48x8xf32>
    %52 = vector.multi_reduction <maximumf>, %51, %cst_14 [2] : vector<48x8x8xf32> to vector<48x8xf32>
    %53 = vector.shape_cast %52 : vector<48x8xf32> to vector<48x8x1xf32>
    %54 = vector.broadcast %53 : vector<48x8x1xf32> to vector<48x8x8xf32>
    %55 = arith.subf %51, %54 : vector<48x8x8xf32>
    %56 = math.exp %55 : vector<48x8x8xf32>
    %cst_15 = arith.constant dense<0.000000e+00> : vector<48x8xf32>
    %57 = vector.multi_reduction <add>, %56, %cst_15 [2] : vector<48x8x8xf32> to vector<48x8xf32>
    %58 = vector.shape_cast %57 : vector<48x8xf32> to vector<48x8x1xf32>
    %59 = tpu.reciprocal %58 {approx = true} : vector<48x8x1xf32> -> vector<48x8x1xf32>
    %60 = vector.broadcast %59 : vector<48x8x1xf32> to vector<48x8x8xf32>
    %61 = arith.mulf %56, %60 : vector<48x8x8xf32>
    %62 = arith.truncf %61 : vector<48x8x8xf32> to vector<48x8x8xbf16>
    %63 = arith.truncf %48 : vector<48x8x8xf32> to vector<48x8x8xbf16>
    "tpu.trace_start"() <{level = 10 : i32, message = "bqk,bkd->bqd"}> : () -> ()
    %cst_16 = arith.constant dense<0.000000e+00> : vector<48x8x8xf32>
    %64 = tpu.matmul %62, %63, %cst_16 {dimension_numbers = #tpu.dot_dimension_numbers<[2], [1], [1], [2], [0, 0, 0, 1, 1, 2], [0], [0]>} : vector<48x8x8xbf16>, vector<48x8x8xbf16>, vector<48x8x8xf32> -> vector<48x8x8xf32>
    "tpu.trace_stop"() : () -> ()
    %65 = vector.extract_strided_slice %64 {offsets = [0, 0, 0], sizes = [6, 8, 8], strides = [1, 1, 1]} : vector<48x8x8xf32> to vector<6x8x8xf32>
    %66 = vector.shape_cast %65 : vector<6x8x8xf32> to vector<48x8xf32>
    %67 = vector.extract_strided_slice %64 {offsets = [6, 0, 0], sizes = [6, 8, 8], strides = [1, 1, 1]} : vector<48x8x8xf32> to vector<6x8x8xf32>
    %68 = vector.shape_cast %67 : vector<6x8x8xf32> to vector<48x8xf32>
    %69 = vector.extract_strided_slice %64 {offsets = [12, 0, 0], sizes = [6, 8, 8], strides = [1, 1, 1]} : vector<48x8x8xf32> to vector<6x8x8xf32>
    %70 = vector.shape_cast %69 : vector<6x8x8xf32> to vector<48x8xf32>
    %71 = vector.extract_strided_slice %64 {offsets = [18, 0, 0], sizes = [6, 8, 8], strides = [1, 1, 1]} : vector<48x8x8xf32> to vector<6x8x8xf32>
    %72 = vector.shape_cast %71 : vector<6x8x8xf32> to vector<48x8xf32>
    %73 = vector.extract_strided_slice %64 {offsets = [24, 0, 0], sizes = [6, 8, 8], strides = [1, 1, 1]} : vector<48x8x8xf32> to vector<6x8x8xf32>
    %74 = vector.shape_cast %73 : vector<6x8x8xf32> to vector<48x8xf32>
    %75 = vector.extract_strided_slice %64 {offsets = [30, 0, 0], sizes = [6, 8, 8], strides = [1, 1, 1]} : vector<48x8x8xf32> to vector<6x8x8xf32>
    %76 = vector.shape_cast %75 : vector<6x8x8xf32> to vector<48x8xf32>
    %77 = vector.extract_strided_slice %64 {offsets = [36, 0, 0], sizes = [6, 8, 8], strides = [1, 1, 1]} : vector<48x8x8xf32> to vector<6x8x8xf32>
    %78 = vector.shape_cast %77 : vector<6x8x8xf32> to vector<48x8xf32>
    %79 = vector.extract_strided_slice %64 {offsets = [42, 0, 0], sizes = [6, 8, 8], strides = [1, 1, 1]} : vector<48x8x8xf32> to vector<6x8x8xf32>
    %80 = vector.shape_cast %79 : vector<6x8x8xf32> to vector<48x8xf32>
    %81 = tpu.concatenate %66, %68, %70, %72, %74, %76, %78, %80 in 1 : vector<48x8xf32>, vector<48x8xf32>, vector<48x8xf32>, vector<48x8xf32>, vector<48x8xf32>, vector<48x8xf32>, vector<48x8xf32>, vector<48x8xf32> -> vector<48x64xf32>
    %82 = arith.truncf %81 : vector<48x64xf32> to vector<48x64xbf16>
    %c0_17 = arith.constant 0 : index
    %c0_18 = arith.constant 0 : index
    %c0_19 = arith.constant 0 : index
    %83 = vector.load %arg6[%c0_17, %c0_18, %c0_19] : memref<2x64x64xbf16, #tpu.memory_space<vmem>>, vector<1x64x64xbf16>
    %84 = vector.shape_cast %83 : vector<1x64x64xbf16> to vector<64x64xbf16>
    %cst_20 = arith.constant dense<0.000000e+00> : vector<48x64xf32>
    %85 = tpu.matmul %82, %84, %cst_20 {dimension_numbers = #tpu.dot_dimension_numbers<[1], [0], [0], [1], [0, 0, 1, 1], [], []>} : vector<48x64xbf16>, vector<64x64xbf16>, vector<48x64xf32> -> vector<48x64xf32>
    %c0_21 = arith.constant 0 : index
    %c0_22 = arith.constant 0 : index
    %c0_23 = arith.constant 0 : index
    %86 = vector.load %arg7[%c0_21, %c0_22, %c0_23] : memref<2x1x64xf32, #tpu.memory_space<vmem>>, vector<1x1x64xf32>
    %87 = vector.shape_cast %86 : vector<1x1x64xf32> to vector<1x64xf32>
    %88 = vector.broadcast %87 : vector<1x64xf32> to vector<48x64xf32>
    %89 = arith.addf %85, %88 : vector<48x64xf32>
    %90 = arith.addf %7, %89 : vector<48x64xf32>
    %c0_24 = arith.constant 0 : index
    %c0_25 = arith.constant 0 : index
    %c0_26 = arith.constant 0 : index
    %91 = vector.load %arg12[%c0_24, %c0_25, %c0_26] : memref<2x1x64xf32, #tpu.memory_space<vmem>>, vector<1x1x64xf32>
    %92 = vector.shape_cast %91 : vector<1x1x64xf32> to vector<1x64xf32>
    %c0_27 = arith.constant 0 : index
    %c0_28 = arith.constant 0 : index
    %c0_29 = arith.constant 0 : index
    %93 = vector.load %arg13[%c0_27, %c0_28, %c0_29] : memref<2x1x64xf32, #tpu.memory_space<vmem>>, vector<1x1x64xf32>
    %94 = vector.shape_cast %93 : vector<1x1x64xf32> to vector<1x64xf32>
    %cst_30 = arith.constant dense<0.000000e+00> : vector<48xf32>
    %95 = vector.multi_reduction <add>, %90, %cst_30 [1] : vector<48x64xf32> to vector<48xf32>
    %96 = vector.shape_cast %95 : vector<48xf32> to vector<48x1xf32>
    %cst_31 = arith.constant 6.400000e+01 : f32
    %97 = vector.broadcast %cst_31 : f32 to vector<48x1xf32>
    %98 = arith.divf %96, %97 : vector<48x1xf32>
    %99 = vector.broadcast %98 : vector<48x1xf32> to vector<48x64xf32>
    %100 = arith.subf %90, %99 : vector<48x64xf32>
    %101 = arith.mulf %100, %100 : vector<48x64xf32>
    %cst_32 = arith.constant dense<0.000000e+00> : vector<48xf32>
    %102 = vector.multi_reduction <add>, %101, %cst_32 [1] : vector<48x64xf32> to vector<48xf32>
    %103 = vector.shape_cast %102 : vector<48xf32> to vector<48x1xf32>
    %cst_33 = arith.constant 6.400000e+01 : f32
    %104 = vector.broadcast %cst_33 : f32 to vector<48x1xf32>
    %105 = arith.divf %103, %104 : vector<48x1xf32>
    %106 = vector.broadcast %98 : vector<48x1xf32> to vector<48x64xf32>
    %107 = arith.subf %90, %106 : vector<48x64xf32>
    %cst_34 = arith.constant 9.99999974E-6 : f32
    %108 = vector.broadcast %cst_34 : f32 to vector<48x1xf32>
    %109 = arith.addf %105, %108 : vector<48x1xf32>
    %110 = math.rsqrt %109 : vector<48x1xf32>
    %111 = vector.broadcast %110 : vector<48x1xf32> to vector<48x64xf32>
    %112 = arith.mulf %107, %111 : vector<48x64xf32>
    %113 = vector.broadcast %92 : vector<1x64xf32> to vector<48x64xf32>
    %114 = arith.mulf %112, %113 : vector<48x64xf32>
    %115 = vector.broadcast %94 : vector<1x64xf32> to vector<48x64xf32>
    %116 = arith.addf %114, %115 : vector<48x64xf32>
    %117 = arith.truncf %116 : vector<48x64xf32> to vector<48x64xbf16>
    %c0_35 = arith.constant 0 : index
    %c0_36 = arith.constant 0 : index
    %c0_37 = arith.constant 0 : index
    %118 = vector.load %arg8[%c0_35, %c0_36, %c0_37] : memref<2x64x64xbf16, #tpu.memory_space<vmem>>, vector<1x64x64xbf16>
    %119 = vector.shape_cast %118 : vector<1x64x64xbf16> to vector<64x64xbf16>
    %cst_38 = arith.constant dense<0.000000e+00> : vector<48x64xf32>
    %120 = tpu.matmul %117, %119, %cst_38 {dimension_numbers = #tpu.dot_dimension_numbers<[1], [0], [0], [1], [0, 0, 1, 1], [], []>} : vector<48x64xbf16>, vector<64x64xbf16>, vector<48x64xf32> -> vector<48x64xf32>
    %c0_39 = arith.constant 0 : index
    %c0_40 = arith.constant 0 : index
    %c0_41 = arith.constant 0 : index
    %121 = vector.load %arg9[%c0_39, %c0_40, %c0_41] : memref<2x1x64xf32, #tpu.memory_space<vmem>>, vector<1x1x64xf32>
    %122 = vector.shape_cast %121 : vector<1x1x64xf32> to vector<1x64xf32>
    %123 = vector.broadcast %122 : vector<1x64xf32> to vector<48x64xf32>
    %124 = arith.addf %120, %123 : vector<48x64xf32>
    %cst_42 = arith.constant 0.000000e+00 : f32
    %125 = vector.broadcast %cst_42 : f32 to vector<48x64xf32>
    %126 = arith.maximumf %124, %125 : vector<48x64xf32>
    %127 = arith.truncf %126 : vector<48x64xf32> to vector<48x64xbf16>
    %c0_43 = arith.constant 0 : index
    %c0_44 = arith.constant 0 : index
    %c0_45 = arith.constant 0 : index
    %128 = vector.load %arg10[%c0_43, %c0_44, %c0_45] : memref<2x64x64xbf16, #tpu.memory_space<vmem>>, vector<1x64x64xbf16>
    %129 = vector.shape_cast %128 : vector<1x64x64xbf16> to vector<64x64xbf16>
    %cst_46 = arith.constant dense<0.000000e+00> : vector<48x64xf32>
    %130 = tpu.matmul %127, %129, %cst_46 {dimension_numbers = #tpu.dot_dimension_numbers<[1], [0], [0], [1], [0, 0, 1, 1], [], []>} : vector<48x64xbf16>, vector<64x64xbf16>, vector<48x64xf32> -> vector<48x64xf32>
    %c0_47 = arith.constant 0 : index
    %c0_48 = arith.constant 0 : index
    %c0_49 = arith.constant 0 : index
    %131 = vector.load %arg11[%c0_47, %c0_48, %c0_49] : memref<2x1x64xf32, #tpu.memory_space<vmem>>, vector<1x1x64xf32>
    %132 = vector.shape_cast %131 : vector<1x1x64xf32> to vector<1x64xf32>
    %133 = vector.broadcast %132 : vector<1x64xf32> to vector<48x64xf32>
    %134 = arith.addf %130, %133 : vector<48x64xf32>
    %135 = arith.addf %116, %134 : vector<48x64xf32>
    %c0_50 = arith.constant 0 : index
    %c0_51 = arith.constant 0 : index
    %c0_52 = arith.constant 0 : index
    %136 = vector.load %arg14[%c0_50, %c0_51, %c0_52] : memref<2x1x64xf32, #tpu.memory_space<vmem>>, vector<1x1x64xf32>
    %137 = vector.shape_cast %136 : vector<1x1x64xf32> to vector<1x64xf32>
    %c0_53 = arith.constant 0 : index
    %c0_54 = arith.constant 0 : index
    %c0_55 = arith.constant 0 : index
    %138 = vector.load %arg15[%c0_53, %c0_54, %c0_55] : memref<2x1x64xf32, #tpu.memory_space<vmem>>, vector<1x1x64xf32>
    %139 = vector.shape_cast %138 : vector<1x1x64xf32> to vector<1x64xf32>
    %cst_56 = arith.constant dense<0.000000e+00> : vector<48xf32>
    %140 = vector.multi_reduction <add>, %135, %cst_56 [1] : vector<48x64xf32> to vector<48xf32>
    %141 = vector.shape_cast %140 : vector<48xf32> to vector<48x1xf32>
    %cst_57 = arith.constant 6.400000e+01 : f32
    %142 = vector.broadcast %cst_57 : f32 to vector<48x1xf32>
    %143 = arith.divf %141, %142 : vector<48x1xf32>
    %144 = vector.broadcast %143 : vector<48x1xf32> to vector<48x64xf32>
    %145 = arith.subf %135, %144 : vector<48x64xf32>
    %146 = arith.mulf %145, %145 : vector<48x64xf32>
    %cst_58 = arith.constant dense<0.000000e+00> : vector<48xf32>
    %147 = vector.multi_reduction <add>, %146, %cst_58 [1] : vector<48x64xf32> to vector<48xf32>
    %148 = vector.shape_cast %147 : vector<48xf32> to vector<48x1xf32>
    %cst_59 = arith.constant 6.400000e+01 : f32
    %149 = vector.broadcast %cst_59 : f32 to vector<48x1xf32>
    %150 = arith.divf %148, %149 : vector<48x1xf32>
    %151 = vector.broadcast %143 : vector<48x1xf32> to vector<48x64xf32>
    %152 = arith.subf %135, %151 : vector<48x64xf32>
    %cst_60 = arith.constant 9.99999974E-6 : f32
    %153 = vector.broadcast %cst_60 : f32 to vector<48x1xf32>
    %154 = arith.addf %150, %153 : vector<48x1xf32>
    %155 = math.rsqrt %154 : vector<48x1xf32>
    %156 = vector.broadcast %155 : vector<48x1xf32> to vector<48x64xf32>
    %157 = arith.mulf %152, %156 : vector<48x64xf32>
    %158 = vector.broadcast %137 : vector<1x64xf32> to vector<48x64xf32>
    %159 = arith.mulf %157, %158 : vector<48x64xf32>
    %160 = vector.broadcast %139 : vector<1x64xf32> to vector<48x64xf32>
    %161 = arith.addf %159, %160 : vector<48x64xf32>
    %162 = arith.truncf %161 : vector<48x64xf32> to vector<48x64xbf16>
    %c1 = arith.constant 1 : index
    %c0_61 = arith.constant 0 : index
    %c0_62 = arith.constant 0 : index
    %163 = vector.load %arg4[%c1, %c0_61, %c0_62] : memref<2x64x192xbf16, #tpu.memory_space<vmem>>, vector<1x64x192xbf16>
    %164 = vector.shape_cast %163 : vector<1x64x192xbf16> to vector<64x192xbf16>
    %cst_63 = arith.constant dense<0.000000e+00> : vector<48x192xf32>
    %165 = tpu.matmul %162, %164, %cst_63 {dimension_numbers = #tpu.dot_dimension_numbers<[1], [0], [0], [1], [0, 0, 1, 1], [], []>} : vector<48x64xbf16>, vector<64x192xbf16>, vector<48x192xf32> -> vector<48x192xf32>
    %c1_64 = arith.constant 1 : index
    %c0_65 = arith.constant 0 : index
    %c0_66 = arith.constant 0 : index
    %166 = vector.load %arg5[%c1_64, %c0_65, %c0_66] : memref<2x1x192xf32, #tpu.memory_space<vmem>>, vector<1x1x192xf32>
    %167 = vector.shape_cast %166 : vector<1x1x192xf32> to vector<1x192xf32>
    %168 = vector.broadcast %167 : vector<1x192xf32> to vector<48x192xf32>
    %169 = arith.addf %165, %168 : vector<48x192xf32>
    %170 = vector.extract_strided_slice %169 {offsets = [0, 0], sizes = [48, 64], strides = [1, 1]} : vector<48x192xf32> to vector<48x64xf32>
    %171 = vector.shape_cast %170 : vector<48x64xf32> to vector<6x8x64xf32>
    %172 = vector.extract_strided_slice %169 {offsets = [0, 64], sizes = [48, 64], strides = [1, 1]} : vector<48x192xf32> to vector<48x64xf32>
    %173 = vector.shape_cast %172 : vector<48x64xf32> to vector<6x8x64xf32>
    %174 = vector.extract_strided_slice %169 {offsets = [0, 128], sizes = [48, 64], strides = [1, 1]} : vector<48x192xf32> to vector<48x64xf32>
    %175 = vector.shape_cast %174 : vector<48x64xf32> to vector<6x8x64xf32>
    %176 = vector.extract_strided_slice %171 {offsets = [0, 0, 0], sizes = [6, 8, 8], strides = [1, 1, 1]} : vector<6x8x64xf32> to vector<6x8x8xf32>
    %177 = vector.extract_strided_slice %171 {offsets = [0, 0, 8], sizes = [6, 8, 8], strides = [1, 1, 1]} : vector<6x8x64xf32> to vector<6x8x8xf32>
    %178 = vector.extract_strided_slice %171 {offsets = [0, 0, 16], sizes = [6, 8, 8], strides = [1, 1, 1]} : vector<6x8x64xf32> to vector<6x8x8xf32>
    %179 = vector.extract_strided_slice %171 {offsets = [0, 0, 24], sizes = [6, 8, 8], strides = [1, 1, 1]} : vector<6x8x64xf32> to vector<6x8x8xf32>
    %180 = vector.extract_strided_slice %171 {offsets = [0, 0, 32], sizes = [6, 8, 8], strides = [1, 1, 1]} : vector<6x8x64xf32> to vector<6x8x8xf32>
    %181 = vector.extract_strided_slice %171 {offsets = [0, 0, 40], sizes = [6, 8, 8], strides = [1, 1, 1]} : vector<6x8x64xf32> to vector<6x8x8xf32>
    %182 = vector.extract_strided_slice %171 {offsets = [0, 0, 48], sizes = [6, 8, 8], strides = [1, 1, 1]} : vector<6x8x64xf32> to vector<6x8x8xf32>
    %183 = vector.extract_strided_slice %171 {offsets = [0, 0, 56], sizes = [6, 8, 8], strides = [1, 1, 1]} : vector<6x8x64xf32> to vector<6x8x8xf32>
    %184 = tpu.concatenate %176, %177, %178, %179, %180, %181, %182, %183 in 0 : vector<6x8x8xf32>, vector<6x8x8xf32>, vector<6x8x8xf32>, vector<6x8x8xf32>, vector<6x8x8xf32>, vector<6x8x8xf32>, vector<6x8x8xf32>, vector<6x8x8xf32> -> vector<48x8x8xf32>
    %185 = vector.extract_strided_slice %173 {offsets = [0, 0, 0], sizes = [6, 8, 8], strides = [1, 1, 1]} : vector<6x8x64xf32> to vector<6x8x8xf32>
    %186 = vector.extract_strided_slice %173 {offsets = [0, 0, 8], sizes = [6, 8, 8], strides = [1, 1, 1]} : vector<6x8x64xf32> to vector<6x8x8xf32>
    %187 = vector.extract_strided_slice %173 {offsets = [0, 0, 16], sizes = [6, 8, 8], strides = [1, 1, 1]} : vector<6x8x64xf32> to vector<6x8x8xf32>
    %188 = vector.extract_strided_slice %173 {offsets = [0, 0, 24], sizes = [6, 8, 8], strides = [1, 1, 1]} : vector<6x8x64xf32> to vector<6x8x8xf32>
    %189 = vector.extract_strided_slice %173 {offsets = [0, 0, 32], sizes = [6, 8, 8], strides = [1, 1, 1]} : vector<6x8x64xf32> to vector<6x8x8xf32>
    %190 = vector.extract_strided_slice %173 {offsets = [0, 0, 40], sizes = [6, 8, 8], strides = [1, 1, 1]} : vector<6x8x64xf32> to vector<6x8x8xf32>
    %191 = vector.extract_strided_slice %173 {offsets = [0, 0, 48], sizes = [6, 8, 8], strides = [1, 1, 1]} : vector<6x8x64xf32> to vector<6x8x8xf32>
    %192 = vector.extract_strided_slice %173 {offsets = [0, 0, 56], sizes = [6, 8, 8], strides = [1, 1, 1]} : vector<6x8x64xf32> to vector<6x8x8xf32>
    %193 = tpu.concatenate %185, %186, %187, %188, %189, %190, %191, %192 in 0 : vector<6x8x8xf32>, vector<6x8x8xf32>, vector<6x8x8xf32>, vector<6x8x8xf32>, vector<6x8x8xf32>, vector<6x8x8xf32>, vector<6x8x8xf32>, vector<6x8x8xf32> -> vector<48x8x8xf32>
    %194 = vector.extract_strided_slice %175 {offsets = [0, 0, 0], sizes = [6, 8, 8], strides = [1, 1, 1]} : vector<6x8x64xf32> to vector<6x8x8xf32>
    %195 = vector.extract_strided_slice %175 {offsets = [0, 0, 8], sizes = [6, 8, 8], strides = [1, 1, 1]} : vector<6x8x64xf32> to vector<6x8x8xf32>
    %196 = vector.extract_strided_slice %175 {offsets = [0, 0, 16], sizes = [6, 8, 8], strides = [1, 1, 1]} : vector<6x8x64xf32> to vector<6x8x8xf32>
    %197 = vector.extract_strided_slice %175 {offsets = [0, 0, 24], sizes = [6, 8, 8], strides = [1, 1, 1]} : vector<6x8x64xf32> to vector<6x8x8xf32>
    %198 = vector.extract_strided_slice %175 {offsets = [0, 0, 32], sizes = [6, 8, 8], strides = [1, 1, 1]} : vector<6x8x64xf32> to vector<6x8x8xf32>
    %199 = vector.extract_strided_slice %175 {offsets = [0, 0, 40], sizes = [6, 8, 8], strides = [1, 1, 1]} : vector<6x8x64xf32> to vector<6x8x8xf32>
    %200 = vector.extract_strided_slice %175 {offsets = [0, 0, 48], sizes = [6, 8, 8], strides = [1, 1, 1]} : vector<6x8x64xf32> to vector<6x8x8xf32>
    %201 = vector.extract_strided_slice %175 {offsets = [0, 0, 56], sizes = [6, 8, 8], strides = [1, 1, 1]} : vector<6x8x64xf32> to vector<6x8x8xf32>
    %202 = tpu.concatenate %194, %195, %196, %197, %198, %199, %200, %201 in 0 : vector<6x8x8xf32>, vector<6x8x8xf32>, vector<6x8x8xf32>, vector<6x8x8xf32>, vector<6x8x8xf32>, vector<6x8x8xf32>, vector<6x8x8xf32>, vector<6x8x8xf32> -> vector<48x8x8xf32>
    %203 = arith.truncf %184 : vector<48x8x8xf32> to vector<48x8x8xbf16>
    %204 = arith.truncf %193 : vector<48x8x8xf32> to vector<48x8x8xbf16>
    "tpu.trace_start"() <{level = 10 : i32, message = "bqd,bkd->bqk"}> : () -> ()
    %cst_67 = arith.constant dense<0.000000e+00> : vector<48x8x8xf32>
    %205 = tpu.matmul %203, %204, %cst_67 {dimension_numbers = #tpu.dot_dimension_numbers<[2], [2], [1], [1], [0, 0, 0, 1, 1, 1], [0], [0]>} : vector<48x8x8xbf16>, vector<48x8x8xbf16>, vector<48x8x8xf32> -> vector<48x8x8xf32>
    "tpu.trace_stop"() : () -> ()
    %cst_68 = arith.constant dense<0xFF800000> : vector<48x8xf32>
    %206 = vector.multi_reduction <maximumf>, %205, %cst_68 [2] : vector<48x8x8xf32> to vector<48x8xf32>
    %207 = vector.shape_cast %206 : vector<48x8xf32> to vector<48x8x1xf32>
    %208 = vector.broadcast %207 : vector<48x8x1xf32> to vector<48x8x8xf32>
    %209 = arith.subf %205, %208 : vector<48x8x8xf32>
    %210 = math.exp %209 : vector<48x8x8xf32>
    %cst_69 = arith.constant dense<0.000000e+00> : vector<48x8xf32>
    %211 = vector.multi_reduction <add>, %210, %cst_69 [2] : vector<48x8x8xf32> to vector<48x8xf32>
    %212 = vector.shape_cast %211 : vector<48x8xf32> to vector<48x8x1xf32>
    %213 = tpu.reciprocal %212 {approx = true} : vector<48x8x1xf32> -> vector<48x8x1xf32>
    %214 = vector.broadcast %213 : vector<48x8x1xf32> to vector<48x8x8xf32>
    %215 = arith.mulf %210, %214 : vector<48x8x8xf32>
    %216 = arith.truncf %215 : vector<48x8x8xf32> to vector<48x8x8xbf16>
    %217 = arith.truncf %202 : vector<48x8x8xf32> to vector<48x8x8xbf16>
    "tpu.trace_start"() <{level = 10 : i32, message = "bqk,bkd->bqd"}> : () -> ()
    %cst_70 = arith.constant dense<0.000000e+00> : vector<48x8x8xf32>
    %218 = tpu.matmul %216, %217, %cst_70 {dimension_numbers = #tpu.dot_dimension_numbers<[2], [1], [1], [2], [0, 0, 0, 1, 1, 2], [0], [0]>} : vector<48x8x8xbf16>, vector<48x8x8xbf16>, vector<48x8x8xf32> -> vector<48x8x8xf32>
    "tpu.trace_stop"() : () -> ()
    %219 = vector.extract_strided_slice %218 {offsets = [0, 0, 0], sizes = [6, 8, 8], strides = [1, 1, 1]} : vector<48x8x8xf32> to vector<6x8x8xf32>
    %220 = vector.shape_cast %219 : vector<6x8x8xf32> to vector<48x8xf32>
    %221 = vector.extract_strided_slice %218 {offsets = [6, 0, 0], sizes = [6, 8, 8], strides = [1, 1, 1]} : vector<48x8x8xf32> to vector<6x8x8xf32>
    %222 = vector.shape_cast %221 : vector<6x8x8xf32> to vector<48x8xf32>
    %223 = vector.extract_strided_slice %218 {offsets = [12, 0, 0], sizes = [6, 8, 8], strides = [1, 1, 1]} : vector<48x8x8xf32> to vector<6x8x8xf32>
    %224 = vector.shape_cast %223 : vector<6x8x8xf32> to vector<48x8xf32>
    %225 = vector.extract_strided_slice %218 {offsets = [18, 0, 0], sizes = [6, 8, 8], strides = [1, 1, 1]} : vector<48x8x8xf32> to vector<6x8x8xf32>
    %226 = vector.shape_cast %225 : vector<6x8x8xf32> to vector<48x8xf32>
    %227 = vector.extract_strided_slice %218 {offsets = [24, 0, 0], sizes = [6, 8, 8], strides = [1, 1, 1]} : vector<48x8x8xf32> to vector<6x8x8xf32>
    %228 = vector.shape_cast %227 : vector<6x8x8xf32> to vector<48x8xf32>
    %229 = vector.extract_strided_slice %218 {offsets = [30, 0, 0], sizes = [6, 8, 8], strides = [1, 1, 1]} : vector<48x8x8xf32> to vector<6x8x8xf32>
    %230 = vector.shape_cast %229 : vector<6x8x8xf32> to vector<48x8xf32>
    %231 = vector.extract_strided_slice %218 {offsets = [36, 0, 0], sizes = [6, 8, 8], strides = [1, 1, 1]} : vector<48x8x8xf32> to vector<6x8x8xf32>
    %232 = vector.shape_cast %231 : vector<6x8x8xf32> to vector<48x8xf32>
    %233 = vector.extract_strided_slice %218 {offsets = [42, 0, 0], sizes = [6, 8, 8], strides = [1, 1, 1]} : vector<48x8x8xf32> to vector<6x8x8xf32>
    %234 = vector.shape_cast %233 : vector<6x8x8xf32> to vector<48x8xf32>
    %235 = tpu.concatenate %220, %222, %224, %226, %228, %230, %232, %234 in 1 : vector<48x8xf32>, vector<48x8xf32>, vector<48x8xf32>, vector<48x8xf32>, vector<48x8xf32>, vector<48x8xf32>, vector<48x8xf32>, vector<48x8xf32> -> vector<48x64xf32>
    %236 = arith.truncf %235 : vector<48x64xf32> to vector<48x64xbf16>
    %c1_71 = arith.constant 1 : index
    %c0_72 = arith.constant 0 : index
    %c0_73 = arith.constant 0 : index
    %237 = vector.load %arg6[%c1_71, %c0_72, %c0_73] : memref<2x64x64xbf16, #tpu.memory_space<vmem>>, vector<1x64x64xbf16>
    %238 = vector.shape_cast %237 : vector<1x64x64xbf16> to vector<64x64xbf16>
    %cst_74 = arith.constant dense<0.000000e+00> : vector<48x64xf32>
    %239 = tpu.matmul %236, %238, %cst_74 {dimension_numbers = #tpu.dot_dimension_numbers<[1], [0], [0], [1], [0, 0, 1, 1], [], []>} : vector<48x64xbf16>, vector<64x64xbf16>, vector<48x64xf32> -> vector<48x64xf32>
    %c1_75 = arith.constant 1 : index
    %c0_76 = arith.constant 0 : index
    %c0_77 = arith.constant 0 : index
    %240 = vector.load %arg7[%c1_75, %c0_76, %c0_77] : memref<2x1x64xf32, #tpu.memory_space<vmem>>, vector<1x1x64xf32>
    %241 = vector.shape_cast %240 : vector<1x1x64xf32> to vector<1x64xf32>
    %242 = vector.broadcast %241 : vector<1x64xf32> to vector<48x64xf32>
    %243 = arith.addf %239, %242 : vector<48x64xf32>
    %244 = arith.addf %161, %243 : vector<48x64xf32>
    %c1_78 = arith.constant 1 : index
    %c0_79 = arith.constant 0 : index
    %c0_80 = arith.constant 0 : index
    %245 = vector.load %arg12[%c1_78, %c0_79, %c0_80] : memref<2x1x64xf32, #tpu.memory_space<vmem>>, vector<1x1x64xf32>
    %246 = vector.shape_cast %245 : vector<1x1x64xf32> to vector<1x64xf32>
    %c1_81 = arith.constant 1 : index
    %c0_82 = arith.constant 0 : index
    %c0_83 = arith.constant 0 : index
    %247 = vector.load %arg13[%c1_81, %c0_82, %c0_83] : memref<2x1x64xf32, #tpu.memory_space<vmem>>, vector<1x1x64xf32>
    %248 = vector.shape_cast %247 : vector<1x1x64xf32> to vector<1x64xf32>
    %cst_84 = arith.constant dense<0.000000e+00> : vector<48xf32>
    %249 = vector.multi_reduction <add>, %244, %cst_84 [1] : vector<48x64xf32> to vector<48xf32>
    %250 = vector.shape_cast %249 : vector<48xf32> to vector<48x1xf32>
    %cst_85 = arith.constant 6.400000e+01 : f32
    %251 = vector.broadcast %cst_85 : f32 to vector<48x1xf32>
    %252 = arith.divf %250, %251 : vector<48x1xf32>
    %253 = vector.broadcast %252 : vector<48x1xf32> to vector<48x64xf32>
    %254 = arith.subf %244, %253 : vector<48x64xf32>
    %255 = arith.mulf %254, %254 : vector<48x64xf32>
    %cst_86 = arith.constant dense<0.000000e+00> : vector<48xf32>
    %256 = vector.multi_reduction <add>, %255, %cst_86 [1] : vector<48x64xf32> to vector<48xf32>
    %257 = vector.shape_cast %256 : vector<48xf32> to vector<48x1xf32>
    %cst_87 = arith.constant 6.400000e+01 : f32
    %258 = vector.broadcast %cst_87 : f32 to vector<48x1xf32>
    %259 = arith.divf %257, %258 : vector<48x1xf32>
    %260 = vector.broadcast %252 : vector<48x1xf32> to vector<48x64xf32>
    %261 = arith.subf %244, %260 : vector<48x64xf32>
    %cst_88 = arith.constant 9.99999974E-6 : f32
    %262 = vector.broadcast %cst_88 : f32 to vector<48x1xf32>
    %263 = arith.addf %259, %262 : vector<48x1xf32>
    %264 = math.rsqrt %263 : vector<48x1xf32>
    %265 = vector.broadcast %264 : vector<48x1xf32> to vector<48x64xf32>
    %266 = arith.mulf %261, %265 : vector<48x64xf32>
    %267 = vector.broadcast %246 : vector<1x64xf32> to vector<48x64xf32>
    %268 = arith.mulf %266, %267 : vector<48x64xf32>
    %269 = vector.broadcast %248 : vector<1x64xf32> to vector<48x64xf32>
    %270 = arith.addf %268, %269 : vector<48x64xf32>
    %271 = arith.truncf %270 : vector<48x64xf32> to vector<48x64xbf16>
    %c1_89 = arith.constant 1 : index
    %c0_90 = arith.constant 0 : index
    %c0_91 = arith.constant 0 : index
    %272 = vector.load %arg8[%c1_89, %c0_90, %c0_91] : memref<2x64x64xbf16, #tpu.memory_space<vmem>>, vector<1x64x64xbf16>
    %273 = vector.shape_cast %272 : vector<1x64x64xbf16> to vector<64x64xbf16>
    %cst_92 = arith.constant dense<0.000000e+00> : vector<48x64xf32>
    %274 = tpu.matmul %271, %273, %cst_92 {dimension_numbers = #tpu.dot_dimension_numbers<[1], [0], [0], [1], [0, 0, 1, 1], [], []>} : vector<48x64xbf16>, vector<64x64xbf16>, vector<48x64xf32> -> vector<48x64xf32>
    %c1_93 = arith.constant 1 : index
    %c0_94 = arith.constant 0 : index
    %c0_95 = arith.constant 0 : index
    %275 = vector.load %arg9[%c1_93, %c0_94, %c0_95] : memref<2x1x64xf32, #tpu.memory_space<vmem>>, vector<1x1x64xf32>
    %276 = vector.shape_cast %275 : vector<1x1x64xf32> to vector<1x64xf32>
    %277 = vector.broadcast %276 : vector<1x64xf32> to vector<48x64xf32>
    %278 = arith.addf %274, %277 : vector<48x64xf32>
    %cst_96 = arith.constant 0.000000e+00 : f32
    %279 = vector.broadcast %cst_96 : f32 to vector<48x64xf32>
    %280 = arith.maximumf %278, %279 : vector<48x64xf32>
    %281 = arith.truncf %280 : vector<48x64xf32> to vector<48x64xbf16>
    %c1_97 = arith.constant 1 : index
    %c0_98 = arith.constant 0 : index
    %c0_99 = arith.constant 0 : index
    %282 = vector.load %arg10[%c1_97, %c0_98, %c0_99] : memref<2x64x64xbf16, #tpu.memory_space<vmem>>, vector<1x64x64xbf16>
    %283 = vector.shape_cast %282 : vector<1x64x64xbf16> to vector<64x64xbf16>
    %cst_100 = arith.constant dense<0.000000e+00> : vector<48x64xf32>
    %284 = tpu.matmul %281, %283, %cst_100 {dimension_numbers = #tpu.dot_dimension_numbers<[1], [0], [0], [1], [0, 0, 1, 1], [], []>} : vector<48x64xbf16>, vector<64x64xbf16>, vector<48x64xf32> -> vector<48x64xf32>
    %c1_101 = arith.constant 1 : index
    %c0_102 = arith.constant 0 : index
    %c0_103 = arith.constant 0 : index
    %285 = vector.load %arg11[%c1_101, %c0_102, %c0_103] : memref<2x1x64xf32, #tpu.memory_space<vmem>>, vector<1x1x64xf32>
    %286 = vector.shape_cast %285 : vector<1x1x64xf32> to vector<1x64xf32>
    %287 = vector.broadcast %286 : vector<1x64xf32> to vector<48x64xf32>
    %288 = arith.addf %284, %287 : vector<48x64xf32>
    %289 = arith.addf %270, %288 : vector<48x64xf32>
    %c1_104 = arith.constant 1 : index
    %c0_105 = arith.constant 0 : index
    %c0_106 = arith.constant 0 : index
    %290 = vector.load %arg14[%c1_104, %c0_105, %c0_106] : memref<2x1x64xf32, #tpu.memory_space<vmem>>, vector<1x1x64xf32>
    %291 = vector.shape_cast %290 : vector<1x1x64xf32> to vector<1x64xf32>
    %c1_107 = arith.constant 1 : index
    %c0_108 = arith.constant 0 : index
    %c0_109 = arith.constant 0 : index
    %292 = vector.load %arg15[%c1_107, %c0_108, %c0_109] : memref<2x1x64xf32, #tpu.memory_space<vmem>>, vector<1x1x64xf32>
    %293 = vector.shape_cast %292 : vector<1x1x64xf32> to vector<1x64xf32>
    %cst_110 = arith.constant dense<0.000000e+00> : vector<48xf32>
    %294 = vector.multi_reduction <add>, %289, %cst_110 [1] : vector<48x64xf32> to vector<48xf32>
    %295 = vector.shape_cast %294 : vector<48xf32> to vector<48x1xf32>
    %cst_111 = arith.constant 6.400000e+01 : f32
    %296 = vector.broadcast %cst_111 : f32 to vector<48x1xf32>
    %297 = arith.divf %295, %296 : vector<48x1xf32>
    %298 = vector.broadcast %297 : vector<48x1xf32> to vector<48x64xf32>
    %299 = arith.subf %289, %298 : vector<48x64xf32>
    %300 = arith.mulf %299, %299 : vector<48x64xf32>
    %cst_112 = arith.constant dense<0.000000e+00> : vector<48xf32>
    %301 = vector.multi_reduction <add>, %300, %cst_112 [1] : vector<48x64xf32> to vector<48xf32>
    %302 = vector.shape_cast %301 : vector<48xf32> to vector<48x1xf32>
    %cst_113 = arith.constant 6.400000e+01 : f32
    %303 = vector.broadcast %cst_113 : f32 to vector<48x1xf32>
    %304 = arith.divf %302, %303 : vector<48x1xf32>
    %305 = vector.broadcast %297 : vector<48x1xf32> to vector<48x64xf32>
    %306 = arith.subf %289, %305 : vector<48x64xf32>
    %cst_114 = arith.constant 9.99999974E-6 : f32
    %307 = vector.broadcast %cst_114 : f32 to vector<48x1xf32>
    %308 = arith.addf %304, %307 : vector<48x1xf32>
    %309 = math.rsqrt %308 : vector<48x1xf32>
    %310 = vector.broadcast %309 : vector<48x1xf32> to vector<48x64xf32>
    %311 = arith.mulf %306, %310 : vector<48x64xf32>
    %312 = vector.broadcast %291 : vector<1x64xf32> to vector<48x64xf32>
    %313 = arith.mulf %311, %312 : vector<48x64xf32>
    %314 = vector.broadcast %293 : vector<1x64xf32> to vector<48x64xf32>
    %315 = arith.addf %313, %314 : vector<48x64xf32>
    %316 = vector.shape_cast %315 : vector<48x64xf32> to vector<6x8x64xf32>
    %cst_115 = arith.constant dense<0.000000e+00> : vector<6x64xf32>
    %317 = vector.multi_reduction <add>, %316, %cst_115 [1] : vector<6x8x64xf32> to vector<6x64xf32>
    %cst_116 = arith.constant 8.000000e+00 : f32
    %318 = vector.broadcast %cst_116 : f32 to vector<6x64xf32>
    %319 = arith.divf %317, %318 : vector<6x64xf32>
    %320 = arith.truncf %319 : vector<6x64xf32> to vector<6x64xbf16>
    %c0_117 = arith.constant 0 : index
    %c0_118 = arith.constant 0 : index
    %321 = vector.load %arg16[%c0_117, %c0_118] : memref<64x128xbf16, #tpu.memory_space<vmem>>, vector<64x128xbf16>
    %cst_119 = arith.constant dense<0.000000e+00> : vector<6x128xf32>
    %322 = tpu.matmul %320, %321, %cst_119 {dimension_numbers = #tpu.dot_dimension_numbers<[1], [0], [0], [1], [0, 0, 1, 1], [], []>} : vector<6x64xbf16>, vector<64x128xbf16>, vector<6x128xf32> -> vector<6x128xf32>
    %c0_120 = arith.constant 0 : index
    %c0_121 = arith.constant 0 : index
    %323 = vector.load %arg17[%c0_120, %c0_121] : memref<1x128xf32, #tpu.memory_space<vmem>>, vector<1x128xf32>
    %324 = vector.broadcast %323 : vector<1x128xf32> to vector<6x128xf32>
    %325 = arith.addf %322, %324 : vector<6x128xf32>
    %cst_122 = arith.constant 0.000000e+00 : f32
    %326 = vector.broadcast %cst_122 : f32 to vector<6x128xf32>
    %327 = arith.maximumf %325, %326 : vector<6x128xf32>
    %c0_123 = arith.constant 0 : index
    %c0_124 = arith.constant 0 : index
    %c0_125 = arith.constant 0 : index
    %328 = vector.load %arg18[%c0_123, %c0_124, %c0_125] : memref<1x6x128xf32, #tpu.memory_space<vmem>>, vector<1x6x128xf32>
    %329 = vector.shape_cast %328 : vector<1x6x128xf32> to vector<6x128xf32>
    %330 = vector.shape_cast %327 : vector<6x128xf32> to vector<1x6x128xf32>
    tpu.vector_store %arg18[%c0_123, %c0_124, %c0_125], %330 {strides = array<i32>} : memref<1x6x128xf32, #tpu.memory_space<vmem>>, vector<1x6x128xf32>,
    return
  }
  func.func @transform_0(%arg0: i32) -> (i32, i32, i32) {
    %c0_i32 = arith.constant 0 : i32
    %c0_i32_0 = arith.constant 0 : i32
    %c0_i32_1 = arith.constant 0 : i32
    return %arg0, %c0_i32, %c0_i32_0 : i32, i32, i32
  }
  func.func @transform_1(%arg0: i32) -> (i32, i32) {
    %c0_i32 = arith.constant 0 : i32
    %c0_i32_0 = arith.constant 0 : i32
    %c0_i32_1 = arith.constant 0 : i32
    return %c0_i32, %c0_i32_0 : i32, i32
  }
  func.func @transform_2(%arg0: i32) -> (i32, i32) {
    %c0_i32 = arith.constant 0 : i32
    %c0_i32_0 = arith.constant 0 : i32
    %c0_i32_1 = arith.constant 0 : i32
    return %c0_i32, %c0_i32_0 : i32, i32
  }
  func.func @transform_3(%arg0: i32) -> (i32, i32, i32) {
    %c0_i32 = arith.constant 0 : i32
    %c0_i32_0 = arith.constant 0 : i32
    %c0_i32_1 = arith.constant 0 : i32
    %c0_i32_2 = arith.constant 0 : i32
    return %c0_i32, %c0_i32_0, %c0_i32_1 : i32, i32, i32
  }
  func.func @transform_4(%arg0: i32) -> (i32, i32, i32) {
    %c0_i32 = arith.constant 0 : i32
    %c0_i32_0 = arith.constant 0 : i32
    %c0_i32_1 = arith.constant 0 : i32
    %c0_i32_2 = arith.constant 0 : i32
    return %c0_i32, %c0_i32_0, %c0_i32_1 : i32, i32, i32
  }
  func.func @transform_5(%arg0: i32) -> (i32, i32, i32) {
    %c0_i32 = arith.constant 0 : i32
    %c0_i32_0 = arith.constant 0 : i32
    %c0_i32_1 = arith.constant 0 : i32
    %c0_i32_2 = arith.constant 0 : i32
    return %c0_i32, %c0_i32_0, %c0_i32_1 : i32, i32, i32
  }
  func.func @transform_6(%arg0: i32) -> (i32, i32, i32) {
    %c0_i32 = arith.constant 0 : i32
    %c0_i32_0 = arith.constant 0 : i32
    %c0_i32_1 = arith.constant 0 : i32
    %c0_i32_2 = arith.constant 0 : i32
    return %c0_i32, %c0_i32_0, %c0_i32_1 : i32, i32, i32
  }
  func.func @transform_7(%arg0: i32) -> (i32, i32, i32) {
    %c0_i32 = arith.constant 0 : i32
    %c0_i32_0 = arith.constant 0 : i32
    %c0_i32_1 = arith.constant 0 : i32
    %c0_i32_2 = arith.constant 0 : i32
    return %c0_i32, %c0_i32_0, %c0_i32_1 : i32, i32, i32
  }
  func.func @transform_8(%arg0: i32) -> (i32, i32, i32) {
    %c0_i32 = arith.constant 0 : i32
    %c0_i32_0 = arith.constant 0 : i32
    %c0_i32_1 = arith.constant 0 : i32
    %c0_i32_2 = arith.constant 0 : i32
    return %c0_i32, %c0_i32_0, %c0_i32_1 : i32, i32, i32
  }
  func.func @transform_9(%arg0: i32) -> (i32, i32, i32) {
    %c0_i32 = arith.constant 0 : i32
    %c0_i32_0 = arith.constant 0 : i32
    %c0_i32_1 = arith.constant 0 : i32
    %c0_i32_2 = arith.constant 0 : i32
    return %c0_i32, %c0_i32_0, %c0_i32_1 : i32, i32, i32
  }
  func.func @transform_10(%arg0: i32) -> (i32, i32, i32) {
    %c0_i32 = arith.constant 0 : i32
    %c0_i32_0 = arith.constant 0 : i32
    %c0_i32_1 = arith.constant 0 : i32
    %c0_i32_2 = arith.constant 0 : i32
    return %c0_i32, %c0_i32_0, %c0_i32_1 : i32, i32, i32
  }
  func.func @transform_11(%arg0: i32) -> (i32, i32, i32) {
    %c0_i32 = arith.constant 0 : i32
    %c0_i32_0 = arith.constant 0 : i32
    %c0_i32_1 = arith.constant 0 : i32
    %c0_i32_2 = arith.constant 0 : i32
    return %c0_i32, %c0_i32_0, %c0_i32_1 : i32, i32, i32
  }
  func.func @transform_12(%arg0: i32) -> (i32, i32, i32) {
    %c0_i32 = arith.constant 0 : i32
    %c0_i32_0 = arith.constant 0 : i32
    %c0_i32_1 = arith.constant 0 : i32
    %c0_i32_2 = arith.constant 0 : i32
    return %c0_i32, %c0_i32_0, %c0_i32_1 : i32, i32, i32
  }
  func.func @transform_13(%arg0: i32) -> (i32, i32, i32) {
    %c0_i32 = arith.constant 0 : i32
    %c0_i32_0 = arith.constant 0 : i32
    %c0_i32_1 = arith.constant 0 : i32
    %c0_i32_2 = arith.constant 0 : i32
    return %c0_i32, %c0_i32_0, %c0_i32_1 : i32, i32, i32
  }
  func.func @transform_14(%arg0: i32) -> (i32, i32, i32) {
    %c0_i32 = arith.constant 0 : i32
    %c0_i32_0 = arith.constant 0 : i32
    %c0_i32_1 = arith.constant 0 : i32
    %c0_i32_2 = arith.constant 0 : i32
    return %c0_i32, %c0_i32_0, %c0_i32_1 : i32, i32, i32
  }
  func.func @transform_15(%arg0: i32) -> (i32, i32) {
    %c0_i32 = arith.constant 0 : i32
    %c0_i32_0 = arith.constant 0 : i32
    %c0_i32_1 = arith.constant 0 : i32
    return %c0_i32, %c0_i32_0 : i32, i32
  }
  func.func @transform_16(%arg0: i32) -> (i32, i32) {
    %c0_i32 = arith.constant 0 : i32
    %c0_i32_0 = arith.constant 0 : i32
    %c0_i32_1 = arith.constant 0 : i32
    return %c0_i32, %c0_i32_0 : i32, i32
  }
  func.func @transform_17(%arg0: i32) -> (i32, i32, i32) {
    %c0_i32 = arith.constant 0 : i32
    %c0_i32_0 = arith.constant 0 : i32
    %c0_i32_1 = arith.constant 0 : i32
    return %arg0, %c0_i32, %c0_i32_0 : i32, i32, i32
  }
}

</mosaic_0001>

<llo_original>
// kernel: transformer_forward.1
$region0: #{transformer_forward.1}
  #allocation0 [shape = 'u32[]', space=smem, size = 0x4, offset = 0x4, fixed_abs, tag = 'smem constant byte address 0x4 - core index']
  #allocation1 [shape = 'u32[72,128]{1,0:T(1,128)}', space=vmem, size = 0x9000, scoped, tag = 'internal scratch']
  %s0 = inlined_call_operand.vmem [shape: f32[6,8,4], index: 0, kind: input, shape index: {}]
  %s1 = inlined_call_operand.vmem [shape: bf16[4,64], index: 1, kind: input, shape index: {}]
  %s2 = inlined_call_operand.vmem [shape: f32[1,64], index: 2, kind: input, shape index: {}]
  %s3 = inlined_call_operand.vmem [shape: bf16[2,64,192], index: 3, kind: input, shape index: {}]
  %s4 = inlined_call_operand.vmem [shape: f32[2,1,192], index: 4, kind: input, shape index: {}]
  %s5 = inlined_call_operand.hbm [shape: bf16[2,64,64], index: 5, kind: input, shape index: {}]
  %s6 = inlined_call_operand.vmem [shape: f32[2,1,64], index: 6, kind: input, shape index: {}]
  %s7 = inlined_call_operand.hbm [shape: bf16[2,64,64], index: 7, kind: input, shape index: {}]
  %s8 = inlined_call_operand.vmem [shape: f32[2,1,64], index: 8, kind: input, shape index: {}]
  %s9 = inlined_call_operand.hbm [shape: bf16[2,64,64], index: 9, kind: input, shape index: {}]
  %s10 = inlined_call_operand.vmem [shape: f32[2,1,64], index: 10, kind: input, shape index: {}]
  %s11 = inlined_call_operand.vmem [shape: f32[2,1,64], index: 11, kind: input, shape index: {}]
  %s12 = inlined_call_operand.vmem [shape: f32[2,1,64], index: 12, kind: input, shape index: {}]
  %s13 = inlined_call_operand.vmem [shape: f32[2,1,64], index: 13, kind: input, shape index: {}]
  %s14 = inlined_call_operand.vmem [shape: f32[2,1,64], index: 14, kind: input, shape index: {}]
  %s15 = inlined_call_operand.hbm [shape: bf16[64,128], index: 15, kind: input, shape index: {}]
  %s16 = inlined_call_operand.vmem [shape: f32[1,128], index: 16, kind: input, shape index: {}]
  %s17 = inlined_call_operand.vmem [shape: f32[1,6,128], index: 17, kind: output, shape index: {}]
  %s18 = sld [smem:[#allocation0]]
  $region94: #{transformer_forward.1} parent=0
    _
  %s20 = ssub.s32 1, %s18
  %s21 = scalar_select 0, %s20, %s18
  $region1: #{transformer_forward.1} parent=0
    #allocation2 [shape = 'u8[32768]{0}', space=vmem, size = 0x8000, scoped, tag = 'input window, operand 5, single buffered']
    #allocation3 [shape = 's32[1]{0}', space=sflag, size = 0x4, scoped, tag = 'scoped memory for transformer_forward.1']
    #allocation4 [shape = 'u8[32768]{0}', space=vmem, size = 0x8000, scoped, tag = 'input window, operand 7, single buffered']
    #allocation5 [shape = 's32[1]{0}', space=sflag, size = 0x4, scoped, tag = 'scoped memory for transformer_forward.1']
    #allocation6 [shape = 'u8[32768]{0}', space=vmem, size = 0x8000, scoped, tag = 'input window, operand 9, single buffered']
    #allocation7 [shape = 'u8[16384]{0}', space=vmem, size = 0x4000, scoped, tag = 'input window, operand 15, single buffered']
    #allocation8 [shape = 's32[1]{0}', space=sflag, size = 0x4, scoped, tag = 'scoped memory for transformer_forward.1']
    %22 = vsyncpa [#allocation3], 0
    %23 = vsyncpa [#allocation5], 0
    %24 = vsyncpa [#allocation8], 0
    // Predicated region
    $region2: #{transformer_forward.1} parent=1 // pred_check
      _
    $region3: #{transformer_forward.1} parent=1 // pred_check_branch
      %26 = sbr.rel (0) target = $region5
    $region4: #{transformer_forward.1} parent=1 // pred_region
      _
    $region5: #{transformer_forward.1} parent=1 // pred_fallthru
      _
    // Predicated region
    $region6: #{transformer_forward.1} parent=1 // pred_check
      _
    $region7: #{transformer_forward.1} parent=1 // pred_check_branch
      %28 = sbr.rel (0) target = $region9
    $region8: #{transformer_forward.1} parent=1 // pred_region
      _
    $region9: #{transformer_forward.1} parent=1 // pred_fallthru
      _
    // Predicated region
    $region10: #{transformer_forward.1} parent=1 // pred_check
      _
    $region11: #{transformer_forward.1} parent=1 // pred_check_branch
      %30 = sbr.rel (0) target = $region13
    $region12: #{transformer_forward.1} parent=1 // pred_region
      _
    $region13: #{transformer_forward.1} parent=1 // pred_fallthru
      _
    // Predicated region
    $region14: #{transformer_forward.1} parent=1 // pred_check
      _
    $region15: #{transformer_forward.1} parent=1 // pred_check_branch
      %32 = sbr.rel (0) target = $region17
    $region16: #{transformer_forward.1} parent=1 // pred_region
      _
    $region17: #{transformer_forward.1} parent=1 // pred_fallthru
      _
    // Predicated region
    $region18: #{transformer_forward.1} parent=1 // pred_check
      _
    $region19: #{transformer_forward.1} parent=1 // pred_check_branch
      %34 = sbr.rel (0) target = $region21
    $region20: #{transformer_forward.1} parent=1 // pred_region
      _
    $region21: #{transformer_forward.1} parent=1 // pred_fallthru
      _
    // Predicated region
    $region22: #{transformer_forward.1} parent=1 // pred_check
      _
    $region23: #{transformer_forward.1} parent=1 // pred_check_branch
      %36 = sbr.rel (0) target = $region25
    $region24: #{transformer_forward.1} parent=1 // pred_region
      %38 = vsyncadd [#allocation3], 0
      %s39 = sshll.u32 %s5, 4
      %s40 = int_to_ptr.hbm [resolvable:$true] %s39
      %s41 = sshll.u32 [#allocation2], 4
      %s42 = int_to_ptr.vmem [resolvable:$true] %s41
      %47 = dma.hbm_to_vmem [thread:$0]  %s40, 1024, %s42, [#allocation3], 64, 64, 4
    $region25: #{transformer_forward.1} parent=1 // pred_fallthru
      _
    // Predicated region
    $region26: #{transformer_forward.1} parent=1 // pred_check
      _
    $region27: #{transformer_forward.1} parent=1 // pred_check_branch
      %49 = sbr.rel (0) target = $region29
    $region28: #{transformer_forward.1} parent=1 // pred_region
      _
    $region29: #{transformer_forward.1} parent=1 // pred_fallthru
      _
    // Predicated region
    $region30: #{transformer_forward.1} parent=1 // pred_check
      _
    $region31: #{transformer_forward.1} parent=1 // pred_check_branch
      %51 = sbr.rel (0) target = $region33
    $region32: #{transformer_forward.1} parent=1 // pred_region
      %53 = vsyncadd [#allocation5], 0
      %s54 = sshll.u32 %s7, 4
      %s55 = int_to_ptr.hbm [resolvable:$true] %s54
      %s56 = sshll.u32 [#allocation4], 4
      %s57 = int_to_ptr.vmem [resolvable:$true] %s56
      %62 = dma.hbm_to_vmem [thread:$0]  %s55, 1024, %s57, [#allocation5], 64, 64, 4
    $region33: #{transformer_forward.1} parent=1 // pred_fallthru
      _
    // Predicated region
    $region34: #{transformer_forward.1} parent=1 // pred_check
      _
    $region35: #{transformer_forward.1} parent=1 // pred_check_branch
      %64 = sbr.rel (0) target = $region37
    $region36: #{transformer_forward.1} parent=1 // pred_region
      _
    $region37: #{transformer_forward.1} parent=1 // pred_fallthru
      _
    // Predicated region
    $region38: #{transformer_forward.1} parent=1 // pred_check
      _
    $region39: #{transformer_forward.1} parent=1 // pred_check_branch
      %66 = sbr.rel (0) target = $region41
    $region40: #{transformer_forward.1} parent=1 // pred_region
      %68 = vsyncadd [#allocation5], 0
      %s69 = sshll.u32 %s9, 4
      %s70 = int_to_ptr.hbm [resolvable:$true] %s69
      %s71 = sshll.u32 [#allocation6], 4
      %s72 = int_to_ptr.vmem [resolvable:$true] %s71
      %77 = dma.hbm_to_vmem [thread:$0]  %s70, 1024, %s72, [#allocation5], 64, 64, 4
    $region41: #{transformer_forward.1} parent=1 // pred_fallthru
      _
    // Predicated region
    $region42: #{transformer_forward.1} parent=1 // pred_check
      _
    $region43: #{transformer_forward.1} parent=1 // pred_check_branch
      %79 = sbr.rel (0) target = $region45
    $region44: #{transformer_forward.1} parent=1 // pred_region
      _
    $region45: #{transformer_forward.1} parent=1 // pred_fallthru
      _
    // Predicated region
    $region46: #{transformer_forward.1} parent=1 // pred_check
      _
    $region47: #{transformer_forward.1} parent=1 // pred_check_branch
      %81 = sbr.rel (0) target = $region49
    $region48: #{transformer_forward.1} parent=1 // pred_region
      _
    $region49: #{transformer_forward.1} parent=1 // pred_fallthru
      _
    // Predicated region
    $region50: #{transformer_forward.1} parent=1 // pred_check
      _
    $region51: #{transformer_forward.1} parent=1 // pred_check_branch
      %83 = sbr.rel (0) target = $region53
    $region52: #{transformer_forward.1} parent=1 // pred_region
      _
    $region53: #{transformer_forward.1} parent=1 // pred_fallthru
      _
    // Predicated region
    $region54: #{transformer_forward.1} parent=1 // pred_check
      _
    $region55: #{transformer_forward.1} parent=1 // pred_check_branch
      %85 = sbr.rel (0) target = $region57
    $region56: #{transformer_forward.1} parent=1 // pred_region
      _
    $region57: #{transformer_forward.1} parent=1 // pred_fallthru
      _
    // Predicated region
    $region58: #{transformer_forward.1} parent=1 // pred_check
      _
    $region59: #{transformer_forward.1} parent=1 // pred_check_branch
      %87 = sbr.rel (0) target = $region61
    $region60: #{transformer_forward.1} parent=1 // pred_region
      _
    $region61: #{transformer_forward.1} parent=1 // pred_fallthru
      _
    // Predicated region
    $region62: #{transformer_forward.1} parent=1 // pred_check
      _
    $region63: #{transformer_forward.1} parent=1 // pred_check_branch
      %89 = sbr.rel (0) target = $region65
    $region64: #{transformer_forward.1} parent=1 // pred_region
      %91 = vsyncadd [#allocation8], 0
      %s92 = sshll.u32 %s15, 4
      %s93 = int_to_ptr.hbm [resolvable:$true] %s92
      %s94 = sshll.u32 [#allocation7], 4
      %s95 = int_to_ptr.vmem [resolvable:$true] %s94
      %100 = dma.hbm_to_vmem [thread:$0]  %s93, 512, %s95, [#allocation8], 64, 64, 4
    $region65: #{transformer_forward.1} parent=1 // pred_fallthru
      _
    // Predicated region
    $region66: #{transformer_forward.1} parent=1 // pred_check
      _
    $region67: #{transformer_forward.1} parent=1 // pred_check_branch
      %102 = sbr.rel (0) target = $region69
    $region68: #{transformer_forward.1} parent=1 // pred_region
      _
    $region69: #{transformer_forward.1} parent=1 // pred_fallthru
      _
    // Predicated region
    $region70: #{transformer_forward.1} parent=1 // pred_check
      _
    $region71: #{transformer_forward.1} parent=1 // pred_check_branch
      %104 = sbr.rel (0) target = $region73
    $region72: #{transformer_forward.1} parent=1 // pred_region
      %106 = dma.done [#allocation3], 1024
    $region73: #{transformer_forward.1} parent=1 // pred_fallthru
      _
    // Predicated region
    $region74: #{transformer_forward.1} parent=1 // pred_check
      _
    $region75: #{transformer_forward.1} parent=1 // pred_check_branch
      %108 = sbr.rel (0) target = $region77
    $region76: #{transformer_forward.1} parent=1 // pred_region
      %110 = dma.done [#allocation5], 1024
    $region77: #{transformer_forward.1} parent=1 // pred_fallthru
      _
    // Predicated region
    $region78: #{transformer_forward.1} parent=1 // pred_check
      _
    $region79: #{transformer_forward.1} parent=1 // pred_check_branch
      %112 = sbr.rel (0) target = $region81
    $region80: #{transformer_forward.1} parent=1 // pred_region
      %114 = dma.done [#allocation5], 1024
    $region81: #{transformer_forward.1} parent=1 // pred_fallthru
      _
    // Predicated region
    $region82: #{transformer_forward.1} parent=1 // pred_check
      _
    $region83: #{transformer_forward.1} parent=1 // pred_check_branch
      %116 = sbr.rel (0) target = $region85
    $region84: #{transformer_forward.1} parent=1 // pred_region
      %118 = dma.done [#allocation8], 512
    $region85: #{transformer_forward.1} parent=1 // pred_fallthru
      _
    %v120 = vld [vmem:[%s0] sm:$0xff]
    %v121 = vld [vmem:[%s0 + $0x8] sm:$0xff]
    %v122 = vld [vmem:[%s0 + $0x10] sm:$0xff]
    %v123 = vld [vmem:[%s0 + $0x18] sm:$0xff]
    %v124 = vld [vmem:[%s0 + $0x20] sm:$0xff]
    %v125 = vld [vmem:[%s0 + $0x28] sm:$0xff]
    %v126 = vpack.c.bf16 %v121, %v120
    %v127 = vpack.c.bf16 %v123, %v122
    %v128 = vpack.c.bf16 %v125, %v124
    %v129 = vld [vmem:[%s1] sm:$0x3]
    %v130 = vld [vmem:[%s2] sm:$0x1]
    %v132 = vperm.slane %v130, 0
    %vm134 = vcmask 31744
    %v136 = vsel %vm134, %v126, 0
    %v139 = vsel %vm134, %v127, 0
    %v142 = vsel %vm134, %v128, 0
    %vm144 = vcmask 1041408
    %v146 = vsel %vm144, %v129, 0
    %148 = vmatpush.bf16.msra.mxu0 0
    %149 = vmatpush.bf16.msra.mxu0 0
    %150 = vmatpush.bf16.msra.mxu0 0
    %151 = vmatpush.bf16.msra.mxu0 0
    %152 = vmatpush.bf16.msra.mxu0 0
    %153 = vmatpush.bf16.msra.mxu0 0
    %154 = vmatpush.bf16.msra.mxu0 0
    %155 = vmatpush.bf16.msra.mxu0 %v146
    %156 = vmatmul.bf16.gmra.mxu0 %v136
    %v157 = vpop.f32.mrf.mxu0
    %v158 = vadd.f32 %v132, %v157
    %v159 = vpop.f32.mrf.mxu0
    %v160 = vadd.f32 %v132, %v159
    %161 = vmatmul.bf16.gmra.mxu0 %v139
    %v162 = vpop.f32.mrf.mxu0
    %v163 = vadd.f32 %v132, %v162
    %v164 = vpop.f32.mrf.mxu0
    %v165 = vadd.f32 %v132, %v164
    %166 = vmatmul.bf16.gmra.mxu0 %v142
    %v167 = vpop.f32.mrf.mxu0
    %v168 = vadd.f32 %v132, %v167
    %v169 = vpop.f32.mrf.mxu0
    %v170 = vadd.f32 %v132, %v169
    %171 = vdwg.mxu0
    %v172 = vpack.c.bf16 %v160, %v158
    %v173 = vpack.c.bf16 %v165, %v163
    %v174 = vpack.c.bf16 %v170, %v168
    %v175 = vld [vmem:[%s3] sm:$0xff]
    %v176 = vld [vmem:[%s3 + $0x8] sm:$0xff]
    %v177 = vld [vmem:[%s3 + $0x10] sm:$0xff]
    %v178 = vld [vmem:[%s3 + $0x18] sm:$0xff]
    %v179 = vld [vmem:[%s3 + $0x20] sm:$0xff]
    %v180 = vld [vmem:[%s3 + $0x28] sm:$0xff]
    %v181 = vld [vmem:[%s3 + $0x30] sm:$0xff]
    %v182 = vld [vmem:[%s3 + $0x38] sm:$0xff]
    %v183 = vld [vmem:[%s4] sm:$0x3]
    %v185 = vperm.slane %v183, 0
    %v186 = vperm.slane %v183, 1
    %v197 = vunpack.c.l.b16 %v175
    %v198 = vunpack.c.h.b16 %v175
    %v199 = vunpack.c.l.b16 %v176
    %v200 = vunpack.c.h.b16 %v176
    %v201 = vunpack.c.l.b16 %v177
    %v202 = vunpack.c.h.b16 %v177
    %v203 = vunpack.c.l.b16 %v178
    %v204 = vunpack.c.h.b16 %v178
    %v205 = vunpack.c.l.b16 %v179
    %v206 = vunpack.c.h.b16 %v179
    %v207 = vunpack.c.l.b16 %v180
    %v208 = vunpack.c.h.b16 %v180
    %v209 = vunpack.c.l.b16 %v181
    %v210 = vunpack.c.h.b16 %v181
    %v211 = vunpack.c.l.b16 %v182
    %v212 = vunpack.c.h.b16 %v182
    %v213 = vpack.c.b16 %v199, %v197
    %v214 = vpack.c.b16 %v200, %v198
    %v215 = vpack.c.b16 %v203, %v201
    %v216 = vpack.c.b16 %v204, %v202
    %v217 = vpack.c.b16 %v207, %v205
    %v218 = vpack.c.b16 %v208, %v206
    %v219 = vpack.c.b16 %v211, %v209
    %v220 = vpack.c.b16 %v212, %v210
    %vm229 = vcmask 523264
    %v231 = vsel %vm229, %v172, 0
    %v234 = vsel %vm229, %v173, 0
    %v237 = vsel %vm229, %v174, 0
    %239 = vmatpush.bf16.msra.mxu0 0
    %240 = vmatpush.bf16.msra.mxu0 0
    %241 = vmatpush.bf16.msra.mxu0 0
    %242 = vmatpush.bf16.msra.mxu0 0
    %243 = vmatpush.bf16.msra.mxu0 %v219
    %244 = vmatpush.bf16.msra.mxu0 %v217
    %245 = vmatpush.bf16.msra.mxu0 %v215
    %246 = vmatpush.bf16.msra.mxu0 %v213
    %247 = vmatmul.bf16.gmra.mxu0 %v231
    %v248 = vpop.f32.mrf.mxu0
    %v249 = vadd.f32 %v185, %v248
    %v250 = vpop.f32.mrf.mxu0
    %v251 = vadd.f32 %v185, %v250
    %252 = vmatmul.bf16.gmra.mxu0 %v234
    %v253 = vpop.f32.mrf.mxu0
    %v254 = vadd.f32 %v185, %v253
    %v255 = vpop.f32.mrf.mxu0
    %v256 = vadd.f32 %v185, %v255
    %257 = vmatmul.bf16.gmra.mxu0 %v237
    %v258 = vpop.f32.mrf.mxu0
    %v259 = vadd.f32 %v185, %v258
    %v260 = vpop.f32.mrf.mxu0
    %v261 = vadd.f32 %v185, %v260
    %262 = vdwg.mxu0
    %263 = vmatpush.bf16.msra.mxu0 0
    %264 = vmatpush.bf16.msra.mxu0 0
    %265 = vmatpush.bf16.msra.mxu0 0
    %266 = vmatpush.bf16.msra.mxu0 0
    %267 = vmatpush.bf16.msra.mxu0 %v220
    %268 = vmatpush.bf16.msra.mxu0 %v218
    %269 = vmatpush.bf16.msra.mxu0 %v216
    %270 = vmatpush.bf16.msra.mxu0 %v214
    %271 = vmatmul.bf16.gmra.mxu0 %v231
    %v272 = vpop.f32.mrf.mxu0
    %v273 = vadd.f32 %v186, %v272
    %v274 = vpop.f32.mrf.mxu0
    %v275 = vadd.f32 %v186, %v274
    %276 = vmatmul.bf16.gmra.mxu0 %v234
    %v277 = vpop.f32.mrf.mxu0
    %v278 = vadd.f32 %v186, %v277
    %v279 = vpop.f32.mrf.mxu0
    %v280 = vadd.f32 %v186, %v279
    %281 = vmatmul.bf16.gmra.mxu0 %v237
    %v282 = vpop.f32.mrf.mxu0
    %v283 = vadd.f32 %v186, %v282
    %v284 = vpop.f32.mrf.mxu0
    %v285 = vadd.f32 %v186, %v284
    %286 = vdwg.mxu0
    %293 = vrot.lane.b32.xlu0 %v249, 120
    %v294 = vpop.permute.xlu0 %293
    %295 = vrot.lane.b32.xlu0 %v251, 120
    %v296 = vpop.permute.xlu0 %295
    %297 = vrot.lane.b32.xlu0 %v254, 120
    %v298 = vpop.permute.xlu0 %297
    %299 = vrot.lane.b32.xlu0 %v256, 120
    %v300 = vpop.permute.xlu0 %299
    %301 = vrot.lane.b32.xlu0 %v259, 120
    %v302 = vpop.permute.xlu0 %301
    %303 = vrot.lane.b32.xlu0 %v261, 120
    %v304 = vpop.permute.xlu0 %303
    %311 = vrot.lane.b32.xlu0 %v249, 112
    %v312 = vpop.permute.xlu0 %311
    %313 = vrot.lane.b32.xlu0 %v251, 112
    %v314 = vpop.permute.xlu0 %313
    %315 = vrot.lane.b32.xlu0 %v254, 112
    %v316 = vpop.permute.xlu0 %315
    %317 = vrot.lane.b32.xlu0 %v256, 112
    %v318 = vpop.permute.xlu0 %317
    %319 = vrot.lane.b32.xlu0 %v259, 112
    %v320 = vpop.permute.xlu0 %319
    %321 = vrot.lane.b32.xlu0 %v261, 112
    %v322 = vpop.permute.xlu0 %321
    %329 = vrot.lane.b32.xlu0 %v249, 104
    %v330 = vpop.permute.xlu0 %329
    %331 = vrot.lane.b32.xlu0 %v251, 104
    %v332 = vpop.permute.xlu0 %331
    %333 = vrot.lane.b32.xlu0 %v254, 104
    %v334 = vpop.permute.xlu0 %333
    %335 = vrot.lane.b32.xlu0 %v256, 104
    %v336 = vpop.permute.xlu0 %335
    %337 = vrot.lane.b32.xlu0 %v259, 104
    %v338 = vpop.permute.xlu0 %337
    %339 = vrot.lane.b32.xlu0 %v261, 104
    %v340 = vpop.permute.xlu0 %339
    %347 = vrot.lane.b32.xlu0 %v249, 96
    %v348 = vpop.permute.xlu0 %347
    %349 = vrot.lane.b32.xlu0 %v251, 96
    %v350 = vpop.permute.xlu0 %349
    %351 = vrot.lane.b32.xlu0 %v254, 96
    %v352 = vpop.permute.xlu0 %351
    %353 = vrot.lane.b32.xlu0 %v256, 96
    %v354 = vpop.permute.xlu0 %353
    %355 = vrot.lane.b32.xlu0 %v259, 96
    %v356 = vpop.permute.xlu0 %355
    %357 = vrot.lane.b32.xlu0 %v261, 96
    %v358 = vpop.permute.xlu0 %357
    %365 = vrot.lane.b32.xlu0 %v249, 88
    %v366 = vpop.permute.xlu0 %365
    %367 = vrot.lane.b32.xlu0 %v251, 88
    %v368 = vpop.permute.xlu0 %367
    %369 = vrot.lane.b32.xlu0 %v254, 88
    %v370 = vpop.permute.xlu0 %369
    %371 = vrot.lane.b32.xlu0 %v256, 88
    %v372 = vpop.permute.xlu0 %371
    %373 = vrot.lane.b32.xlu0 %v259, 88
    %v374 = vpop.permute.xlu0 %373
    %375 = vrot.lane.b32.xlu0 %v261, 88
    %v376 = vpop.permute.xlu0 %375
    %383 = vrot.lane.b32.xlu0 %v249, 80
    %v384 = vpop.permute.xlu0 %383
    %385 = vrot.lane.b32.xlu0 %v251, 80
    %v386 = vpop.permute.xlu0 %385
    %387 = vrot.lane.b32.xlu0 %v254, 80
    %v388 = vpop.permute.xlu0 %387
    %389 = vrot.lane.b32.xlu0 %v256, 80
    %v390 = vpop.permute.xlu0 %389
    %391 = vrot.lane.b32.xlu0 %v259, 80
    %v392 = vpop.permute.xlu0 %391
    %393 = vrot.lane.b32.xlu0 %v261, 80
    %v394 = vpop.permute.xlu0 %393
    %401 = vrot.lane.b32.xlu0 %v249, 72
    %v402 = vpop.permute.xlu0 %401
    %403 = vrot.lane.b32.xlu0 %v251, 72
    %v404 = vpop.permute.xlu0 %403
    %405 = vrot.lane.b32.xlu0 %v254, 72
    %v406 = vpop.permute.xlu0 %405
    %407 = vrot.lane.b32.xlu0 %v256, 72
    %v408 = vpop.permute.xlu0 %407
    %409 = vrot.lane.b32.xlu0 %v259, 72
    %v410 = vpop.permute.xlu0 %409
    %411 = vrot.lane.b32.xlu0 %v261, 72
    %v412 = vpop.permute.xlu0 %411
    %425 = vrot.lane.b32.xlu0 %v273, 120
    %v426 = vpop.permute.xlu0 %425
    %427 = vrot.lane.b32.xlu0 %v275, 120
    %v428 = vpop.permute.xlu0 %427
    %429 = vrot.lane.b32.xlu0 %v278, 120
    %v430 = vpop.permute.xlu0 %429
    %431 = vrot.lane.b32.xlu0 %v280, 120
    %v432 = vpop.permute.xlu0 %431
    %433 = vrot.lane.b32.xlu0 %v283, 120
    %v434 = vpop.permute.xlu0 %433
    %435 = vrot.lane.b32.xlu0 %v285, 120
    %v436 = vpop.permute.xlu0 %435
    %443 = vrot.lane.b32.xlu0 %v273, 112
    %v444 = vpop.permute.xlu0 %443
    %445 = vrot.lane.b32.xlu0 %v275, 112
    %v446 = vpop.permute.xlu0 %445
    %447 = vrot.lane.b32.xlu0 %v278, 112
    %v448 = vpop.permute.xlu0 %447
    %449 = vrot.lane.b32.xlu0 %v280, 112
    %v450 = vpop.permute.xlu0 %449
    %451 = vrot.lane.b32.xlu0 %v283, 112
    %v452 = vpop.permute.xlu0 %451
    %453 = vrot.lane.b32.xlu0 %v285, 112
    %v454 = vpop.permute.xlu0 %453
    %461 = vrot.lane.b32.xlu0 %v273, 104
    %v462 = vpop.permute.xlu0 %461
    %463 = vrot.lane.b32.xlu0 %v275, 104
    %v464 = vpop.permute.xlu0 %463
    %465 = vrot.lane.b32.xlu0 %v278, 104
    %v466 = vpop.permute.xlu0 %465
    %467 = vrot.lane.b32.xlu0 %v280, 104
    %v468 = vpop.permute.xlu0 %467
    %469 = vrot.lane.b32.xlu0 %v283, 104
    %v470 = vpop.permute.xlu0 %469
    %471 = vrot.lane.b32.xlu0 %v285, 104
    %v472 = vpop.permute.xlu0 %471
    %479 = vrot.lane.b32.xlu0 %v273, 96
    %v480 = vpop.permute.xlu0 %479
    %481 = vrot.lane.b32.xlu0 %v275, 96
    %v482 = vpop.permute.xlu0 %481
    %483 = vrot.lane.b32.xlu0 %v278, 96
    %v484 = vpop.permute.xlu0 %483
    %485 = vrot.lane.b32.xlu0 %v280, 96
    %v486 = vpop.permute.xlu0 %485
    %487 = vrot.lane.b32.xlu0 %v283, 96
    %v488 = vpop.permute.xlu0 %487
    %489 = vrot.lane.b32.xlu0 %v285, 96
    %v490 = vpop.permute.xlu0 %489
    %497 = vrot.lane.b32.xlu0 %v273, 88
    %v498 = vpop.permute.xlu0 %497
    %499 = vrot.lane.b32.xlu0 %v275, 88
    %v500 = vpop.permute.xlu0 %499
    %501 = vrot.lane.b32.xlu0 %v278, 88
    %v502 = vpop.permute.xlu0 %501
    %503 = vrot.lane.b32.xlu0 %v280, 88
    %v504 = vpop.permute.xlu0 %503
    %505 = vrot.lane.b32.xlu0 %v283, 88
    %v506 = vpop.permute.xlu0 %505
    %507 = vrot.lane.b32.xlu0 %v285, 88
    %v508 = vpop.permute.xlu0 %507
    %515 = vrot.lane.b32.xlu0 %v273, 80
    %v516 = vpop.permute.xlu0 %515
    %517 = vrot.lane.b32.xlu0 %v275, 80
    %v518 = vpop.permute.xlu0 %517
    %519 = vrot.lane.b32.xlu0 %v278, 80
    %v520 = vpop.permute.xlu0 %519
    %521 = vrot.lane.b32.xlu0 %v280, 80
    %v522 = vpop.permute.xlu0 %521
    %523 = vrot.lane.b32.xlu0 %v283, 80
    %v524 = vpop.permute.xlu0 %523
    %525 = vrot.lane.b32.xlu0 %v285, 80
    %v526 = vpop.permute.xlu0 %525
    %533 = vrot.lane.b32.xlu0 %v273, 72
    %v534 = vpop.permute.xlu0 %533
    %535 = vrot.lane.b32.xlu0 %v275, 72
    %v536 = vpop.permute.xlu0 %535
    %537 = vrot.lane.b32.xlu0 %v278, 72
    %v538 = vpop.permute.xlu0 %537
    %539 = vrot.lane.b32.xlu0 %v280, 72
    %v540 = vpop.permute.xlu0 %539
    %541 = vrot.lane.b32.xlu0 %v283, 72
    %v542 = vpop.permute.xlu0 %541
    %543 = vrot.lane.b32.xlu0 %v285, 72
    %v544 = vpop.permute.xlu0 %543
    %v551 = vpack.c.bf16 %v249, %v249
    %v552 = vpack.c.bf16 %v251, %v251
    %v553 = vpack.c.bf16 %v254, %v254
    %v554 = vpack.c.bf16 %v256, %v256
    %v555 = vpack.c.bf16 %v259, %v259
    %v556 = vpack.c.bf16 %v261, %v261
    %v557 = vpack.c.bf16 %v294, %v294
    %v558 = vpack.c.bf16 %v296, %v296
    %v559 = vpack.c.bf16 %v298, %v298
    %v560 = vpack.c.bf16 %v300, %v300
    %v561 = vpack.c.bf16 %v302, %v302
    %v562 = vpack.c.bf16 %v304, %v304
    %v563 = vpack.c.bf16 %v312, %v312
    %v564 = vpack.c.bf16 %v314, %v314
    %v565 = vpack.c.bf16 %v316, %v316
    %v566 = vpack.c.bf16 %v318, %v318
    %v567 = vpack.c.bf16 %v320, %v320
    %v568 = vpack.c.bf16 %v322, %v322
    %v569 = vpack.c.bf16 %v330, %v330
    %v570 = vpack.c.bf16 %v332, %v332
    %v571 = vpack.c.bf16 %v334, %v334
    %v572 = vpack.c.bf16 %v336, %v336
    %v573 = vpack.c.bf16 %v338, %v338
    %v574 = vpack.c.bf16 %v340, %v340
    %v575 = vpack.c.bf16 %v348, %v348
    %v576 = vpack.c.bf16 %v350, %v350
    %v577 = vpack.c.bf16 %v352, %v352
    %v578 = vpack.c.bf16 %v354, %v354
    %v579 = vpack.c.bf16 %v356, %v356
    %v580 = vpack.c.bf16 %v358, %v358
    %v581 = vpack.c.bf16 %v366, %v366
    %v582 = vpack.c.bf16 %v368, %v368
    %v583 = vpack.c.bf16 %v370, %v370
    %v584 = vpack.c.bf16 %v372, %v372
    %v585 = vpack.c.bf16 %v374, %v374
    %v586 = vpack.c.bf16 %v376, %v376
    %v587 = vpack.c.bf16 %v384, %v384
    %v588 = vpack.c.bf16 %v386, %v386
    %v589 = vpack.c.bf16 %v388, %v388
    %v590 = vpack.c.bf16 %v390, %v390
    %v591 = vpack.c.bf16 %v392, %v392
    %v592 = vpack.c.bf16 %v394, %v394
    %v593 = vpack.c.bf16 %v402, %v402
    %v594 = vpack.c.bf16 %v404, %v404
    %v595 = vpack.c.bf16 %v406, %v406
    %v596 = vpack.c.bf16 %v408, %v408
    %v597 = vpack.c.bf16 %v410, %v410
    %v598 = vpack.c.bf16 %v412, %v412
    %v600 = vunpack.c.l.b16 %v551
    %v601 = vpack.c.b16 %v600, %v600
    %602 = vrot.lane.b32.xlu0 %v601, 64
    %v603 = vpop.permute.xlu0 %602
    %vm604 = vcmask 64512
    %v606 = vsel %vm604, %v551, 0
    %v609 = vsel %vm604, %v603, 0
    %611 = vmatpush.bf16.xpose.msra.mxu0 0
    %612 = vmatpush.bf16.xpose.msra.mxu0 0
    %613 = vmatpush.bf16.xpose.msra.mxu0 0
    %614 = vmatpush.bf16.xpose.msra.mxu0 0
    %615 = vmatpush.bf16.xpose.msra.mxu0 0
    %616 = vmatpush.bf16.xpose.msra.mxu0 0
    %617 = vmatpush.bf16.xpose.msra.mxu0 0
    %618 = vmatpush.bf16.xpose.msra.mxu0 %v609
    %619 = vmatmul.bf16.gmra.mxu0 %v606
    %v620 = vpop.f32.mrf.mxu0
    %v621 = vadd.f32 0.0, %v620
    %v622 = vpop.f32.mrf.mxu0
    %623 = vdwg.mxu0
    %v625 = vunpack.c.l.b16 %v552
    %v626 = vpack.c.b16 %v625, %v625
    %627 = vrot.lane.b32.xlu0 %v626, 64
    %v628 = vpop.permute.xlu0 %627
    %v630 = vsel %vm604, %v552, 0
    %v633 = vsel %vm604, %v628, 0
    %635 = vmatpush.bf16.xpose.msra.mxu0 0
    %636 = vmatpush.bf16.xpose.msra.mxu0 0
    %637 = vmatpush.bf16.xpose.msra.mxu0 0
    %638 = vmatpush.bf16.xpose.msra.mxu0 0
    %639 = vmatpush.bf16.xpose.msra.mxu0 0
    %640 = vmatpush.bf16.xpose.msra.mxu0 0
    %641 = vmatpush.bf16.xpose.msra.mxu0 0
    %642 = vmatpush.bf16.xpose.msra.mxu0 %v633
    %643 = vmatmul.bf16.gmra.mxu0 %v630
    %v644 = vpop.f32.mrf.mxu0
    %v645 = vadd.f32 0.0, %v644
    %v646 = vpop.f32.mrf.mxu0
    %647 = vdwg.mxu0
    %v649 = vunpack.c.l.b16 %v553
    %v650 = vpack.c.b16 %v649, %v649
    %651 = vrot.lane.b32.xlu0 %v650, 64
    %v652 = vpop.permute.xlu0 %651
    %v654 = vsel %vm604, %v553, 0
    %v657 = vsel %vm604, %v652, 0
    %659 = vmatpush.bf16.xpose.msra.mxu0 0
    %660 = vmatpush.bf16.xpose.msra.mxu0 0
    %661 = vmatpush.bf16.xpose.msra.mxu0 0
    %662 = vmatpush.bf16.xpose.msra.mxu0 0
    %663 = vmatpush.bf16.xpose.msra.mxu0 0
    %664 = vmatpush.bf16.xpose.msra.mxu0 0
    %665 = vmatpush.bf16.xpose.msra.mxu0 0
    %666 = vmatpush.bf16.xpose.msra.mxu0 %v657
    %667 = vmatmul.bf16.gmra.mxu0 %v654
    %v668 = vpop.f32.mrf.mxu0
    %v669 = vadd.f32 0.0, %v668
    %v670 = vpop.f32.mrf.mxu0
    %671 = vdwg.mxu0
    %v673 = vunpack.c.l.b16 %v554
    %v674 = vpack.c.b16 %v673, %v673
    %675 = vrot.lane.b32.xlu0 %v674, 64
    %v676 = vpop.permute.xlu0 %675
    %v678 = vsel %vm604, %v554, 0
    %v681 = vsel %vm604, %v676, 0
    %683 = vmatpush.bf16.xpose.msra.mxu0 0
    %684 = vmatpush.bf16.xpose.msra.mxu0 0
    %685 = vmatpush.bf16.xpose.msra.mxu0 0
    %686 = vmatpush.bf16.xpose.msra.mxu0 0
    %687 = vmatpush.bf16.xpose.msra.mxu0 0
    %688 = vmatpush.bf16.xpose.msra.mxu0 0
    %689 = vmatpush.bf16.xpose.msra.mxu0 0
    %690 = vmatpush.bf16.xpose.msra.mxu0 %v681
    %691 = vmatmul.bf16.gmra.mxu0 %v678
    %v692 = vpop.f32.mrf.mxu0
    %v693 = vadd.f32 0.0, %v692
    %v694 = vpop.f32.mrf.mxu0
    %695 = vdwg.mxu0
    %v697 = vunpack.c.l.b16 %v555
    %v698 = vpack.c.b16 %v697, %v697
    %699 = vrot.lane.b32.xlu0 %v698, 64
    %v700 = vpop.permute.xlu0 %699
    %v702 = vsel %vm604, %v555, 0
    %v705 = vsel %vm604, %v700, 0
    %707 = vmatpush.bf16.xpose.msra.mxu0 0
    %708 = vmatpush.bf16.xpose.msra.mxu0 0
    %709 = vmatpush.bf16.xpose.msra.mxu0 0
    %710 = vmatpush.bf16.xpose.msra.mxu0 0
    %711 = vmatpush.bf16.xpose.msra.mxu0 0
    %712 = vmatpush.bf16.xpose.msra.mxu0 0
    %713 = vmatpush.bf16.xpose.msra.mxu0 0
    %714 = vmatpush.bf16.xpose.msra.mxu0 %v705
    %715 = vmatmul.bf16.gmra.mxu0 %v702
    %v716 = vpop.f32.mrf.mxu0
    %v717 = vadd.f32 0.0, %v716
    %v718 = vpop.f32.mrf.mxu0
    %719 = vdwg.mxu0
    %v721 = vunpack.c.l.b16 %v556
    %v722 = vpack.c.b16 %v721, %v721
    %723 = vrot.lane.b32.xlu0 %v722, 64
    %v724 = vpop.permute.xlu0 %723
    %v726 = vsel %vm604, %v556, 0
    %v729 = vsel %vm604, %v724, 0
    %731 = vmatpush.bf16.xpose.msra.mxu0 0
    %732 = vmatpush.bf16.xpose.msra.mxu0 0
    %733 = vmatpush.bf16.xpose.msra.mxu0 0
    %734 = vmatpush.bf16.xpose.msra.mxu0 0
    %735 = vmatpush.bf16.xpose.msra.mxu0 0
    %736 = vmatpush.bf16.xpose.msra.mxu0 0
    %737 = vmatpush.bf16.xpose.msra.mxu0 0
    %738 = vmatpush.bf16.xpose.msra.mxu0 %v729
    %739 = vmatmul.bf16.gmra.mxu0 %v726
    %v740 = vpop.f32.mrf.mxu0
    %v741 = vadd.f32 0.0, %v740
    %v742 = vpop.f32.mrf.mxu0
    %743 = vdwg.mxu0
    %v745 = vunpack.c.l.b16 %v557
    %v746 = vpack.c.b16 %v745, %v745
    %747 = vrot.lane.b32.xlu0 %v746, 64
    %v748 = vpop.permute.xlu0 %747
    %v750 = vsel %vm604, %v557, 0
    %v753 = vsel %vm604, %v748, 0
    %755 = vmatpush.bf16.xpose.msra.mxu0 0
    %756 = vmatpush.bf16.xpose.msra.mxu0 0
    %757 = vmatpush.bf16.xpose.msra.mxu0 0
    %758 = vmatpush.bf16.xpose.msra.mxu0 0
    %759 = vmatpush.bf16.xpose.msra.mxu0 0
    %760 = vmatpush.bf16.xpose.msra.mxu0 0
    %761 = vmatpush.bf16.xpose.msra.mxu0 0
    %762 = vmatpush.bf16.xpose.msra.mxu0 %v753
    %763 = vmatmul.bf16.gmra.mxu0 %v750
    %v764 = vpop.f32.mrf.mxu0
    %v765 = vadd.f32 0.0, %v764
    %v766 = vpop.f32.mrf.mxu0
    %767 = vdwg.mxu0
    %v769 = vunpack.c.l.b16 %v558
    %v770 = vpack.c.b16 %v769, %v769
    %771 = vrot.lane.b32.xlu0 %v770, 64
    %v772 = vpop.permute.xlu0 %771
    %v774 = vsel %vm604, %v558, 0
    %v777 = vsel %vm604, %v772, 0
    %779 = vmatpush.bf16.xpose.msra.mxu0 0
    %780 = vmatpush.bf16.xpose.msra.mxu0 0
    %781 = vmatpush.bf16.xpose.msra.mxu0 0
    %782 = vmatpush.bf16.xpose.msra.mxu0 0
    %783 = vmatpush.bf16.xpose.msra.mxu0 0
    %784 = vmatpush.bf16.xpose.msra.mxu0 0
    %785 = vmatpush.bf16.xpose.msra.mxu0 0
    %786 = vmatpush.bf16.xpose.msra.mxu0 %v777
    %787 = vmatmul.bf16.gmra.mxu0 %v774
    %v788 = vpop.f32.mrf.mxu0
    %v789 = vadd.f32 0.0, %v788
    %v790 = vpop.f32.mrf.mxu0
    %791 = vdwg.mxu0
    %v793 = vunpack.c.l.b16 %v559
    %v794 = vpack.c.b16 %v793, %v793
    %795 = vrot.lane.b32.xlu0 %v794, 64
    %v796 = vpop.permute.xlu0 %795
    %v798 = vsel %vm604, %v559, 0
    %v801 = vsel %vm604, %v796, 0
    %803 = vmatpush.bf16.xpose.msra.mxu0 0
    %804 = vmatpush.bf16.xpose.msra.mxu0 0
    %805 = vmatpush.bf16.xpose.msra.mxu0 0
    %806 = vmatpush.bf16.xpose.msra.mxu0 0
    %807 = vmatpush.bf16.xpose.msra.mxu0 0
    %808 = vmatpush.bf16.xpose.msra.mxu0 0
    %809 = vmatpush.bf16.xpose.msra.mxu0 0
    %810 = vmatpush.bf16.xpose.msra.mxu0 %v801
    %811 = vmatmul.bf16.gmra.mxu0 %v798
    %v812 = vpop.f32.mrf.mxu0
    %v813 = vadd.f32 0.0, %v812
    %v814 = vpop.f32.mrf.mxu0
    %815 = vdwg.mxu0
    %v817 = vunpack.c.l.b16 %v560
    %v818 = vpack.c.b16 %v817, %v817
    %819 = vrot.lane.b32.xlu0 %v818, 64
    %v820 = vpop.permute.xlu0 %819
    %v822 = vsel %vm604, %v560, 0
    %v825 = vsel %vm604, %v820, 0
    %827 = vmatpush.bf16.xpose.msra.mxu0 0
    %828 = vmatpush.bf16.xpose.msra.mxu0 0
    %829 = vmatpush.bf16.xpose.msra.mxu0 0
    %830 = vmatpush.bf16.xpose.msra.mxu0 0
    %831 = vmatpush.bf16.xpose.msra.mxu0 0
    %832 = vmatpush.bf16.xpose.msra.mxu0 0
    %833 = vmatpush.bf16.xpose.msra.mxu0 0
    %834 = vmatpush.bf16.xpose.msra.mxu0 %v825
    %835 = vmatmul.bf16.gmra.mxu0 %v822
    %v836 = vpop.f32.mrf.mxu0
    %v837 = vadd.f32 0.0, %v836
    %v838 = vpop.f32.mrf.mxu0
    %839 = vdwg.mxu0
    %v841 = vunpack.c.l.b16 %v561
    %v842 = vpack.c.b16 %v841, %v841
    %843 = vrot.lane.b32.xlu0 %v842, 64
    %v844 = vpop.permute.xlu0 %843
    %v846 = vsel %vm604, %v561, 0
    %v849 = vsel %vm604, %v844, 0
    %851 = vmatpush.bf16.xpose.msra.mxu0 0
    %852 = vmatpush.bf16.xpose.msra.mxu0 0
    %853 = vmatpush.bf16.xpose.msra.mxu0 0
    %854 = vmatpush.bf16.xpose.msra.mxu0 0
    %855 = vmatpush.bf16.xpose.msra.mxu0 0
    %856 = vmatpush.bf16.xpose.msra.mxu0 0
    %857 = vmatpush.bf16.xpose.msra.mxu0 0
    %858 = vmatpush.bf16.xpose.msra.mxu0 %v849
    %859 = vmatmul.bf16.gmra.mxu0 %v846
    %v860 = vpop.f32.mrf.mxu0
    %v861 = vadd.f32 0.0, %v860
    %v862 = vpop.f32.mrf.mxu0
    %863 = vdwg.mxu0
    %v865 = vunpack.c.l.b16 %v562
    %v866 = vpack.c.b16 %v865, %v865
    %867 = vrot.lane.b32.xlu0 %v866, 64
    %v868 = vpop.permute.xlu0 %867
    %v870 = vsel %vm604, %v562, 0
    %v873 = vsel %vm604, %v868, 0
    %875 = vmatpush.bf16.xpose.msra.mxu0 0
    %876 = vmatpush.bf16.xpose.msra.mxu0 0
    %877 = vmatpush.bf16.xpose.msra.mxu0 0
    %878 = vmatpush.bf16.xpose.msra.mxu0 0
    %879 = vmatpush.bf16.xpose.msra.mxu0 0
    %880 = vmatpush.bf16.xpose.msra.mxu0 0
    %881 = vmatpush.bf16.xpose.msra.mxu0 0
    %882 = vmatpush.bf16.xpose.msra.mxu0 %v873
    %883 = vmatmul.bf16.gmra.mxu0 %v870
    %v884 = vpop.f32.mrf.mxu0
    %v885 = vadd.f32 0.0, %v884
    %v886 = vpop.f32.mrf.mxu0
    %887 = vdwg.mxu0
    %v889 = vunpack.c.l.b16 %v563
    %v890 = vpack.c.b16 %v889, %v889
    %891 = vrot.lane.b32.xlu0 %v890, 64
    %v892 = vpop.permute.xlu0 %891
    %v894 = vsel %vm604, %v563, 0
    %v897 = vsel %vm604, %v892, 0
    %899 = vmatpush.bf16.xpose.msra.mxu0 0
    %900 = vmatpush.bf16.xpose.msra.mxu0 0
    %901 = vmatpush.bf16.xpose.msra.mxu0 0
    %902 = vmatpush.bf16.xpose.msra.mxu0 0
    %903 = vmatpush.bf16.xpose.msra.mxu0 0
    %904 = vmatpush.bf16.xpose.msra.mxu0 0
    %905 = vmatpush.bf16.xpose.msra.mxu0 0
    %906 = vmatpush.bf16.xpose.msra.mxu0 %v897
    %907 = vmatmul.bf16.gmra.mxu0 %v894
    %v908 = vpop.f32.mrf.mxu0
    %v909 = vadd.f32 0.0, %v908
    %v910 = vpop.f32.mrf.mxu0
    %911 = vdwg.mxu0
    %v913 = vunpack.c.l.b16 %v564
    %v914 = vpack.c.b16 %v913, %v913
    %915 = vrot.lane.b32.xlu0 %v914, 64
    %v916 = vpop.permute.xlu0 %915
    %v918 = vsel %vm604, %v564, 0
    %v921 = vsel %vm604, %v916, 0
    %923 = vmatpush.bf16.xpose.msra.mxu0 0
    %924 = vmatpush.bf16.xpose.msra.mxu0 0
    %925 = vmatpush.bf16.xpose.msra.mxu0 0
    %926 = vmatpush.bf16.xpose.msra.mxu0 0
    %927 = vmatpush.bf16.xpose.msra.mxu0 0
    %928 = vmatpush.bf16.xpose.msra.mxu0 0
    %929 = vmatpush.bf16.xpose.msra.mxu0 0
    %930 = vmatpush.bf16.xpose.msra.mxu0 %v921
    %931 = vmatmul.bf16.gmra.mxu0 %v918
    %v932 = vpop.f32.mrf.mxu0
    %v933 = vadd.f32 0.0, %v932
    %v934 = vpop.f32.mrf.mxu0
    %935 = vdwg.mxu0
    %v937 = vunpack.c.l.b16 %v565
    %v938 = vpack.c.b16 %v937, %v937
    %939 = vrot.lane.b32.xlu0 %v938, 64
    %v940 = vpop.permute.xlu0 %939
    %v942 = vsel %vm604, %v565, 0
    %v945 = vsel %vm604, %v940, 0
    %947 = vmatpush.bf16.xpose.msra.mxu0 0
    %948 = vmatpush.bf16.xpose.msra.mxu0 0
    %949 = vmatpush.bf16.xpose.msra.mxu0 0
    %950 = vmatpush.bf16.xpose.msra.mxu0 0
    %951 = vmatpush.bf16.xpose.msra.mxu0 0
    %952 = vmatpush.bf16.xpose.msra.mxu0 0
    %953 = vmatpush.bf16.xpose.msra.mxu0 0
    %954 = vmatpush.bf16.xpose.msra.mxu0 %v945
    %955 = vmatmul.bf16.gmra.mxu0 %v942
    %v956 = vpop.f32.mrf.mxu0
    %v957 = vadd.f32 0.0, %v956
    %v958 = vpop.f32.mrf.mxu0
    %959 = vdwg.mxu0
    %v961 = vunpack.c.l.b16 %v566
    %v962 = vpack.c.b16 %v961, %v961
    %963 = vrot.lane.b32.xlu0 %v962, 64
    %v964 = vpop.permute.xlu0 %963
    %v966 = vsel %vm604, %v566, 0
    %v969 = vsel %vm604, %v964, 0
    %971 = vmatpush.bf16.xpose.msra.mxu0 0
    %972 = vmatpush.bf16.xpose.msra.mxu0 0
    %973 = vmatpush.bf16.xpose.msra.mxu0 0
    %974 = vmatpush.bf16.xpose.msra.mxu0 0
    %975 = vmatpush.bf16.xpose.msra.mxu0 0
    %976 = vmatpush.bf16.xpose.msra.mxu0 0
    %977 = vmatpush.bf16.xpose.msra.mxu0 0
    %978 = vmatpush.bf16.xpose.msra.mxu0 %v969
    %979 = vmatmul.bf16.gmra.mxu0 %v966
    %v980 = vpop.f32.mrf.mxu0
    %v981 = vadd.f32 0.0, %v980
    %v982 = vpop.f32.mrf.mxu0
    %983 = vdwg.mxu0
    %v985 = vunpack.c.l.b16 %v567
    %v986 = vpack.c.b16 %v985, %v985
    %987 = vrot.lane.b32.xlu0 %v986, 64
    %v988 = vpop.permute.xlu0 %987
    %v990 = vsel %vm604, %v567, 0
    %v993 = vsel %vm604, %v988, 0
    %995 = vmatpush.bf16.xpose.msra.mxu0 0
    %996 = vmatpush.bf16.xpose.msra.mxu0 0
    %997 = vmatpush.bf16.xpose.msra.mxu0 0
    %998 = vmatpush.bf16.xpose.msra.mxu0 0
    %999 = vmatpush.bf16.xpose.msra.mxu0 0
    %1000 = vmatpush.bf16.xpose.msra.mxu0 0
    %1001 = vmatpush.bf16.xpose.msra.mxu0 0
    %1002 = vmatpush.bf16.xpose.msra.mxu0 %v993
    %1003 = vmatmul.bf16.gmra.mxu0 %v990
    %v1004 = vpop.f32.mrf.mxu0
    %v1005 = vadd.f32 0.0, %v1004
    %v1006 = vpop.f32.mrf.mxu0
    %1007 = vdwg.mxu0
    %v1009 = vunpack.c.l.b16 %v568
    %v1010 = vpack.c.b16 %v1009, %v1009
    %1011 = vrot.lane.b32.xlu0 %v1010, 64
    %v1012 = vpop.permute.xlu0 %1011
    %v1014 = vsel %vm604, %v568, 0
    %v1017 = vsel %vm604, %v1012, 0
    %1019 = vmatpush.bf16.xpose.msra.mxu0 0
    %1020 = vmatpush.bf16.xpose.msra.mxu0 0
    %1021 = vmatpush.bf16.xpose.msra.mxu0 0
    %1022 = vmatpush.bf16.xpose.msra.mxu0 0
    %1023 = vmatpush.bf16.xpose.msra.mxu0 0
    %1024 = vmatpush.bf16.xpose.msra.mxu0 0
    %1025 = vmatpush.bf16.xpose.msra.mxu0 0
    %1026 = vmatpush.bf16.xpose.msra.mxu0 %v1017
    %1027 = vmatmul.bf16.gmra.mxu0 %v1014
    %v1028 = vpop.f32.mrf.mxu0
    %v1029 = vadd.f32 0.0, %v1028
    %v1030 = vpop.f32.mrf.mxu0
    %1031 = vdwg.mxu0
    %v1033 = vunpack.c.l.b16 %v569
    %v1034 = vpack.c.b16 %v1033, %v1033
    %1035 = vrot.lane.b32.xlu0 %v1034, 64
    %v1036 = vpop.permute.xlu0 %1035
    %v1038 = vsel %vm604, %v569, 0
    %v1041 = vsel %vm604, %v1036, 0
    %1043 = vmatpush.bf16.xpose.msra.mxu0 0
    %1044 = vmatpush.bf16.xpose.msra.mxu0 0
    %1045 = vmatpush.bf16.xpose.msra.mxu0 0
    %1046 = vmatpush.bf16.xpose.msra.mxu0 0
    %1047 = vmatpush.bf16.xpose.msra.mxu0 0
    %1048 = vmatpush.bf16.xpose.msra.mxu0 0
    %1049 = vmatpush.bf16.xpose.msra.mxu0 0
    %1050 = vmatpush.bf16.xpose.msra.mxu0 %v1041
    %1051 = vmatmul.bf16.gmra.mxu0 %v1038
    %v1052 = vpop.f32.mrf.mxu0
    %v1053 = vadd.f32 0.0, %v1052
    %v1054 = vpop.f32.mrf.mxu0
    %1055 = vdwg.mxu0
    %v1057 = vunpack.c.l.b16 %v570
    %v1058 = vpack.c.b16 %v1057, %v1057
    %1059 = vrot.lane.b32.xlu0 %v1058, 64
    %v1060 = vpop.permute.xlu0 %1059
    %v1062 = vsel %vm604, %v570, 0
    %v1065 = vsel %vm604, %v1060, 0
    %1067 = vmatpush.bf16.xpose.msra.mxu0 0
    %1068 = vmatpush.bf16.xpose.msra.mxu0 0
    %1069 = vmatpush.bf16.xpose.msra.mxu0 0
    %1070 = vmatpush.bf16.xpose.msra.mxu0 0
    %1071 = vmatpush.bf16.xpose.msra.mxu0 0
    %1072 = vmatpush.bf16.xpose.msra.mxu0 0
    %1073 = vmatpush.bf16.xpose.msra.mxu0 0
    %1074 = vmatpush.bf16.xpose.msra.mxu0 %v1065
    %1075 = vmatmul.bf16.gmra.mxu0 %v1062
    %v1076 = vpop.f32.mrf.mxu0
    %v1077 = vadd.f32 0.0, %v1076
    %v1078 = vpop.f32.mrf.mxu0
    %1079 = vdwg.mxu0
    %v1081 = vunpack.c.l.b16 %v571
    %v1082 = vpack.c.b16 %v1081, %v1081
    %1083 = vrot.lane.b32.xlu0 %v1082, 64
    %v1084 = vpop.permute.xlu0 %1083
    %v1086 = vsel %vm604, %v571, 0
    %v1089 = vsel %vm604, %v1084, 0
    %1091 = vmatpush.bf16.xpose.msra.mxu0 0
    %1092 = vmatpush.bf16.xpose.msra.mxu0 0
    %1093 = vmatpush.bf16.xpose.msra.mxu0 0
    %1094 = vmatpush.bf16.xpose.msra.mxu0 0
    %1095 = vmatpush.bf16.xpose.msra.mxu0 0
    %1096 = vmatpush.bf16.xpose.msra.mxu0 0
    %1097 = vmatpush.bf16.xpose.msra.mxu0 0
    %1098 = vmatpush.bf16.xpose.msra.mxu0 %v1089
    %1099 = vmatmul.bf16.gmra.mxu0 %v1086
    %v1100 = vpop.f32.mrf.mxu0
    %v1101 = vadd.f32 0.0, %v1100
    %v1102 = vpop.f32.mrf.mxu0
    %1103 = vdwg.mxu0
    %v1105 = vunpack.c.l.b16 %v572
    %v1106 = vpack.c.b16 %v1105, %v1105
    %1107 = vrot.lane.b32.xlu0 %v1106, 64
    %v1108 = vpop.permute.xlu0 %1107
    %v1110 = vsel %vm604, %v572, 0
    %v1113 = vsel %vm604, %v1108, 0
    %1115 = vmatpush.bf16.xpose.msra.mxu0 0
    %1116 = vmatpush.bf16.xpose.msra.mxu0 0
    %1117 = vmatpush.bf16.xpose.msra.mxu0 0
    %1118 = vmatpush.bf16.xpose.msra.mxu0 0
    %1119 = vmatpush.bf16.xpose.msra.mxu0 0
    %1120 = vmatpush.bf16.xpose.msra.mxu0 0
    %1121 = vmatpush.bf16.xpose.msra.mxu0 0
    %1122 = vmatpush.bf16.xpose.msra.mxu0 %v1113
    %1123 = vmatmul.bf16.gmra.mxu0 %v1110
    %v1124 = vpop.f32.mrf.mxu0
    %v1125 = vadd.f32 0.0, %v1124
    %v1126 = vpop.f32.mrf.mxu0
    %1127 = vdwg.mxu0
    %v1129 = vunpack.c.l.b16 %v573
    %v1130 = vpack.c.b16 %v1129, %v1129
    %1131 = vrot.lane.b32.xlu0 %v1130, 64
    %v1132 = vpop.permute.xlu0 %1131
    %v1134 = vsel %vm604, %v573, 0
    %v1137 = vsel %vm604, %v1132, 0
    %1139 = vmatpush.bf16.xpose.msra.mxu0 0
    %1140 = vmatpush.bf16.xpose.msra.mxu0 0
    %1141 = vmatpush.bf16.xpose.msra.mxu0 0
    %1142 = vmatpush.bf16.xpose.msra.mxu0 0
    %1143 = vmatpush.bf16.xpose.msra.mxu0 0
    %1144 = vmatpush.bf16.xpose.msra.mxu0 0
    %1145 = vmatpush.bf16.xpose.msra.mxu0 0
    %1146 = vmatpush.bf16.xpose.msra.mxu0 %v1137
    %1147 = vmatmul.bf16.gmra.mxu0 %v1134
    %v1148 = vpop.f32.mrf.mxu0
    %v1149 = vadd.f32 0.0, %v1148
    %v1150 = vpop.f32.mrf.mxu0
    %1151 = vdwg.mxu0
    %v1153 = vunpack.c.l.b16 %v574
    %v1154 = vpack.c.b16 %v1153, %v1153
    %1155 = vrot.lane.b32.xlu0 %v1154, 64
    %v1156 = vpop.permute.xlu0 %1155
    %v1158 = vsel %vm604, %v574, 0
    %v1161 = vsel %vm604, %v1156, 0
    %1163 = vmatpush.bf16.xpose.msra.mxu0 0
    %1164 = vmatpush.bf16.xpose.msra.mxu0 0
    %1165 = vmatpush.bf16.xpose.msra.mxu0 0
    %1166 = vmatpush.bf16.xpose.msra.mxu0 0
    %1167 = vmatpush.bf16.xpose.msra.mxu0 0
    %1168 = vmatpush.bf16.xpose.msra.mxu0 0
    %1169 = vmatpush.bf16.xpose.msra.mxu0 0
    %1170 = vmatpush.bf16.xpose.msra.mxu0 %v1161
    %1171 = vmatmul.bf16.gmra.mxu0 %v1158
    %v1172 = vpop.f32.mrf.mxu0
    %v1173 = vadd.f32 0.0, %v1172
    %v1174 = vpop.f32.mrf.mxu0
    %1175 = vdwg.mxu0
    %v1177 = vunpack.c.l.b16 %v575
    %v1178 = vpack.c.b16 %v1177, %v1177
    %1179 = vrot.lane.b32.xlu0 %v1178, 64
    %v1180 = vpop.permute.xlu0 %1179
    %v1182 = vsel %vm604, %v575, 0
    %v1185 = vsel %vm604, %v1180, 0
    %1187 = vmatpush.bf16.xpose.msra.mxu0 0
    %1188 = vmatpush.bf16.xpose.msra.mxu0 0
    %1189 = vmatpush.bf16.xpose.msra.mxu0 0
    %1190 = vmatpush.bf16.xpose.msra.mxu0 0
    %1191 = vmatpush.bf16.xpose.msra.mxu0 0
    %1192 = vmatpush.bf16.xpose.msra.mxu0 0
    %1193 = vmatpush.bf16.xpose.msra.mxu0 0
    %1194 = vmatpush.bf16.xpose.msra.mxu0 %v1185
    %1195 = vmatmul.bf16.gmra.mxu0 %v1182
    %v1196 = vpop.f32.mrf.mxu0
    %v1197 = vadd.f32 0.0, %v1196
    %v1198 = vpop.f32.mrf.mxu0
    %1199 = vdwg.mxu0
    %v1201 = vunpack.c.l.b16 %v576
    %v1202 = vpack.c.b16 %v1201, %v1201
    %1203 = vrot.lane.b32.xlu0 %v1202, 64
    %v1204 = vpop.permute.xlu0 %1203
    %v1206 = vsel %vm604, %v576, 0
    %v1209 = vsel %vm604, %v1204, 0
    %1211 = vmatpush.bf16.xpose.msra.mxu0 0
    %1212 = vmatpush.bf16.xpose.msra.mxu0 0
    %1213 = vmatpush.bf16.xpose.msra.mxu0 0
    %1214 = vmatpush.bf16.xpose.msra.mxu0 0
    %1215 = vmatpush.bf16.xpose.msra.mxu0 0
    %1216 = vmatpush.bf16.xpose.msra.mxu0 0
    %1217 = vmatpush.bf16.xpose.msra.mxu0 0
    %1218 = vmatpush.bf16.xpose.msra.mxu0 %v1209
    %1219 = vmatmul.bf16.gmra.mxu0 %v1206
    %v1220 = vpop.f32.mrf.mxu0
    %v1221 = vadd.f32 0.0, %v1220
    %v1222 = vpop.f32.mrf.mxu0
    %1223 = vdwg.mxu0
    %v1225 = vunpack.c.l.b16 %v577
    %v1226 = vpack.c.b16 %v1225, %v1225
    %1227 = vrot.lane.b32.xlu0 %v1226, 64
    %v1228 = vpop.permute.xlu0 %1227
    %v1230 = vsel %vm604, %v577, 0
    %v1233 = vsel %vm604, %v1228, 0
    %1235 = vmatpush.bf16.xpose.msra.mxu0 0
    %1236 = vmatpush.bf16.xpose.msra.mxu0 0
    %1237 = vmatpush.bf16.xpose.msra.mxu0 0
    %1238 = vmatpush.bf16.xpose.msra.mxu0 0
    %1239 = vmatpush.bf16.xpose.msra.mxu0 0
    %1240 = vmatpush.bf16.xpose.msra.mxu0 0
    %1241 = vmatpush.bf16.xpose.msra.mxu0 0
    %1242 = vmatpush.bf16.xpose.msra.mxu0 %v1233
    %1243 = vmatmul.bf16.gmra.mxu0 %v1230
    %v1244 = vpop.f32.mrf.mxu0
    %v1245 = vadd.f32 0.0, %v1244
    %v1246 = vpop.f32.mrf.mxu0
    %1247 = vdwg.mxu0
    %v1249 = vunpack.c.l.b16 %v578
    %v1250 = vpack.c.b16 %v1249, %v1249
    %1251 = vrot.lane.b32.xlu0 %v1250, 64
    %v1252 = vpop.permute.xlu0 %1251
    %v1254 = vsel %vm604, %v578, 0
    %v1257 = vsel %vm604, %v1252, 0
    %1259 = vmatpush.bf16.xpose.msra.mxu0 0
    %1260 = vmatpush.bf16.xpose.msra.mxu0 0
    %1261 = vmatpush.bf16.xpose.msra.mxu0 0
    %1262 = vmatpush.bf16.xpose.msra.mxu0 0
    %1263 = vmatpush.bf16.xpose.msra.mxu0 0
    %1264 = vmatpush.bf16.xpose.msra.mxu0 0
    %1265 = vmatpush.bf16.xpose.msra.mxu0 0
    %1266 = vmatpush.bf16.xpose.msra.mxu0 %v1257
    %1267 = vmatmul.bf16.gmra.mxu0 %v1254
    %v1268 = vpop.f32.mrf.mxu0
    %v1269 = vadd.f32 0.0, %v1268
    %v1270 = vpop.f32.mrf.mxu0
    %1271 = vdwg.mxu0
    %v1273 = vunpack.c.l.b16 %v579
    %v1274 = vpack.c.b16 %v1273, %v1273
    %1275 = vrot.lane.b32.xlu0 %v1274, 64
    %v1276 = vpop.permute.xlu0 %1275
    %v1278 = vsel %vm604, %v579, 0
    %v1281 = vsel %vm604, %v1276, 0
    %1283 = vmatpush.bf16.xpose.msra.mxu0 0
    %1284 = vmatpush.bf16.xpose.msra.mxu0 0
    %1285 = vmatpush.bf16.xpose.msra.mxu0 0
    %1286 = vmatpush.bf16.xpose.msra.mxu0 0
    %1287 = vmatpush.bf16.xpose.msra.mxu0 0
    %1288 = vmatpush.bf16.xpose.msra.mxu0 0
    %1289 = vmatpush.bf16.xpose.msra.mxu0 0
    %1290 = vmatpush.bf16.xpose.msra.mxu0 %v1281
    %1291 = vmatmul.bf16.gmra.mxu0 %v1278
    %v1292 = vpop.f32.mrf.mxu0
    %v1293 = vadd.f32 0.0, %v1292
    %v1294 = vpop.f32.mrf.mxu0
    %1295 = vdwg.mxu0
    %v1297 = vunpack.c.l.b16 %v580
    %v1298 = vpack.c.b16 %v1297, %v1297
    %1299 = vrot.lane.b32.xlu0 %v1298, 64
    %v1300 = vpop.permute.xlu0 %1299
    %v1302 = vsel %vm604, %v580, 0
    %v1305 = vsel %vm604, %v1300, 0
    %1307 = vmatpush.bf16.xpose.msra.mxu0 0
    %1308 = vmatpush.bf16.xpose.msra.mxu0 0
    %1309 = vmatpush.bf16.xpose.msra.mxu0 0
    %1310 = vmatpush.bf16.xpose.msra.mxu0 0
    %1311 = vmatpush.bf16.xpose.msra.mxu0 0
    %1312 = vmatpush.bf16.xpose.msra.mxu0 0
    %1313 = vmatpush.bf16.xpose.msra.mxu0 0
    %1314 = vmatpush.bf16.xpose.msra.mxu0 %v1305
    %1315 = vmatmul.bf16.gmra.mxu0 %v1302
    %v1316 = vpop.f32.mrf.mxu0
    %v1317 = vadd.f32 0.0, %v1316
    %v1318 = vpop.f32.mrf.mxu0
    %1319 = vdwg.mxu0
    %v1321 = vunpack.c.l.b16 %v581
    %v1322 = vpack.c.b16 %v1321, %v1321
    %1323 = vrot.lane.b32.xlu0 %v1322, 64
    %v1324 = vpop.permute.xlu0 %1323
    %v1326 = vsel %vm604, %v581, 0
    %v1329 = vsel %vm604, %v1324, 0
    %1331 = vmatpush.bf16.xpose.msra.mxu0 0
    %1332 = vmatpush.bf16.xpose.msra.mxu0 0
    %1333 = vmatpush.bf16.xpose.msra.mxu0 0
    %1334 = vmatpush.bf16.xpose.msra.mxu0 0
    %1335 = vmatpush.bf16.xpose.msra.mxu0 0
    %1336 = vmatpush.bf16.xpose.msra.mxu0 0
    %1337 = vmatpush.bf16.xpose.msra.mxu0 0
    %1338 = vmatpush.bf16.xpose.msra.mxu0 %v1329
    %1339 = vmatmul.bf16.gmra.mxu0 %v1326
    %v1340 = vpop.f32.mrf.mxu0
    %v1341 = vadd.f32 0.0, %v1340
    %v1342 = vpop.f32.mrf.mxu0
    %1343 = vdwg.mxu0
    %v1345 = vunpack.c.l.b16 %v582
    %v1346 = vpack.c.b16 %v1345, %v1345
    %1347 = vrot.lane.b32.xlu0 %v1346, 64
    %v1348 = vpop.permute.xlu0 %1347
    %v1350 = vsel %vm604, %v582, 0
    %v1353 = vsel %vm604, %v1348, 0
    %1355 = vmatpush.bf16.xpose.msra.mxu0 0
    %1356 = vmatpush.bf16.xpose.msra.mxu0 0
    %1357 = vmatpush.bf16.xpose.msra.mxu0 0
    %1358 = vmatpush.bf16.xpose.msra.mxu0 0
    %1359 = vmatpush.bf16.xpose.msra.mxu0 0
    %1360 = vmatpush.bf16.xpose.msra.mxu0 0
    %1361 = vmatpush.bf16.xpose.msra.mxu0 0
    %1362 = vmatpush.bf16.xpose.msra.mxu0 %v1353
    %1363 = vmatmul.bf16.gmra.mxu0 %v1350
    %v1364 = vpop.f32.mrf.mxu0
    %v1365 = vadd.f32 0.0, %v1364
    %v1366 = vpop.f32.mrf.mxu0
    %1367 = vdwg.mxu0
    %v1369 = vunpack.c.l.b16 %v583
    %v1370 = vpack.c.b16 %v1369, %v1369
    %1371 = vrot.lane.b32.xlu0 %v1370, 64
    %v1372 = vpop.permute.xlu0 %1371
    %v1374 = vsel %vm604, %v583, 0
    %v1377 = vsel %vm604, %v1372, 0
    %1379 = vmatpush.bf16.xpose.msra.mxu0 0
    %1380 = vmatpush.bf16.xpose.msra.mxu0 0
    %1381 = vmatpush.bf16.xpose.msra.mxu0 0
    %1382 = vmatpush.bf16.xpose.msra.mxu0 0
    %1383 = vmatpush.bf16.xpose.msra.mxu0 0
    %1384 = vmatpush.bf16.xpose.msra.mxu0 0
    %1385 = vmatpush.bf16.xpose.msra.mxu0 0
    %1386 = vmatpush.bf16.xpose.msra.mxu0 %v1377
    %1387 = vmatmul.bf16.gmra.mxu0 %v1374
    %v1388 = vpop.f32.mrf.mxu0
    %v1389 = vadd.f32 0.0, %v1388
    %v1390 = vpop.f32.mrf.mxu0
    %1391 = vdwg.mxu0
    %v1393 = vunpack.c.l.b16 %v584
    %v1394 = vpack.c.b16 %v1393, %v1393
    %1395 = vrot.lane.b32.xlu0 %v1394, 64
    %v1396 = vpop.permute.xlu0 %1395
    %v1398 = vsel %vm604, %v584, 0
    %v1401 = vsel %vm604, %v1396, 0
    %1403 = vmatpush.bf16.xpose.msra.mxu0 0
    %1404 = vmatpush.bf16.xpose.msra.mxu0 0
    %1405 = vmatpush.bf16.xpose.msra.mxu0 0
    %1406 = vmatpush.bf16.xpose.msra.mxu0 0
    %1407 = vmatpush.bf16.xpose.msra.mxu0 0
    %1408 = vmatpush.bf16.xpose.msra.mxu0 0
    %1409 = vmatpush.bf16.xpose.msra.mxu0 0
    %1410 = vmatpush.bf16.xpose.msra.mxu0 %v1401
    %1411 = vmatmul.bf16.gmra.mxu0 %v1398
    %v1412 = vpop.f32.mrf.mxu0
    %v1413 = vadd.f32 0.0, %v1412
    %v1414 = vpop.f32.mrf.mxu0
    %1415 = vdwg.mxu0
    %v1417 = vunpack.c.l.b16 %v585
    %v1418 = vpack.c.b16 %v1417, %v1417
    %1419 = vrot.lane.b32.xlu0 %v1418, 64
    %v1420 = vpop.permute.xlu0 %1419
    %v1422 = vsel %vm604, %v585, 0
    %v1425 = vsel %vm604, %v1420, 0
    %1427 = vmatpush.bf16.xpose.msra.mxu0 0
    %1428 = vmatpush.bf16.xpose.msra.mxu0 0
    %1429 = vmatpush.bf16.xpose.msra.mxu0 0
    %1430 = vmatpush.bf16.xpose.msra.mxu0 0
    %1431 = vmatpush.bf16.xpose.msra.mxu0 0
    %1432 = vmatpush.bf16.xpose.msra.mxu0 0
    %1433 = vmatpush.bf16.xpose.msra.mxu0 0
    %1434 = vmatpush.bf16.xpose.msra.mxu0 %v1425
    %1435 = vmatmul.bf16.gmra.mxu0 %v1422
    %v1436 = vpop.f32.mrf.mxu0
    %v1437 = vadd.f32 0.0, %v1436
    %v1438 = vpop.f32.mrf.mxu0
    %1439 = vdwg.mxu0
    %v1441 = vunpack.c.l.b16 %v586
    %v1442 = vpack.c.b16 %v1441, %v1441
    %1443 = vrot.lane.b32.xlu0 %v1442, 64
    %v1444 = vpop.permute.xlu0 %1443
    %v1446 = vsel %vm604, %v586, 0
    %v1449 = vsel %vm604, %v1444, 0
    %1451 = vmatpush.bf16.xpose.msra.mxu0 0
    %1452 = vmatpush.bf16.xpose.msra.mxu0 0
    %1453 = vmatpush.bf16.xpose.msra.mxu0 0
    %1454 = vmatpush.bf16.xpose.msra.mxu0 0
    %1455 = vmatpush.bf16.xpose.msra.mxu0 0
    %1456 = vmatpush.bf16.xpose.msra.mxu0 0
    %1457 = vmatpush.bf16.xpose.msra.mxu0 0
    %1458 = vmatpush.bf16.xpose.msra.mxu0 %v1449
    %1459 = vmatmul.bf16.gmra.mxu0 %v1446
    %v1460 = vpop.f32.mrf.mxu0
    %v1461 = vadd.f32 0.0, %v1460
    %v1462 = vpop.f32.mrf.mxu0
    %1463 = vdwg.mxu0
    %v1465 = vunpack.c.l.b16 %v587
    %v1466 = vpack.c.b16 %v1465, %v1465
    %1467 = vrot.lane.b32.xlu0 %v1466, 64
    %v1468 = vpop.permute.xlu0 %1467
    %v1470 = vsel %vm604, %v587, 0
    %v1473 = vsel %vm604, %v1468, 0
    %1475 = vmatpush.bf16.xpose.msra.mxu0 0
    %1476 = vmatpush.bf16.xpose.msra.mxu0 0
    %1477 = vmatpush.bf16.xpose.msra.mxu0 0
    %1478 = vmatpush.bf16.xpose.msra.mxu0 0
    %1479 = vmatpush.bf16.xpose.msra.mxu0 0
    %1480 = vmatpush.bf16.xpose.msra.mxu0 0
    %1481 = vmatpush.bf16.xpose.msra.mxu0 0
    %1482 = vmatpush.bf16.xpose.msra.mxu0 %v1473
    %1483 = vmatmul.bf16.gmra.mxu0 %v1470
    %v1484 = vpop.f32.mrf.mxu0
    %v1485 = vadd.f32 0.0, %v1484
    %v1486 = vpop.f32.mrf.mxu0
    %1487 = vdwg.mxu0
    %v1489 = vunpack.c.l.b16 %v588
    %v1490 = vpack.c.b16 %v1489, %v1489
    %1491 = vrot.lane.b32.xlu0 %v1490, 64
    %v1492 = vpop.permute.xlu0 %1491
    %v1494 = vsel %vm604, %v588, 0
    %v1497 = vsel %vm604, %v1492, 0
    %1499 = vmatpush.bf16.xpose.msra.mxu0 0
    %1500 = vmatpush.bf16.xpose.msra.mxu0 0
    %1501 = vmatpush.bf16.xpose.msra.mxu0 0
    %1502 = vmatpush.bf16.xpose.msra.mxu0 0
    %1503 = vmatpush.bf16.xpose.msra.mxu0 0
    %1504 = vmatpush.bf16.xpose.msra.mxu0 0
    %1505 = vmatpush.bf16.xpose.msra.mxu0 0
    %1506 = vmatpush.bf16.xpose.msra.mxu0 %v1497
    %1507 = vmatmul.bf16.gmra.mxu0 %v1494
    %v1508 = vpop.f32.mrf.mxu0
    %v1509 = vadd.f32 0.0, %v1508
    %v1510 = vpop.f32.mrf.mxu0
    %1511 = vdwg.mxu0
    %v1513 = vunpack.c.l.b16 %v589
    %v1514 = vpack.c.b16 %v1513, %v1513
    %1515 = vrot.lane.b32.xlu0 %v1514, 64
    %v1516 = vpop.permute.xlu0 %1515
    %v1518 = vsel %vm604, %v589, 0
    %v1521 = vsel %vm604, %v1516, 0
    %1523 = vmatpush.bf16.xpose.msra.mxu0 0
    %1524 = vmatpush.bf16.xpose.msra.mxu0 0
    %1525 = vmatpush.bf16.xpose.msra.mxu0 0
    %1526 = vmatpush.bf16.xpose.msra.mxu0 0
    %1527 = vmatpush.bf16.xpose.msra.mxu0 0
    %1528 = vmatpush.bf16.xpose.msra.mxu0 0
    %1529 = vmatpush.bf16.xpose.msra.mxu0 0
    %1530 = vmatpush.bf16.xpose.msra.mxu0 %v1521
    %1531 = vmatmul.bf16.gmra.mxu0 %v1518
    %v1532 = vpop.f32.mrf.mxu0
    %v1533 = vadd.f32 0.0, %v1532
    %v1534 = vpop.f32.mrf.mxu0
    %1535 = vdwg.mxu0
    %v1537 = vunpack.c.l.b16 %v590
    %v1538 = vpack.c.b16 %v1537, %v1537
    %1539 = vrot.lane.b32.xlu0 %v1538, 64
    %v1540 = vpop.permute.xlu0 %1539
    %v1542 = vsel %vm604, %v590, 0
    %v1545 = vsel %vm604, %v1540, 0
    %1547 = vmatpush.bf16.xpose.msra.mxu0 0
    %1548 = vmatpush.bf16.xpose.msra.mxu0 0
    %1549 = vmatpush.bf16.xpose.msra.mxu0 0
    %1550 = vmatpush.bf16.xpose.msra.mxu0 0
    %1551 = vmatpush.bf16.xpose.msra.mxu0 0
    %1552 = vmatpush.bf16.xpose.msra.mxu0 0
    %1553 = vmatpush.bf16.xpose.msra.mxu0 0
    %1554 = vmatpush.bf16.xpose.msra.mxu0 %v1545
    %1555 = vmatmul.bf16.gmra.mxu0 %v1542
    %v1556 = vpop.f32.mrf.mxu0
    %v1557 = vadd.f32 0.0, %v1556
    %v1558 = vpop.f32.mrf.mxu0
    %1559 = vdwg.mxu0
    %v1561 = vunpack.c.l.b16 %v591
    %v1562 = vpack.c.b16 %v1561, %v1561
    %1563 = vrot.lane.b32.xlu0 %v1562, 64
    %v1564 = vpop.permute.xlu0 %1563
    %v1566 = vsel %vm604, %v591, 0
    %v1569 = vsel %vm604, %v1564, 0
    %1571 = vmatpush.bf16.xpose.msra.mxu0 0
    %1572 = vmatpush.bf16.xpose.msra.mxu0 0
    %1573 = vmatpush.bf16.xpose.msra.mxu0 0
    %1574 = vmatpush.bf16.xpose.msra.mxu0 0
    %1575 = vmatpush.bf16.xpose.msra.mxu0 0
    %1576 = vmatpush.bf16.xpose.msra.mxu0 0
    %1577 = vmatpush.bf16.xpose.msra.mxu0 0
    %1578 = vmatpush.bf16.xpose.msra.mxu0 %v1569
    %1579 = vmatmul.bf16.gmra.mxu0 %v1566
    %v1580 = vpop.f32.mrf.mxu0
    %v1581 = vadd.f32 0.0, %v1580
    %v1582 = vpop.f32.mrf.mxu0
    %1583 = vdwg.mxu0
    %v1585 = vunpack.c.l.b16 %v592
    %v1586 = vpack.c.b16 %v1585, %v1585
    %1587 = vrot.lane.b32.xlu0 %v1586, 64
    %v1588 = vpop.permute.xlu0 %1587
    %v1590 = vsel %vm604, %v592, 0
    %v1593 = vsel %vm604, %v1588, 0
    %1595 = vmatpush.bf16.xpose.msra.mxu0 0
    %1596 = vmatpush.bf16.xpose.msra.mxu0 0
    %1597 = vmatpush.bf16.xpose.msra.mxu0 0
    %1598 = vmatpush.bf16.xpose.msra.mxu0 0
    %1599 = vmatpush.bf16.xpose.msra.mxu0 0
    %1600 = vmatpush.bf16.xpose.msra.mxu0 0
    %1601 = vmatpush.bf16.xpose.msra.mxu0 0
    %1602 = vmatpush.bf16.xpose.msra.mxu0 %v1593
    %1603 = vmatmul.bf16.gmra.mxu0 %v1590
    %v1604 = vpop.f32.mrf.mxu0
    %v1605 = vadd.f32 0.0, %v1604
    %v1606 = vpop.f32.mrf.mxu0
    %1607 = vdwg.mxu0
    %v1609 = vunpack.c.l.b16 %v593
    %v1610 = vpack.c.b16 %v1609, %v1609
    %1611 = vrot.lane.b32.xlu0 %v1610, 64
    %v1612 = vpop.permute.xlu0 %1611
    %v1614 = vsel %vm604, %v593, 0
    %v1617 = vsel %vm604, %v1612, 0
    %1619 = vmatpush.bf16.xpose.msra.mxu0 0
    %1620 = vmatpush.bf16.xpose.msra.mxu0 0
    %1621 = vmatpush.bf16.xpose.msra.mxu0 0
    %1622 = vmatpush.bf16.xpose.msra.mxu0 0
    %1623 = vmatpush.bf16.xpose.msra.mxu0 0
    %1624 = vmatpush.bf16.xpose.msra.mxu0 0
    %1625 = vmatpush.bf16.xpose.msra.mxu0 0
    %1626 = vmatpush.bf16.xpose.msra.mxu0 %v1617
    %1627 = vmatmul.bf16.gmra.mxu0 %v1614
    %v1628 = vpop.f32.mrf.mxu0
    %v1629 = vadd.f32 0.0, %v1628
    %v1630 = vpop.f32.mrf.mxu0
    %1631 = vdwg.mxu0
    %v1633 = vunpack.c.l.b16 %v594
    %v1634 = vpack.c.b16 %v1633, %v1633
    %1635 = vrot.lane.b32.xlu0 %v1634, 64
    %v1636 = vpop.permute.xlu0 %1635
    %v1638 = vsel %vm604, %v594, 0
    %v1641 = vsel %vm604, %v1636, 0
    %1643 = vmatpush.bf16.xpose.msra.mxu0 0
    %1644 = vmatpush.bf16.xpose.msra.mxu0 0
    %1645 = vmatpush.bf16.xpose.msra.mxu0 0
    %1646 = vmatpush.bf16.xpose.msra.mxu0 0
    %1647 = vmatpush.bf16.xpose.msra.mxu0 0
    %1648 = vmatpush.bf16.xpose.msra.mxu0 0
    %1649 = vmatpush.bf16.xpose.msra.mxu0 0
    %1650 = vmatpush.bf16.xpose.msra.mxu0 %v1641
    %1651 = vmatmul.bf16.gmra.mxu0 %v1638
    %v1652 = vpop.f32.mrf.mxu0
    %v1653 = vadd.f32 0.0, %v1652
    %v1654 = vpop.f32.mrf.mxu0
    %1655 = vdwg.mxu0
    %v1657 = vunpack.c.l.b16 %v595
    %v1658 = vpack.c.b16 %v1657, %v1657
    %1659 = vrot.lane.b32.xlu0 %v1658, 64
    %v1660 = vpop.permute.xlu0 %1659
    %v1662 = vsel %vm604, %v595, 0
    %v1665 = vsel %vm604, %v1660, 0
    %1667 = vmatpush.bf16.xpose.msra.mxu0 0
    %1668 = vmatpush.bf16.xpose.msra.mxu0 0
    %1669 = vmatpush.bf16.xpose.msra.mxu0 0
    %1670 = vmatpush.bf16.xpose.msra.mxu0 0
    %1671 = vmatpush.bf16.xpose.msra.mxu0 0
    %1672 = vmatpush.bf16.xpose.msra.mxu0 0
    %1673 = vmatpush.bf16.xpose.msra.mxu0 0
    %1674 = vmatpush.bf16.xpose.msra.mxu0 %v1665
    %1675 = vmatmul.bf16.gmra.mxu0 %v1662
    %v1676 = vpop.f32.mrf.mxu0
    %v1677 = vadd.f32 0.0, %v1676
    %v1678 = vpop.f32.mrf.mxu0
    %1679 = vdwg.mxu0
    %v1681 = vunpack.c.l.b16 %v596
    %v1682 = vpack.c.b16 %v1681, %v1681
    %1683 = vrot.lane.b32.xlu0 %v1682, 64
    %v1684 = vpop.permute.xlu0 %1683
    %v1686 = vsel %vm604, %v596, 0
    %v1689 = vsel %vm604, %v1684, 0
    %1691 = vmatpush.bf16.xpose.msra.mxu0 0
    %1692 = vmatpush.bf16.xpose.msra.mxu0 0
    %1693 = vmatpush.bf16.xpose.msra.mxu0 0
    %1694 = vmatpush.bf16.xpose.msra.mxu0 0
    %1695 = vmatpush.bf16.xpose.msra.mxu0 0
    %1696 = vmatpush.bf16.xpose.msra.mxu0 0
    %1697 = vmatpush.bf16.xpose.msra.mxu0 0
    %1698 = vmatpush.bf16.xpose.msra.mxu0 %v1689
    %1699 = vmatmul.bf16.gmra.mxu0 %v1686
    %v1700 = vpop.f32.mrf.mxu0
    %v1701 = vadd.f32 0.0, %v1700
    %v1702 = vpop.f32.mrf.mxu0
    %1703 = vdwg.mxu0
    %v1705 = vunpack.c.l.b16 %v597
    %v1706 = vpack.c.b16 %v1705, %v1705
    %1707 = vrot.lane.b32.xlu0 %v1706, 64
    %v1708 = vpop.permute.xlu0 %1707
    %v1710 = vsel %vm604, %v597, 0
    %v1713 = vsel %vm604, %v1708, 0
    %1715 = vmatpush.bf16.xpose.msra.mxu0 0
    %1716 = vmatpush.bf16.xpose.msra.mxu0 0
    %1717 = vmatpush.bf16.xpose.msra.mxu0 0
    %1718 = vmatpush.bf16.xpose.msra.mxu0 0
    %1719 = vmatpush.bf16.xpose.msra.mxu0 0
    %1720 = vmatpush.bf16.xpose.msra.mxu0 0
    %1721 = vmatpush.bf16.xpose.msra.mxu0 0
    %1722 = vmatpush.bf16.xpose.msra.mxu0 %v1713
    %1723 = vmatmul.bf16.gmra.mxu0 %v1710
    %v1724 = vpop.f32.mrf.mxu0
    %v1725 = vadd.f32 0.0, %v1724
    %v1726 = vpop.f32.mrf.mxu0
    %1727 = vdwg.mxu0
    %v1729 = vunpack.c.l.b16 %v598
    %v1730 = vpack.c.b16 %v1729, %v1729
    %1731 = vrot.lane.b32.xlu0 %v1730, 64
    %v1732 = vpop.permute.xlu0 %1731
    %v1734 = vsel %vm604, %v598, 0
    %v1737 = vsel %vm604, %v1732, 0
    %1739 = vmatpush.bf16.xpose.msra.mxu0 0
    %1740 = vmatpush.bf16.xpose.msra.mxu0 0
    %1741 = vmatpush.bf16.xpose.msra.mxu0 0
    %1742 = vmatpush.bf16.xpose.msra.mxu0 0
    %1743 = vmatpush.bf16.xpose.msra.mxu0 0
    %1744 = vmatpush.bf16.xpose.msra.mxu0 0
    %1745 = vmatpush.bf16.xpose.msra.mxu0 0
    %1746 = vmatpush.bf16.xpose.msra.mxu0 %v1737
    %1747 = vmatmul.bf16.gmra.mxu0 %v1734
    %v1748 = vpop.f32.mrf.mxu0
    %v1749 = vadd.f32 0.0, %v1748
    %v1750 = vpop.f32.mrf.mxu0
    %1751 = vdwg.mxu0
    %v1752 = vsel %vm604, %v621, -inf
    %1753 = vmax.xlane.f32.xlu0 %v1752
    %v1754 = vpop.xlane.xlu0 %1753
    %v1755 = vsel %vm604, %v645, -inf
    %1756 = vmax.xlane.f32.xlu0 %v1755
    %v1757 = vpop.xlane.xlu0 %1756
    %v1758 = vsel %vm604, %v669, -inf
    %1759 = vmax.xlane.f32.xlu0 %v1758
    %v1760 = vpop.xlane.xlu0 %1759
    %v1761 = vsel %vm604, %v693, -inf
    %1762 = vmax.xlane.f32.xlu0 %v1761
    %v1763 = vpop.xlane.xlu0 %1762
    %v1764 = vsel %vm604, %v717, -inf
    %1765 = vmax.xlane.f32.xlu0 %v1764
    %v1766 = vpop.xlane.xlu0 %1765
    %v1767 = vsel %vm604, %v741, -inf
    %1768 = vmax.xlane.f32.xlu0 %v1767
    %v1769 = vpop.xlane.xlu0 %1768
    %v1770 = vsel %vm604, %v765, -inf
    %1771 = vmax.xlane.f32.xlu0 %v1770
    %v1772 = vpop.xlane.xlu0 %1771
    %v1773 = vsel %vm604, %v789, -inf
    %1774 = vmax.xlane.f32.xlu0 %v1773
    %v1775 = vpop.xlane.xlu0 %1774
    %v1776 = vsel %vm604, %v813, -inf
    %1777 = vmax.xlane.f32.xlu0 %v1776
    %v1778 = vpop.xlane.xlu0 %1777
    %v1779 = vsel %vm604, %v837, -inf
    %1780 = vmax.xlane.f32.xlu0 %v1779
    %v1781 = vpop.xlane.xlu0 %1780
    %v1782 = vsel %vm604, %v861, -inf
    %1783 = vmax.xlane.f32.xlu0 %v1782
    %v1784 = vpop.xlane.xlu0 %1783
    %v1785 = vsel %vm604, %v885, -inf
    %1786 = vmax.xlane.f32.xlu0 %v1785
    %v1787 = vpop.xlane.xlu0 %1786
    %v1788 = vsel %vm604, %v909, -inf
    %1789 = vmax.xlane.f32.xlu0 %v1788
    %v1790 = vpop.xlane.xlu0 %1789
    %v1791 = vsel %vm604, %v933, -inf
    %1792 = vmax.xlane.f32.xlu0 %v1791
    %v1793 = vpop.xlane.xlu0 %1792
    %v1794 = vsel %vm604, %v957, -inf
    %1795 = vmax.xlane.f32.xlu0 %v1794
    %v1796 = vpop.xlane.xlu0 %1795
    %v1797 = vsel %vm604, %v981, -inf
    %1798 = vmax.xlane.f32.xlu0 %v1797
    %v1799 = vpop.xlane.xlu0 %1798
    %v1800 = vsel %vm604, %v1005, -inf
    %1801 = vmax.xlane.f32.xlu0 %v1800
    %v1802 = vpop.xlane.xlu0 %1801
    %v1803 = vsel %vm604, %v1029, -inf
    %1804 = vmax.xlane.f32.xlu0 %v1803
    %v1805 = vpop.xlane.xlu0 %1804
    %v1806 = vsel %vm604, %v1053, -inf
    %1807 = vmax.xlane.f32.xlu0 %v1806
    %v1808 = vpop.xlane.xlu0 %1807
    %v1809 = vsel %vm604, %v1077, -inf
    %1810 = vmax.xlane.f32.xlu0 %v1809
    %v1811 = vpop.xlane.xlu0 %1810
    %v1812 = vsel %vm604, %v1101, -inf
    %1813 = vmax.xlane.f32.xlu0 %v1812
    %v1814 = vpop.xlane.xlu0 %1813
    %v1815 = vsel %vm604, %v1125, -inf
    %1816 = vmax.xlane.f32.xlu0 %v1815
    %v1817 = vpop.xlane.xlu0 %1816
    %v1818 = vsel %vm604, %v1149, -inf
    %1819 = vmax.xlane.f32.xlu0 %v1818
    %v1820 = vpop.xlane.xlu0 %1819
    %v1821 = vsel %vm604, %v1173, -inf
    %1822 = vmax.xlane.f32.xlu0 %v1821
    %v1823 = vpop.xlane.xlu0 %1822
    %v1824 = vsel %vm604, %v1197, -inf
    %1825 = vmax.xlane.f32.xlu0 %v1824
    %v1826 = vpop.xlane.xlu0 %1825
    %v1827 = vsel %vm604, %v1221, -inf
    %1828 = vmax.xlane.f32.xlu0 %v1827
    %v1829 = vpop.xlane.xlu0 %1828
    %v1830 = vsel %vm604, %v1245, -inf
    %1831 = vmax.xlane.f32.xlu0 %v1830
    %v1832 = vpop.xlane.xlu0 %1831
    %v1833 = vsel %vm604, %v1269, -inf
    %1834 = vmax.xlane.f32.xlu0 %v1833
    %v1835 = vpop.xlane.xlu0 %1834
    %v1836 = vsel %vm604, %v1293, -inf
    %1837 = vmax.xlane.f32.xlu0 %v1836
    %v1838 = vpop.xlane.xlu0 %1837
    %v1839 = vsel %vm604, %v1317, -inf
    %1840 = vmax.xlane.f32.xlu0 %v1839
    %v1841 = vpop.xlane.xlu0 %1840
    %v1842 = vsel %vm604, %v1341, -inf
    %1843 = vmax.xlane.f32.xlu0 %v1842
    %v1844 = vpop.xlane.xlu0 %1843
    %v1845 = vsel %vm604, %v1365, -inf
    %1846 = vmax.xlane.f32.xlu0 %v1845
    %v1847 = vpop.xlane.xlu0 %1846
    %v1848 = vsel %vm604, %v1389, -inf
    %1849 = vmax.xlane.f32.xlu0 %v1848
    %v1850 = vpop.xlane.xlu0 %1849
    %v1851 = vsel %vm604, %v1413, -inf
    %1852 = vmax.xlane.f32.xlu0 %v1851
    %v1853 = vpop.xlane.xlu0 %1852
    %v1854 = vsel %vm604, %v1437, -inf
    %1855 = vmax.xlane.f32.xlu0 %v1854
    %v1856 = vpop.xlane.xlu0 %1855
    %v1857 = vsel %vm604, %v1461, -inf
    %1858 = vmax.xlane.f32.xlu0 %v1857
    %v1859 = vpop.xlane.xlu0 %1858
    %v1860 = vsel %vm604, %v1485, -inf
    %1861 = vmax.xlane.f32.xlu0 %v1860
    %v1862 = vpop.xlane.xlu0 %1861
    %v1863 = vsel %vm604, %v1509, -inf
    %1864 = vmax.xlane.f32.xlu0 %v1863
    %v1865 = vpop.xlane.xlu0 %1864
    %v1866 = vsel %vm604, %v1533, -inf
    %1867 = vmax.xlane.f32.xlu0 %v1866
    %v1868 = vpop.xlane.xlu0 %1867
    %v1869 = vsel %vm604, %v1557, -inf
    %1870 = vmax.xlane.f32.xlu0 %v1869
    %v1871 = vpop.xlane.xlu0 %1870
    %v1872 = vsel %vm604, %v1581, -inf
    %1873 = vmax.xlane.f32.xlu0 %v1872
    %v1874 = vpop.xlane.xlu0 %1873
    %v1875 = vsel %vm604, %v1605, -inf
    %1876 = vmax.xlane.f32.xlu0 %v1875
    %v1877 = vpop.xlane.xlu0 %1876
    %v1878 = vsel %vm604, %v1629, -inf
    %1879 = vmax.xlane.f32.xlu0 %v1878
    %v1880 = vpop.xlane.xlu0 %1879
    %v1881 = vsel %vm604, %v1653, -inf
    %1882 = vmax.xlane.f32.xlu0 %v1881
    %v1883 = vpop.xlane.xlu0 %1882
    %v1884 = vsel %vm604, %v1677, -inf
    %1885 = vmax.xlane.f32.xlu0 %v1884
    %v1886 = vpop.xlane.xlu0 %1885
    %v1887 = vsel %vm604, %v1701, -inf
    %1888 = vmax.xlane.f32.xlu0 %v1887
    %v1889 = vpop.xlane.xlu0 %1888
    %v1890 = vsel %vm604, %v1725, -inf
    %1891 = vmax.xlane.f32.xlu0 %v1890
    %v1892 = vpop.xlane.xlu0 %1891
    %v1893 = vsel %vm604, %v1749, -inf
    %1894 = vmax.xlane.f32.xlu0 %v1893
    %v1895 = vpop.xlane.xlu0 %1894
    %v1896 = vsub.f32 %v621, %v1754
    %v1897 = vsub.f32 %v645, %v1757
    %v1898 = vsub.f32 %v669, %v1760
    %v1899 = vsub.f32 %v693, %v1763
    %v1900 = vsub.f32 %v717, %v1766
    %v1901 = vsub.f32 %v741, %v1769
    %v1902 = vsub.f32 %v765, %v1772
    %v1903 = vsub.f32 %v789, %v1775
    %v1904 = vsub.f32 %v813, %v1778
    %v1905 = vsub.f32 %v837, %v1781
    %v1906 = vsub.f32 %v861, %v1784
    %v1907 = vsub.f32 %v885, %v1787
    %v1908 = vsub.f32 %v909, %v1790
    %v1909 = vsub.f32 %v933, %v1793
    %v1910 = vsub.f32 %v957, %v1796
    %v1911 = vsub.f32 %v981, %v1799
    %v1912 = vsub.f32 %v1005, %v1802
    %v1913 = vsub.f32 %v1029, %v1805
    %v1914 = vsub.f32 %v1053, %v1808
    %v1915 = vsub.f32 %v1077, %v1811
    %v1916 = vsub.f32 %v1101, %v1814
    %v1917 = vsub.f32 %v1125, %v1817
    %v1918 = vsub.f32 %v1149, %v1820
    %v1919 = vsub.f32 %v1173, %v1823
    %v1920 = vsub.f32 %v1197, %v1826
    %v1921 = vsub.f32 %v1221, %v1829
    %v1922 = vsub.f32 %v1245, %v1832
    %v1923 = vsub.f32 %v1269, %v1835
    %v1924 = vsub.f32 %v1293, %v1838
    %v1925 = vsub.f32 %v1317, %v1841
    %v1926 = vsub.f32 %v1341, %v1844
    %v1927 = vsub.f32 %v1365, %v1847
    %v1928 = vsub.f32 %v1389, %v1850
    %v1929 = vsub.f32 %v1413, %v1853
    %v1930 = vsub.f32 %v1437, %v1856
    %v1931 = vsub.f32 %v1461, %v1859
    %v1932 = vsub.f32 %v1485, %v1862
    %v1933 = vsub.f32 %v1509, %v1865
    %v1934 = vsub.f32 %v1533, %v1868
    %v1935 = vsub.f32 %v1557, %v1871
    %v1936 = vsub.f32 %v1581, %v1874
    %v1937 = vsub.f32 %v1605, %v1877
    %v1938 = vsub.f32 %v1629, %v1880
    %v1939 = vsub.f32 %v1653, %v1883
    %v1940 = vsub.f32 %v1677, %v1886
    %v1941 = vsub.f32 %v1701, %v1889
    %v1942 = vsub.f32 %v1725, %v1892
    %v1943 = vsub.f32 %v1749, %v1895
    %v1944 = vmul.f32 %v1896, 1.442695
    %v1945 = vpow.pop %v1944
    %v1946 = vmul.f32 %v1897, 1.442695
    %v1947 = vpow.pop %v1946
    %v1948 = vmul.f32 %v1898, 1.442695
    %v1949 = vpow.pop %v1948
    %v1950 = vmul.f32 %v1899, 1.442695
    %v1951 = vpow.pop %v1950
    %v1952 = vmul.f32 %v1900, 1.442695
    %v1953 = vpow.pop %v1952
    %v1954 = vmul.f32 %v1901, 1.442695
    %v1955 = vpow.pop %v1954
    %v1956 = vmul.f32 %v1902, 1.442695
    %v1957 = vpow.pop %v1956
    %v1958 = vmul.f32 %v1903, 1.442695
    %v1959 = vpow.pop %v1958
    %v1960 = vmul.f32 %v1904, 1.442695
    %v1961 = vpow.pop %v1960
    %v1962 = vmul.f32 %v1905, 1.442695
    %v1963 = vpow.pop %v1962
    %v1964 = vmul.f32 %v1906, 1.442695
    %v1965 = vpow.pop %v1964
    %v1966 = vmul.f32 %v1907, 1.442695
    %v1967 = vpow.pop %v1966
    %v1968 = vmul.f32 %v1908, 1.442695
    %v1969 = vpow.pop %v1968
    %v1970 = vmul.f32 %v1909, 1.442695
    %v1971 = vpow.pop %v1970
    %v1972 = vmul.f32 %v1910, 1.442695
    %v1973 = vpow.pop %v1972
    %v1974 = vmul.f32 %v1911, 1.442695
    %v1975 = vpow.pop %v1974
    %v1976 = vmul.f32 %v1912, 1.442695
    %v1977 = vpow.pop %v1976
    %v1978 = vmul.f32 %v1913, 1.442695
    %v1979 = vpow.pop %v1978
    %v1980 = vmul.f32 %v1914, 1.442695
    %v1981 = vpow.pop %v1980
    %v1982 = vmul.f32 %v1915, 1.442695
    %v1983 = vpow.pop %v1982
    %v1984 = vmul.f32 %v1916, 1.442695
    %v1985 = vpow.pop %v1984
    %v1986 = vmul.f32 %v1917, 1.442695
    %v1987 = vpow.pop %v1986
    %v1988 = vmul.f32 %v1918, 1.442695
    %v1989 = vpow.pop %v1988
    %v1990 = vmul.f32 %v1919, 1.442695
    %v1991 = vpow.pop %v1990
    %v1992 = vmul.f32 %v1920, 1.442695
    %v1993 = vpow.pop %v1992
    %v1994 = vmul.f32 %v1921, 1.442695
    %v1995 = vpow.pop %v1994
    %v1996 = vmul.f32 %v1922, 1.442695
    %v1997 = vpow.pop %v1996
    %v1998 = vmul.f32 %v1923, 1.442695
    %v1999 = vpow.pop %v1998
    %v2000 = vmul.f32 %v1924, 1.442695
    %v2001 = vpow.pop %v2000
    %v2002 = vmul.f32 %v1925, 1.442695
    %v2003 = vpow.pop %v2002
    %v2004 = vmul.f32 %v1926, 1.442695
    %v2005 = vpow.pop %v2004
    %v2006 = vmul.f32 %v1927, 1.442695
    %v2007 = vpow.pop %v2006
    %v2008 = vmul.f32 %v1928, 1.442695
    %v2009 = vpow.pop %v2008
    %v2010 = vmul.f32 %v1929, 1.442695
    %v2011 = vpow.pop %v2010
    %v2012 = vmul.f32 %v1930, 1.442695
    %v2013 = vpow.pop %v2012
    %v2014 = vmul.f32 %v1931, 1.442695
    %v2015 = vpow.pop %v2014
    %v2016 = vmul.f32 %v1932, 1.442695
    %v2017 = vpow.pop %v2016
    %v2018 = vmul.f32 %v1933, 1.442695
    %v2019 = vpow.pop %v2018
    %v2020 = vmul.f32 %v1934, 1.442695
    %v2021 = vpow.pop %v2020
    %v2022 = vmul.f32 %v1935, 1.442695
    %v2023 = vpow.pop %v2022
    %v2024 = vmul.f32 %v1936, 1.442695
    %v2025 = vpow.pop %v2024
    %v2026 = vmul.f32 %v1937, 1.442695
    %v2027 = vpow.pop %v2026
    %v2028 = vmul.f32 %v1938, 1.442695
    %v2029 = vpow.pop %v2028
    %v2030 = vmul.f32 %v1939, 1.442695
    %v2031 = vpow.pop %v2030
    %v2032 = vmul.f32 %v1940, 1.442695
    %v2033 = vpow.pop %v2032
    %v2034 = vmul.f32 %v1941, 1.442695
    %v2035 = vpow.pop %v2034
    %v2036 = vmul.f32 %v1942, 1.442695
    %v2037 = vpow.pop %v2036
    %v2038 = vmul.f32 %v1943, 1.442695
    %v2039 = vpow.pop %v2038
    %v2040 = vsel %vm604, %v1945, 0.0
    %2041 = vadd.xlane.f32.xlu0 %v2040
    %v2042 = vpop.xlane.xlu0 %2041
    %v2043 = vsel %vm604, %v1947, 0.0
    %2044 = vadd.xlane.f32.xlu0 %v2043
    %v2045 = vpop.xlane.xlu0 %2044
    %v2046 = vsel %vm604, %v1949, 0.0
    %2047 = vadd.xlane.f32.xlu0 %v2046
    %v2048 = vpop.xlane.xlu0 %2047
    %v2049 = vsel %vm604, %v1951, 0.0
    %2050 = vadd.xlane.f32.xlu0 %v2049
    %v2051 = vpop.xlane.xlu0 %2050
    %v2052 = vsel %vm604, %v1953, 0.0
    %2053 = vadd.xlane.f32.xlu0 %v2052
    %v2054 = vpop.xlane.xlu0 %2053
    %v2055 = vsel %vm604, %v1955, 0.0
    %2056 = vadd.xlane.f32.xlu0 %v2055
    %v2057 = vpop.xlane.xlu0 %2056
    %v2058 = vsel %vm604, %v1957, 0.0
    %2059 = vadd.xlane.f32.xlu0 %v2058
    %v2060 = vpop.xlane.xlu0 %2059
    %v2061 = vsel %vm604, %v1959, 0.0
    %2062 = vadd.xlane.f32.xlu0 %v2061
    %v2063 = vpop.xlane.xlu0 %2062
    %v2064 = vsel %vm604, %v1961, 0.0
    %2065 = vadd.xlane.f32.xlu0 %v2064
    %v2066 = vpop.xlane.xlu0 %2065
    %v2067 = vsel %vm604, %v1963, 0.0
    %2068 = vadd.xlane.f32.xlu0 %v2067
    %v2069 = vpop.xlane.xlu0 %2068
    %v2070 = vsel %vm604, %v1965, 0.0
    %2071 = vadd.xlane.f32.xlu0 %v2070
    %v2072 = vpop.xlane.xlu0 %2071
    %v2073 = vsel %vm604, %v1967, 0.0
    %2074 = vadd.xlane.f32.xlu0 %v2073
    %v2075 = vpop.xlane.xlu0 %2074
    %v2076 = vsel %vm604, %v1969, 0.0
    %2077 = vadd.xlane.f32.xlu0 %v2076
    %v2078 = vpop.xlane.xlu0 %2077
    %v2079 = vsel %vm604, %v1971, 0.0
    %2080 = vadd.xlane.f32.xlu0 %v2079
    %v2081 = vpop.xlane.xlu0 %2080
    %v2082 = vsel %vm604, %v1973, 0.0
    %2083 = vadd.xlane.f32.xlu0 %v2082
    %v2084 = vpop.xlane.xlu0 %2083
    %v2085 = vsel %vm604, %v1975, 0.0
    %2086 = vadd.xlane.f32.xlu0 %v2085
    %v2087 = vpop.xlane.xlu0 %2086
    %v2088 = vsel %vm604, %v1977, 0.0
    %2089 = vadd.xlane.f32.xlu0 %v2088
    %v2090 = vpop.xlane.xlu0 %2089
    %v2091 = vsel %vm604, %v1979, 0.0
    %2092 = vadd.xlane.f32.xlu0 %v2091
    %v2093 = vpop.xlane.xlu0 %2092
    %v2094 = vsel %vm604, %v1981, 0.0
    %2095 = vadd.xlane.f32.xlu0 %v2094
    %v2096 = vpop.xlane.xlu0 %2095
    %v2097 = vsel %vm604, %v1983, 0.0
    %2098 = vadd.xlane.f32.xlu0 %v2097
    %v2099 = vpop.xlane.xlu0 %2098
    %v2100 = vsel %vm604, %v1985, 0.0
    %2101 = vadd.xlane.f32.xlu0 %v2100
    %v2102 = vpop.xlane.xlu0 %2101
    %v2103 = vsel %vm604, %v1987, 0.0
    %2104 = vadd.xlane.f32.xlu0 %v2103
    %v2105 = vpop.xlane.xlu0 %2104
    %v2106 = vsel %vm604, %v1989, 0.0
    %2107 = vadd.xlane.f32.xlu0 %v2106
    %v2108 = vpop.xlane.xlu0 %2107
    %v2109 = vsel %vm604, %v1991, 0.0
    %2110 = vadd.xlane.f32.xlu0 %v2109
    %v2111 = vpop.xlane.xlu0 %2110
    %v2112 = vsel %vm604, %v1993, 0.0
    %2113 = vadd.xlane.f32.xlu0 %v2112
    %v2114 = vpop.xlane.xlu0 %2113
    %v2115 = vsel %vm604, %v1995, 0.0
    %2116 = vadd.xlane.f32.xlu0 %v2115
    %v2117 = vpop.xlane.xlu0 %2116
    %v2118 = vsel %vm604, %v1997, 0.0
    %2119 = vadd.xlane.f32.xlu0 %v2118
    %v2120 = vpop.xlane.xlu0 %2119
    %v2121 = vsel %vm604, %v1999, 0.0
    %2122 = vadd.xlane.f32.xlu0 %v2121
    %v2123 = vpop.xlane.xlu0 %2122
    %v2124 = vsel %vm604, %v2001, 0.0
    %2125 = vadd.xlane.f32.xlu0 %v2124
    %v2126 = vpop.xlane.xlu0 %2125
    %v2127 = vsel %vm604, %v2003, 0.0
    %2128 = vadd.xlane.f32.xlu0 %v2127
    %v2129 = vpop.xlane.xlu0 %2128
    %v2130 = vsel %vm604, %v2005, 0.0
    %2131 = vadd.xlane.f32.xlu0 %v2130
    %v2132 = vpop.xlane.xlu0 %2131
    %v2133 = vsel %vm604, %v2007, 0.0
    %2134 = vadd.xlane.f32.xlu0 %v2133
    %v2135 = vpop.xlane.xlu0 %2134
    %v2136 = vsel %vm604, %v2009, 0.0
    %2137 = vadd.xlane.f32.xlu0 %v2136
    %v2138 = vpop.xlane.xlu0 %2137
    %v2139 = vsel %vm604, %v2011, 0.0
    %2140 = vadd.xlane.f32.xlu0 %v2139
    %v2141 = vpop.xlane.xlu0 %2140
    %v2142 = vsel %vm604, %v2013, 0.0
    %2143 = vadd.xlane.f32.xlu0 %v2142
    %v2144 = vpop.xlane.xlu0 %2143
    %v2145 = vsel %vm604, %v2015, 0.0
    %2146 = vadd.xlane.f32.xlu0 %v2145
    %v2147 = vpop.xlane.xlu0 %2146
    %v2148 = vsel %vm604, %v2017, 0.0
    %2149 = vadd.xlane.f32.xlu0 %v2148
    %v2150 = vpop.xlane.xlu0 %2149
    %v2151 = vsel %vm604, %v2019, 0.0
    %2152 = vadd.xlane.f32.xlu0 %v2151
    %v2153 = vpop.xlane.xlu0 %2152
    %v2154 = vsel %vm604, %v2021, 0.0
    %2155 = vadd.xlane.f32.xlu0 %v2154
    %v2156 = vpop.xlane.xlu0 %2155
    %v2157 = vsel %vm604, %v2023, 0.0
    %2158 = vadd.xlane.f32.xlu0 %v2157
    %v2159 = vpop.xlane.xlu0 %2158
    %v2160 = vsel %vm604, %v2025, 0.0
    %2161 = vadd.xlane.f32.xlu0 %v2160
    %v2162 = vpop.xlane.xlu0 %2161
    %v2163 = vsel %vm604, %v2027, 0.0
    %2164 = vadd.xlane.f32.xlu0 %v2163
    %v2165 = vpop.xlane.xlu0 %2164
    %v2166 = vsel %vm604, %v2029, 0.0
    %2167 = vadd.xlane.f32.xlu0 %v2166
    %v2168 = vpop.xlane.xlu0 %2167
    %v2169 = vsel %vm604, %v2031, 0.0
    %2170 = vadd.xlane.f32.xlu0 %v2169
    %v2171 = vpop.xlane.xlu0 %2170
    %v2172 = vsel %vm604, %v2033, 0.0
    %2173 = vadd.xlane.f32.xlu0 %v2172
    %v2174 = vpop.xlane.xlu0 %2173
    %v2175 = vsel %vm604, %v2035, 0.0
    %2176 = vadd.xlane.f32.xlu0 %v2175
    %v2177 = vpop.xlane.xlu0 %2176
    %v2178 = vsel %vm604, %v2037, 0.0
    %2179 = vadd.xlane.f32.xlu0 %v2178
    %v2180 = vpop.xlane.xlu0 %2179
    %v2181 = vsel %vm604, %v2039, 0.0
    %2182 = vadd.xlane.f32.xlu0 %v2181
    %v2183 = vpop.xlane.xlu0 %2182
    %v2184 = vrcp.pop %v2042
    %v2185 = vrcp.pop %v2045
    %v2186 = vrcp.pop %v2048
    %v2187 = vrcp.pop %v2051
    %v2188 = vrcp.pop %v2054
    %v2189 = vrcp.pop %v2057
    %v2190 = vrcp.pop %v2060
    %v2191 = vrcp.pop %v2063
    %v2192 = vrcp.pop %v2066
    %v2193 = vrcp.pop %v2069
    %v2194 = vrcp.pop %v2072
    %v2195 = vrcp.pop %v2075
    %v2196 = vrcp.pop %v2078
    %v2197 = vrcp.pop %v2081
    %v2198 = vrcp.pop %v2084
    %v2199 = vrcp.pop %v2087
    %v2200 = vrcp.pop %v2090
    %v2201 = vrcp.pop %v2093
    %v2202 = vrcp.pop %v2096
    %v2203 = vrcp.pop %v2099
    %v2204 = vrcp.pop %v2102
    %v2205 = vrcp.pop %v2105
    %v2206 = vrcp.pop %v2108
    %v2207 = vrcp.pop %v2111
    %v2208 = vrcp.pop %v2114
    %v2209 = vrcp.pop %v2117
    %v2210 = vrcp.pop %v2120
    %v2211 = vrcp.pop %v2123
    %v2212 = vrcp.pop %v2126
    %v2213 = vrcp.pop %v2129
    %v2214 = vrcp.pop %v2132
    %v2215 = vrcp.pop %v2135
    %v2216 = vrcp.pop %v2138
    %v2217 = vrcp.pop %v2141
    %v2218 = vrcp.pop %v2144
    %v2219 = vrcp.pop %v2147
    %v2220 = vrcp.pop %v2150
    %v2221 = vrcp.pop %v2153
    %v2222 = vrcp.pop %v2156
    %v2223 = vrcp.pop %v2159
    %v2224 = vrcp.pop %v2162
    %v2225 = vrcp.pop %v2165
    %v2226 = vrcp.pop %v2168
    %v2227 = vrcp.pop %v2171
    %v2228 = vrcp.pop %v2174
    %v2229 = vrcp.pop %v2177
    %v2230 = vrcp.pop %v2180
    %v2231 = vrcp.pop %v2183
    %v2232 = vmul.f32 %v1945, %v2184
    %v2233 = vmul.f32 %v1947, %v2185
    %v2234 = vmul.f32 %v1949, %v2186
    %v2235 = vmul.f32 %v1951, %v2187
    %v2236 = vmul.f32 %v1953, %v2188
    %v2237 = vmul.f32 %v1955, %v2189
    %v2238 = vmul.f32 %v1957, %v2190
    %v2239 = vmul.f32 %v1959, %v2191
    %v2240 = vmul.f32 %v1961, %v2192
    %v2241 = vmul.f32 %v1963, %v2193
    %v2242 = vmul.f32 %v1965, %v2194
    %v2243 = vmul.f32 %v1967, %v2195
    %v2244 = vmul.f32 %v1969, %v2196
    %v2245 = vmul.f32 %v1971, %v2197
    %v2246 = vmul.f32 %v1973, %v2198
    %v2247 = vmul.f32 %v1975, %v2199
    %v2248 = vmul.f32 %v1977, %v2200
    %v2249 = vmul.f32 %v1979, %v2201
    %v2250 = vmul.f32 %v1981, %v2202
    %v2251 = vmul.f32 %v1983, %v2203
    %v2252 = vmul.f32 %v1985, %v2204
    %v2253 = vmul.f32 %v1987, %v2205
    %v2254 = vmul.f32 %v1989, %v2206
    %v2255 = vmul.f32 %v1991, %v2207
    %v2256 = vmul.f32 %v1993, %v2208
    %v2257 = vmul.f32 %v1995, %v2209
    %v2258 = vmul.f32 %v1997, %v2210
    %v2259 = vmul.f32 %v1999, %v2211
    %v2260 = vmul.f32 %v2001, %v2212
    %v2261 = vmul.f32 %v2003, %v2213
    %v2262 = vmul.f32 %v2005, %v2214
    %v2263 = vmul.f32 %v2007, %v2215
    %v2264 = vmul.f32 %v2009, %v2216
    %v2265 = vmul.f32 %v2011, %v2217
    %v2266 = vmul.f32 %v2013, %v2218
    %v2267 = vmul.f32 %v2015, %v2219
    %v2268 = vmul.f32 %v2017, %v2220
    %v2269 = vmul.f32 %v2019, %v2221
    %v2270 = vmul.f32 %v2021, %v2222
    %v2271 = vmul.f32 %v2023, %v2223
    %v2272 = vmul.f32 %v2025, %v2224
    %v2273 = vmul.f32 %v2027, %v2225
    %v2274 = vmul.f32 %v2029, %v2226
    %v2275 = vmul.f32 %v2031, %v2227
    %v2276 = vmul.f32 %v2033, %v2228
    %v2277 = vmul.f32 %v2035, %v2229
    %v2278 = vmul.f32 %v2037, %v2230
    %v2279 = vmul.f32 %v2039, %v2231
    %v2280 = vpack.c.bf16 %v2232, %v2232
    %v2281 = vpack.c.bf16 %v2233, %v2233
    %v2282 = vpack.c.bf16 %v2234, %v2234
    %v2283 = vpack.c.bf16 %v2235, %v2235
    %v2284 = vpack.c.bf16 %v2236, %v2236
    %v2285 = vpack.c.bf16 %v2237, %v2237
    %v2286 = vpack.c.bf16 %v2238, %v2238
    %v2287 = vpack.c.bf16 %v2239, %v2239
    %v2288 = vpack.c.bf16 %v2240, %v2240
    %v2289 = vpack.c.bf16 %v2241, %v2241
    %v2290 = vpack.c.bf16 %v2242, %v2242
    %v2291 = vpack.c.bf16 %v2243, %v2243
    %v2292 = vpack.c.bf16 %v2244, %v2244
    %v2293 = vpack.c.bf16 %v2245, %v2245
    %v2294 = vpack.c.bf16 %v2246, %v2246
    %v2295 = vpack.c.bf16 %v2247, %v2247
    %v2296 = vpack.c.bf16 %v2248, %v2248
    %v2297 = vpack.c.bf16 %v2249, %v2249
    %v2298 = vpack.c.bf16 %v2250, %v2250
    %v2299 = vpack.c.bf16 %v2251, %v2251
    %v2300 = vpack.c.bf16 %v2252, %v2252
    %v2301 = vpack.c.bf16 %v2253, %v2253
    %v2302 = vpack.c.bf16 %v2254, %v2254
    %v2303 = vpack.c.bf16 %v2255, %v2255
    %v2304 = vpack.c.bf16 %v2256, %v2256
    %v2305 = vpack.c.bf16 %v2257, %v2257
    %v2306 = vpack.c.bf16 %v2258, %v2258
    %v2307 = vpack.c.bf16 %v2259, %v2259
    %v2308 = vpack.c.bf16 %v2260, %v2260
    %v2309 = vpack.c.bf16 %v2261, %v2261
    %v2310 = vpack.c.bf16 %v2262, %v2262
    %v2311 = vpack.c.bf16 %v2263, %v2263
    %v2312 = vpack.c.bf16 %v2264, %v2264
    %v2313 = vpack.c.bf16 %v2265, %v2265
    %v2314 = vpack.c.bf16 %v2266, %v2266
    %v2315 = vpack.c.bf16 %v2267, %v2267
    %v2316 = vpack.c.bf16 %v2268, %v2268
    %v2317 = vpack.c.bf16 %v2269, %v2269
    %v2318 = vpack.c.bf16 %v2270, %v2270
    %v2319 = vpack.c.bf16 %v2271, %v2271
    %v2320 = vpack.c.bf16 %v2272, %v2272
    %v2321 = vpack.c.bf16 %v2273, %v2273
    %v2322 = vpack.c.bf16 %v2274, %v2274
    %v2323 = vpack.c.bf16 %v2275, %v2275
    %v2324 = vpack.c.bf16 %v2276, %v2276
    %v2325 = vpack.c.bf16 %v2277, %v2277
    %v2326 = vpack.c.bf16 %v2278, %v2278
    %v2327 = vpack.c.bf16 %v2279, %v2279
    %v2328 = vpack.c.bf16 %v273, %v273
    %v2329 = vpack.c.bf16 %v275, %v275
    %v2330 = vpack.c.bf16 %v278, %v278
    %v2331 = vpack.c.bf16 %v280, %v280
    %v2332 = vpack.c.bf16 %v283, %v283
    %v2333 = vpack.c.bf16 %v285, %v285
    %v2334 = vpack.c.bf16 %v426, %v426
    %v2335 = vpack.c.bf16 %v428, %v428
    %v2336 = vpack.c.bf16 %v430, %v430
    %v2337 = vpack.c.bf16 %v432, %v432
    %v2338 = vpack.c.bf16 %v434, %v434
    %v2339 = vpack.c.bf16 %v436, %v436
    %v2340 = vpack.c.bf16 %v444, %v444
    %v2341 = vpack.c.bf16 %v446, %v446
    %v2342 = vpack.c.bf16 %v448, %v448
    %v2343 = vpack.c.bf16 %v450, %v450
    %v2344 = vpack.c.bf16 %v452, %v452
    %v2345 = vpack.c.bf16 %v454, %v454
    %v2346 = vpack.c.bf16 %v462, %v462
    %v2347 = vpack.c.bf16 %v464, %v464
    %v2348 = vpack.c.bf16 %v466, %v466
    %v2349 = vpack.c.bf16 %v468, %v468
    %v2350 = vpack.c.bf16 %v470, %v470
    %v2351 = vpack.c.bf16 %v472, %v472
    %v2352 = vpack.c.bf16 %v480, %v480
    %v2353 = vpack.c.bf16 %v482, %v482
    %v2354 = vpack.c.bf16 %v484, %v484
    %v2355 = vpack.c.bf16 %v486, %v486
    %v2356 = vpack.c.bf16 %v488, %v488
    %v2357 = vpack.c.bf16 %v490, %v490
    %v2358 = vpack.c.bf16 %v498, %v498
    %v2359 = vpack.c.bf16 %v500, %v500
    %v2360 = vpack.c.bf16 %v502, %v502
    %v2361 = vpack.c.bf16 %v504, %v504
    %v2362 = vpack.c.bf16 %v506, %v506
    %v2363 = vpack.c.bf16 %v508, %v508
    %v2364 = vpack.c.bf16 %v516, %v516
    %v2365 = vpack.c.bf16 %v518, %v518
    %v2366 = vpack.c.bf16 %v520, %v520
    %v2367 = vpack.c.bf16 %v522, %v522
    %v2368 = vpack.c.bf16 %v524, %v524
    %v2369 = vpack.c.bf16 %v526, %v526
    %v2370 = vpack.c.bf16 %v534, %v534
    %v2371 = vpack.c.bf16 %v536, %v536
    %v2372 = vpack.c.bf16 %v538, %v538
    %v2373 = vpack.c.bf16 %v540, %v540
    %v2374 = vpack.c.bf16 %v542, %v542
    %v2375 = vpack.c.bf16 %v544, %v544
    %v2377 = vsel %vm604, %v2280, 0
    %vm2379 = vcmask 1043456
    %v2381 = vsel %vm2379, %v2328, 0
    %2383 = vmatpush.bf16.msra.mxu0 0
    %2384 = vmatpush.bf16.msra.mxu0 0
    %2385 = vmatpush.bf16.msra.mxu0 0
    %2386 = vmatpush.bf16.msra.mxu0 0
    %2387 = vmatpush.bf16.msra.mxu0 0
    %2388 = vmatpush.bf16.msra.mxu0 0
    %2389 = vmatpush.bf16.msra.mxu0 0
    %2390 = vmatpush.bf16.msra.mxu0 %v2381
    %2391 = vmatmul.bf16.gmra.mxu0 %v2377
    %v2392 = vpop.f32.mrf.mxu0
    %v2393 = vadd.f32 0.0, %v2392
    %v2394 = vpop.f32.mrf.mxu0
    %2395 = vdwg.mxu0
    %v2397 = vsel %vm604, %v2281, 0
    %v2400 = vsel %vm2379, %v2329, 0
    %2402 = vmatpush.bf16.msra.mxu0 0
    %2403 = vmatpush.bf16.msra.mxu0 0
    %2404 = vmatpush.bf16.msra.mxu0 0
    %2405 = vmatpush.bf16.msra.mxu0 0
    %2406 = vmatpush.bf16.msra.mxu0 0
    %2407 = vmatpush.bf16.msra.mxu0 0
    %2408 = vmatpush.bf16.msra.mxu0 0
    %2409 = vmatpush.bf16.msra.mxu0 %v2400
    %2410 = vmatmul.bf16.gmra.mxu0 %v2397
    %v2411 = vpop.f32.mrf.mxu0
    %v2412 = vadd.f32 0.0, %v2411
    %v2413 = vpop.f32.mrf.mxu0
    %2414 = vdwg.mxu0
    %v2416 = vsel %vm604, %v2282, 0
    %v2419 = vsel %vm2379, %v2330, 0
    %2421 = vmatpush.bf16.msra.mxu0 0
    %2422 = vmatpush.bf16.msra.mxu0 0
    %2423 = vmatpush.bf16.msra.mxu0 0
    %2424 = vmatpush.bf16.msra.mxu0 0
    %2425 = vmatpush.bf16.msra.mxu0 0
    %2426 = vmatpush.bf16.msra.mxu0 0
    %2427 = vmatpush.bf16.msra.mxu0 0
    %2428 = vmatpush.bf16.msra.mxu0 %v2419
    %2429 = vmatmul.bf16.gmra.mxu0 %v2416
    %v2430 = vpop.f32.mrf.mxu0
    %v2431 = vadd.f32 0.0, %v2430
    %v2432 = vpop.f32.mrf.mxu0
    %2433 = vdwg.mxu0
    %v2435 = vsel %vm604, %v2283, 0
    %v2438 = vsel %vm2379, %v2331, 0
    %2440 = vmatpush.bf16.msra.mxu0 0
    %2441 = vmatpush.bf16.msra.mxu0 0
    %2442 = vmatpush.bf16.msra.mxu0 0
    %2443 = vmatpush.bf16.msra.mxu0 0
    %2444 = vmatpush.bf16.msra.mxu0 0
    %2445 = vmatpush.bf16.msra.mxu0 0
    %2446 = vmatpush.bf16.msra.mxu0 0
    %2447 = vmatpush.bf16.msra.mxu0 %v2438
    %2448 = vmatmul.bf16.gmra.mxu0 %v2435
    %v2449 = vpop.f32.mrf.mxu0
    %v2450 = vadd.f32 0.0, %v2449
    %v2451 = vpop.f32.mrf.mxu0
    %2452 = vdwg.mxu0
    %v2454 = vsel %vm604, %v2284, 0
    %v2457 = vsel %vm2379, %v2332, 0
    %2459 = vmatpush.bf16.msra.mxu0 0
    %2460 = vmatpush.bf16.msra.mxu0 0
    %2461 = vmatpush.bf16.msra.mxu0 0
    %2462 = vmatpush.bf16.msra.mxu0 0
    %2463 = vmatpush.bf16.msra.mxu0 0
    %2464 = vmatpush.bf16.msra.mxu0 0
    %2465 = vmatpush.bf16.msra.mxu0 0
    %2466 = vmatpush.bf16.msra.mxu0 %v2457
    %2467 = vmatmul.bf16.gmra.mxu0 %v2454
    %v2468 = vpop.f32.mrf.mxu0
    %v2469 = vadd.f32 0.0, %v2468
    %v2470 = vpop.f32.mrf.mxu0
    %2471 = vdwg.mxu0
    %v2473 = vsel %vm604, %v2285, 0
    %v2476 = vsel %vm2379, %v2333, 0
    %2478 = vmatpush.bf16.msra.mxu0 0
    %2479 = vmatpush.bf16.msra.mxu0 0
    %2480 = vmatpush.bf16.msra.mxu0 0
    %2481 = vmatpush.bf16.msra.mxu0 0
    %2482 = vmatpush.bf16.msra.mxu0 0
    %2483 = vmatpush.bf16.msra.mxu0 0
    %2484 = vmatpush.bf16.msra.mxu0 0
    %2485 = vmatpush.bf16.msra.mxu0 %v2476
    %2486 = vmatmul.bf16.gmra.mxu0 %v2473
    %v2487 = vpop.f32.mrf.mxu0
    %v2488 = vadd.f32 0.0, %v2487
    %v2489 = vpop.f32.mrf.mxu0
    %2490 = vdwg.mxu0
    %v2492 = vsel %vm604, %v2286, 0
    %v2495 = vsel %vm2379, %v2334, 0
    %2497 = vmatpush.bf16.msra.mxu0 0
    %2498 = vmatpush.bf16.msra.mxu0 0
    %2499 = vmatpush.bf16.msra.mxu0 0
    %2500 = vmatpush.bf16.msra.mxu0 0
    %2501 = vmatpush.bf16.msra.mxu0 0
    %2502 = vmatpush.bf16.msra.mxu0 0
    %2503 = vmatpush.bf16.msra.mxu0 0
    %2504 = vmatpush.bf16.msra.mxu0 %v2495
    %2505 = vmatmul.bf16.gmra.mxu0 %v2492
    %v2506 = vpop.f32.mrf.mxu0
    %v2507 = vadd.f32 0.0, %v2506
    %v2508 = vpop.f32.mrf.mxu0
    %2509 = vdwg.mxu0
    %v2511 = vsel %vm604, %v2287, 0
    %v2514 = vsel %vm2379, %v2335, 0
    %2516 = vmatpush.bf16.msra.mxu0 0
    %2517 = vmatpush.bf16.msra.mxu0 0
    %2518 = vmatpush.bf16.msra.mxu0 0
    %2519 = vmatpush.bf16.msra.mxu0 0
    %2520 = vmatpush.bf16.msra.mxu0 0
    %2521 = vmatpush.bf16.msra.mxu0 0
    %2522 = vmatpush.bf16.msra.mxu0 0
    %2523 = vmatpush.bf16.msra.mxu0 %v2514
    %2524 = vmatmul.bf16.gmra.mxu0 %v2511
    %v2525 = vpop.f32.mrf.mxu0
    %v2526 = vadd.f32 0.0, %v2525
    %v2527 = vpop.f32.mrf.mxu0
    %2528 = vdwg.mxu0
    %v2530 = vsel %vm604, %v2288, 0
    %v2533 = vsel %vm2379, %v2336, 0
    %2535 = vmatpush.bf16.msra.mxu0 0
    %2536 = vmatpush.bf16.msra.mxu0 0
    %2537 = vmatpush.bf16.msra.mxu0 0
    %2538 = vmatpush.bf16.msra.mxu0 0
    %2539 = vmatpush.bf16.msra.mxu0 0
    %2540 = vmatpush.bf16.msra.mxu0 0
    %2541 = vmatpush.bf16.msra.mxu0 0
    %2542 = vmatpush.bf16.msra.mxu0 %v2533
    %2543 = vmatmul.bf16.gmra.mxu0 %v2530
    %v2544 = vpop.f32.mrf.mxu0
    %v2545 = vadd.f32 0.0, %v2544
    %v2546 = vpop.f32.mrf.mxu0
    %2547 = vdwg.mxu0
    %v2549 = vsel %vm604, %v2289, 0
    %v2552 = vsel %vm2379, %v2337, 0
    %2554 = vmatpush.bf16.msra.mxu0 0
    %2555 = vmatpush.bf16.msra.mxu0 0
    %2556 = vmatpush.bf16.msra.mxu0 0
    %2557 = vmatpush.bf16.msra.mxu0 0
    %2558 = vmatpush.bf16.msra.mxu0 0
    %2559 = vmatpush.bf16.msra.mxu0 0
    %2560 = vmatpush.bf16.msra.mxu0 0
    %2561 = vmatpush.bf16.msra.mxu0 %v2552
    %2562 = vmatmul.bf16.gmra.mxu0 %v2549
    %v2563 = vpop.f32.mrf.mxu0
    %v2564 = vadd.f32 0.0, %v2563
    %v2565 = vpop.f32.mrf.mxu0
    %2566 = vdwg.mxu0
    %v2568 = vsel %vm604, %v2290, 0
    %v2571 = vsel %vm2379, %v2338, 0
    %2573 = vmatpush.bf16.msra.mxu0 0
    %2574 = vmatpush.bf16.msra.mxu0 0
    %2575 = vmatpush.bf16.msra.mxu0 0
    %2576 = vmatpush.bf16.msra.mxu0 0
    %2577 = vmatpush.bf16.msra.mxu0 0
    %2578 = vmatpush.bf16.msra.mxu0 0
    %2579 = vmatpush.bf16.msra.mxu0 0
    %2580 = vmatpush.bf16.msra.mxu0 %v2571
    %2581 = vmatmul.bf16.gmra.mxu0 %v2568
    %v2582 = vpop.f32.mrf.mxu0
    %v2583 = vadd.f32 0.0, %v2582
    %v2584 = vpop.f32.mrf.mxu0
    %2585 = vdwg.mxu0
    %v2587 = vsel %vm604, %v2291, 0
    %v2590 = vsel %vm2379, %v2339, 0
    %2592 = vmatpush.bf16.msra.mxu0 0
    %2593 = vmatpush.bf16.msra.mxu0 0
    %2594 = vmatpush.bf16.msra.mxu0 0
    %2595 = vmatpush.bf16.msra.mxu0 0
    %2596 = vmatpush.bf16.msra.mxu0 0
    %2597 = vmatpush.bf16.msra.mxu0 0
    %2598 = vmatpush.bf16.msra.mxu0 0
    %2599 = vmatpush.bf16.msra.mxu0 %v2590
    %2600 = vmatmul.bf16.gmra.mxu0 %v2587
    %v2601 = vpop.f32.mrf.mxu0
    %v2602 = vadd.f32 0.0, %v2601
    %v2603 = vpop.f32.mrf.mxu0
    %2604 = vdwg.mxu0
    %v2606 = vsel %vm604, %v2292, 0
    %v2609 = vsel %vm2379, %v2340, 0
    %2611 = vmatpush.bf16.msra.mxu0 0
    %2612 = vmatpush.bf16.msra.mxu0 0
    %2613 = vmatpush.bf16.msra.mxu0 0
    %2614 = vmatpush.bf16.msra.mxu0 0
    %2615 = vmatpush.bf16.msra.mxu0 0
    %2616 = vmatpush.bf16.msra.mxu0 0
    %2617 = vmatpush.bf16.msra.mxu0 0
    %2618 = vmatpush.bf16.msra.mxu0 %v2609
    %2619 = vmatmul.bf16.gmra.mxu0 %v2606
    %v2620 = vpop.f32.mrf.mxu0
    %v2621 = vadd.f32 0.0, %v2620
    %v2622 = vpop.f32.mrf.mxu0
    %2623 = vdwg.mxu0
    %v2625 = vsel %vm604, %v2293, 0
    %v2628 = vsel %vm2379, %v2341, 0
    %2630 = vmatpush.bf16.msra.mxu0 0
    %2631 = vmatpush.bf16.msra.mxu0 0
    %2632 = vmatpush.bf16.msra.mxu0 0
    %2633 = vmatpush.bf16.msra.mxu0 0
    %2634 = vmatpush.bf16.msra.mxu0 0
    %2635 = vmatpush.bf16.msra.mxu0 0
    %2636 = vmatpush.bf16.msra.mxu0 0
    %2637 = vmatpush.bf16.msra.mxu0 %v2628
    %2638 = vmatmul.bf16.gmra.mxu0 %v2625
    %v2639 = vpop.f32.mrf.mxu0
    %v2640 = vadd.f32 0.0, %v2639
    %v2641 = vpop.f32.mrf.mxu0
    %2642 = vdwg.mxu0
    %v2644 = vsel %vm604, %v2294, 0
    %v2647 = vsel %vm2379, %v2342, 0
    %2649 = vmatpush.bf16.msra.mxu0 0
    %2650 = vmatpush.bf16.msra.mxu0 0
    %2651 = vmatpush.bf16.msra.mxu0 0
    %2652 = vmatpush.bf16.msra.mxu0 0
    %2653 = vmatpush.bf16.msra.mxu0 0
    %2654 = vmatpush.bf16.msra.mxu0 0
    %2655 = vmatpush.bf16.msra.mxu0 0
    %2656 = vmatpush.bf16.msra.mxu0 %v2647
    %2657 = vmatmul.bf16.gmra.mxu0 %v2644
    %v2658 = vpop.f32.mrf.mxu0
    %v2659 = vadd.f32 0.0, %v2658
    %v2660 = vpop.f32.mrf.mxu0
    %2661 = vdwg.mxu0
    %v2663 = vsel %vm604, %v2295, 0
    %v2666 = vsel %vm2379, %v2343, 0
    %2668 = vmatpush.bf16.msra.mxu0 0
    %2669 = vmatpush.bf16.msra.mxu0 0
    %2670 = vmatpush.bf16.msra.mxu0 0
    %2671 = vmatpush.bf16.msra.mxu0 0
    %2672 = vmatpush.bf16.msra.mxu0 0
    %2673 = vmatpush.bf16.msra.mxu0 0
    %2674 = vmatpush.bf16.msra.mxu0 0
    %2675 = vmatpush.bf16.msra.mxu0 %v2666
    %2676 = vmatmul.bf16.gmra.mxu0 %v2663
    %v2677 = vpop.f32.mrf.mxu0
    %v2678 = vadd.f32 0.0, %v2677
    %v2679 = vpop.f32.mrf.mxu0
    %2680 = vdwg.mxu0
    %v2682 = vsel %vm604, %v2296, 0
    %v2685 = vsel %vm2379, %v2344, 0
    %2687 = vmatpush.bf16.msra.mxu0 0
    %2688 = vmatpush.bf16.msra.mxu0 0
    %2689 = vmatpush.bf16.msra.mxu0 0
    %2690 = vmatpush.bf16.msra.mxu0 0
    %2691 = vmatpush.bf16.msra.mxu0 0
    %2692 = vmatpush.bf16.msra.mxu0 0
    %2693 = vmatpush.bf16.msra.mxu0 0
    %2694 = vmatpush.bf16.msra.mxu0 %v2685
    %2695 = vmatmul.bf16.gmra.mxu0 %v2682
    %v2696 = vpop.f32.mrf.mxu0
    %v2697 = vadd.f32 0.0, %v2696
    %v2698 = vpop.f32.mrf.mxu0
    %2699 = vdwg.mxu0
    %v2701 = vsel %vm604, %v2297, 0
    %v2704 = vsel %vm2379, %v2345, 0
    %2706 = vmatpush.bf16.msra.mxu0 0
    %2707 = vmatpush.bf16.msra.mxu0 0
    %2708 = vmatpush.bf16.msra.mxu0 0
    %2709 = vmatpush.bf16.msra.mxu0 0
    %2710 = vmatpush.bf16.msra.mxu0 0
    %2711 = vmatpush.bf16.msra.mxu0 0
    %2712 = vmatpush.bf16.msra.mxu0 0
    %2713 = vmatpush.bf16.msra.mxu0 %v2704
    %2714 = vmatmul.bf16.gmra.mxu0 %v2701
    %v2715 = vpop.f32.mrf.mxu0
    %v2716 = vadd.f32 0.0, %v2715
    %v2717 = vpop.f32.mrf.mxu0
    %2718 = vdwg.mxu0
    %v2720 = vsel %vm604, %v2298, 0
    %v2723 = vsel %vm2379, %v2346, 0
    %2725 = vmatpush.bf16.msra.mxu0 0
    %2726 = vmatpush.bf16.msra.mxu0 0
    %2727 = vmatpush.bf16.msra.mxu0 0
    %2728 = vmatpush.bf16.msra.mxu0 0
    %2729 = vmatpush.bf16.msra.mxu0 0
    %2730 = vmatpush.bf16.msra.mxu0 0
    %2731 = vmatpush.bf16.msra.mxu0 0
    %2732 = vmatpush.bf16.msra.mxu0 %v2723
    %2733 = vmatmul.bf16.gmra.mxu0 %v2720
    %v2734 = vpop.f32.mrf.mxu0
    %v2735 = vadd.f32 0.0, %v2734
    %v2736 = vpop.f32.mrf.mxu0
    %2737 = vdwg.mxu0
    %v2739 = vsel %vm604, %v2299, 0
    %v2742 = vsel %vm2379, %v2347, 0
    %2744 = vmatpush.bf16.msra.mxu0 0
    %2745 = vmatpush.bf16.msra.mxu0 0
    %2746 = vmatpush.bf16.msra.mxu0 0
    %2747 = vmatpush.bf16.msra.mxu0 0
    %2748 = vmatpush.bf16.msra.mxu0 0
    %2749 = vmatpush.bf16.msra.mxu0 0
    %2750 = vmatpush.bf16.msra.mxu0 0
    %2751 = vmatpush.bf16.msra.mxu0 %v2742
    %2752 = vmatmul.bf16.gmra.mxu0 %v2739
    %v2753 = vpop.f32.mrf.mxu0
    %v2754 = vadd.f32 0.0, %v2753
    %v2755 = vpop.f32.mrf.mxu0
    %2756 = vdwg.mxu0
    %v2758 = vsel %vm604, %v2300, 0
    %v2761 = vsel %vm2379, %v2348, 0
    %2763 = vmatpush.bf16.msra.mxu0 0
    %2764 = vmatpush.bf16.msra.mxu0 0
    %2765 = vmatpush.bf16.msra.mxu0 0
    %2766 = vmatpush.bf16.msra.mxu0 0
    %2767 = vmatpush.bf16.msra.mxu0 0
    %2768 = vmatpush.bf16.msra.mxu0 0
    %2769 = vmatpush.bf16.msra.mxu0 0
    %2770 = vmatpush.bf16.msra.mxu0 %v2761
    %2771 = vmatmul.bf16.gmra.mxu0 %v2758
    %v2772 = vpop.f32.mrf.mxu0
    %v2773 = vadd.f32 0.0, %v2772
    %v2774 = vpop.f32.mrf.mxu0
    %2775 = vdwg.mxu0
    %v2777 = vsel %vm604, %v2301, 0
    %v2780 = vsel %vm2379, %v2349, 0
    %2782 = vmatpush.bf16.msra.mxu0 0
    %2783 = vmatpush.bf16.msra.mxu0 0
    %2784 = vmatpush.bf16.msra.mxu0 0
    %2785 = vmatpush.bf16.msra.mxu0 0
    %2786 = vmatpush.bf16.msra.mxu0 0
    %2787 = vmatpush.bf16.msra.mxu0 0
    %2788 = vmatpush.bf16.msra.mxu0 0
    %2789 = vmatpush.bf16.msra.mxu0 %v2780
    %2790 = vmatmul.bf16.gmra.mxu0 %v2777
    %v2791 = vpop.f32.mrf.mxu0
    %v2792 = vadd.f32 0.0, %v2791
    %v2793 = vpop.f32.mrf.mxu0
    %2794 = vdwg.mxu0
    %v2796 = vsel %vm604, %v2302, 0
    %v2799 = vsel %vm2379, %v2350, 0
    %2801 = vmatpush.bf16.msra.mxu0 0
    %2802 = vmatpush.bf16.msra.mxu0 0
    %2803 = vmatpush.bf16.msra.mxu0 0
    %2804 = vmatpush.bf16.msra.mxu0 0
    %2805 = vmatpush.bf16.msra.mxu0 0
    %2806 = vmatpush.bf16.msra.mxu0 0
    %2807 = vmatpush.bf16.msra.mxu0 0
    %2808 = vmatpush.bf16.msra.mxu0 %v2799
    %2809 = vmatmul.bf16.gmra.mxu0 %v2796
    %v2810 = vpop.f32.mrf.mxu0
    %v2811 = vadd.f32 0.0, %v2810
    %v2812 = vpop.f32.mrf.mxu0
    %2813 = vdwg.mxu0
    %v2815 = vsel %vm604, %v2303, 0
    %v2818 = vsel %vm2379, %v2351, 0
    %2820 = vmatpush.bf16.msra.mxu0 0
    %2821 = vmatpush.bf16.msra.mxu0 0
    %2822 = vmatpush.bf16.msra.mxu0 0
    %2823 = vmatpush.bf16.msra.mxu0 0
    %2824 = vmatpush.bf16.msra.mxu0 0
    %2825 = vmatpush.bf16.msra.mxu0 0
    %2826 = vmatpush.bf16.msra.mxu0 0
    %2827 = vmatpush.bf16.msra.mxu0 %v2818
    %2828 = vmatmul.bf16.gmra.mxu0 %v2815
    %v2829 = vpop.f32.mrf.mxu0
    %v2830 = vadd.f32 0.0, %v2829
    %v2831 = vpop.f32.mrf.mxu0
    %2832 = vdwg.mxu0
    %v2834 = vsel %vm604, %v2304, 0
    %v2837 = vsel %vm2379, %v2352, 0
    %2839 = vmatpush.bf16.msra.mxu0 0
    %2840 = vmatpush.bf16.msra.mxu0 0
    %2841 = vmatpush.bf16.msra.mxu0 0
    %2842 = vmatpush.bf16.msra.mxu0 0
    %2843 = vmatpush.bf16.msra.mxu0 0
    %2844 = vmatpush.bf16.msra.mxu0 0
    %2845 = vmatpush.bf16.msra.mxu0 0
    %2846 = vmatpush.bf16.msra.mxu0 %v2837
    %2847 = vmatmul.bf16.gmra.mxu0 %v2834
    %v2848 = vpop.f32.mrf.mxu0
    %v2849 = vadd.f32 0.0, %v2848
    %v2850 = vpop.f32.mrf.mxu0
    %2851 = vdwg.mxu0
    %v2853 = vsel %vm604, %v2305, 0
    %v2856 = vsel %vm2379, %v2353, 0
    %2858 = vmatpush.bf16.msra.mxu0 0
    %2859 = vmatpush.bf16.msra.mxu0 0
    %2860 = vmatpush.bf16.msra.mxu0 0
    %2861 = vmatpush.bf16.msra.mxu0 0
    %2862 = vmatpush.bf16.msra.mxu0 0
    %2863 = vmatpush.bf16.msra.mxu0 0
    %2864 = vmatpush.bf16.msra.mxu0 0
    %2865 = vmatpush.bf16.msra.mxu0 %v2856
    %2866 = vmatmul.bf16.gmra.mxu0 %v2853
    %v2867 = vpop.f32.mrf.mxu0
    %v2868 = vadd.f32 0.0, %v2867
    %v2869 = vpop.f32.mrf.mxu0
    %2870 = vdwg.mxu0
    %v2872 = vsel %vm604, %v2306, 0
    %v2875 = vsel %vm2379, %v2354, 0
    %2877 = vmatpush.bf16.msra.mxu0 0
    %2878 = vmatpush.bf16.msra.mxu0 0
    %2879 = vmatpush.bf16.msra.mxu0 0
    %2880 = vmatpush.bf16.msra.mxu0 0
    %2881 = vmatpush.bf16.msra.mxu0 0
    %2882 = vmatpush.bf16.msra.mxu0 0
    %2883 = vmatpush.bf16.msra.mxu0 0
    %2884 = vmatpush.bf16.msra.mxu0 %v2875
    %2885 = vmatmul.bf16.gmra.mxu0 %v2872
    %v2886 = vpop.f32.mrf.mxu0
    %v2887 = vadd.f32 0.0, %v2886
    %v2888 = vpop.f32.mrf.mxu0
    %2889 = vdwg.mxu0
    %v2891 = vsel %vm604, %v2307, 0
    %v2894 = vsel %vm2379, %v2355, 0
    %2896 = vmatpush.bf16.msra.mxu0 0
    %2897 = vmatpush.bf16.msra.mxu0 0
    %2898 = vmatpush.bf16.msra.mxu0 0
    %2899 = vmatpush.bf16.msra.mxu0 0
    %2900 = vmatpush.bf16.msra.mxu0 0
    %2901 = vmatpush.bf16.msra.mxu0 0
    %2902 = vmatpush.bf16.msra.mxu0 0
    %2903 = vmatpush.bf16.msra.mxu0 %v2894
    %2904 = vmatmul.bf16.gmra.mxu0 %v2891
    %v2905 = vpop.f32.mrf.mxu0
    %v2906 = vadd.f32 0.0, %v2905
    %v2907 = vpop.f32.mrf.mxu0
    %2908 = vdwg.mxu0
    %v2910 = vsel %vm604, %v2308, 0
    %v2913 = vsel %vm2379, %v2356, 0
    %2915 = vmatpush.bf16.msra.mxu0 0
    %2916 = vmatpush.bf16.msra.mxu0 0
    %2917 = vmatpush.bf16.msra.mxu0 0
    %2918 = vmatpush.bf16.msra.mxu0 0
    %2919 = vmatpush.bf16.msra.mxu0 0
    %2920 = vmatpush.bf16.msra.mxu0 0
    %2921 = vmatpush.bf16.msra.mxu0 0
    %2922 = vmatpush.bf16.msra.mxu0 %v2913
    %2923 = vmatmul.bf16.gmra.mxu0 %v2910
    %v2924 = vpop.f32.mrf.mxu0
    %v2925 = vadd.f32 0.0, %v2924
    %v2926 = vpop.f32.mrf.mxu0
    %2927 = vdwg.mxu0
    %v2929 = vsel %vm604, %v2309, 0
    %v2932 = vsel %vm2379, %v2357, 0
    %2934 = vmatpush.bf16.msra.mxu0 0
    %2935 = vmatpush.bf16.msra.mxu0 0
    %2936 = vmatpush.bf16.msra.mxu0 0
    %2937 = vmatpush.bf16.msra.mxu0 0
    %2938 = vmatpush.bf16.msra.mxu0 0
    %2939 = vmatpush.bf16.msra.mxu0 0
    %2940 = vmatpush.bf16.msra.mxu0 0
    %2941 = vmatpush.bf16.msra.mxu0 %v2932
    %2942 = vmatmul.bf16.gmra.mxu0 %v2929
    %v2943 = vpop.f32.mrf.mxu0
    %v2944 = vadd.f32 0.0, %v2943
    %v2945 = vpop.f32.mrf.mxu0
    %2946 = vdwg.mxu0
    %v2948 = vsel %vm604, %v2310, 0
    %v2951 = vsel %vm2379, %v2358, 0
    %2953 = vmatpush.bf16.msra.mxu0 0
    %2954 = vmatpush.bf16.msra.mxu0 0
    %2955 = vmatpush.bf16.msra.mxu0 0
    %2956 = vmatpush.bf16.msra.mxu0 0
    %2957 = vmatpush.bf16.msra.mxu0 0
    %2958 = vmatpush.bf16.msra.mxu0 0
    %2959 = vmatpush.bf16.msra.mxu0 0
    %2960 = vmatpush.bf16.msra.mxu0 %v2951
    %2961 = vmatmul.bf16.gmra.mxu0 %v2948
    %v2962 = vpop.f32.mrf.mxu0
    %v2963 = vadd.f32 0.0, %v2962
    %v2964 = vpop.f32.mrf.mxu0
    %2965 = vdwg.mxu0
    %v2967 = vsel %vm604, %v2311, 0
    %v2970 = vsel %vm2379, %v2359, 0
    %2972 = vmatpush.bf16.msra.mxu0 0
    %2973 = vmatpush.bf16.msra.mxu0 0
    %2974 = vmatpush.bf16.msra.mxu0 0
    %2975 = vmatpush.bf16.msra.mxu0 0
    %2976 = vmatpush.bf16.msra.mxu0 0
    %2977 = vmatpush.bf16.msra.mxu0 0
    %2978 = vmatpush.bf16.msra.mxu0 0
    %2979 = vmatpush.bf16.msra.mxu0 %v2970
    %2980 = vmatmul.bf16.gmra.mxu0 %v2967
    %v2981 = vpop.f32.mrf.mxu0
    %v2982 = vadd.f32 0.0, %v2981
    %v2983 = vpop.f32.mrf.mxu0
    %2984 = vdwg.mxu0
    %v2986 = vsel %vm604, %v2312, 0
    %v2989 = vsel %vm2379, %v2360, 0
    %2991 = vmatpush.bf16.msra.mxu0 0
    %2992 = vmatpush.bf16.msra.mxu0 0
    %2993 = vmatpush.bf16.msra.mxu0 0
    %2994 = vmatpush.bf16.msra.mxu0 0
    %2995 = vmatpush.bf16.msra.mxu0 0
    %2996 = vmatpush.bf16.msra.mxu0 0
    %2997 = vmatpush.bf16.msra.mxu0 0
    %2998 = vmatpush.bf16.msra.mxu0 %v2989
    %2999 = vmatmul.bf16.gmra.mxu0 %v2986
    %v3000 = vpop.f32.mrf.mxu0
    %v3001 = vadd.f32 0.0, %v3000
    %v3002 = vpop.f32.mrf.mxu0
    %3003 = vdwg.mxu0
    %v3005 = vsel %vm604, %v2313, 0
    %v3008 = vsel %vm2379, %v2361, 0
    %3010 = vmatpush.bf16.msra.mxu0 0
    %3011 = vmatpush.bf16.msra.mxu0 0
    %3012 = vmatpush.bf16.msra.mxu0 0
    %3013 = vmatpush.bf16.msra.mxu0 0
    %3014 = vmatpush.bf16.msra.mxu0 0
    %3015 = vmatpush.bf16.msra.mxu0 0
    %3016 = vmatpush.bf16.msra.mxu0 0
    %3017 = vmatpush.bf16.msra.mxu0 %v3008
    %3018 = vmatmul.bf16.gmra.mxu0 %v3005
    %v3019 = vpop.f32.mrf.mxu0
    %v3020 = vadd.f32 0.0, %v3019
    %v3021 = vpop.f32.mrf.mxu0
    %3022 = vdwg.mxu0
    %v3024 = vsel %vm604, %v2314, 0
    %v3027 = vsel %vm2379, %v2362, 0
    %3029 = vmatpush.bf16.msra.mxu0 0
    %3030 = vmatpush.bf16.msra.mxu0 0
    %3031 = vmatpush.bf16.msra.mxu0 0
    %3032 = vmatpush.bf16.msra.mxu0 0
    %3033 = vmatpush.bf16.msra.mxu0 0
    %3034 = vmatpush.bf16.msra.mxu0 0
    %3035 = vmatpush.bf16.msra.mxu0 0
    %3036 = vmatpush.bf16.msra.mxu0 %v3027
    %3037 = vmatmul.bf16.gmra.mxu0 %v3024
    %v3038 = vpop.f32.mrf.mxu0
    %v3039 = vadd.f32 0.0, %v3038
    %v3040 = vpop.f32.mrf.mxu0
    %3041 = vdwg.mxu0
    %v3043 = vsel %vm604, %v2315, 0
    %v3046 = vsel %vm2379, %v2363, 0
    %3048 = vmatpush.bf16.msra.mxu0 0
    %3049 = vmatpush.bf16.msra.mxu0 0
    %3050 = vmatpush.bf16.msra.mxu0 0
    %3051 = vmatpush.bf16.msra.mxu0 0
    %3052 = vmatpush.bf16.msra.mxu0 0
    %3053 = vmatpush.bf16.msra.mxu0 0
    %3054 = vmatpush.bf16.msra.mxu0 0
    %3055 = vmatpush.bf16.msra.mxu0 %v3046
    %3056 = vmatmul.bf16.gmra.mxu0 %v3043
    %v3057 = vpop.f32.mrf.mxu0
    %v3058 = vadd.f32 0.0, %v3057
    %v3059 = vpop.f32.mrf.mxu0
    %3060 = vdwg.mxu0
    %v3062 = vsel %vm604, %v2316, 0
    %v3065 = vsel %vm2379, %v2364, 0
    %3067 = vmatpush.bf16.msra.mxu0 0
    %3068 = vmatpush.bf16.msra.mxu0 0
    %3069 = vmatpush.bf16.msra.mxu0 0
    %3070 = vmatpush.bf16.msra.mxu0 0
    %3071 = vmatpush.bf16.msra.mxu0 0
    %3072 = vmatpush.bf16.msra.mxu0 0
    %3073 = vmatpush.bf16.msra.mxu0 0
    %3074 = vmatpush.bf16.msra.mxu0 %v3065
    %3075 = vmatmul.bf16.gmra.mxu0 %v3062
    %v3076 = vpop.f32.mrf.mxu0
    %v3077 = vadd.f32 0.0, %v3076
    %v3078 = vpop.f32.mrf.mxu0
    %3079 = vdwg.mxu0
    %v3081 = vsel %vm604, %v2317, 0
    %v3084 = vsel %vm2379, %v2365, 0
    %3086 = vmatpush.bf16.msra.mxu0 0
    %3087 = vmatpush.bf16.msra.mxu0 0
    %3088 = vmatpush.bf16.msra.mxu0 0
    %3089 = vmatpush.bf16.msra.mxu0 0
    %3090 = vmatpush.bf16.msra.mxu0 0
    %3091 = vmatpush.bf16.msra.mxu0 0
    %3092 = vmatpush.bf16.msra.mxu0 0
    %3093 = vmatpush.bf16.msra.mxu0 %v3084
    %3094 = vmatmul.bf16.gmra.mxu0 %v3081
    %v3095 = vpop.f32.mrf.mxu0
    %v3096 = vadd.f32 0.0, %v3095
    %v3097 = vpop.f32.mrf.mxu0
    %3098 = vdwg.mxu0
    %v3100 = vsel %vm604, %v2318, 0
    %v3103 = vsel %vm2379, %v2366, 0
    %3105 = vmatpush.bf16.msra.mxu0 0
    %3106 = vmatpush.bf16.msra.mxu0 0
    %3107 = vmatpush.bf16.msra.mxu0 0
    %3108 = vmatpush.bf16.msra.mxu0 0
    %3109 = vmatpush.bf16.msra.mxu0 0
    %3110 = vmatpush.bf16.msra.mxu0 0
    %3111 = vmatpush.bf16.msra.mxu0 0
    %3112 = vmatpush.bf16.msra.mxu0 %v3103
    %3113 = vmatmul.bf16.gmra.mxu0 %v3100
    %v3114 = vpop.f32.mrf.mxu0
    %v3115 = vadd.f32 0.0, %v3114
    %v3116 = vpop.f32.mrf.mxu0
    %3117 = vdwg.mxu0
    %v3119 = vsel %vm604, %v2319, 0
    %v3122 = vsel %vm2379, %v2367, 0
    %3124 = vmatpush.bf16.msra.mxu0 0
    %3125 = vmatpush.bf16.msra.mxu0 0
    %3126 = vmatpush.bf16.msra.mxu0 0
    %3127 = vmatpush.bf16.msra.mxu0 0
    %3128 = vmatpush.bf16.msra.mxu0 0
    %3129 = vmatpush.bf16.msra.mxu0 0
    %3130 = vmatpush.bf16.msra.mxu0 0
    %3131 = vmatpush.bf16.msra.mxu0 %v3122
    %3132 = vmatmul.bf16.gmra.mxu0 %v3119
    %v3133 = vpop.f32.mrf.mxu0
    %v3134 = vadd.f32 0.0, %v3133
    %v3135 = vpop.f32.mrf.mxu0
    %3136 = vdwg.mxu0
    %v3138 = vsel %vm604, %v2320, 0
    %v3141 = vsel %vm2379, %v2368, 0
    %3143 = vmatpush.bf16.msra.mxu0 0
    %3144 = vmatpush.bf16.msra.mxu0 0
    %3145 = vmatpush.bf16.msra.mxu0 0
    %3146 = vmatpush.bf16.msra.mxu0 0
    %3147 = vmatpush.bf16.msra.mxu0 0
    %3148 = vmatpush.bf16.msra.mxu0 0
    %3149 = vmatpush.bf16.msra.mxu0 0
    %3150 = vmatpush.bf16.msra.mxu0 %v3141
    %3151 = vmatmul.bf16.gmra.mxu0 %v3138
    %v3152 = vpop.f32.mrf.mxu0
    %v3153 = vadd.f32 0.0, %v3152
    %v3154 = vpop.f32.mrf.mxu0
    %3155 = vdwg.mxu0
    %v3157 = vsel %vm604, %v2321, 0
    %v3160 = vsel %vm2379, %v2369, 0
    %3162 = vmatpush.bf16.msra.mxu0 0
    %3163 = vmatpush.bf16.msra.mxu0 0
    %3164 = vmatpush.bf16.msra.mxu0 0
    %3165 = vmatpush.bf16.msra.mxu0 0
    %3166 = vmatpush.bf16.msra.mxu0 0
    %3167 = vmatpush.bf16.msra.mxu0 0
    %3168 = vmatpush.bf16.msra.mxu0 0
    %3169 = vmatpush.bf16.msra.mxu0 %v3160
    %3170 = vmatmul.bf16.gmra.mxu0 %v3157
    %v3171 = vpop.f32.mrf.mxu0
    %v3172 = vadd.f32 0.0, %v3171
    %v3173 = vpop.f32.mrf.mxu0
    %3174 = vdwg.mxu0
    %v3176 = vsel %vm604, %v2322, 0
    %v3179 = vsel %vm2379, %v2370, 0
    %3181 = vmatpush.bf16.msra.mxu0 0
    %3182 = vmatpush.bf16.msra.mxu0 0
    %3183 = vmatpush.bf16.msra.mxu0 0
    %3184 = vmatpush.bf16.msra.mxu0 0
    %3185 = vmatpush.bf16.msra.mxu0 0
    %3186 = vmatpush.bf16.msra.mxu0 0
    %3187 = vmatpush.bf16.msra.mxu0 0
    %3188 = vmatpush.bf16.msra.mxu0 %v3179
    %3189 = vmatmul.bf16.gmra.mxu0 %v3176
    %v3190 = vpop.f32.mrf.mxu0
    %v3191 = vadd.f32 0.0, %v3190
    %v3192 = vpop.f32.mrf.mxu0
    %3193 = vdwg.mxu0
    %v3195 = vsel %vm604, %v2323, 0
    %v3198 = vsel %vm2379, %v2371, 0
    %3200 = vmatpush.bf16.msra.mxu0 0
    %3201 = vmatpush.bf16.msra.mxu0 0
    %3202 = vmatpush.bf16.msra.mxu0 0
    %3203 = vmatpush.bf16.msra.mxu0 0
    %3204 = vmatpush.bf16.msra.mxu0 0
    %3205 = vmatpush.bf16.msra.mxu0 0
    %3206 = vmatpush.bf16.msra.mxu0 0
    %3207 = vmatpush.bf16.msra.mxu0 %v3198
    %3208 = vmatmul.bf16.gmra.mxu0 %v3195
    %v3209 = vpop.f32.mrf.mxu0
    %v3210 = vadd.f32 0.0, %v3209
    %v3211 = vpop.f32.mrf.mxu0
    %3212 = vdwg.mxu0
    %v3214 = vsel %vm604, %v2324, 0
    %v3217 = vsel %vm2379, %v2372, 0
    %3219 = vmatpush.bf16.msra.mxu0 0
    %3220 = vmatpush.bf16.msra.mxu0 0
    %3221 = vmatpush.bf16.msra.mxu0 0
    %3222 = vmatpush.bf16.msra.mxu0 0
    %3223 = vmatpush.bf16.msra.mxu0 0
    %3224 = vmatpush.bf16.msra.mxu0 0
    %3225 = vmatpush.bf16.msra.mxu0 0
    %3226 = vmatpush.bf16.msra.mxu0 %v3217
    %3227 = vmatmul.bf16.gmra.mxu0 %v3214
    %v3228 = vpop.f32.mrf.mxu0
    %v3229 = vadd.f32 0.0, %v3228
    %v3230 = vpop.f32.mrf.mxu0
    %3231 = vdwg.mxu0
    %v3233 = vsel %vm604, %v2325, 0
    %v3236 = vsel %vm2379, %v2373, 0
    %3238 = vmatpush.bf16.msra.mxu0 0
    %3239 = vmatpush.bf16.msra.mxu0 0
    %3240 = vmatpush.bf16.msra.mxu0 0
    %3241 = vmatpush.bf16.msra.mxu0 0
    %3242 = vmatpush.bf16.msra.mxu0 0
    %3243 = vmatpush.bf16.msra.mxu0 0
    %3244 = vmatpush.bf16.msra.mxu0 0
    %3245 = vmatpush.bf16.msra.mxu0 %v3236
    %3246 = vmatmul.bf16.gmra.mxu0 %v3233
    %v3247 = vpop.f32.mrf.mxu0
    %v3248 = vadd.f32 0.0, %v3247
    %v3249 = vpop.f32.mrf.mxu0
    %3250 = vdwg.mxu0
    %v3252 = vsel %vm604, %v2326, 0
    %v3255 = vsel %vm2379, %v2374, 0
    %3257 = vmatpush.bf16.msra.mxu0 0
    %3258 = vmatpush.bf16.msra.mxu0 0
    %3259 = vmatpush.bf16.msra.mxu0 0
    %3260 = vmatpush.bf16.msra.mxu0 0
    %3261 = vmatpush.bf16.msra.mxu0 0
    %3262 = vmatpush.bf16.msra.mxu0 0
    %3263 = vmatpush.bf16.msra.mxu0 0
    %3264 = vmatpush.bf16.msra.mxu0 %v3255
    %3265 = vmatmul.bf16.gmra.mxu0 %v3252
    %v3266 = vpop.f32.mrf.mxu0
    %v3267 = vadd.f32 0.0, %v3266
    %v3268 = vpop.f32.mrf.mxu0
    %3269 = vdwg.mxu0
    %v3271 = vsel %vm604, %v2327, 0
    %v3274 = vsel %vm2379, %v2375, 0
    %3276 = vmatpush.bf16.msra.mxu0 0
    %3277 = vmatpush.bf16.msra.mxu0 0
    %3278 = vmatpush.bf16.msra.mxu0 0
    %3279 = vmatpush.bf16.msra.mxu0 0
    %3280 = vmatpush.bf16.msra.mxu0 0
    %3281 = vmatpush.bf16.msra.mxu0 0
    %3282 = vmatpush.bf16.msra.mxu0 0
    %3283 = vmatpush.bf16.msra.mxu0 %v3274
    %3284 = vmatmul.bf16.gmra.mxu0 %v3271
    %v3285 = vpop.f32.mrf.mxu0
    %v3286 = vadd.f32 0.0, %v3285
    %v3287 = vpop.f32.mrf.mxu0
    %3288 = vdwg.mxu0
    %3295 = vrot.lane.b32.xlu0 %v2507, 8
    %v3296 = vpop.permute.xlu0 %3295
    %3297 = vrot.lane.b32.xlu0 %v2526, 8
    %v3298 = vpop.permute.xlu0 %3297
    %3299 = vrot.lane.b32.xlu0 %v2545, 8
    %v3300 = vpop.permute.xlu0 %3299
    %3301 = vrot.lane.b32.xlu0 %v2564, 8
    %v3302 = vpop.permute.xlu0 %3301
    %3303 = vrot.lane.b32.xlu0 %v2583, 8
    %v3304 = vpop.permute.xlu0 %3303
    %3305 = vrot.lane.b32.xlu0 %v2602, 8
    %v3306 = vpop.permute.xlu0 %3305
    %3319 = vrot.lane.b32.xlu0 %v2621, 16
    %v3320 = vpop.permute.xlu0 %3319
    %3321 = vrot.lane.b32.xlu0 %v2640, 16
    %v3322 = vpop.permute.xlu0 %3321
    %3323 = vrot.lane.b32.xlu0 %v2659, 16
    %v3324 = vpop.permute.xlu0 %3323
    %3325 = vrot.lane.b32.xlu0 %v2678, 16
    %v3326 = vpop.permute.xlu0 %3325
    %3327 = vrot.lane.b32.xlu0 %v2697, 16
    %v3328 = vpop.permute.xlu0 %3327
    %3329 = vrot.lane.b32.xlu0 %v2716, 16
    %v3330 = vpop.permute.xlu0 %3329
    %3343 = vrot.lane.b32.xlu0 %v2735, 24
    %v3344 = vpop.permute.xlu0 %3343
    %3345 = vrot.lane.b32.xlu0 %v2754, 24
    %v3346 = vpop.permute.xlu0 %3345
    %3347 = vrot.lane.b32.xlu0 %v2773, 24
    %v3348 = vpop.permute.xlu0 %3347
    %3349 = vrot.lane.b32.xlu0 %v2792, 24
    %v3350 = vpop.permute.xlu0 %3349
    %3351 = vrot.lane.b32.xlu0 %v2811, 24
    %v3352 = vpop.permute.xlu0 %3351
    %3353 = vrot.lane.b32.xlu0 %v2830, 24
    %v3354 = vpop.permute.xlu0 %3353
    %3367 = vrot.lane.b32.xlu0 %v2849, 32
    %v3368 = vpop.permute.xlu0 %3367
    %3369 = vrot.lane.b32.xlu0 %v2868, 32
    %v3370 = vpop.permute.xlu0 %3369
    %3371 = vrot.lane.b32.xlu0 %v2887, 32
    %v3372 = vpop.permute.xlu0 %3371
    %3373 = vrot.lane.b32.xlu0 %v2906, 32
    %v3374 = vpop.permute.xlu0 %3373
    %3375 = vrot.lane.b32.xlu0 %v2925, 32
    %v3376 = vpop.permute.xlu0 %3375
    %3377 = vrot.lane.b32.xlu0 %v2944, 32
    %v3378 = vpop.permute.xlu0 %3377
    %3391 = vrot.lane.b32.xlu0 %v2963, 40
    %v3392 = vpop.permute.xlu0 %3391
    %3393 = vrot.lane.b32.xlu0 %v2982, 40
    %v3394 = vpop.permute.xlu0 %3393
    %3395 = vrot.lane.b32.xlu0 %v3001, 40
    %v3396 = vpop.permute.xlu0 %3395
    %3397 = vrot.lane.b32.xlu0 %v3020, 40
    %v3398 = vpop.permute.xlu0 %3397
    %3399 = vrot.lane.b32.xlu0 %v3039, 40
    %v3400 = vpop.permute.xlu0 %3399
    %3401 = vrot.lane.b32.xlu0 %v3058, 40
    %v3402 = vpop.permute.xlu0 %3401
    %3415 = vrot.lane.b32.xlu0 %v3077, 48
    %v3416 = vpop.permute.xlu0 %3415
    %3417 = vrot.lane.b32.xlu0 %v3096, 48
    %v3418 = vpop.permute.xlu0 %3417
    %3419 = vrot.lane.b32.xlu0 %v3115, 48
    %v3420 = vpop.permute.xlu0 %3419
    %3421 = vrot.lane.b32.xlu0 %v3134, 48
    %v3422 = vpop.permute.xlu0 %3421
    %3423 = vrot.lane.b32.xlu0 %v3153, 48
    %v3424 = vpop.permute.xlu0 %3423
    %3425 = vrot.lane.b32.xlu0 %v3172, 48
    %v3426 = vpop.permute.xlu0 %3425
    %3439 = vrot.lane.b32.xlu0 %v3191, 56
    %v3440 = vpop.permute.xlu0 %3439
    %3441 = vrot.lane.b32.xlu0 %v3210, 56
    %v3442 = vpop.permute.xlu0 %3441
    %3443 = vrot.lane.b32.xlu0 %v3229, 56
    %v3444 = vpop.permute.xlu0 %3443
    %3445 = vrot.lane.b32.xlu0 %v3248, 56
    %v3446 = vpop.permute.xlu0 %3445
    %3447 = vrot.lane.b32.xlu0 %v3267, 56
    %v3448 = vpop.permute.xlu0 %3447
    %3449 = vrot.lane.b32.xlu0 %v3286, 56
    %v3450 = vpop.permute.xlu0 %3449
    %v3457 = vsel %vm604, %v2393, %v3296
    %v3458 = vsel %vm604, %v2412, %v3298
    %v3459 = vsel %vm604, %v2431, %v3300
    %v3460 = vsel %vm604, %v2450, %v3302
    %v3461 = vsel %vm604, %v2469, %v3304
    %v3462 = vsel %vm604, %v2488, %v3306
    %vm3463 = vcmask 130048
    %v3464 = vsel %vm3463, %v3457, %v3320
    %v3465 = vsel %vm3463, %v3458, %v3322
    %v3466 = vsel %vm3463, %v3459, %v3324
    %v3467 = vsel %vm3463, %v3460, %v3326
    %v3468 = vsel %vm3463, %v3461, %v3328
    %v3469 = vsel %vm3463, %v3462, %v3330
    %vm3470 = vcmask 195584
    %v3471 = vsel %vm3470, %v3464, %v3344
    %v3472 = vsel %vm3470, %v3465, %v3346
    %v3473 = vsel %vm3470, %v3466, %v3348
    %v3474 = vsel %vm3470, %v3467, %v3350
    %v3475 = vsel %vm3470, %v3468, %v3352
    %v3476 = vsel %vm3470, %v3469, %v3354
    %vm3477 = vcmask 261120
    %v3478 = vsel %vm3477, %v3471, %v3368
    %v3479 = vsel %vm3477, %v3472, %v3370
    %v3480 = vsel %vm3477, %v3473, %v3372
    %v3481 = vsel %vm3477, %v3474, %v3374
    %v3482 = vsel %vm3477, %v3475, %v3376
    %v3483 = vsel %vm3477, %v3476, %v3378
    %vm3484 = vcmask 326656
    %v3485 = vsel %vm3484, %v3478, %v3392
    %v3486 = vsel %vm3484, %v3479, %v3394
    %v3487 = vsel %vm3484, %v3480, %v3396
    %v3488 = vsel %vm3484, %v3481, %v3398
    %v3489 = vsel %vm3484, %v3482, %v3400
    %v3490 = vsel %vm3484, %v3483, %v3402
    %vm3491 = vcmask 392192
    %v3492 = vsel %vm3491, %v3485, %v3416
    %v3493 = vsel %vm3491, %v3486, %v3418
    %v3494 = vsel %vm3491, %v3487, %v3420
    %v3495 = vsel %vm3491, %v3488, %v3422
    %v3496 = vsel %vm3491, %v3489, %v3424
    %v3497 = vsel %vm3491, %v3490, %v3426
    %vm3498 = vcmask 457728
    %v3499 = vsel %vm3498, %v3492, %v3440
    %v3500 = vsel %vm3498, %v3493, %v3442
    %v3501 = vsel %vm3498, %v3494, %v3444
    %v3502 = vsel %vm3498, %v3495, %v3446
    %v3503 = vsel %vm3498, %v3496, %v3448
    %v3504 = vsel %vm3498, %v3497, %v3450
    %v3505 = vpack.c.bf16 %v3500, %v3499
    %v3506 = vpack.c.bf16 %v3502, %v3501
    %v3507 = vpack.c.bf16 %v3504, %v3503
    %v3508 = vld [vmem:[#allocation2] sm:$0xf]
    %v3509 = vld [vmem:[#allocation2 + $0x4] sm:$0xf]
    %v3510 = vld [vmem:[#allocation2 + $0x8] sm:$0xf]
    %v3511 = vld [vmem:[#allocation2 + $0xc] sm:$0xf]
    %v3512 = vld [vmem:[#allocation2 + $0x10] sm:$0xf]
    %v3513 = vld [vmem:[#allocation2 + $0x14] sm:$0xf]
    %v3514 = vld [vmem:[#allocation2 + $0x18] sm:$0xf]
    %v3515 = vld [vmem:[#allocation2 + $0x1c] sm:$0xf]
    %v3516 = vld [vmem:[%s6] sm:$0x1]
    %v3518 = vperm.slane %v3516, 0
    %v3528 = vunpack.c.l.b16 %v3508
    %v3529 = vunpack.c.l.b16 %v3509
    %v3530 = vunpack.c.l.b16 %v3510
    %v3531 = vunpack.c.l.b16 %v3511
    %v3532 = vunpack.c.l.b16 %v3512
    %v3533 = vunpack.c.l.b16 %v3513
    %v3534 = vunpack.c.l.b16 %v3514
    %v3535 = vunpack.c.l.b16 %v3515
    %v3536 = vpack.c.b16 %v3529, %v3528
    %v3537 = vpack.c.b16 %v3531, %v3530
    %v3538 = vpack.c.b16 %v3533, %v3532
    %v3539 = vpack.c.b16 %v3535, %v3534
    %v3545 = vsel %vm229, %v3505, 0
    %v3548 = vsel %vm229, %v3506, 0
    %v3551 = vsel %vm229, %v3507, 0
    %3553 = vmatpush.bf16.msra.mxu0 0
    %3554 = vmatpush.bf16.msra.mxu0 0
    %3555 = vmatpush.bf16.msra.mxu0 0
    %3556 = vmatpush.bf16.msra.mxu0 0
    %3557 = vmatpush.bf16.msra.mxu0 %v3539
    %3558 = vmatpush.bf16.msra.mxu0 %v3538
    %3559 = vmatpush.bf16.msra.mxu0 %v3537
    %3560 = vmatpush.bf16.msra.mxu0 %v3536
    %3561 = vmatmul.bf16.gmra.mxu0 %v3545
    %v3562 = vpop.f32.mrf.mxu0
    %v3563 = vadd.f32 %v3518, %v3562
    %v3564 = vpop.f32.mrf.mxu0
    %v3565 = vadd.f32 %v3518, %v3564
    %3566 = vmatmul.bf16.gmra.mxu0 %v3548
    %v3567 = vpop.f32.mrf.mxu0
    %v3568 = vadd.f32 %v3518, %v3567
    %v3569 = vpop.f32.mrf.mxu0
    %v3570 = vadd.f32 %v3518, %v3569
    %3571 = vmatmul.bf16.gmra.mxu0 %v3551
    %v3572 = vpop.f32.mrf.mxu0
    %v3573 = vadd.f32 %v3518, %v3572
    %v3574 = vpop.f32.mrf.mxu0
    %v3575 = vadd.f32 %v3518, %v3574
    %3576 = vdwg.mxu0
    %v3577 = vadd.f32 %v158, %v3563
    %v3578 = vadd.f32 %v160, %v3565
    %v3579 = vadd.f32 %v163, %v3568
    %v3580 = vadd.f32 %v165, %v3570
    %v3581 = vadd.f32 %v168, %v3573
    %v3582 = vadd.f32 %v170, %v3575
    %v3583 = vld [vmem:[%s11] sm:$0x1]
    %v3584 = vld [vmem:[%s12] sm:$0x1]
    %v3585 = vsel %vm229, %v3577, 0.0
    %3586 = vadd.xlane.f32.xlu0 %v3585
    %v3587 = vpop.xlane.xlu0 %3586
    %v3588 = vsel %vm229, %v3578, 0.0
    %3589 = vadd.xlane.f32.xlu0 %v3588
    %v3590 = vpop.xlane.xlu0 %3589
    %v3591 = vsel %vm229, %v3579, 0.0
    %3592 = vadd.xlane.f32.xlu0 %v3591
    %v3593 = vpop.xlane.xlu0 %3592
    %v3594 = vsel %vm229, %v3580, 0.0
    %3595 = vadd.xlane.f32.xlu0 %v3594
    %v3596 = vpop.xlane.xlu0 %3595
    %v3597 = vsel %vm229, %v3581, 0.0
    %3598 = vadd.xlane.f32.xlu0 %v3597
    %v3599 = vpop.xlane.xlu0 %3598
    %v3600 = vsel %vm229, %v3582, 0.0
    %3601 = vadd.xlane.f32.xlu0 %v3600
    %v3602 = vpop.xlane.xlu0 %3601
    %v3603 = vrcp.pop 64.0
    %v3604 = vmul.f32 64.0, %v3603
    %v3605 = vsub.f32 1.0, %v3604
    %v3606 = vmul.f32 %v3603, %v3605
    %v3607 = vadd.f32 %v3603, %v3606
    %vm3608 = vweird.f32 %v3603
    %v3609 = vsel %vm3608, %v3603, %v3607
    %v3610 = vmul.f32 %v3587, %v3609
    %v3611 = vmul.f32 %v3590, %v3609
    %v3612 = vmul.f32 %v3593, %v3609
    %v3613 = vmul.f32 %v3596, %v3609
    %v3614 = vmul.f32 %v3599, %v3609
    %v3615 = vmul.f32 %v3602, %v3609
    %v3616 = vsub.f32 %v3577, %v3610
    %v3617 = vsub.f32 %v3578, %v3611
    %v3618 = vsub.f32 %v3579, %v3612
    %v3619 = vsub.f32 %v3580, %v3613
    %v3620 = vsub.f32 %v3581, %v3614
    %v3621 = vsub.f32 %v3582, %v3615
    %v3622 = vmul.f32 %v3616, %v3616
    %v3623 = vmul.f32 %v3617, %v3617
    %v3624 = vmul.f32 %v3618, %v3618
    %v3625 = vmul.f32 %v3619, %v3619
    %v3626 = vmul.f32 %v3620, %v3620
    %v3627 = vmul.f32 %v3621, %v3621
    %v3628 = vsel %vm229, %v3622, 0.0
    %3629 = vadd.xlane.f32.xlu0 %v3628
    %v3630 = vpop.xlane.xlu0 %3629
    %v3631 = vsel %vm229, %v3623, 0.0
    %3632 = vadd.xlane.f32.xlu0 %v3631
    %v3633 = vpop.xlane.xlu0 %3632
    %v3634 = vsel %vm229, %v3624, 0.0
    %3635 = vadd.xlane.f32.xlu0 %v3634
    %v3636 = vpop.xlane.xlu0 %3635
    %v3637 = vsel %vm229, %v3625, 0.0
    %3638 = vadd.xlane.f32.xlu0 %v3637
    %v3639 = vpop.xlane.xlu0 %3638
    %v3640 = vsel %vm229, %v3626, 0.0
    %3641 = vadd.xlane.f32.xlu0 %v3640
    %v3642 = vpop.xlane.xlu0 %3641
    %v3643 = vsel %vm229, %v3627, 0.0
    %3644 = vadd.xlane.f32.xlu0 %v3643
    %v3645 = vpop.xlane.xlu0 %3644
    %v3646 = vmul.f32 %v3630, %v3609
    %v3647 = vmul.f32 %v3633, %v3609
    %v3648 = vmul.f32 %v3636, %v3609
    %v3649 = vmul.f32 %v3639, %v3609
    %v3650 = vmul.f32 %v3642, %v3609
    %v3651 = vmul.f32 %v3645, %v3609
    %v3652 = vadd.f32 %v3646, 1e-05
    %v3653 = vadd.f32 %v3647, 1e-05
    %v3654 = vadd.f32 %v3648, 1e-05
    %v3655 = vadd.f32 %v3649, 1e-05
    %v3656 = vadd.f32 %v3650, 1e-05
    %v3657 = vadd.f32 %v3651, 1e-05
    %v3658 = vrsqrt.pop %v3652
    %v3659 = vmul.f32 %v3658, %v3652
    %v3660 = vmul.f32 %v3659, %v3658
    %v3661 = vmul.f32 0.5, %v3660
    %v3662 = vsub.f32 1.5, %v3661
    %v3663 = vmul.f32 %v3658, %v3662
    %vm3664 = vweird.f32 %v3652
    %vm3665 = vweird.f32 %v3658
    %vm3666 = vmor %vm3664, %vm3665
    %v3667 = vsel %vm3666, %v3658, %v3663
    %v3668 = vrsqrt.pop %v3653
    %v3669 = vmul.f32 %v3668, %v3653
    %v3670 = vmul.f32 %v3669, %v3668
    %v3671 = vmul.f32 0.5, %v3670
    %v3672 = vsub.f32 1.5, %v3671
    %v3673 = vmul.f32 %v3668, %v3672
    %vm3674 = vweird.f32 %v3653
    %vm3675 = vweird.f32 %v3668
    %vm3676 = vmor %vm3674, %vm3675
    %v3677 = vsel %vm3676, %v3668, %v3673
    %v3678 = vrsqrt.pop %v3654
    %v3679 = vmul.f32 %v3678, %v3654
    %v3680 = vmul.f32 %v3679, %v3678
    %v3681 = vmul.f32 0.5, %v3680
    %v3682 = vsub.f32 1.5, %v3681
    %v3683 = vmul.f32 %v3678, %v3682
    %vm3684 = vweird.f32 %v3654
    %vm3685 = vweird.f32 %v3678
    %vm3686 = vmor %vm3684, %vm3685
    %v3687 = vsel %vm3686, %v3678, %v3683
    %v3688 = vrsqrt.pop %v3655
    %v3689 = vmul.f32 %v3688, %v3655
    %v3690 = vmul.f32 %v3689, %v3688
    %v3691 = vmul.f32 0.5, %v3690
    %v3692 = vsub.f32 1.5, %v3691
    %v3693 = vmul.f32 %v3688, %v3692
    %vm3694 = vweird.f32 %v3655
    %vm3695 = vweird.f32 %v3688
    %vm3696 = vmor %vm3694, %vm3695
    %v3697 = vsel %vm3696, %v3688, %v3693
    %v3698 = vrsqrt.pop %v3656
    %v3699 = vmul.f32 %v3698, %v3656
    %v3700 = vmul.f32 %v3699, %v3698
    %v3701 = vmul.f32 0.5, %v3700
    %v3702 = vsub.f32 1.5, %v3701
    %v3703 = vmul.f32 %v3698, %v3702
    %vm3704 = vweird.f32 %v3656
    %vm3705 = vweird.f32 %v3698
    %vm3706 = vmor %vm3704, %vm3705
    %v3707 = vsel %vm3706, %v3698, %v3703
    %v3708 = vrsqrt.pop %v3657
    %v3709 = vmul.f32 %v3708, %v3657
    %v3710 = vmul.f32 %v3709, %v3708
    %v3711 = vmul.f32 0.5, %v3710
    %v3712 = vsub.f32 1.5, %v3711
    %v3713 = vmul.f32 %v3708, %v3712
    %vm3714 = vweird.f32 %v3657
    %vm3715 = vweird.f32 %v3708
    %vm3716 = vmor %vm3714, %vm3715
    %v3717 = vsel %vm3716, %v3708, %v3713
    %v3718 = vmul.f32 %v3616, %v3667
    %v3719 = vmul.f32 %v3617, %v3677
    %v3720 = vmul.f32 %v3618, %v3687
    %v3721 = vmul.f32 %v3619, %v3697
    %v3722 = vmul.f32 %v3620, %v3707
    %v3723 = vmul.f32 %v3621, %v3717
    %v3725 = vperm.slane %v3583, 0
    %v3727 = vmul.f32 %v3718, %v3725
    %v3728 = vmul.f32 %v3719, %v3725
    %v3729 = vmul.f32 %v3720, %v3725
    %v3730 = vmul.f32 %v3721, %v3725
    %v3731 = vmul.f32 %v3722, %v3725
    %v3732 = vmul.f32 %v3723, %v3725
    %v3734 = vperm.slane %v3584, 0
    %v3736 = vadd.f32 %v3727, %v3734
    %v3737 = vadd.f32 %v3728, %v3734
    %v3738 = vadd.f32 %v3729, %v3734
    %v3739 = vadd.f32 %v3730, %v3734
    %v3740 = vadd.f32 %v3731, %v3734
    %v3741 = vadd.f32 %v3732, %v3734
    %v3742 = vpack.c.bf16 %v3737, %v3736
    %v3743 = vpack.c.bf16 %v3739, %v3738
    %v3744 = vpack.c.bf16 %v3741, %v3740
    %v3745 = vld [vmem:[#allocation4] sm:$0xf]
    %v3746 = vld [vmem:[#allocation4 + $0x4] sm:$0xf]
    %v3747 = vld [vmem:[#allocation4 + $0x8] sm:$0xf]
    %v3748 = vld [vmem:[#allocation4 + $0xc] sm:$0xf]
    %v3749 = vld [vmem:[#allocation4 + $0x10] sm:$0xf]
    %v3750 = vld [vmem:[#allocation4 + $0x14] sm:$0xf]
    %v3751 = vld [vmem:[#allocation4 + $0x18] sm:$0xf]
    %v3752 = vld [vmem:[#allocation4 + $0x1c] sm:$0xf]
    %v3753 = vld [vmem:[%s8] sm:$0x1]
    %v3755 = vperm.slane %v3753, 0
    %v3765 = vunpack.c.l.b16 %v3745
    %v3766 = vunpack.c.l.b16 %v3746
    %v3767 = vunpack.c.l.b16 %v3747
    %v3768 = vunpack.c.l.b16 %v3748
    %v3769 = vunpack.c.l.b16 %v3749
    %v3770 = vunpack.c.l.b16 %v3750
    %v3771 = vunpack.c.l.b16 %v3751
    %v3772 = vunpack.c.l.b16 %v3752
    %v3773 = vpack.c.b16 %v3766, %v3765
    %v3774 = vpack.c.b16 %v3768, %v3767
    %v3775 = vpack.c.b16 %v3770, %v3769
    %v3776 = vpack.c.b16 %v3772, %v3771
    %v3782 = vsel %vm229, %v3742, 0
    %v3785 = vsel %vm229, %v3743, 0
    %v3788 = vsel %vm229, %v3744, 0
    %3790 = vmatpush.bf16.msra.mxu0 0
    %3791 = vmatpush.bf16.msra.mxu0 0
    %3792 = vmatpush.bf16.msra.mxu0 0
    %3793 = vmatpush.bf16.msra.mxu0 0
    %3794 = vmatpush.bf16.msra.mxu0 %v3776
    %3795 = vmatpush.bf16.msra.mxu0 %v3775
    %3796 = vmatpush.bf16.msra.mxu0 %v3774
    %3797 = vmatpush.bf16.msra.mxu0 %v3773
    %3798 = vmatmul.bf16.gmra.mxu0 %v3782
    %v3799 = vpop.f32.mrf.mxu0
    %v3800 = vadd.f32 %v3755, %v3799
    %v3801 = vpop.f32.mrf.mxu0
    %v3802 = vadd.f32 %v3755, %v3801
    %3803 = vmatmul.bf16.gmra.mxu0 %v3785
    %v3804 = vpop.f32.mrf.mxu0
    %v3805 = vadd.f32 %v3755, %v3804
    %v3806 = vpop.f32.mrf.mxu0
    %v3807 = vadd.f32 %v3755, %v3806
    %3808 = vmatmul.bf16.gmra.mxu0 %v3788
    %v3809 = vpop.f32.mrf.mxu0
    %v3810 = vadd.f32 %v3755, %v3809
    %v3811 = vpop.f32.mrf.mxu0
    %v3812 = vadd.f32 %v3755, %v3811
    %3813 = vdwg.mxu0
    %v3814 = vmax.f32 %v3800, 0.0
    %v3815 = vmax.f32 %v3802, 0.0
    %v3816 = vmax.f32 %v3805, 0.0
    %v3817 = vmax.f32 %v3807, 0.0
    %v3818 = vmax.f32 %v3810, 0.0
    %v3819 = vmax.f32 %v3812, 0.0
    %v3820 = vpack.c.bf16 %v3815, %v3814
    %v3821 = vpack.c.bf16 %v3817, %v3816
    %v3822 = vpack.c.bf16 %v3819, %v3818
    %v3823 = vld [vmem:[#allocation6] sm:$0xf]
    %v3824 = vld [vmem:[#allocation6 + $0x4] sm:$0xf]
    %v3825 = vld [vmem:[#allocation6 + $0x8] sm:$0xf]
    %v3826 = vld [vmem:[#allocation6 + $0xc] sm:$0xf]
    %v3827 = vld [vmem:[#allocation6 + $0x10] sm:$0xf]
    %v3828 = vld [vmem:[#allocation6 + $0x14] sm:$0xf]
    %v3829 = vld [vmem:[#allocation6 + $0x18] sm:$0xf]
    %v3830 = vld [vmem:[#allocation6 + $0x1c] sm:$0xf]
    %v3831 = vld [vmem:[%s10] sm:$0x1]
    %v3833 = vperm.slane %v3831, 0
    %v3843 = vunpack.c.l.b16 %v3823
    %v3844 = vunpack.c.l.b16 %v3824
    %v3845 = vunpack.c.l.b16 %v3825
    %v3846 = vunpack.c.l.b16 %v3826
    %v3847 = vunpack.c.l.b16 %v3827
    %v3848 = vunpack.c.l.b16 %v3828
    %v3849 = vunpack.c.l.b16 %v3829
    %v3850 = vunpack.c.l.b16 %v3830
    %v3851 = vpack.c.b16 %v3844, %v3843
    %v3852 = vpack.c.b16 %v3846, %v3845
    %v3853 = vpack.c.b16 %v3848, %v3847
    %v3854 = vpack.c.b16 %v3850, %v3849
    %v3860 = vsel %vm229, %v3820, 0
    %v3863 = vsel %vm229, %v3821, 0
    %v3866 = vsel %vm229, %v3822, 0
    %3868 = vmatpush.bf16.msra.mxu0 0
    %3869 = vmatpush.bf16.msra.mxu0 0
    %3870 = vmatpush.bf16.msra.mxu0 0
    %3871 = vmatpush.bf16.msra.mxu0 0
    %3872 = vmatpush.bf16.msra.mxu0 %v3854
    %3873 = vmatpush.bf16.msra.mxu0 %v3853
    %3874 = vmatpush.bf16.msra.mxu0 %v3852
    %3875 = vmatpush.bf16.msra.mxu0 %v3851
    %3876 = vmatmul.bf16.gmra.mxu0 %v3860
    %v3877 = vpop.f32.mrf.mxu0
    %v3878 = vadd.f32 %v3833, %v3877
    %v3879 = vpop.f32.mrf.mxu0
    %v3880 = vadd.f32 %v3833, %v3879
    %3881 = vmatmul.bf16.gmra.mxu0 %v3863
    %v3882 = vpop.f32.mrf.mxu0
    %v3883 = vadd.f32 %v3833, %v3882
    %v3884 = vpop.f32.mrf.mxu0
    %v3885 = vadd.f32 %v3833, %v3884
    %3886 = vmatmul.bf16.gmra.mxu0 %v3866
    %v3887 = vpop.f32.mrf.mxu0
    %v3888 = vadd.f32 %v3833, %v3887
    %v3889 = vpop.f32.mrf.mxu0
    %v3890 = vadd.f32 %v3833, %v3889
    %3891 = vdwg.mxu0
    %v3892 = vadd.f32 %v3736, %v3878
    %v3893 = vadd.f32 %v3737, %v3880
    %v3894 = vadd.f32 %v3738, %v3883
    %v3895 = vadd.f32 %v3739, %v3885
    %v3896 = vadd.f32 %v3740, %v3888
    %v3897 = vadd.f32 %v3741, %v3890
    %v3898 = vld [vmem:[%s13] sm:$0x1]
    %v3899 = vld [vmem:[%s14] sm:$0x1]
    %v3900 = vsel %vm229, %v3892, 0.0
    %3901 = vadd.xlane.f32.xlu0 %v3900
    %v3902 = vpop.xlane.xlu0 %3901
    %v3903 = vsel %vm229, %v3893, 0.0
    %3904 = vadd.xlane.f32.xlu0 %v3903
    %v3905 = vpop.xlane.xlu0 %3904
    %v3906 = vsel %vm229, %v3894, 0.0
    %3907 = vadd.xlane.f32.xlu0 %v3906
    %v3908 = vpop.xlane.xlu0 %3907
    %v3909 = vsel %vm229, %v3895, 0.0
    %3910 = vadd.xlane.f32.xlu0 %v3909
    %v3911 = vpop.xlane.xlu0 %3910
    %v3912 = vsel %vm229, %v3896, 0.0
    %3913 = vadd.xlane.f32.xlu0 %v3912
    %v3914 = vpop.xlane.xlu0 %3913
    %v3915 = vsel %vm229, %v3897, 0.0
    %3916 = vadd.xlane.f32.xlu0 %v3915
    %v3917 = vpop.xlane.xlu0 %3916
    %v3918 = vmul.f32 %v3902, %v3609
    %v3919 = vmul.f32 %v3905, %v3609
    %v3920 = vmul.f32 %v3908, %v3609
    %v3921 = vmul.f32 %v3911, %v3609
    %v3922 = vmul.f32 %v3914, %v3609
    %v3923 = vmul.f32 %v3917, %v3609
    %v3924 = vsub.f32 %v3892, %v3918
    %v3925 = vsub.f32 %v3893, %v3919
    %v3926 = vsub.f32 %v3894, %v3920
    %v3927 = vsub.f32 %v3895, %v3921
    %v3928 = vsub.f32 %v3896, %v3922
    %v3929 = vsub.f32 %v3897, %v3923
    %v3930 = vmul.f32 %v3924, %v3924
    %v3931 = vmul.f32 %v3925, %v3925
    %v3932 = vmul.f32 %v3926, %v3926
    %v3933 = vmul.f32 %v3927, %v3927
    %v3934 = vmul.f32 %v3928, %v3928
    %v3935 = vmul.f32 %v3929, %v3929
    %v3936 = vsel %vm229, %v3930, 0.0
    %3937 = vadd.xlane.f32.xlu0 %v3936
    %v3938 = vpop.xlane.xlu0 %3937
    %v3939 = vsel %vm229, %v3931, 0.0
    %3940 = vadd.xlane.f32.xlu0 %v3939
    %v3941 = vpop.xlane.xlu0 %3940
    %v3942 = vsel %vm229, %v3932, 0.0
    %3943 = vadd.xlane.f32.xlu0 %v3942
    %v3944 = vpop.xlane.xlu0 %3943
    %v3945 = vsel %vm229, %v3933, 0.0
    %3946 = vadd.xlane.f32.xlu0 %v3945
    %v3947 = vpop.xlane.xlu0 %3946
    %v3948 = vsel %vm229, %v3934, 0.0
    %3949 = vadd.xlane.f32.xlu0 %v3948
    %v3950 = vpop.xlane.xlu0 %3949
    %v3951 = vsel %vm229, %v3935, 0.0
    %3952 = vadd.xlane.f32.xlu0 %v3951
    %v3953 = vpop.xlane.xlu0 %3952
    %v3954 = vmul.f32 %v3938, %v3609
    %v3955 = vmul.f32 %v3941, %v3609
    %v3956 = vmul.f32 %v3944, %v3609
    %v3957 = vmul.f32 %v3947, %v3609
    %v3958 = vmul.f32 %v3950, %v3609
    %v3959 = vmul.f32 %v3953, %v3609
    %v3960 = vadd.f32 %v3954, 1e-05
    %v3961 = vadd.f32 %v3955, 1e-05
    %v3962 = vadd.f32 %v3956, 1e-05
    %v3963 = vadd.f32 %v3957, 1e-05
    %v3964 = vadd.f32 %v3958, 1e-05
    %v3965 = vadd.f32 %v3959, 1e-05
    %v3966 = vrsqrt.pop %v3960
    %v3967 = vmul.f32 %v3966, %v3960
    %v3968 = vmul.f32 %v3967, %v3966
    %v3969 = vmul.f32 0.5, %v3968
    %v3970 = vsub.f32 1.5, %v3969
    %v3971 = vmul.f32 %v3966, %v3970
    %vm3972 = vweird.f32 %v3960
    %vm3973 = vweird.f32 %v3966
    %vm3974 = vmor %vm3972, %vm3973
    %v3975 = vsel %vm3974, %v3966, %v3971
    %v3976 = vrsqrt.pop %v3961
    %v3977 = vmul.f32 %v3976, %v3961
    %v3978 = vmul.f32 %v3977, %v3976
    %v3979 = vmul.f32 0.5, %v3978
    %v3980 = vsub.f32 1.5, %v3979
    %v3981 = vmul.f32 %v3976, %v3980
    %vm3982 = vweird.f32 %v3961
    %vm3983 = vweird.f32 %v3976
    %vm3984 = vmor %vm3982, %vm3983
    %v3985 = vsel %vm3984, %v3976, %v3981
    %v3986 = vrsqrt.pop %v3962
    %v3987 = vmul.f32 %v3986, %v3962
    %v3988 = vmul.f32 %v3987, %v3986
    %v3989 = vmul.f32 0.5, %v3988
    %v3990 = vsub.f32 1.5, %v3989
    %v3991 = vmul.f32 %v3986, %v3990
    %vm3992 = vweird.f32 %v3962
    %vm3993 = vweird.f32 %v3986
    %vm3994 = vmor %vm3992, %vm3993
    %v3995 = vsel %vm3994, %v3986, %v3991
    %v3996 = vrsqrt.pop %v3963
    %v3997 = vmul.f32 %v3996, %v3963
    %v3998 = vmul.f32 %v3997, %v3996
    %v3999 = vmul.f32 0.5, %v3998
    %v4000 = vsub.f32 1.5, %v3999
    %v4001 = vmul.f32 %v3996, %v4000
    %vm4002 = vweird.f32 %v3963
    %vm4003 = vweird.f32 %v3996
    %vm4004 = vmor %vm4002, %vm4003
    %v4005 = vsel %vm4004, %v3996, %v4001
    %v4006 = vrsqrt.pop %v3964
    %v4007 = vmul.f32 %v4006, %v3964
    %v4008 = vmul.f32 %v4007, %v4006
    %v4009 = vmul.f32 0.5, %v4008
    %v4010 = vsub.f32 1.5, %v4009
    %v4011 = vmul.f32 %v4006, %v4010
    %vm4012 = vweird.f32 %v3964
    %vm4013 = vweird.f32 %v4006
    %vm4014 = vmor %vm4012, %vm4013
    %v4015 = vsel %vm4014, %v4006, %v4011
    %v4016 = vrsqrt.pop %v3965
    %v4017 = vmul.f32 %v4016, %v3965
    %v4018 = vmul.f32 %v4017, %v4016
    %v4019 = vmul.f32 0.5, %v4018
    %v4020 = vsub.f32 1.5, %v4019
    %v4021 = vmul.f32 %v4016, %v4020
    %vm4022 = vweird.f32 %v3965
    %vm4023 = vweird.f32 %v4016
    %vm4024 = vmor %vm4022, %vm4023
    %v4025 = vsel %vm4024, %v4016, %v4021
    %v4026 = vmul.f32 %v3924, %v3975
    %v4027 = vmul.f32 %v3925, %v3985
    %v4028 = vmul.f32 %v3926, %v3995
    %v4029 = vmul.f32 %v3927, %v4005
    %v4030 = vmul.f32 %v3928, %v4015
    %v4031 = vmul.f32 %v3929, %v4025
    %v4033 = vperm.slane %v3898, 0
    %v4035 = vmul.f32 %v4026, %v4033
    %v4036 = vmul.f32 %v4027, %v4033
    %v4037 = vmul.f32 %v4028, %v4033
    %v4038 = vmul.f32 %v4029, %v4033
    %v4039 = vmul.f32 %v4030, %v4033
    %v4040 = vmul.f32 %v4031, %v4033
    %v4042 = vperm.slane %v3899, 0
    %v4044 = vadd.f32 %v4035, %v4042
    %v4045 = vadd.f32 %v4036, %v4042
    %v4046 = vadd.f32 %v4037, %v4042
    %v4047 = vadd.f32 %v4038, %v4042
    %v4048 = vadd.f32 %v4039, %v4042
    %v4049 = vadd.f32 %v4040, %v4042
    %v4050 = vpack.c.bf16 %v4045, %v4044
    %v4051 = vpack.c.bf16 %v4047, %v4046
    %v4052 = vpack.c.bf16 %v4049, %v4048
    %s4053 = scalar_lea.vmem %s3, 64
    %v4054 = vld [vmem:[%s4053] sm:$0xff]
    %v4055 = vld [vmem:[%s4053 + $0x8] sm:$0xff]
    %v4056 = vld [vmem:[%s4053 + $0x10] sm:$0xff]
    %v4057 = vld [vmem:[%s4053 + $0x18] sm:$0xff]
    %v4058 = vld [vmem:[%s4053 + $0x20] sm:$0xff]
    %v4059 = vld [vmem:[%s4053 + $0x28] sm:$0xff]
    %v4060 = vld [vmem:[%s4053 + $0x30] sm:$0xff]
    %v4061 = vld [vmem:[%s4053 + $0x38] sm:$0xff]
    %s4062 = scalar_lea.vmem %s4, 2
    %v4063 = vld [vmem:[%s4062] sm:$0x3]
    %v4065 = vperm.slane %v4063, 0
    %v4066 = vperm.slane %v4063, 1
    %v4077 = vunpack.c.l.b16 %v4054
    %v4078 = vunpack.c.h.b16 %v4054
    %v4079 = vunpack.c.l.b16 %v4055
    %v4080 = vunpack.c.h.b16 %v4055
    %v4081 = vunpack.c.l.b16 %v4056
    %v4082 = vunpack.c.h.b16 %v4056
    %v4083 = vunpack.c.l.b16 %v4057
    %v4084 = vunpack.c.h.b16 %v4057
    %v4085 = vunpack.c.l.b16 %v4058
    %v4086 = vunpack.c.h.b16 %v4058
    %v4087 = vunpack.c.l.b16 %v4059
    %v4088 = vunpack.c.h.b16 %v4059
    %v4089 = vunpack.c.l.b16 %v4060
    %v4090 = vunpack.c.h.b16 %v4060
    %v4091 = vunpack.c.l.b16 %v4061
    %v4092 = vunpack.c.h.b16 %v4061
    %v4093 = vpack.c.b16 %v4079, %v4077
    %v4094 = vpack.c.b16 %v4080, %v4078
    %v4095 = vpack.c.b16 %v4083, %v4081
    %v4096 = vpack.c.b16 %v4084, %v4082
    %v4097 = vpack.c.b16 %v4087, %v4085
    %v4098 = vpack.c.b16 %v4088, %v4086
    %v4099 = vpack.c.b16 %v4091, %v4089
    %v4100 = vpack.c.b16 %v4092, %v4090
    %v4110 = vsel %vm229, %v4050, 0
    %v4113 = vsel %vm229, %v4051, 0
    %v4116 = vsel %vm229, %v4052, 0
    %4118 = vmatpush.bf16.msra.mxu0 0
    %4119 = vmatpush.bf16.msra.mxu0 0
    %4120 = vmatpush.bf16.msra.mxu0 0
    %4121 = vmatpush.bf16.msra.mxu0 0
    %4122 = vmatpush.bf16.msra.mxu0 %v4099
    %4123 = vmatpush.bf16.msra.mxu0 %v4097
    %4124 = vmatpush.bf16.msra.mxu0 %v4095
    %4125 = vmatpush.bf16.msra.mxu0 %v4093
    %4126 = vmatmul.bf16.gmra.mxu0 %v4110
    %v4127 = vpop.f32.mrf.mxu0
    %v4128 = vadd.f32 %v4065, %v4127
    %v4129 = vpop.f32.mrf.mxu0
    %v4130 = vadd.f32 %v4065, %v4129
    %4131 = vmatmul.bf16.gmra.mxu0 %v4113
    %v4132 = vpop.f32.mrf.mxu0
    %v4133 = vadd.f32 %v4065, %v4132
    %v4134 = vpop.f32.mrf.mxu0
    %v4135 = vadd.f32 %v4065, %v4134
    %4136 = vmatmul.bf16.gmra.mxu0 %v4116
    %v4137 = vpop.f32.mrf.mxu0
    %v4138 = vadd.f32 %v4065, %v4137
    %v4139 = vpop.f32.mrf.mxu0
    %v4140 = vadd.f32 %v4065, %v4139
    %4141 = vdwg.mxu0
    %4142 = vmatpush.bf16.msra.mxu0 0
    %4143 = vmatpush.bf16.msra.mxu0 0
    %4144 = vmatpush.bf16.msra.mxu0 0
    %4145 = vmatpush.bf16.msra.mxu0 0
    %4146 = vmatpush.bf16.msra.mxu0 %v4100
    %4147 = vmatpush.bf16.msra.mxu0 %v4098
    %4148 = vmatpush.bf16.msra.mxu0 %v4096
    %4149 = vmatpush.bf16.msra.mxu0 %v4094
    %4150 = vmatmul.bf16.gmra.mxu0 %v4110
    %v4151 = vpop.f32.mrf.mxu0
    %v4152 = vadd.f32 %v4066, %v4151
    %v4153 = vpop.f32.mrf.mxu0
    %v4154 = vadd.f32 %v4066, %v4153
    %4155 = vmatmul.bf16.gmra.mxu0 %v4113
    %v4156 = vpop.f32.mrf.mxu0
    %v4157 = vadd.f32 %v4066, %v4156
    %v4158 = vpop.f32.mrf.mxu0
    %v4159 = vadd.f32 %v4066, %v4158
    %4160 = vmatmul.bf16.gmra.mxu0 %v4116
    %v4161 = vpop.f32.mrf.mxu0
    %v4162 = vadd.f32 %v4066, %v4161
    %v4163 = vpop.f32.mrf.mxu0
    %v4164 = vadd.f32 %v4066, %v4163
    %4165 = vdwg.mxu0
    %4172 = vrot.lane.b32.xlu0 %v4128, 120
    %v4173 = vpop.permute.xlu0 %4172
    %4174 = vrot.lane.b32.xlu0 %v4130, 120
    %v4175 = vpop.permute.xlu0 %4174
    %4176 = vrot.lane.b32.xlu0 %v4133, 120
    %v4177 = vpop.permute.xlu0 %4176
    %4178 = vrot.lane.b32.xlu0 %v4135, 120
    %v4179 = vpop.permute.xlu0 %4178
    %4180 = vrot.lane.b32.xlu0 %v4138, 120
    %v4181 = vpop.permute.xlu0 %4180
    %4182 = vrot.lane.b32.xlu0 %v4140, 120
    %v4183 = vpop.permute.xlu0 %4182
    %4190 = vrot.lane.b32.xlu0 %v4128, 112
    %v4191 = vpop.permute.xlu0 %4190
    %4192 = vrot.lane.b32.xlu0 %v4130, 112
    %v4193 = vpop.permute.xlu0 %4192
    %4194 = vrot.lane.b32.xlu0 %v4133, 112
    %v4195 = vpop.permute.xlu0 %4194
    %4196 = vrot.lane.b32.xlu0 %v4135, 112
    %v4197 = vpop.permute.xlu0 %4196
    %4198 = vrot.lane.b32.xlu0 %v4138, 112
    %v4199 = vpop.permute.xlu0 %4198
    %4200 = vrot.lane.b32.xlu0 %v4140, 112
    %v4201 = vpop.permute.xlu0 %4200
    %4208 = vrot.lane.b32.xlu0 %v4128, 104
    %v4209 = vpop.permute.xlu0 %4208
    %4210 = vrot.lane.b32.xlu0 %v4130, 104
    %v4211 = vpop.permute.xlu0 %4210
    %4212 = vrot.lane.b32.xlu0 %v4133, 104
    %v4213 = vpop.permute.xlu0 %4212
    %4214 = vrot.lane.b32.xlu0 %v4135, 104
    %v4215 = vpop.permute.xlu0 %4214
    %4216 = vrot.lane.b32.xlu0 %v4138, 104
    %v4217 = vpop.permute.xlu0 %4216
    %4218 = vrot.lane.b32.xlu0 %v4140, 104
    %v4219 = vpop.permute.xlu0 %4218
    %4226 = vrot.lane.b32.xlu0 %v4128, 96
    %v4227 = vpop.permute.xlu0 %4226
    %4228 = vrot.lane.b32.xlu0 %v4130, 96
    %v4229 = vpop.permute.xlu0 %4228
    %4230 = vrot.lane.b32.xlu0 %v4133, 96
    %v4231 = vpop.permute.xlu0 %4230
    %4232 = vrot.lane.b32.xlu0 %v4135, 96
    %v4233 = vpop.permute.xlu0 %4232
    %4234 = vrot.lane.b32.xlu0 %v4138, 96
    %v4235 = vpop.permute.xlu0 %4234
    %4236 = vrot.lane.b32.xlu0 %v4140, 96
    %v4237 = vpop.permute.xlu0 %4236
    %4244 = vrot.lane.b32.xlu0 %v4128, 88
    %v4245 = vpop.permute.xlu0 %4244
    %4246 = vrot.lane.b32.xlu0 %v4130, 88
    %v4247 = vpop.permute.xlu0 %4246
    %4248 = vrot.lane.b32.xlu0 %v4133, 88
    %v4249 = vpop.permute.xlu0 %4248
    %4250 = vrot.lane.b32.xlu0 %v4135, 88
    %v4251 = vpop.permute.xlu0 %4250
    %4252 = vrot.lane.b32.xlu0 %v4138, 88
    %v4253 = vpop.permute.xlu0 %4252
    %4254 = vrot.lane.b32.xlu0 %v4140, 88
    %v4255 = vpop.permute.xlu0 %4254
    %4262 = vrot.lane.b32.xlu0 %v4128, 80
    %v4263 = vpop.permute.xlu0 %4262
    %4264 = vrot.lane.b32.xlu0 %v4130, 80
    %v4265 = vpop.permute.xlu0 %4264
    %4266 = vrot.lane.b32.xlu0 %v4133, 80
    %v4267 = vpop.permute.xlu0 %4266
    %4268 = vrot.lane.b32.xlu0 %v4135, 80
    %v4269 = vpop.permute.xlu0 %4268
    %4270 = vrot.lane.b32.xlu0 %v4138, 80
    %v4271 = vpop.permute.xlu0 %4270
    %4272 = vrot.lane.b32.xlu0 %v4140, 80
    %v4273 = vpop.permute.xlu0 %4272
    %4280 = vrot.lane.b32.xlu0 %v4128, 72
    %v4281 = vpop.permute.xlu0 %4280
    %4282 = vrot.lane.b32.xlu0 %v4130, 72
    %v4283 = vpop.permute.xlu0 %4282
    %4284 = vrot.lane.b32.xlu0 %v4133, 72
    %v4285 = vpop.permute.xlu0 %4284
    %4286 = vrot.lane.b32.xlu0 %v4135, 72
    %v4287 = vpop.permute.xlu0 %4286
    %4288 = vrot.lane.b32.xlu0 %v4138, 72
    %v4289 = vpop.permute.xlu0 %4288
    %4290 = vrot.lane.b32.xlu0 %v4140, 72
    %v4291 = vpop.permute.xlu0 %4290
    %4304 = vrot.lane.b32.xlu0 %v4152, 120
    %v4305 = vpop.permute.xlu0 %4304
    %4306 = vrot.lane.b32.xlu0 %v4154, 120
    %v4307 = vpop.permute.xlu0 %4306
    %4308 = vrot.lane.b32.xlu0 %v4157, 120
    %v4309 = vpop.permute.xlu0 %4308
    %4310 = vrot.lane.b32.xlu0 %v4159, 120
    %v4311 = vpop.permute.xlu0 %4310
    %4312 = vrot.lane.b32.xlu0 %v4162, 120
    %v4313 = vpop.permute.xlu0 %4312
    %4314 = vrot.lane.b32.xlu0 %v4164, 120
    %v4315 = vpop.permute.xlu0 %4314
    %4322 = vrot.lane.b32.xlu0 %v4152, 112
    %v4323 = vpop.permute.xlu0 %4322
    %4324 = vrot.lane.b32.xlu0 %v4154, 112
    %v4325 = vpop.permute.xlu0 %4324
    %4326 = vrot.lane.b32.xlu0 %v4157, 112
    %v4327 = vpop.permute.xlu0 %4326
    %4328 = vrot.lane.b32.xlu0 %v4159, 112
    %v4329 = vpop.permute.xlu0 %4328
    %4330 = vrot.lane.b32.xlu0 %v4162, 112
    %v4331 = vpop.permute.xlu0 %4330
    %4332 = vrot.lane.b32.xlu0 %v4164, 112
    %v4333 = vpop.permute.xlu0 %4332
    %4340 = vrot.lane.b32.xlu0 %v4152, 104
    %v4341 = vpop.permute.xlu0 %4340
    %4342 = vrot.lane.b32.xlu0 %v4154, 104
    %v4343 = vpop.permute.xlu0 %4342
    %4344 = vrot.lane.b32.xlu0 %v4157, 104
    %v4345 = vpop.permute.xlu0 %4344
    %4346 = vrot.lane.b32.xlu0 %v4159, 104
    %v4347 = vpop.permute.xlu0 %4346
    %4348 = vrot.lane.b32.xlu0 %v4162, 104
    %v4349 = vpop.permute.xlu0 %4348
    %4350 = vrot.lane.b32.xlu0 %v4164, 104
    %v4351 = vpop.permute.xlu0 %4350
    %4358 = vrot.lane.b32.xlu0 %v4152, 96
    %v4359 = vpop.permute.xlu0 %4358
    %4360 = vrot.lane.b32.xlu0 %v4154, 96
    %v4361 = vpop.permute.xlu0 %4360
    %4362 = vrot.lane.b32.xlu0 %v4157, 96
    %v4363 = vpop.permute.xlu0 %4362
    %4364 = vrot.lane.b32.xlu0 %v4159, 96
    %v4365 = vpop.permute.xlu0 %4364
    %4366 = vrot.lane.b32.xlu0 %v4162, 96
    %v4367 = vpop.permute.xlu0 %4366
    %4368 = vrot.lane.b32.xlu0 %v4164, 96
    %v4369 = vpop.permute.xlu0 %4368
    %4376 = vrot.lane.b32.xlu0 %v4152, 88
    %v4377 = vpop.permute.xlu0 %4376
    %4378 = vrot.lane.b32.xlu0 %v4154, 88
    %v4379 = vpop.permute.xlu0 %4378
    %4380 = vrot.lane.b32.xlu0 %v4157, 88
    %v4381 = vpop.permute.xlu0 %4380
    %4382 = vrot.lane.b32.xlu0 %v4159, 88
    %v4383 = vpop.permute.xlu0 %4382
    %4384 = vrot.lane.b32.xlu0 %v4162, 88
    %v4385 = vpop.permute.xlu0 %4384
    %4386 = vrot.lane.b32.xlu0 %v4164, 88
    %v4387 = vpop.permute.xlu0 %4386
    %4394 = vrot.lane.b32.xlu0 %v4152, 80
    %v4395 = vpop.permute.xlu0 %4394
    %4396 = vrot.lane.b32.xlu0 %v4154, 80
    %v4397 = vpop.permute.xlu0 %4396
    %4398 = vrot.lane.b32.xlu0 %v4157, 80
    %v4399 = vpop.permute.xlu0 %4398
    %4400 = vrot.lane.b32.xlu0 %v4159, 80
    %v4401 = vpop.permute.xlu0 %4400
    %4402 = vrot.lane.b32.xlu0 %v4162, 80
    %v4403 = vpop.permute.xlu0 %4402
    %4404 = vrot.lane.b32.xlu0 %v4164, 80
    %v4405 = vpop.permute.xlu0 %4404
    %4412 = vrot.lane.b32.xlu0 %v4152, 72
    %v4413 = vpop.permute.xlu0 %4412
    %4414 = vrot.lane.b32.xlu0 %v4154, 72
    %v4415 = vpop.permute.xlu0 %4414
    %4416 = vrot.lane.b32.xlu0 %v4157, 72
    %v4417 = vpop.permute.xlu0 %4416
    %4418 = vrot.lane.b32.xlu0 %v4159, 72
    %v4419 = vpop.permute.xlu0 %4418
    %4420 = vrot.lane.b32.xlu0 %v4162, 72
    %v4421 = vpop.permute.xlu0 %4420
    %4422 = vrot.lane.b32.xlu0 %v4164, 72
    %v4423 = vpop.permute.xlu0 %4422
    %v4430 = vpack.c.bf16 %v4128, %v4128
    %v4431 = vpack.c.bf16 %v4130, %v4130
    %v4432 = vpack.c.bf16 %v4133, %v4133
    %v4433 = vpack.c.bf16 %v4135, %v4135
    %v4434 = vpack.c.bf16 %v4138, %v4138
    %v4435 = vpack.c.bf16 %v4140, %v4140
    %v4436 = vpack.c.bf16 %v4173, %v4173
    %v4437 = vpack.c.bf16 %v4175, %v4175
    %v4438 = vpack.c.bf16 %v4177, %v4177
    %v4439 = vpack.c.bf16 %v4179, %v4179
    %v4440 = vpack.c.bf16 %v4181, %v4181
    %v4441 = vpack.c.bf16 %v4183, %v4183
    %v4442 = vpack.c.bf16 %v4191, %v4191
    %v4443 = vpack.c.bf16 %v4193, %v4193
    %v4444 = vpack.c.bf16 %v4195, %v4195
    %v4445 = vpack.c.bf16 %v4197, %v4197
    %v4446 = vpack.c.bf16 %v4199, %v4199
    %v4447 = vpack.c.bf16 %v4201, %v4201
    %v4448 = vpack.c.bf16 %v4209, %v4209
    %v4449 = vpack.c.bf16 %v4211, %v4211
    %v4450 = vpack.c.bf16 %v4213, %v4213
    %v4451 = vpack.c.bf16 %v4215, %v4215
    %v4452 = vpack.c.bf16 %v4217, %v4217
    %v4453 = vpack.c.bf16 %v4219, %v4219
    %v4454 = vpack.c.bf16 %v4227, %v4227
    %v4455 = vpack.c.bf16 %v4229, %v4229
    %v4456 = vpack.c.bf16 %v4231, %v4231
    %v4457 = vpack.c.bf16 %v4233, %v4233
    %v4458 = vpack.c.bf16 %v4235, %v4235
    %v4459 = vpack.c.bf16 %v4237, %v4237
    %v4460 = vpack.c.bf16 %v4245, %v4245
    %v4461 = vpack.c.bf16 %v4247, %v4247
    %v4462 = vpack.c.bf16 %v4249, %v4249
    %v4463 = vpack.c.bf16 %v4251, %v4251
    %v4464 = vpack.c.bf16 %v4253, %v4253
    %v4465 = vpack.c.bf16 %v4255, %v4255
    %v4466 = vpack.c.bf16 %v4263, %v4263
    %v4467 = vpack.c.bf16 %v4265, %v4265
    %v4468 = vpack.c.bf16 %v4267, %v4267
    %v4469 = vpack.c.bf16 %v4269, %v4269
    %v4470 = vpack.c.bf16 %v4271, %v4271
    %v4471 = vpack.c.bf16 %v4273, %v4273
    %v4472 = vpack.c.bf16 %v4281, %v4281
    %v4473 = vpack.c.bf16 %v4283, %v4283
    %v4474 = vpack.c.bf16 %v4285, %v4285
    %v4475 = vpack.c.bf16 %v4287, %v4287
    %v4476 = vpack.c.bf16 %v4289, %v4289
    %v4477 = vpack.c.bf16 %v4291, %v4291
    %v4479 = vunpack.c.l.b16 %v4430
    %v4480 = vpack.c.b16 %v4479, %v4479
    %4481 = vrot.lane.b32.xlu0 %v4480, 64
    %v4482 = vpop.permute.xlu0 %4481
    %v4484 = vsel %vm604, %v4430, 0
    %v4487 = vsel %vm604, %v4482, 0
    %4489 = vmatpush.bf16.xpose.msra.mxu0 0
    %4490 = vmatpush.bf16.xpose.msra.mxu0 0
    %4491 = vmatpush.bf16.xpose.msra.mxu0 0
    %4492 = vmatpush.bf16.xpose.msra.mxu0 0
    %4493 = vmatpush.bf16.xpose.msra.mxu0 0
    %4494 = vmatpush.bf16.xpose.msra.mxu0 0
    %4495 = vmatpush.bf16.xpose.msra.mxu0 0
    %4496 = vmatpush.bf16.xpose.msra.mxu0 %v4487
    %4497 = vmatmul.bf16.gmra.mxu0 %v4484
    %v4498 = vpop.f32.mrf.mxu0
    %v4499 = vadd.f32 0.0, %v4498
    %v4500 = vpop.f32.mrf.mxu0
    %4501 = vdwg.mxu0
    %v4503 = vunpack.c.l.b16 %v4431
    %v4504 = vpack.c.b16 %v4503, %v4503
    %4505 = vrot.lane.b32.xlu0 %v4504, 64
    %v4506 = vpop.permute.xlu0 %4505
    %v4508 = vsel %vm604, %v4431, 0
    %v4511 = vsel %vm604, %v4506, 0
    %4513 = vmatpush.bf16.xpose.msra.mxu0 0
    %4514 = vmatpush.bf16.xpose.msra.mxu0 0
    %4515 = vmatpush.bf16.xpose.msra.mxu0 0
    %4516 = vmatpush.bf16.xpose.msra.mxu0 0
    %4517 = vmatpush.bf16.xpose.msra.mxu0 0
    %4518 = vmatpush.bf16.xpose.msra.mxu0 0
    %4519 = vmatpush.bf16.xpose.msra.mxu0 0
    %4520 = vmatpush.bf16.xpose.msra.mxu0 %v4511
    %4521 = vmatmul.bf16.gmra.mxu0 %v4508
    %v4522 = vpop.f32.mrf.mxu0
    %v4523 = vadd.f32 0.0, %v4522
    %v4524 = vpop.f32.mrf.mxu0
    %4525 = vdwg.mxu0
    %v4527 = vunpack.c.l.b16 %v4432
    %v4528 = vpack.c.b16 %v4527, %v4527
    %4529 = vrot.lane.b32.xlu0 %v4528, 64
    %v4530 = vpop.permute.xlu0 %4529
    %v4532 = vsel %vm604, %v4432, 0
    %v4535 = vsel %vm604, %v4530, 0
    %4537 = vmatpush.bf16.xpose.msra.mxu0 0
    %4538 = vmatpush.bf16.xpose.msra.mxu0 0
    %4539 = vmatpush.bf16.xpose.msra.mxu0 0
    %4540 = vmatpush.bf16.xpose.msra.mxu0 0
    %4541 = vmatpush.bf16.xpose.msra.mxu0 0
    %4542 = vmatpush.bf16.xpose.msra.mxu0 0
    %4543 = vmatpush.bf16.xpose.msra.mxu0 0
    %4544 = vmatpush.bf16.xpose.msra.mxu0 %v4535
    %4545 = vmatmul.bf16.gmra.mxu0 %v4532
    %v4546 = vpop.f32.mrf.mxu0
    %v4547 = vadd.f32 0.0, %v4546
    %v4548 = vpop.f32.mrf.mxu0
    %4549 = vdwg.mxu0
    %v4551 = vunpack.c.l.b16 %v4433
    %v4552 = vpack.c.b16 %v4551, %v4551
    %4553 = vrot.lane.b32.xlu0 %v4552, 64
    %v4554 = vpop.permute.xlu0 %4553
    %v4556 = vsel %vm604, %v4433, 0
    %v4559 = vsel %vm604, %v4554, 0
    %4561 = vmatpush.bf16.xpose.msra.mxu0 0
    %4562 = vmatpush.bf16.xpose.msra.mxu0 0
    %4563 = vmatpush.bf16.xpose.msra.mxu0 0
    %4564 = vmatpush.bf16.xpose.msra.mxu0 0
    %4565 = vmatpush.bf16.xpose.msra.mxu0 0
    %4566 = vmatpush.bf16.xpose.msra.mxu0 0
    %4567 = vmatpush.bf16.xpose.msra.mxu0 0
    %4568 = vmatpush.bf16.xpose.msra.mxu0 %v4559
    %4569 = vmatmul.bf16.gmra.mxu0 %v4556
    %v4570 = vpop.f32.mrf.mxu0
    %v4571 = vadd.f32 0.0, %v4570
    %v4572 = vpop.f32.mrf.mxu0
    %4573 = vdwg.mxu0
    %v4575 = vunpack.c.l.b16 %v4434
    %v4576 = vpack.c.b16 %v4575, %v4575
    %4577 = vrot.lane.b32.xlu0 %v4576, 64
    %v4578 = vpop.permute.xlu0 %4577
    %v4580 = vsel %vm604, %v4434, 0
    %v4583 = vsel %vm604, %v4578, 0
    %4585 = vmatpush.bf16.xpose.msra.mxu0 0
    %4586 = vmatpush.bf16.xpose.msra.mxu0 0
    %4587 = vmatpush.bf16.xpose.msra.mxu0 0
    %4588 = vmatpush.bf16.xpose.msra.mxu0 0
    %4589 = vmatpush.bf16.xpose.msra.mxu0 0
    %4590 = vmatpush.bf16.xpose.msra.mxu0 0
    %4591 = vmatpush.bf16.xpose.msra.mxu0 0
    %4592 = vmatpush.bf16.xpose.msra.mxu0 %v4583
    %4593 = vmatmul.bf16.gmra.mxu0 %v4580
    %v4594 = vpop.f32.mrf.mxu0
    %v4595 = vadd.f32 0.0, %v4594
    %v4596 = vpop.f32.mrf.mxu0
    %4597 = vdwg.mxu0
    %v4599 = vunpack.c.l.b16 %v4435
    %v4600 = vpack.c.b16 %v4599, %v4599
    %4601 = vrot.lane.b32.xlu0 %v4600, 64
    %v4602 = vpop.permute.xlu0 %4601
    %v4604 = vsel %vm604, %v4435, 0
    %v4607 = vsel %vm604, %v4602, 0
    %4609 = vmatpush.bf16.xpose.msra.mxu0 0
    %4610 = vmatpush.bf16.xpose.msra.mxu0 0
    %4611 = vmatpush.bf16.xpose.msra.mxu0 0
    %4612 = vmatpush.bf16.xpose.msra.mxu0 0
    %4613 = vmatpush.bf16.xpose.msra.mxu0 0
    %4614 = vmatpush.bf16.xpose.msra.mxu0 0
    %4615 = vmatpush.bf16.xpose.msra.mxu0 0
    %4616 = vmatpush.bf16.xpose.msra.mxu0 %v4607
    %4617 = vmatmul.bf16.gmra.mxu0 %v4604
    %v4618 = vpop.f32.mrf.mxu0
    %v4619 = vadd.f32 0.0, %v4618
    %v4620 = vpop.f32.mrf.mxu0
    %4621 = vdwg.mxu0
    %v4623 = vunpack.c.l.b16 %v4436
    %v4624 = vpack.c.b16 %v4623, %v4623
    %4625 = vrot.lane.b32.xlu0 %v4624, 64
    %v4626 = vpop.permute.xlu0 %4625
    %v4628 = vsel %vm604, %v4436, 0
    %v4631 = vsel %vm604, %v4626, 0
    %4633 = vmatpush.bf16.xpose.msra.mxu0 0
    %4634 = vmatpush.bf16.xpose.msra.mxu0 0
    %4635 = vmatpush.bf16.xpose.msra.mxu0 0
    %4636 = vmatpush.bf16.xpose.msra.mxu0 0
    %4637 = vmatpush.bf16.xpose.msra.mxu0 0
    %4638 = vmatpush.bf16.xpose.msra.mxu0 0
    %4639 = vmatpush.bf16.xpose.msra.mxu0 0
    %4640 = vmatpush.bf16.xpose.msra.mxu0 %v4631
    %4641 = vmatmul.bf16.gmra.mxu0 %v4628
    %v4642 = vpop.f32.mrf.mxu0
    %v4643 = vadd.f32 0.0, %v4642
    %v4644 = vpop.f32.mrf.mxu0
    %4645 = vdwg.mxu0
    %v4647 = vunpack.c.l.b16 %v4437
    %v4648 = vpack.c.b16 %v4647, %v4647
    %4649 = vrot.lane.b32.xlu0 %v4648, 64
    %v4650 = vpop.permute.xlu0 %4649
    %v4652 = vsel %vm604, %v4437, 0
    %v4655 = vsel %vm604, %v4650, 0
    %4657 = vmatpush.bf16.xpose.msra.mxu0 0
    %4658 = vmatpush.bf16.xpose.msra.mxu0 0
    %4659 = vmatpush.bf16.xpose.msra.mxu0 0
    %4660 = vmatpush.bf16.xpose.msra.mxu0 0
    %4661 = vmatpush.bf16.xpose.msra.mxu0 0
    %4662 = vmatpush.bf16.xpose.msra.mxu0 0
    %4663 = vmatpush.bf16.xpose.msra.mxu0 0
    %4664 = vmatpush.bf16.xpose.msra.mxu0 %v4655
    %4665 = vmatmul.bf16.gmra.mxu0 %v4652
    %v4666 = vpop.f32.mrf.mxu0
    %v4667 = vadd.f32 0.0, %v4666
    %v4668 = vpop.f32.mrf.mxu0
    %4669 = vdwg.mxu0
    %v4671 = vunpack.c.l.b16 %v4438
    %v4672 = vpack.c.b16 %v4671, %v4671
    %4673 = vrot.lane.b32.xlu0 %v4672, 64
    %v4674 = vpop.permute.xlu0 %4673
    %v4676 = vsel %vm604, %v4438, 0
    %v4679 = vsel %vm604, %v4674, 0
    %4681 = vmatpush.bf16.xpose.msra.mxu0 0
    %4682 = vmatpush.bf16.xpose.msra.mxu0 0
    %4683 = vmatpush.bf16.xpose.msra.mxu0 0
    %4684 = vmatpush.bf16.xpose.msra.mxu0 0
    %4685 = vmatpush.bf16.xpose.msra.mxu0 0
    %4686 = vmatpush.bf16.xpose.msra.mxu0 0
    %4687 = vmatpush.bf16.xpose.msra.mxu0 0
    %4688 = vmatpush.bf16.xpose.msra.mxu0 %v4679
    %4689 = vmatmul.bf16.gmra.mxu0 %v4676
    %v4690 = vpop.f32.mrf.mxu0
    %v4691 = vadd.f32 0.0, %v4690
    %v4692 = vpop.f32.mrf.mxu0
    %4693 = vdwg.mxu0
    %v4695 = vunpack.c.l.b16 %v4439
    %v4696 = vpack.c.b16 %v4695, %v4695
    %4697 = vrot.lane.b32.xlu0 %v4696, 64
    %v4698 = vpop.permute.xlu0 %4697
    %v4700 = vsel %vm604, %v4439, 0
    %v4703 = vsel %vm604, %v4698, 0
    %4705 = vmatpush.bf16.xpose.msra.mxu0 0
    %4706 = vmatpush.bf16.xpose.msra.mxu0 0
    %4707 = vmatpush.bf16.xpose.msra.mxu0 0
    %4708 = vmatpush.bf16.xpose.msra.mxu0 0
    %4709 = vmatpush.bf16.xpose.msra.mxu0 0
    %4710 = vmatpush.bf16.xpose.msra.mxu0 0
    %4711 = vmatpush.bf16.xpose.msra.mxu0 0
    %4712 = vmatpush.bf16.xpose.msra.mxu0 %v4703
    %4713 = vmatmul.bf16.gmra.mxu0 %v4700
    %v4714 = vpop.f32.mrf.mxu0
    %v4715 = vadd.f32 0.0, %v4714
    %v4716 = vpop.f32.mrf.mxu0
    %4717 = vdwg.mxu0
    %v4719 = vunpack.c.l.b16 %v4440
    %v4720 = vpack.c.b16 %v4719, %v4719
    %4721 = vrot.lane.b32.xlu0 %v4720, 64
    %v4722 = vpop.permute.xlu0 %4721
    %v4724 = vsel %vm604, %v4440, 0
    %v4727 = vsel %vm604, %v4722, 0
    %4729 = vmatpush.bf16.xpose.msra.mxu0 0
    %4730 = vmatpush.bf16.xpose.msra.mxu0 0
    %4731 = vmatpush.bf16.xpose.msra.mxu0 0
    %4732 = vmatpush.bf16.xpose.msra.mxu0 0
    %4733 = vmatpush.bf16.xpose.msra.mxu0 0
    %4734 = vmatpush.bf16.xpose.msra.mxu0 0
    %4735 = vmatpush.bf16.xpose.msra.mxu0 0
    %4736 = vmatpush.bf16.xpose.msra.mxu0 %v4727
    %4737 = vmatmul.bf16.gmra.mxu0 %v4724
    %v4738 = vpop.f32.mrf.mxu0
    %v4739 = vadd.f32 0.0, %v4738
    %v4740 = vpop.f32.mrf.mxu0
    %4741 = vdwg.mxu0
    %v4743 = vunpack.c.l.b16 %v4441
    %v4744 = vpack.c.b16 %v4743, %v4743
    %4745 = vrot.lane.b32.xlu0 %v4744, 64
    %v4746 = vpop.permute.xlu0 %4745
    %v4748 = vsel %vm604, %v4441, 0
    %v4751 = vsel %vm604, %v4746, 0
    %4753 = vmatpush.bf16.xpose.msra.mxu0 0
    %4754 = vmatpush.bf16.xpose.msra.mxu0 0
    %4755 = vmatpush.bf16.xpose.msra.mxu0 0
    %4756 = vmatpush.bf16.xpose.msra.mxu0 0
    %4757 = vmatpush.bf16.xpose.msra.mxu0 0
    %4758 = vmatpush.bf16.xpose.msra.mxu0 0
    %4759 = vmatpush.bf16.xpose.msra.mxu0 0
    %4760 = vmatpush.bf16.xpose.msra.mxu0 %v4751
    %4761 = vmatmul.bf16.gmra.mxu0 %v4748
    %v4762 = vpop.f32.mrf.mxu0
    %v4763 = vadd.f32 0.0, %v4762
    %v4764 = vpop.f32.mrf.mxu0
    %4765 = vdwg.mxu0
    %v4767 = vunpack.c.l.b16 %v4442
    %v4768 = vpack.c.b16 %v4767, %v4767
    %4769 = vrot.lane.b32.xlu0 %v4768, 64
    %v4770 = vpop.permute.xlu0 %4769
    %v4772 = vsel %vm604, %v4442, 0
    %v4775 = vsel %vm604, %v4770, 0
    %4777 = vmatpush.bf16.xpose.msra.mxu0 0
    %4778 = vmatpush.bf16.xpose.msra.mxu0 0
    %4779 = vmatpush.bf16.xpose.msra.mxu0 0
    %4780 = vmatpush.bf16.xpose.msra.mxu0 0
    %4781 = vmatpush.bf16.xpose.msra.mxu0 0
    %4782 = vmatpush.bf16.xpose.msra.mxu0 0
    %4783 = vmatpush.bf16.xpose.msra.mxu0 0
    %4784 = vmatpush.bf16.xpose.msra.mxu0 %v4775
    %4785 = vmatmul.bf16.gmra.mxu0 %v4772
    %v4786 = vpop.f32.mrf.mxu0
    %v4787 = vadd.f32 0.0, %v4786
    %v4788 = vpop.f32.mrf.mxu0
    %4789 = vdwg.mxu0
    %v4791 = vunpack.c.l.b16 %v4443
    %v4792 = vpack.c.b16 %v4791, %v4791
    %4793 = vrot.lane.b32.xlu0 %v4792, 64
    %v4794 = vpop.permute.xlu0 %4793
    %v4796 = vsel %vm604, %v4443, 0
    %v4799 = vsel %vm604, %v4794, 0
    %4801 = vmatpush.bf16.xpose.msra.mxu0 0
    %4802 = vmatpush.bf16.xpose.msra.mxu0 0
    %4803 = vmatpush.bf16.xpose.msra.mxu0 0
    %4804 = vmatpush.bf16.xpose.msra.mxu0 0
    %4805 = vmatpush.bf16.xpose.msra.mxu0 0
    %4806 = vmatpush.bf16.xpose.msra.mxu0 0
    %4807 = vmatpush.bf16.xpose.msra.mxu0 0
    %4808 = vmatpush.bf16.xpose.msra.mxu0 %v4799
    %4809 = vmatmul.bf16.gmra.mxu0 %v4796
    %v4810 = vpop.f32.mrf.mxu0
    %v4811 = vadd.f32 0.0, %v4810
    %v4812 = vpop.f32.mrf.mxu0
    %4813 = vdwg.mxu0
    %v4815 = vunpack.c.l.b16 %v4444
    %v4816 = vpack.c.b16 %v4815, %v4815
    %4817 = vrot.lane.b32.xlu0 %v4816, 64
    %v4818 = vpop.permute.xlu0 %4817
    %v4820 = vsel %vm604, %v4444, 0
    %v4823 = vsel %vm604, %v4818, 0
    %4825 = vmatpush.bf16.xpose.msra.mxu0 0
    %4826 = vmatpush.bf16.xpose.msra.mxu0 0
    %4827 = vmatpush.bf16.xpose.msra.mxu0 0
    %4828 = vmatpush.bf16.xpose.msra.mxu0 0
    %4829 = vmatpush.bf16.xpose.msra.mxu0 0
    %4830 = vmatpush.bf16.xpose.msra.mxu0 0
    %4831 = vmatpush.bf16.xpose.msra.mxu0 0
    %4832 = vmatpush.bf16.xpose.msra.mxu0 %v4823
    %4833 = vmatmul.bf16.gmra.mxu0 %v4820
    %v4834 = vpop.f32.mrf.mxu0
    %v4835 = vadd.f32 0.0, %v4834
    %v4836 = vpop.f32.mrf.mxu0
    %4837 = vdwg.mxu0
    %v4839 = vunpack.c.l.b16 %v4445
    %v4840 = vpack.c.b16 %v4839, %v4839
    %4841 = vrot.lane.b32.xlu0 %v4840, 64
    %v4842 = vpop.permute.xlu0 %4841
    %v4844 = vsel %vm604, %v4445, 0
    %v4847 = vsel %vm604, %v4842, 0
    %4849 = vmatpush.bf16.xpose.msra.mxu0 0
    %4850 = vmatpush.bf16.xpose.msra.mxu0 0
    %4851 = vmatpush.bf16.xpose.msra.mxu0 0
    %4852 = vmatpush.bf16.xpose.msra.mxu0 0
    %4853 = vmatpush.bf16.xpose.msra.mxu0 0
    %4854 = vmatpush.bf16.xpose.msra.mxu0 0
    %4855 = vmatpush.bf16.xpose.msra.mxu0 0
    %4856 = vmatpush.bf16.xpose.msra.mxu0 %v4847
    %4857 = vmatmul.bf16.gmra.mxu0 %v4844
    %v4858 = vpop.f32.mrf.mxu0
    %v4859 = vadd.f32 0.0, %v4858
    %v4860 = vpop.f32.mrf.mxu0
    %4861 = vdwg.mxu0
    %v4863 = vunpack.c.l.b16 %v4446
    %v4864 = vpack.c.b16 %v4863, %v4863
    %4865 = vrot.lane.b32.xlu0 %v4864, 64
    %v4866 = vpop.permute.xlu0 %4865
    %v4868 = vsel %vm604, %v4446, 0
    %v4871 = vsel %vm604, %v4866, 0
    %4873 = vmatpush.bf16.xpose.msra.mxu0 0
    %4874 = vmatpush.bf16.xpose.msra.mxu0 0
    %4875 = vmatpush.bf16.xpose.msra.mxu0 0
    %4876 = vmatpush.bf16.xpose.msra.mxu0 0
    %4877 = vmatpush.bf16.xpose.msra.mxu0 0
    %4878 = vmatpush.bf16.xpose.msra.mxu0 0
    %4879 = vmatpush.bf16.xpose.msra.mxu0 0
    %4880 = vmatpush.bf16.xpose.msra.mxu0 %v4871
    %4881 = vmatmul.bf16.gmra.mxu0 %v4868
    %v4882 = vpop.f32.mrf.mxu0
    %v4883 = vadd.f32 0.0, %v4882
    %v4884 = vpop.f32.mrf.mxu0
    %4885 = vdwg.mxu0
    %v4887 = vunpack.c.l.b16 %v4447
    %v4888 = vpack.c.b16 %v4887, %v4887
    %4889 = vrot.lane.b32.xlu0 %v4888, 64
    %v4890 = vpop.permute.xlu0 %4889
    %v4892 = vsel %vm604, %v4447, 0
    %v4895 = vsel %vm604, %v4890, 0
    %4897 = vmatpush.bf16.xpose.msra.mxu0 0
    %4898 = vmatpush.bf16.xpose.msra.mxu0 0
    %4899 = vmatpush.bf16.xpose.msra.mxu0 0
    %4900 = vmatpush.bf16.xpose.msra.mxu0 0
    %4901 = vmatpush.bf16.xpose.msra.mxu0 0
    %4902 = vmatpush.bf16.xpose.msra.mxu0 0
    %4903 = vmatpush.bf16.xpose.msra.mxu0 0
    %4904 = vmatpush.bf16.xpose.msra.mxu0 %v4895
    %4905 = vmatmul.bf16.gmra.mxu0 %v4892
    %v4906 = vpop.f32.mrf.mxu0
    %v4907 = vadd.f32 0.0, %v4906
    %v4908 = vpop.f32.mrf.mxu0
    %4909 = vdwg.mxu0
    %v4911 = vunpack.c.l.b16 %v4448
    %v4912 = vpack.c.b16 %v4911, %v4911
    %4913 = vrot.lane.b32.xlu0 %v4912, 64
    %v4914 = vpop.permute.xlu0 %4913
    %v4916 = vsel %vm604, %v4448, 0
    %v4919 = vsel %vm604, %v4914, 0
    %4921 = vmatpush.bf16.xpose.msra.mxu0 0
    %4922 = vmatpush.bf16.xpose.msra.mxu0 0
    %4923 = vmatpush.bf16.xpose.msra.mxu0 0
    %4924 = vmatpush.bf16.xpose.msra.mxu0 0
    %4925 = vmatpush.bf16.xpose.msra.mxu0 0
    %4926 = vmatpush.bf16.xpose.msra.mxu0 0
    %4927 = vmatpush.bf16.xpose.msra.mxu0 0
    %4928 = vmatpush.bf16.xpose.msra.mxu0 %v4919
    %4929 = vmatmul.bf16.gmra.mxu0 %v4916
    %v4930 = vpop.f32.mrf.mxu0
    %v4931 = vadd.f32 0.0, %v4930
    %v4932 = vpop.f32.mrf.mxu0
    %4933 = vdwg.mxu0
    %v4935 = vunpack.c.l.b16 %v4449
    %v4936 = vpack.c.b16 %v4935, %v4935
    %4937 = vrot.lane.b32.xlu0 %v4936, 64
    %v4938 = vpop.permute.xlu0 %4937
    %v4940 = vsel %vm604, %v4449, 0
    %v4943 = vsel %vm604, %v4938, 0
    %4945 = vmatpush.bf16.xpose.msra.mxu0 0
    %4946 = vmatpush.bf16.xpose.msra.mxu0 0
    %4947 = vmatpush.bf16.xpose.msra.mxu0 0
    %4948 = vmatpush.bf16.xpose.msra.mxu0 0
    %4949 = vmatpush.bf16.xpose.msra.mxu0 0
    %4950 = vmatpush.bf16.xpose.msra.mxu0 0
    %4951 = vmatpush.bf16.xpose.msra.mxu0 0
    %4952 = vmatpush.bf16.xpose.msra.mxu0 %v4943
    %4953 = vmatmul.bf16.gmra.mxu0 %v4940
    %v4954 = vpop.f32.mrf.mxu0
    %v4955 = vadd.f32 0.0, %v4954
    %v4956 = vpop.f32.mrf.mxu0
    %4957 = vdwg.mxu0
    %v4959 = vunpack.c.l.b16 %v4450
    %v4960 = vpack.c.b16 %v4959, %v4959
    %4961 = vrot.lane.b32.xlu0 %v4960, 64
    %v4962 = vpop.permute.xlu0 %4961
    %v4964 = vsel %vm604, %v4450, 0
    %v4967 = vsel %vm604, %v4962, 0
    %4969 = vmatpush.bf16.xpose.msra.mxu0 0
    %4970 = vmatpush.bf16.xpose.msra.mxu0 0
    %4971 = vmatpush.bf16.xpose.msra.mxu0 0
    %4972 = vmatpush.bf16.xpose.msra.mxu0 0
    %4973 = vmatpush.bf16.xpose.msra.mxu0 0
    %4974 = vmatpush.bf16.xpose.msra.mxu0 0
    %4975 = vmatpush.bf16.xpose.msra.mxu0 0
    %4976 = vmatpush.bf16.xpose.msra.mxu0 %v4967
    %4977 = vmatmul.bf16.gmra.mxu0 %v4964
    %v4978 = vpop.f32.mrf.mxu0
    %v4979 = vadd.f32 0.0, %v4978
    %v4980 = vpop.f32.mrf.mxu0
    %4981 = vdwg.mxu0
    %v4983 = vunpack.c.l.b16 %v4451
    %v4984 = vpack.c.b16 %v4983, %v4983
    %4985 = vrot.lane.b32.xlu0 %v4984, 64
    %v4986 = vpop.permute.xlu0 %4985
    %v4988 = vsel %vm604, %v4451, 0
    %v4991 = vsel %vm604, %v4986, 0
    %4993 = vmatpush.bf16.xpose.msra.mxu0 0
    %4994 = vmatpush.bf16.xpose.msra.mxu0 0
    %4995 = vmatpush.bf16.xpose.msra.mxu0 0
    %4996 = vmatpush.bf16.xpose.msra.mxu0 0
    %4997 = vmatpush.bf16.xpose.msra.mxu0 0
    %4998 = vmatpush.bf16.xpose.msra.mxu0 0
    %4999 = vmatpush.bf16.xpose.msra.mxu0 0
    %5000 = vmatpush.bf16.xpose.msra.mxu0 %v4991
    %5001 = vmatmul.bf16.gmra.mxu0 %v4988
    %v5002 = vpop.f32.mrf.mxu0
    %v5003 = vadd.f32 0.0, %v5002
    %v5004 = vpop.f32.mrf.mxu0
    %5005 = vdwg.mxu0
    %v5007 = vunpack.c.l.b16 %v4452
    %v5008 = vpack.c.b16 %v5007, %v5007
    %5009 = vrot.lane.b32.xlu0 %v5008, 64
    %v5010 = vpop.permute.xlu0 %5009
    %v5012 = vsel %vm604, %v4452, 0
    %v5015 = vsel %vm604, %v5010, 0
    %5017 = vmatpush.bf16.xpose.msra.mxu0 0
    %5018 = vmatpush.bf16.xpose.msra.mxu0 0
    %5019 = vmatpush.bf16.xpose.msra.mxu0 0
    %5020 = vmatpush.bf16.xpose.msra.mxu0 0
    %5021 = vmatpush.bf16.xpose.msra.mxu0 0
    %5022 = vmatpush.bf16.xpose.msra.mxu0 0
    %5023 = vmatpush.bf16.xpose.msra.mxu0 0
    %5024 = vmatpush.bf16.xpose.msra.mxu0 %v5015
    %5025 = vmatmul.bf16.gmra.mxu0 %v5012
    %v5026 = vpop.f32.mrf.mxu0
    %v5027 = vadd.f32 0.0, %v5026
    %v5028 = vpop.f32.mrf.mxu0
    %5029 = vdwg.mxu0
    %v5031 = vunpack.c.l.b16 %v4453
    %v5032 = vpack.c.b16 %v5031, %v5031
    %5033 = vrot.lane.b32.xlu0 %v5032, 64
    %v5034 = vpop.permute.xlu0 %5033
    %v5036 = vsel %vm604, %v4453, 0
    %v5039 = vsel %vm604, %v5034, 0
    %5041 = vmatpush.bf16.xpose.msra.mxu0 0
    %5042 = vmatpush.bf16.xpose.msra.mxu0 0
    %5043 = vmatpush.bf16.xpose.msra.mxu0 0
    %5044 = vmatpush.bf16.xpose.msra.mxu0 0
    %5045 = vmatpush.bf16.xpose.msra.mxu0 0
    %5046 = vmatpush.bf16.xpose.msra.mxu0 0
    %5047 = vmatpush.bf16.xpose.msra.mxu0 0
    %5048 = vmatpush.bf16.xpose.msra.mxu0 %v5039
    %5049 = vmatmul.bf16.gmra.mxu0 %v5036
    %v5050 = vpop.f32.mrf.mxu0
    %v5051 = vadd.f32 0.0, %v5050
    %v5052 = vpop.f32.mrf.mxu0
    %5053 = vdwg.mxu0
    %v5055 = vunpack.c.l.b16 %v4454
    %v5056 = vpack.c.b16 %v5055, %v5055
    %5057 = vrot.lane.b32.xlu0 %v5056, 64
    %v5058 = vpop.permute.xlu0 %5057
    %v5060 = vsel %vm604, %v4454, 0
    %v5063 = vsel %vm604, %v5058, 0
    %5065 = vmatpush.bf16.xpose.msra.mxu0 0
    %5066 = vmatpush.bf16.xpose.msra.mxu0 0
    %5067 = vmatpush.bf16.xpose.msra.mxu0 0
    %5068 = vmatpush.bf16.xpose.msra.mxu0 0
    %5069 = vmatpush.bf16.xpose.msra.mxu0 0
    %5070 = vmatpush.bf16.xpose.msra.mxu0 0
    %5071 = vmatpush.bf16.xpose.msra.mxu0 0
    %5072 = vmatpush.bf16.xpose.msra.mxu0 %v5063
    %5073 = vmatmul.bf16.gmra.mxu0 %v5060
    %v5074 = vpop.f32.mrf.mxu0
    %v5075 = vadd.f32 0.0, %v5074
    %v5076 = vpop.f32.mrf.mxu0
    %5077 = vdwg.mxu0
    %v5079 = vunpack.c.l.b16 %v4455
    %v5080 = vpack.c.b16 %v5079, %v5079
    %5081 = vrot.lane.b32.xlu0 %v5080, 64
    %v5082 = vpop.permute.xlu0 %5081
    %v5084 = vsel %vm604, %v4455, 0
    %v5087 = vsel %vm604, %v5082, 0
    %5089 = vmatpush.bf16.xpose.msra.mxu0 0
    %5090 = vmatpush.bf16.xpose.msra.mxu0 0
    %5091 = vmatpush.bf16.xpose.msra.mxu0 0
    %5092 = vmatpush.bf16.xpose.msra.mxu0 0
    %5093 = vmatpush.bf16.xpose.msra.mxu0 0
    %5094 = vmatpush.bf16.xpose.msra.mxu0 0
    %5095 = vmatpush.bf16.xpose.msra.mxu0 0
    %5096 = vmatpush.bf16.xpose.msra.mxu0 %v5087
    %5097 = vmatmul.bf16.gmra.mxu0 %v5084
    %v5098 = vpop.f32.mrf.mxu0
    %v5099 = vadd.f32 0.0, %v5098
    %v5100 = vpop.f32.mrf.mxu0
    %5101 = vdwg.mxu0
    %v5103 = vunpack.c.l.b16 %v4456
    %v5104 = vpack.c.b16 %v5103, %v5103
    %5105 = vrot.lane.b32.xlu0 %v5104, 64
    %v5106 = vpop.permute.xlu0 %5105
    %v5108 = vsel %vm604, %v4456, 0
    %v5111 = vsel %vm604, %v5106, 0
    %5113 = vmatpush.bf16.xpose.msra.mxu0 0
    %5114 = vmatpush.bf16.xpose.msra.mxu0 0
    %5115 = vmatpush.bf16.xpose.msra.mxu0 0
    %5116 = vmatpush.bf16.xpose.msra.mxu0 0
    %5117 = vmatpush.bf16.xpose.msra.mxu0 0
    %5118 = vmatpush.bf16.xpose.msra.mxu0 0
    %5119 = vmatpush.bf16.xpose.msra.mxu0 0
    %5120 = vmatpush.bf16.xpose.msra.mxu0 %v5111
    %5121 = vmatmul.bf16.gmra.mxu0 %v5108
    %v5122 = vpop.f32.mrf.mxu0
    %v5123 = vadd.f32 0.0, %v5122
    %v5124 = vpop.f32.mrf.mxu0
    %5125 = vdwg.mxu0
    %v5127 = vunpack.c.l.b16 %v4457
    %v5128 = vpack.c.b16 %v5127, %v5127
    %5129 = vrot.lane.b32.xlu0 %v5128, 64
    %v5130 = vpop.permute.xlu0 %5129
    %v5132 = vsel %vm604, %v4457, 0
    %v5135 = vsel %vm604, %v5130, 0
    %5137 = vmatpush.bf16.xpose.msra.mxu0 0
    %5138 = vmatpush.bf16.xpose.msra.mxu0 0
    %5139 = vmatpush.bf16.xpose.msra.mxu0 0
    %5140 = vmatpush.bf16.xpose.msra.mxu0 0
    %5141 = vmatpush.bf16.xpose.msra.mxu0 0
    %5142 = vmatpush.bf16.xpose.msra.mxu0 0
    %5143 = vmatpush.bf16.xpose.msra.mxu0 0
    %5144 = vmatpush.bf16.xpose.msra.mxu0 %v5135
    %5145 = vmatmul.bf16.gmra.mxu0 %v5132
    %v5146 = vpop.f32.mrf.mxu0
    %v5147 = vadd.f32 0.0, %v5146
    %v5148 = vpop.f32.mrf.mxu0
    %5149 = vdwg.mxu0
    %v5151 = vunpack.c.l.b16 %v4458
    %v5152 = vpack.c.b16 %v5151, %v5151
    %5153 = vrot.lane.b32.xlu0 %v5152, 64
    %v5154 = vpop.permute.xlu0 %5153
    %v5156 = vsel %vm604, %v4458, 0
    %v5159 = vsel %vm604, %v5154, 0
    %5161 = vmatpush.bf16.xpose.msra.mxu0 0
    %5162 = vmatpush.bf16.xpose.msra.mxu0 0
    %5163 = vmatpush.bf16.xpose.msra.mxu0 0
    %5164 = vmatpush.bf16.xpose.msra.mxu0 0
    %5165 = vmatpush.bf16.xpose.msra.mxu0 0
    %5166 = vmatpush.bf16.xpose.msra.mxu0 0
    %5167 = vmatpush.bf16.xpose.msra.mxu0 0
    %5168 = vmatpush.bf16.xpose.msra.mxu0 %v5159
    %5169 = vmatmul.bf16.gmra.mxu0 %v5156
    %v5170 = vpop.f32.mrf.mxu0
    %v5171 = vadd.f32 0.0, %v5170
    %v5172 = vpop.f32.mrf.mxu0
    %5173 = vdwg.mxu0
    %v5175 = vunpack.c.l.b16 %v4459
    %v5176 = vpack.c.b16 %v5175, %v5175
    %5177 = vrot.lane.b32.xlu0 %v5176, 64
    %v5178 = vpop.permute.xlu0 %5177
    %v5180 = vsel %vm604, %v4459, 0
    %v5183 = vsel %vm604, %v5178, 0
    %5185 = vmatpush.bf16.xpose.msra.mxu0 0
    %5186 = vmatpush.bf16.xpose.msra.mxu0 0
    %5187 = vmatpush.bf16.xpose.msra.mxu0 0
    %5188 = vmatpush.bf16.xpose.msra.mxu0 0
    %5189 = vmatpush.bf16.xpose.msra.mxu0 0
    %5190 = vmatpush.bf16.xpose.msra.mxu0 0
    %5191 = vmatpush.bf16.xpose.msra.mxu0 0
    %5192 = vmatpush.bf16.xpose.msra.mxu0 %v5183
    %5193 = vmatmul.bf16.gmra.mxu0 %v5180
    %v5194 = vpop.f32.mrf.mxu0
    %v5195 = vadd.f32 0.0, %v5194
    %v5196 = vpop.f32.mrf.mxu0
    %5197 = vdwg.mxu0
    %v5199 = vunpack.c.l.b16 %v4460
    %v5200 = vpack.c.b16 %v5199, %v5199
    %5201 = vrot.lane.b32.xlu0 %v5200, 64
    %v5202 = vpop.permute.xlu0 %5201
    %v5204 = vsel %vm604, %v4460, 0
    %v5207 = vsel %vm604, %v5202, 0
    %5209 = vmatpush.bf16.xpose.msra.mxu0 0
    %5210 = vmatpush.bf16.xpose.msra.mxu0 0
    %5211 = vmatpush.bf16.xpose.msra.mxu0 0
    %5212 = vmatpush.bf16.xpose.msra.mxu0 0
    %5213 = vmatpush.bf16.xpose.msra.mxu0 0
    %5214 = vmatpush.bf16.xpose.msra.mxu0 0
    %5215 = vmatpush.bf16.xpose.msra.mxu0 0
    %5216 = vmatpush.bf16.xpose.msra.mxu0 %v5207
    %5217 = vmatmul.bf16.gmra.mxu0 %v5204
    %v5218 = vpop.f32.mrf.mxu0
    %v5219 = vadd.f32 0.0, %v5218
    %v5220 = vpop.f32.mrf.mxu0
    %5221 = vdwg.mxu0
    %v5223 = vunpack.c.l.b16 %v4461
    %v5224 = vpack.c.b16 %v5223, %v5223
    %5225 = vrot.lane.b32.xlu0 %v5224, 64
    %v5226 = vpop.permute.xlu0 %5225
    %v5228 = vsel %vm604, %v4461, 0
    %v5231 = vsel %vm604, %v5226, 0
    %5233 = vmatpush.bf16.xpose.msra.mxu0 0
    %5234 = vmatpush.bf16.xpose.msra.mxu0 0
    %5235 = vmatpush.bf16.xpose.msra.mxu0 0
    %5236 = vmatpush.bf16.xpose.msra.mxu0 0
    %5237 = vmatpush.bf16.xpose.msra.mxu0 0
    %5238 = vmatpush.bf16.xpose.msra.mxu0 0
    %5239 = vmatpush.bf16.xpose.msra.mxu0 0
    %5240 = vmatpush.bf16.xpose.msra.mxu0 %v5231
    %5241 = vmatmul.bf16.gmra.mxu0 %v5228
    %v5242 = vpop.f32.mrf.mxu0
    %v5243 = vadd.f32 0.0, %v5242
    %v5244 = vpop.f32.mrf.mxu0
    %5245 = vdwg.mxu0
    %v5247 = vunpack.c.l.b16 %v4462
    %v5248 = vpack.c.b16 %v5247, %v5247
    %5249 = vrot.lane.b32.xlu0 %v5248, 64
    %v5250 = vpop.permute.xlu0 %5249
    %v5252 = vsel %vm604, %v4462, 0
    %v5255 = vsel %vm604, %v5250, 0
    %5257 = vmatpush.bf16.xpose.msra.mxu0 0
    %5258 = vmatpush.bf16.xpose.msra.mxu0 0
    %5259 = vmatpush.bf16.xpose.msra.mxu0 0
    %5260 = vmatpush.bf16.xpose.msra.mxu0 0
    %5261 = vmatpush.bf16.xpose.msra.mxu0 0
    %5262 = vmatpush.bf16.xpose.msra.mxu0 0
    %5263 = vmatpush.bf16.xpose.msra.mxu0 0
    %5264 = vmatpush.bf16.xpose.msra.mxu0 %v5255
    %5265 = vmatmul.bf16.gmra.mxu0 %v5252
    %v5266 = vpop.f32.mrf.mxu0
    %v5267 = vadd.f32 0.0, %v5266
    %v5268 = vpop.f32.mrf.mxu0
    %5269 = vdwg.mxu0
    %v5271 = vunpack.c.l.b16 %v4463
    %v5272 = vpack.c.b16 %v5271, %v5271
    %5273 = vrot.lane.b32.xlu0 %v5272, 64
    %v5274 = vpop.permute.xlu0 %5273
    %v5276 = vsel %vm604, %v4463, 0
    %v5279 = vsel %vm604, %v5274, 0
    %5281 = vmatpush.bf16.xpose.msra.mxu0 0
    %5282 = vmatpush.bf16.xpose.msra.mxu0 0
    %5283 = vmatpush.bf16.xpose.msra.mxu0 0
    %5284 = vmatpush.bf16.xpose.msra.mxu0 0
    %5285 = vmatpush.bf16.xpose.msra.mxu0 0
    %5286 = vmatpush.bf16.xpose.msra.mxu0 0
    %5287 = vmatpush.bf16.xpose.msra.mxu0 0
    %5288 = vmatpush.bf16.xpose.msra.mxu0 %v5279
    %5289 = vmatmul.bf16.gmra.mxu0 %v5276
    %v5290 = vpop.f32.mrf.mxu0
    %v5291 = vadd.f32 0.0, %v5290
    %v5292 = vpop.f32.mrf.mxu0
    %5293 = vdwg.mxu0
    %v5295 = vunpack.c.l.b16 %v4464
    %v5296 = vpack.c.b16 %v5295, %v5295
    %5297 = vrot.lane.b32.xlu0 %v5296, 64
    %v5298 = vpop.permute.xlu0 %5297
    %v5300 = vsel %vm604, %v4464, 0
    %v5303 = vsel %vm604, %v5298, 0
    %5305 = vmatpush.bf16.xpose.msra.mxu0 0
    %5306 = vmatpush.bf16.xpose.msra.mxu0 0
    %5307 = vmatpush.bf16.xpose.msra.mxu0 0
    %5308 = vmatpush.bf16.xpose.msra.mxu0 0
    %5309 = vmatpush.bf16.xpose.msra.mxu0 0
    %5310 = vmatpush.bf16.xpose.msra.mxu0 0
    %5311 = vmatpush.bf16.xpose.msra.mxu0 0
    %5312 = vmatpush.bf16.xpose.msra.mxu0 %v5303
    %5313 = vmatmul.bf16.gmra.mxu0 %v5300
    %v5314 = vpop.f32.mrf.mxu0
    %v5315 = vadd.f32 0.0, %v5314
    %v5316 = vpop.f32.mrf.mxu0
    %5317 = vdwg.mxu0
    %v5319 = vunpack.c.l.b16 %v4465
    %v5320 = vpack.c.b16 %v5319, %v5319
    %5321 = vrot.lane.b32.xlu0 %v5320, 64
    %v5322 = vpop.permute.xlu0 %5321
    %v5324 = vsel %vm604, %v4465, 0
    %v5327 = vsel %vm604, %v5322, 0
    %5329 = vmatpush.bf16.xpose.msra.mxu0 0
    %5330 = vmatpush.bf16.xpose.msra.mxu0 0
    %5331 = vmatpush.bf16.xpose.msra.mxu0 0
    %5332 = vmatpush.bf16.xpose.msra.mxu0 0
    %5333 = vmatpush.bf16.xpose.msra.mxu0 0
    %5334 = vmatpush.bf16.xpose.msra.mxu0 0
    %5335 = vmatpush.bf16.xpose.msra.mxu0 0
    %5336 = vmatpush.bf16.xpose.msra.mxu0 %v5327
    %5337 = vmatmul.bf16.gmra.mxu0 %v5324
    %v5338 = vpop.f32.mrf.mxu0
    %v5339 = vadd.f32 0.0, %v5338
    %v5340 = vpop.f32.mrf.mxu0
    %5341 = vdwg.mxu0
    %v5343 = vunpack.c.l.b16 %v4466
    %v5344 = vpack.c.b16 %v5343, %v5343
    %5345 = vrot.lane.b32.xlu0 %v5344, 64
    %v5346 = vpop.permute.xlu0 %5345
    %v5348 = vsel %vm604, %v4466, 0
    %v5351 = vsel %vm604, %v5346, 0
    %5353 = vmatpush.bf16.xpose.msra.mxu0 0
    %5354 = vmatpush.bf16.xpose.msra.mxu0 0
    %5355 = vmatpush.bf16.xpose.msra.mxu0 0
    %5356 = vmatpush.bf16.xpose.msra.mxu0 0
    %5357 = vmatpush.bf16.xpose.msra.mxu0 0
    %5358 = vmatpush.bf16.xpose.msra.mxu0 0
    %5359 = vmatpush.bf16.xpose.msra.mxu0 0
    %5360 = vmatpush.bf16.xpose.msra.mxu0 %v5351
    %5361 = vmatmul.bf16.gmra.mxu0 %v5348
    %v5362 = vpop.f32.mrf.mxu0
    %v5363 = vadd.f32 0.0, %v5362
    %v5364 = vpop.f32.mrf.mxu0
    %5365 = vdwg.mxu0
    %v5367 = vunpack.c.l.b16 %v4467
    %v5368 = vpack.c.b16 %v5367, %v5367
    %5369 = vrot.lane.b32.xlu0 %v5368, 64
    %v5370 = vpop.permute.xlu0 %5369
    %v5372 = vsel %vm604, %v4467, 0
    %v5375 = vsel %vm604, %v5370, 0
    %5377 = vmatpush.bf16.xpose.msra.mxu0 0
    %5378 = vmatpush.bf16.xpose.msra.mxu0 0
    %5379 = vmatpush.bf16.xpose.msra.mxu0 0
    %5380 = vmatpush.bf16.xpose.msra.mxu0 0
    %5381 = vmatpush.bf16.xpose.msra.mxu0 0
    %5382 = vmatpush.bf16.xpose.msra.mxu0 0
    %5383 = vmatpush.bf16.xpose.msra.mxu0 0
    %5384 = vmatpush.bf16.xpose.msra.mxu0 %v5375
    %5385 = vmatmul.bf16.gmra.mxu0 %v5372
    %v5386 = vpop.f32.mrf.mxu0
    %v5387 = vadd.f32 0.0, %v5386
    %v5388 = vpop.f32.mrf.mxu0
    %5389 = vdwg.mxu0
    %v5391 = vunpack.c.l.b16 %v4468
    %v5392 = vpack.c.b16 %v5391, %v5391
    %5393 = vrot.lane.b32.xlu0 %v5392, 64
    %v5394 = vpop.permute.xlu0 %5393
    %v5396 = vsel %vm604, %v4468, 0
    %v5399 = vsel %vm604, %v5394, 0
    %5401 = vmatpush.bf16.xpose.msra.mxu0 0
    %5402 = vmatpush.bf16.xpose.msra.mxu0 0
    %5403 = vmatpush.bf16.xpose.msra.mxu0 0
    %5404 = vmatpush.bf16.xpose.msra.mxu0 0
    %5405 = vmatpush.bf16.xpose.msra.mxu0 0
    %5406 = vmatpush.bf16.xpose.msra.mxu0 0
    %5407 = vmatpush.bf16.xpose.msra.mxu0 0
    %5408 = vmatpush.bf16.xpose.msra.mxu0 %v5399
    %5409 = vmatmul.bf16.gmra.mxu0 %v5396
    %v5410 = vpop.f32.mrf.mxu0
    %v5411 = vadd.f32 0.0, %v5410
    %v5412 = vpop.f32.mrf.mxu0
    %5413 = vdwg.mxu0
    %v5415 = vunpack.c.l.b16 %v4469
    %v5416 = vpack.c.b16 %v5415, %v5415
    %5417 = vrot.lane.b32.xlu0 %v5416, 64
    %v5418 = vpop.permute.xlu0 %5417
    %v5420 = vsel %vm604, %v4469, 0
    %v5423 = vsel %vm604, %v5418, 0
    %5425 = vmatpush.bf16.xpose.msra.mxu0 0
    %5426 = vmatpush.bf16.xpose.msra.mxu0 0
    %5427 = vmatpush.bf16.xpose.msra.mxu0 0
    %5428 = vmatpush.bf16.xpose.msra.mxu0 0
    %5429 = vmatpush.bf16.xpose.msra.mxu0 0
    %5430 = vmatpush.bf16.xpose.msra.mxu0 0
    %5431 = vmatpush.bf16.xpose.msra.mxu0 0
    %5432 = vmatpush.bf16.xpose.msra.mxu0 %v5423
    %5433 = vmatmul.bf16.gmra.mxu0 %v5420
    %v5434 = vpop.f32.mrf.mxu0
    %v5435 = vadd.f32 0.0, %v5434
    %v5436 = vpop.f32.mrf.mxu0
    %5437 = vdwg.mxu0
    %v5439 = vunpack.c.l.b16 %v4470
    %v5440 = vpack.c.b16 %v5439, %v5439
    %5441 = vrot.lane.b32.xlu0 %v5440, 64
    %v5442 = vpop.permute.xlu0 %5441
    %v5444 = vsel %vm604, %v4470, 0
    %v5447 = vsel %vm604, %v5442, 0
    %5449 = vmatpush.bf16.xpose.msra.mxu0 0
    %5450 = vmatpush.bf16.xpose.msra.mxu0 0
    %5451 = vmatpush.bf16.xpose.msra.mxu0 0
    %5452 = vmatpush.bf16.xpose.msra.mxu0 0
    %5453 = vmatpush.bf16.xpose.msra.mxu0 0
    %5454 = vmatpush.bf16.xpose.msra.mxu0 0
    %5455 = vmatpush.bf16.xpose.msra.mxu0 0
    %5456 = vmatpush.bf16.xpose.msra.mxu0 %v5447
    %5457 = vmatmul.bf16.gmra.mxu0 %v5444
    %v5458 = vpop.f32.mrf.mxu0
    %v5459 = vadd.f32 0.0, %v5458
    %v5460 = vpop.f32.mrf.mxu0
    %5461 = vdwg.mxu0
    %v5463 = vunpack.c.l.b16 %v4471
    %v5464 = vpack.c.b16 %v5463, %v5463
    %5465 = vrot.lane.b32.xlu0 %v5464, 64
    %v5466 = vpop.permute.xlu0 %5465
    %v5468 = vsel %vm604, %v4471, 0
    %v5471 = vsel %vm604, %v5466, 0
    %5473 = vmatpush.bf16.xpose.msra.mxu0 0
    %5474 = vmatpush.bf16.xpose.msra.mxu0 0
    %5475 = vmatpush.bf16.xpose.msra.mxu0 0
    %5476 = vmatpush.bf16.xpose.msra.mxu0 0
    %5477 = vmatpush.bf16.xpose.msra.mxu0 0
    %5478 = vmatpush.bf16.xpose.msra.mxu0 0
    %5479 = vmatpush.bf16.xpose.msra.mxu0 0
    %5480 = vmatpush.bf16.xpose.msra.mxu0 %v5471
    %5481 = vmatmul.bf16.gmra.mxu0 %v5468
    %v5482 = vpop.f32.mrf.mxu0
    %v5483 = vadd.f32 0.0, %v5482
    %v5484 = vpop.f32.mrf.mxu0
    %5485 = vdwg.mxu0
    %v5487 = vunpack.c.l.b16 %v4472
    %v5488 = vpack.c.b16 %v5487, %v5487
    %5489 = vrot.lane.b32.xlu0 %v5488, 64
    %v5490 = vpop.permute.xlu0 %5489
    %v5492 = vsel %vm604, %v4472, 0
    %v5495 = vsel %vm604, %v5490, 0
    %5497 = vmatpush.bf16.xpose.msra.mxu0 0
    %5498 = vmatpush.bf16.xpose.msra.mxu0 0
    %5499 = vmatpush.bf16.xpose.msra.mxu0 0
    %5500 = vmatpush.bf16.xpose.msra.mxu0 0
    %5501 = vmatpush.bf16.xpose.msra.mxu0 0
    %5502 = vmatpush.bf16.xpose.msra.mxu0 0
    %5503 = vmatpush.bf16.xpose.msra.mxu0 0
    %5504 = vmatpush.bf16.xpose.msra.mxu0 %v5495
    %5505 = vmatmul.bf16.gmra.mxu0 %v5492
    %v5506 = vpop.f32.mrf.mxu0
    %v5507 = vadd.f32 0.0, %v5506
    %v5508 = vpop.f32.mrf.mxu0
    %5509 = vdwg.mxu0
    %v5511 = vunpack.c.l.b16 %v4473
    %v5512 = vpack.c.b16 %v5511, %v5511
    %5513 = vrot.lane.b32.xlu0 %v5512, 64
    %v5514 = vpop.permute.xlu0 %5513
    %v5516 = vsel %vm604, %v4473, 0
    %v5519 = vsel %vm604, %v5514, 0
    %5521 = vmatpush.bf16.xpose.msra.mxu0 0
    %5522 = vmatpush.bf16.xpose.msra.mxu0 0
    %5523 = vmatpush.bf16.xpose.msra.mxu0 0
    %5524 = vmatpush.bf16.xpose.msra.mxu0 0
    %5525 = vmatpush.bf16.xpose.msra.mxu0 0
    %5526 = vmatpush.bf16.xpose.msra.mxu0 0
    %5527 = vmatpush.bf16.xpose.msra.mxu0 0
    %5528 = vmatpush.bf16.xpose.msra.mxu0 %v5519
    %5529 = vmatmul.bf16.gmra.mxu0 %v5516
    %v5530 = vpop.f32.mrf.mxu0
    %v5531 = vadd.f32 0.0, %v5530
    %v5532 = vpop.f32.mrf.mxu0
    %5533 = vdwg.mxu0
    %v5535 = vunpack.c.l.b16 %v4474
    %v5536 = vpack.c.b16 %v5535, %v5535
    %5537 = vrot.lane.b32.xlu0 %v5536, 64
    %v5538 = vpop.permute.xlu0 %5537
    %v5540 = vsel %vm604, %v4474, 0
    %v5543 = vsel %vm604, %v5538, 0
    %5545 = vmatpush.bf16.xpose.msra.mxu0 0
    %5546 = vmatpush.bf16.xpose.msra.mxu0 0
    %5547 = vmatpush.bf16.xpose.msra.mxu0 0
    %5548 = vmatpush.bf16.xpose.msra.mxu0 0
    %5549 = vmatpush.bf16.xpose.msra.mxu0 0
    %5550 = vmatpush.bf16.xpose.msra.mxu0 0
    %5551 = vmatpush.bf16.xpose.msra.mxu0 0
    %5552 = vmatpush.bf16.xpose.msra.mxu0 %v5543
    %5553 = vmatmul.bf16.gmra.mxu0 %v5540
    %v5554 = vpop.f32.mrf.mxu0
    %v5555 = vadd.f32 0.0, %v5554
    %v5556 = vpop.f32.mrf.mxu0
    %5557 = vdwg.mxu0
    %v5559 = vunpack.c.l.b16 %v4475
    %v5560 = vpack.c.b16 %v5559, %v5559
    %5561 = vrot.lane.b32.xlu0 %v5560, 64
    %v5562 = vpop.permute.xlu0 %5561
    %v5564 = vsel %vm604, %v4475, 0
    %v5567 = vsel %vm604, %v5562, 0
    %5569 = vmatpush.bf16.xpose.msra.mxu0 0
    %5570 = vmatpush.bf16.xpose.msra.mxu0 0
    %5571 = vmatpush.bf16.xpose.msra.mxu0 0
    %5572 = vmatpush.bf16.xpose.msra.mxu0 0
    %5573 = vmatpush.bf16.xpose.msra.mxu0 0
    %5574 = vmatpush.bf16.xpose.msra.mxu0 0
    %5575 = vmatpush.bf16.xpose.msra.mxu0 0
    %5576 = vmatpush.bf16.xpose.msra.mxu0 %v5567
    %5577 = vmatmul.bf16.gmra.mxu0 %v5564
    %v5578 = vpop.f32.mrf.mxu0
    %v5579 = vadd.f32 0.0, %v5578
    %v5580 = vpop.f32.mrf.mxu0
    %5581 = vdwg.mxu0
    %v5583 = vunpack.c.l.b16 %v4476
    %v5584 = vpack.c.b16 %v5583, %v5583
    %5585 = vrot.lane.b32.xlu0 %v5584, 64
    %v5586 = vpop.permute.xlu0 %5585
    %v5588 = vsel %vm604, %v4476, 0
    %v5591 = vsel %vm604, %v5586, 0
    %5593 = vmatpush.bf16.xpose.msra.mxu0 0
    %5594 = vmatpush.bf16.xpose.msra.mxu0 0
    %5595 = vmatpush.bf16.xpose.msra.mxu0 0
    %5596 = vmatpush.bf16.xpose.msra.mxu0 0
    %5597 = vmatpush.bf16.xpose.msra.mxu0 0
    %5598 = vmatpush.bf16.xpose.msra.mxu0 0
    %5599 = vmatpush.bf16.xpose.msra.mxu0 0
    %5600 = vmatpush.bf16.xpose.msra.mxu0 %v5591
    %5601 = vmatmul.bf16.gmra.mxu0 %v5588
    %v5602 = vpop.f32.mrf.mxu0
    %v5603 = vadd.f32 0.0, %v5602
    %v5604 = vpop.f32.mrf.mxu0
    %5605 = vdwg.mxu0
    %v5607 = vunpack.c.l.b16 %v4477
    %v5608 = vpack.c.b16 %v5607, %v5607
    %5609 = vrot.lane.b32.xlu0 %v5608, 64
    %v5610 = vpop.permute.xlu0 %5609
    %v5612 = vsel %vm604, %v4477, 0
    %v5615 = vsel %vm604, %v5610, 0
    %5617 = vmatpush.bf16.xpose.msra.mxu0 0
    %5618 = vmatpush.bf16.xpose.msra.mxu0 0
    %5619 = vmatpush.bf16.xpose.msra.mxu0 0
    %5620 = vmatpush.bf16.xpose.msra.mxu0 0
    %5621 = vmatpush.bf16.xpose.msra.mxu0 0
    %5622 = vmatpush.bf16.xpose.msra.mxu0 0
    %5623 = vmatpush.bf16.xpose.msra.mxu0 0
    %5624 = vmatpush.bf16.xpose.msra.mxu0 %v5615
    %5625 = vmatmul.bf16.gmra.mxu0 %v5612
    %v5626 = vpop.f32.mrf.mxu0
    %v5627 = vadd.f32 0.0, %v5626
    %v5628 = vpop.f32.mrf.mxu0
    %5629 = vdwg.mxu0
    %v5630 = vsel %vm604, %v4499, -inf
    %5631 = vmax.xlane.f32.xlu0 %v5630
    %v5632 = vpop.xlane.xlu0 %5631
    %v5633 = vsel %vm604, %v4523, -inf
    %5634 = vmax.xlane.f32.xlu0 %v5633
    %v5635 = vpop.xlane.xlu0 %5634
    %v5636 = vsel %vm604, %v4547, -inf
    %5637 = vmax.xlane.f32.xlu0 %v5636
    %v5638 = vpop.xlane.xlu0 %5637
    %v5639 = vsel %vm604, %v4571, -inf
    %5640 = vmax.xlane.f32.xlu0 %v5639
    %v5641 = vpop.xlane.xlu0 %5640
    %v5642 = vsel %vm604, %v4595, -inf
    %5643 = vmax.xlane.f32.xlu0 %v5642
    %v5644 = vpop.xlane.xlu0 %5643
    %v5645 = vsel %vm604, %v4619, -inf
    %5646 = vmax.xlane.f32.xlu0 %v5645
    %v5647 = vpop.xlane.xlu0 %5646
    %v5648 = vsel %vm604, %v4643, -inf
    %5649 = vmax.xlane.f32.xlu0 %v5648
    %v5650 = vpop.xlane.xlu0 %5649
    %v5651 = vsel %vm604, %v4667, -inf
    %5652 = vmax.xlane.f32.xlu0 %v5651
    %v5653 = vpop.xlane.xlu0 %5652
    %v5654 = vsel %vm604, %v4691, -inf
    %5655 = vmax.xlane.f32.xlu0 %v5654
    %v5656 = vpop.xlane.xlu0 %5655
    %v5657 = vsel %vm604, %v4715, -inf
    %5658 = vmax.xlane.f32.xlu0 %v5657
    %v5659 = vpop.xlane.xlu0 %5658
    %v5660 = vsel %vm604, %v4739, -inf
    %5661 = vmax.xlane.f32.xlu0 %v5660
    %v5662 = vpop.xlane.xlu0 %5661
    %v5663 = vsel %vm604, %v4763, -inf
    %5664 = vmax.xlane.f32.xlu0 %v5663
    %v5665 = vpop.xlane.xlu0 %5664
    %v5666 = vsel %vm604, %v4787, -inf
    %5667 = vmax.xlane.f32.xlu0 %v5666
    %v5668 = vpop.xlane.xlu0 %5667
    %v5669 = vsel %vm604, %v4811, -inf
    %5670 = vmax.xlane.f32.xlu0 %v5669
    %v5671 = vpop.xlane.xlu0 %5670
    %v5672 = vsel %vm604, %v4835, -inf
    %5673 = vmax.xlane.f32.xlu0 %v5672
    %v5674 = vpop.xlane.xlu0 %5673
    %v5675 = vsel %vm604, %v4859, -inf
    %5676 = vmax.xlane.f32.xlu0 %v5675
    %v5677 = vpop.xlane.xlu0 %5676
    %v5678 = vsel %vm604, %v4883, -inf
    %5679 = vmax.xlane.f32.xlu0 %v5678
    %v5680 = vpop.xlane.xlu0 %5679
    %v5681 = vsel %vm604, %v4907, -inf
    %5682 = vmax.xlane.f32.xlu0 %v5681
    %v5683 = vpop.xlane.xlu0 %5682
    %v5684 = vsel %vm604, %v4931, -inf
    %5685 = vmax.xlane.f32.xlu0 %v5684
    %v5686 = vpop.xlane.xlu0 %5685
    %v5687 = vsel %vm604, %v4955, -inf
    %5688 = vmax.xlane.f32.xlu0 %v5687
    %v5689 = vpop.xlane.xlu0 %5688
    %v5690 = vsel %vm604, %v4979, -inf
    %5691 = vmax.xlane.f32.xlu0 %v5690
    %v5692 = vpop.xlane.xlu0 %5691
    %v5693 = vsel %vm604, %v5003, -inf
    %5694 = vmax.xlane.f32.xlu0 %v5693
    %v5695 = vpop.xlane.xlu0 %5694
    %v5696 = vsel %vm604, %v5027, -inf
    %5697 = vmax.xlane.f32.xlu0 %v5696
    %v5698 = vpop.xlane.xlu0 %5697
    %v5699 = vsel %vm604, %v5051, -inf
    %5700 = vmax.xlane.f32.xlu0 %v5699
    %v5701 = vpop.xlane.xlu0 %5700
    %v5702 = vsel %vm604, %v5075, -inf
    %5703 = vmax.xlane.f32.xlu0 %v5702
    %v5704 = vpop.xlane.xlu0 %5703
    %v5705 = vsel %vm604, %v5099, -inf
    %5706 = vmax.xlane.f32.xlu0 %v5705
    %v5707 = vpop.xlane.xlu0 %5706
    %v5708 = vsel %vm604, %v5123, -inf
    %5709 = vmax.xlane.f32.xlu0 %v5708
    %v5710 = vpop.xlane.xlu0 %5709
    %v5711 = vsel %vm604, %v5147, -inf
    %5712 = vmax.xlane.f32.xlu0 %v5711
    %v5713 = vpop.xlane.xlu0 %5712
    %v5714 = vsel %vm604, %v5171, -inf
    %5715 = vmax.xlane.f32.xlu0 %v5714
    %v5716 = vpop.xlane.xlu0 %5715
    %v5717 = vsel %vm604, %v5195, -inf
    %5718 = vmax.xlane.f32.xlu0 %v5717
    %v5719 = vpop.xlane.xlu0 %5718
    %v5720 = vsel %vm604, %v5219, -inf
    %5721 = vmax.xlane.f32.xlu0 %v5720
    %v5722 = vpop.xlane.xlu0 %5721
    %v5723 = vsel %vm604, %v5243, -inf
    %5724 = vmax.xlane.f32.xlu0 %v5723
    %v5725 = vpop.xlane.xlu0 %5724
    %v5726 = vsel %vm604, %v5267, -inf
    %5727 = vmax.xlane.f32.xlu0 %v5726
    %v5728 = vpop.xlane.xlu0 %5727
    %v5729 = vsel %vm604, %v5291, -inf
    %5730 = vmax.xlane.f32.xlu0 %v5729
    %v5731 = vpop.xlane.xlu0 %5730
    %v5732 = vsel %vm604, %v5315, -inf
    %5733 = vmax.xlane.f32.xlu0 %v5732
    %v5734 = vpop.xlane.xlu0 %5733
    %v5735 = vsel %vm604, %v5339, -inf
    %5736 = vmax.xlane.f32.xlu0 %v5735
    %v5737 = vpop.xlane.xlu0 %5736
    %v5738 = vsel %vm604, %v5363, -inf
    %5739 = vmax.xlane.f32.xlu0 %v5738
    %v5740 = vpop.xlane.xlu0 %5739
    %v5741 = vsel %vm604, %v5387, -inf
    %5742 = vmax.xlane.f32.xlu0 %v5741
    %v5743 = vpop.xlane.xlu0 %5742
    %v5744 = vsel %vm604, %v5411, -inf
    %5745 = vmax.xlane.f32.xlu0 %v5744
    %v5746 = vpop.xlane.xlu0 %5745
    %v5747 = vsel %vm604, %v5435, -inf
    %5748 = vmax.xlane.f32.xlu0 %v5747
    %v5749 = vpop.xlane.xlu0 %5748
    %v5750 = vsel %vm604, %v5459, -inf
    %5751 = vmax.xlane.f32.xlu0 %v5750
    %v5752 = vpop.xlane.xlu0 %5751
    %v5753 = vsel %vm604, %v5483, -inf
    %5754 = vmax.xlane.f32.xlu0 %v5753
    %v5755 = vpop.xlane.xlu0 %5754
    %v5756 = vsel %vm604, %v5507, -inf
    %5757 = vmax.xlane.f32.xlu0 %v5756
    %v5758 = vpop.xlane.xlu0 %5757
    %v5759 = vsel %vm604, %v5531, -inf
    %5760 = vmax.xlane.f32.xlu0 %v5759
    %v5761 = vpop.xlane.xlu0 %5760
    %v5762 = vsel %vm604, %v5555, -inf
    %5763 = vmax.xlane.f32.xlu0 %v5762
    %v5764 = vpop.xlane.xlu0 %5763
    %v5765 = vsel %vm604, %v5579, -inf
    %5766 = vmax.xlane.f32.xlu0 %v5765
    %v5767 = vpop.xlane.xlu0 %5766
    %v5768 = vsel %vm604, %v5603, -inf
    %5769 = vmax.xlane.f32.xlu0 %v5768
    %v5770 = vpop.xlane.xlu0 %5769
    %v5771 = vsel %vm604, %v5627, -inf
    %5772 = vmax.xlane.f32.xlu0 %v5771
    %v5773 = vpop.xlane.xlu0 %5772
    %v5774 = vsub.f32 %v4499, %v5632
    %v5775 = vsub.f32 %v4523, %v5635
    %v5776 = vsub.f32 %v4547, %v5638
    %v5777 = vsub.f32 %v4571, %v5641
    %v5778 = vsub.f32 %v4595, %v5644
    %v5779 = vsub.f32 %v4619, %v5647
    %v5780 = vsub.f32 %v4643, %v5650
    %v5781 = vsub.f32 %v4667, %v5653
    %v5782 = vsub.f32 %v4691, %v5656
    %v5783 = vsub.f32 %v4715, %v5659
    %v5784 = vsub.f32 %v4739, %v5662
    %v5785 = vsub.f32 %v4763, %v5665
    %v5786 = vsub.f32 %v4787, %v5668
    %v5787 = vsub.f32 %v4811, %v5671
    %v5788 = vsub.f32 %v4835, %v5674
    %v5789 = vsub.f32 %v4859, %v5677
    %v5790 = vsub.f32 %v4883, %v5680
    %v5791 = vsub.f32 %v4907, %v5683
    %v5792 = vsub.f32 %v4931, %v5686
    %v5793 = vsub.f32 %v4955, %v5689
    %v5794 = vsub.f32 %v4979, %v5692
    %v5795 = vsub.f32 %v5003, %v5695
    %v5796 = vsub.f32 %v5027, %v5698
    %v5797 = vsub.f32 %v5051, %v5701
    %v5798 = vsub.f32 %v5075, %v5704
    %v5799 = vsub.f32 %v5099, %v5707
    %v5800 = vsub.f32 %v5123, %v5710
    %v5801 = vsub.f32 %v5147, %v5713
    %v5802 = vsub.f32 %v5171, %v5716
    %v5803 = vsub.f32 %v5195, %v5719
    %v5804 = vsub.f32 %v5219, %v5722
    %v5805 = vsub.f32 %v5243, %v5725
    %v5806 = vsub.f32 %v5267, %v5728
    %v5807 = vsub.f32 %v5291, %v5731
    %v5808 = vsub.f32 %v5315, %v5734
    %v5809 = vsub.f32 %v5339, %v5737
    %v5810 = vsub.f32 %v5363, %v5740
    %v5811 = vsub.f32 %v5387, %v5743
    %v5812 = vsub.f32 %v5411, %v5746
    %v5813 = vsub.f32 %v5435, %v5749
    %v5814 = vsub.f32 %v5459, %v5752
    %v5815 = vsub.f32 %v5483, %v5755
    %v5816 = vsub.f32 %v5507, %v5758
    %v5817 = vsub.f32 %v5531, %v5761
    %v5818 = vsub.f32 %v5555, %v5764
    %v5819 = vsub.f32 %v5579, %v5767
    %v5820 = vsub.f32 %v5603, %v5770
    %v5821 = vsub.f32 %v5627, %v5773
    %v5822 = vmul.f32 %v5774, 1.442695
    %v5823 = vpow.pop %v5822
    %v5824 = vmul.f32 %v5775, 1.442695
    %v5825 = vpow.pop %v5824
    %v5826 = vmul.f32 %v5776, 1.442695
    %v5827 = vpow.pop %v5826
    %v5828 = vmul.f32 %v5777, 1.442695
    %v5829 = vpow.pop %v5828
    %v5830 = vmul.f32 %v5778, 1.442695
    %v5831 = vpow.pop %v5830
    %v5832 = vmul.f32 %v5779, 1.442695
    %v5833 = vpow.pop %v5832
    %v5834 = vmul.f32 %v5780, 1.442695
    %v5835 = vpow.pop %v5834
    %v5836 = vmul.f32 %v5781, 1.442695
    %v5837 = vpow.pop %v5836
    %v5838 = vmul.f32 %v5782, 1.442695
    %v5839 = vpow.pop %v5838
    %v5840 = vmul.f32 %v5783, 1.442695
    %v5841 = vpow.pop %v5840
    %v5842 = vmul.f32 %v5784, 1.442695
    %v5843 = vpow.pop %v5842
    %v5844 = vmul.f32 %v5785, 1.442695
    %v5845 = vpow.pop %v5844
    %v5846 = vmul.f32 %v5786, 1.442695
    %v5847 = vpow.pop %v5846
    %v5848 = vmul.f32 %v5787, 1.442695
    %v5849 = vpow.pop %v5848
    %v5850 = vmul.f32 %v5788, 1.442695
    %v5851 = vpow.pop %v5850
    %v5852 = vmul.f32 %v5789, 1.442695
    %v5853 = vpow.pop %v5852
    %v5854 = vmul.f32 %v5790, 1.442695
    %v5855 = vpow.pop %v5854
    %v5856 = vmul.f32 %v5791, 1.442695
    %v5857 = vpow.pop %v5856
    %v5858 = vmul.f32 %v5792, 1.442695
    %v5859 = vpow.pop %v5858
    %v5860 = vmul.f32 %v5793, 1.442695
    %v5861 = vpow.pop %v5860
    %v5862 = vmul.f32 %v5794, 1.442695
    %v5863 = vpow.pop %v5862
    %v5864 = vmul.f32 %v5795, 1.442695
    %v5865 = vpow.pop %v5864
    %v5866 = vmul.f32 %v5796, 1.442695
    %v5867 = vpow.pop %v5866
    %v5868 = vmul.f32 %v5797, 1.442695
    %v5869 = vpow.pop %v5868
    %v5870 = vmul.f32 %v5798, 1.442695
    %v5871 = vpow.pop %v5870
    %v5872 = vmul.f32 %v5799, 1.442695
    %v5873 = vpow.pop %v5872
    %v5874 = vmul.f32 %v5800, 1.442695
    %v5875 = vpow.pop %v5874
    %v5876 = vmul.f32 %v5801, 1.442695
    %v5877 = vpow.pop %v5876
    %v5878 = vmul.f32 %v5802, 1.442695
    %v5879 = vpow.pop %v5878
    %v5880 = vmul.f32 %v5803, 1.442695
    %v5881 = vpow.pop %v5880
    %v5882 = vmul.f32 %v5804, 1.442695
    %v5883 = vpow.pop %v5882
    %v5884 = vmul.f32 %v5805, 1.442695
    %v5885 = vpow.pop %v5884
    %v5886 = vmul.f32 %v5806, 1.442695
    %v5887 = vpow.pop %v5886
    %v5888 = vmul.f32 %v5807, 1.442695
    %v5889 = vpow.pop %v5888
    %v5890 = vmul.f32 %v5808, 1.442695
    %v5891 = vpow.pop %v5890
    %v5892 = vmul.f32 %v5809, 1.442695
    %v5893 = vpow.pop %v5892
    %v5894 = vmul.f32 %v5810, 1.442695
    %v5895 = vpow.pop %v5894
    %v5896 = vmul.f32 %v5811, 1.442695
    %v5897 = vpow.pop %v5896
    %v5898 = vmul.f32 %v5812, 1.442695
    %v5899 = vpow.pop %v5898
    %v5900 = vmul.f32 %v5813, 1.442695
    %v5901 = vpow.pop %v5900
    %v5902 = vmul.f32 %v5814, 1.442695
    %v5903 = vpow.pop %v5902
    %v5904 = vmul.f32 %v5815, 1.442695
    %v5905 = vpow.pop %v5904
    %v5906 = vmul.f32 %v5816, 1.442695
    %v5907 = vpow.pop %v5906
    %v5908 = vmul.f32 %v5817, 1.442695
    %v5909 = vpow.pop %v5908
    %v5910 = vmul.f32 %v5818, 1.442695
    %v5911 = vpow.pop %v5910
    %v5912 = vmul.f32 %v5819, 1.442695
    %v5913 = vpow.pop %v5912
    %v5914 = vmul.f32 %v5820, 1.442695
    %v5915 = vpow.pop %v5914
    %v5916 = vmul.f32 %v5821, 1.442695
    %v5917 = vpow.pop %v5916
    %v5918 = vsel %vm604, %v5823, 0.0
    %5919 = vadd.xlane.f32.xlu0 %v5918
    %v5920 = vpop.xlane.xlu0 %5919
    %v5921 = vsel %vm604, %v5825, 0.0
    %5922 = vadd.xlane.f32.xlu0 %v5921
    %v5923 = vpop.xlane.xlu0 %5922
    %v5924 = vsel %vm604, %v5827, 0.0
    %5925 = vadd.xlane.f32.xlu0 %v5924
    %v5926 = vpop.xlane.xlu0 %5925
    %v5927 = vsel %vm604, %v5829, 0.0
    %5928 = vadd.xlane.f32.xlu0 %v5927
    %v5929 = vpop.xlane.xlu0 %5928
    %v5930 = vsel %vm604, %v5831, 0.0
    %5931 = vadd.xlane.f32.xlu0 %v5930
    %v5932 = vpop.xlane.xlu0 %5931
    %v5933 = vsel %vm604, %v5833, 0.0
    %5934 = vadd.xlane.f32.xlu0 %v5933
    %v5935 = vpop.xlane.xlu0 %5934
    %v5936 = vsel %vm604, %v5835, 0.0
    %5937 = vadd.xlane.f32.xlu0 %v5936
    %v5938 = vpop.xlane.xlu0 %5937
    %v5939 = vsel %vm604, %v5837, 0.0
    %5940 = vadd.xlane.f32.xlu0 %v5939
    %v5941 = vpop.xlane.xlu0 %5940
    %v5942 = vsel %vm604, %v5839, 0.0
    %5943 = vadd.xlane.f32.xlu0 %v5942
    %v5944 = vpop.xlane.xlu0 %5943
    %v5945 = vsel %vm604, %v5841, 0.0
    %5946 = vadd.xlane.f32.xlu0 %v5945
    %v5947 = vpop.xlane.xlu0 %5946
    %v5948 = vsel %vm604, %v5843, 0.0
    %5949 = vadd.xlane.f32.xlu0 %v5948
    %v5950 = vpop.xlane.xlu0 %5949
    %v5951 = vsel %vm604, %v5845, 0.0
    %5952 = vadd.xlane.f32.xlu0 %v5951
    %v5953 = vpop.xlane.xlu0 %5952
    %v5954 = vsel %vm604, %v5847, 0.0
    %5955 = vadd.xlane.f32.xlu0 %v5954
    %v5956 = vpop.xlane.xlu0 %5955
    %v5957 = vsel %vm604, %v5849, 0.0
    %5958 = vadd.xlane.f32.xlu0 %v5957
    %v5959 = vpop.xlane.xlu0 %5958
    %v5960 = vsel %vm604, %v5851, 0.0
    %5961 = vadd.xlane.f32.xlu0 %v5960
    %v5962 = vpop.xlane.xlu0 %5961
    %v5963 = vsel %vm604, %v5853, 0.0
    %5964 = vadd.xlane.f32.xlu0 %v5963
    %v5965 = vpop.xlane.xlu0 %5964
    %v5966 = vsel %vm604, %v5855, 0.0
    %5967 = vadd.xlane.f32.xlu0 %v5966
    %v5968 = vpop.xlane.xlu0 %5967
    %v5969 = vsel %vm604, %v5857, 0.0
    %5970 = vadd.xlane.f32.xlu0 %v5969
    %v5971 = vpop.xlane.xlu0 %5970
    %v5972 = vsel %vm604, %v5859, 0.0
    %5973 = vadd.xlane.f32.xlu0 %v5972
    %v5974 = vpop.xlane.xlu0 %5973
    %v5975 = vsel %vm604, %v5861, 0.0
    %5976 = vadd.xlane.f32.xlu0 %v5975
    %v5977 = vpop.xlane.xlu0 %5976
    %v5978 = vsel %vm604, %v5863, 0.0
    %5979 = vadd.xlane.f32.xlu0 %v5978
    %v5980 = vpop.xlane.xlu0 %5979
    %v5981 = vsel %vm604, %v5865, 0.0
    %5982 = vadd.xlane.f32.xlu0 %v5981
    %v5983 = vpop.xlane.xlu0 %5982
    %v5984 = vsel %vm604, %v5867, 0.0
    %5985 = vadd.xlane.f32.xlu0 %v5984
    %v5986 = vpop.xlane.xlu0 %5985
    %v5987 = vsel %vm604, %v5869, 0.0
    %5988 = vadd.xlane.f32.xlu0 %v5987
    %v5989 = vpop.xlane.xlu0 %5988
    %v5990 = vsel %vm604, %v5871, 0.0
    %5991 = vadd.xlane.f32.xlu0 %v5990
    %v5992 = vpop.xlane.xlu0 %5991
    %v5993 = vsel %vm604, %v5873, 0.0
    %5994 = vadd.xlane.f32.xlu0 %v5993
    %v5995 = vpop.xlane.xlu0 %5994
    %v5996 = vsel %vm604, %v5875, 0.0
    %5997 = vadd.xlane.f32.xlu0 %v5996
    %v5998 = vpop.xlane.xlu0 %5997
    %v5999 = vsel %vm604, %v5877, 0.0
    %6000 = vadd.xlane.f32.xlu0 %v5999
    %v6001 = vpop.xlane.xlu0 %6000
    %v6002 = vsel %vm604, %v5879, 0.0
    %6003 = vadd.xlane.f32.xlu0 %v6002
    %v6004 = vpop.xlane.xlu0 %6003
    %v6005 = vsel %vm604, %v5881, 0.0
    %6006 = vadd.xlane.f32.xlu0 %v6005
    %v6007 = vpop.xlane.xlu0 %6006
    %v6008 = vsel %vm604, %v5883, 0.0
    %6009 = vadd.xlane.f32.xlu0 %v6008
    %v6010 = vpop.xlane.xlu0 %6009
    %v6011 = vsel %vm604, %v5885, 0.0
    %6012 = vadd.xlane.f32.xlu0 %v6011
    %v6013 = vpop.xlane.xlu0 %6012
    %v6014 = vsel %vm604, %v5887, 0.0
    %6015 = vadd.xlane.f32.xlu0 %v6014
    %v6016 = vpop.xlane.xlu0 %6015
    %v6017 = vsel %vm604, %v5889, 0.0
    %6018 = vadd.xlane.f32.xlu0 %v6017
    %v6019 = vpop.xlane.xlu0 %6018
    %v6020 = vsel %vm604, %v5891, 0.0
    %6021 = vadd.xlane.f32.xlu0 %v6020
    %v6022 = vpop.xlane.xlu0 %6021
    %v6023 = vsel %vm604, %v5893, 0.0
    %6024 = vadd.xlane.f32.xlu0 %v6023
    %v6025 = vpop.xlane.xlu0 %6024
    %v6026 = vsel %vm604, %v5895, 0.0
    %6027 = vadd.xlane.f32.xlu0 %v6026
    %v6028 = vpop.xlane.xlu0 %6027
    %v6029 = vsel %vm604, %v5897, 0.0
    %6030 = vadd.xlane.f32.xlu0 %v6029
    %v6031 = vpop.xlane.xlu0 %6030
    %v6032 = vsel %vm604, %v5899, 0.0
    %6033 = vadd.xlane.f32.xlu0 %v6032
    %v6034 = vpop.xlane.xlu0 %6033
    %v6035 = vsel %vm604, %v5901, 0.0
    %6036 = vadd.xlane.f32.xlu0 %v6035
    %v6037 = vpop.xlane.xlu0 %6036
    %v6038 = vsel %vm604, %v5903, 0.0
    %6039 = vadd.xlane.f32.xlu0 %v6038
    %v6040 = vpop.xlane.xlu0 %6039
    %v6041 = vsel %vm604, %v5905, 0.0
    %6042 = vadd.xlane.f32.xlu0 %v6041
    %v6043 = vpop.xlane.xlu0 %6042
    %v6044 = vsel %vm604, %v5907, 0.0
    %6045 = vadd.xlane.f32.xlu0 %v6044
    %v6046 = vpop.xlane.xlu0 %6045
    %v6047 = vsel %vm604, %v5909, 0.0
    %6048 = vadd.xlane.f32.xlu0 %v6047
    %v6049 = vpop.xlane.xlu0 %6048
    %v6050 = vsel %vm604, %v5911, 0.0
    %6051 = vadd.xlane.f32.xlu0 %v6050
    %v6052 = vpop.xlane.xlu0 %6051
    %v6053 = vsel %vm604, %v5913, 0.0
    %6054 = vadd.xlane.f32.xlu0 %v6053
    %v6055 = vpop.xlane.xlu0 %6054
    %v6056 = vsel %vm604, %v5915, 0.0
    %6057 = vadd.xlane.f32.xlu0 %v6056
    %v6058 = vpop.xlane.xlu0 %6057
    %v6059 = vsel %vm604, %v5917, 0.0
    %6060 = vadd.xlane.f32.xlu0 %v6059
    %v6061 = vpop.xlane.xlu0 %6060
    %v6062 = vrcp.pop %v5920
    %v6063 = vrcp.pop %v5923
    %v6064 = vrcp.pop %v5926
    %v6065 = vrcp.pop %v5929
    %v6066 = vrcp.pop %v5932
    %v6067 = vrcp.pop %v5935
    %v6068 = vrcp.pop %v5938
    %v6069 = vrcp.pop %v5941
    %v6070 = vrcp.pop %v5944
    %v6071 = vrcp.pop %v5947
    %v6072 = vrcp.pop %v5950
    %v6073 = vrcp.pop %v5953
    %v6074 = vrcp.pop %v5956
    %v6075 = vrcp.pop %v5959
    %v6076 = vrcp.pop %v5962
    %v6077 = vrcp.pop %v5965
    %v6078 = vrcp.pop %v5968
    %v6079 = vrcp.pop %v5971
    %v6080 = vrcp.pop %v5974
    %v6081 = vrcp.pop %v5977
    %v6082 = vrcp.pop %v5980
    %v6083 = vrcp.pop %v5983
    %v6084 = vrcp.pop %v5986
    %v6085 = vrcp.pop %v5989
    %v6086 = vrcp.pop %v5992
    %v6087 = vrcp.pop %v5995
    %v6088 = vrcp.pop %v5998
    %v6089 = vrcp.pop %v6001
    %v6090 = vrcp.pop %v6004
    %v6091 = vrcp.pop %v6007
    %v6092 = vrcp.pop %v6010
    %v6093 = vrcp.pop %v6013
    %v6094 = vrcp.pop %v6016
    %v6095 = vrcp.pop %v6019
    %v6096 = vrcp.pop %v6022
    %v6097 = vrcp.pop %v6025
    %v6098 = vrcp.pop %v6028
    %v6099 = vrcp.pop %v6031
    %v6100 = vrcp.pop %v6034
    %v6101 = vrcp.pop %v6037
    %v6102 = vrcp.pop %v6040
    %v6103 = vrcp.pop %v6043
    %v6104 = vrcp.pop %v6046
    %v6105 = vrcp.pop %v6049
    %v6106 = vrcp.pop %v6052
    %v6107 = vrcp.pop %v6055
    %v6108 = vrcp.pop %v6058
    %v6109 = vrcp.pop %v6061
    %v6110 = vmul.f32 %v5823, %v6062
    %v6111 = vmul.f32 %v5825, %v6063
    %v6112 = vmul.f32 %v5827, %v6064
    %v6113 = vmul.f32 %v5829, %v6065
    %v6114 = vmul.f32 %v5831, %v6066
    %v6115 = vmul.f32 %v5833, %v6067
    %v6116 = vmul.f32 %v5835, %v6068
    %v6117 = vmul.f32 %v5837, %v6069
    %v6118 = vmul.f32 %v5839, %v6070
    %v6119 = vmul.f32 %v5841, %v6071
    %v6120 = vmul.f32 %v5843, %v6072
    %v6121 = vmul.f32 %v5845, %v6073
    %v6122 = vmul.f32 %v5847, %v6074
    %v6123 = vmul.f32 %v5849, %v6075
    %v6124 = vmul.f32 %v5851, %v6076
    %v6125 = vmul.f32 %v5853, %v6077
    %v6126 = vmul.f32 %v5855, %v6078
    %v6127 = vmul.f32 %v5857, %v6079
    %v6128 = vmul.f32 %v5859, %v6080
    %v6129 = vmul.f32 %v5861, %v6081
    %v6130 = vmul.f32 %v5863, %v6082
    %v6131 = vmul.f32 %v5865, %v6083
    %v6132 = vmul.f32 %v5867, %v6084
    %v6133 = vmul.f32 %v5869, %v6085
    %v6134 = vmul.f32 %v5871, %v6086
    %v6135 = vmul.f32 %v5873, %v6087
    %v6136 = vmul.f32 %v5875, %v6088
    %v6137 = vmul.f32 %v5877, %v6089
    %v6138 = vmul.f32 %v5879, %v6090
    %v6139 = vmul.f32 %v5881, %v6091
    %v6140 = vmul.f32 %v5883, %v6092
    %v6141 = vmul.f32 %v5885, %v6093
    %v6142 = vmul.f32 %v5887, %v6094
    %v6143 = vmul.f32 %v5889, %v6095
    %v6144 = vmul.f32 %v5891, %v6096
    %v6145 = vmul.f32 %v5893, %v6097
    %v6146 = vmul.f32 %v5895, %v6098
    %v6147 = vmul.f32 %v5897, %v6099
    %v6148 = vmul.f32 %v5899, %v6100
    %v6149 = vmul.f32 %v5901, %v6101
    %v6150 = vmul.f32 %v5903, %v6102
    %v6151 = vmul.f32 %v5905, %v6103
    %v6152 = vmul.f32 %v5907, %v6104
    %v6153 = vmul.f32 %v5909, %v6105
    %v6154 = vmul.f32 %v5911, %v6106
    %v6155 = vmul.f32 %v5913, %v6107
    %v6156 = vmul.f32 %v5915, %v6108
    %v6157 = vmul.f32 %v5917, %v6109
    %v6158 = vpack.c.bf16 %v6110, %v6110
    %v6159 = vpack.c.bf16 %v6111, %v6111
    %v6160 = vpack.c.bf16 %v6112, %v6112
    %v6161 = vpack.c.bf16 %v6113, %v6113
    %v6162 = vpack.c.bf16 %v6114, %v6114
    %v6163 = vpack.c.bf16 %v6115, %v6115
    %v6164 = vpack.c.bf16 %v6116, %v6116
    %v6165 = vpack.c.bf16 %v6117, %v6117
    %v6166 = vpack.c.bf16 %v6118, %v6118
    %v6167 = vpack.c.bf16 %v6119, %v6119
    %v6168 = vpack.c.bf16 %v6120, %v6120
    %v6169 = vpack.c.bf16 %v6121, %v6121
    %v6170 = vpack.c.bf16 %v6122, %v6122
    %v6171 = vpack.c.bf16 %v6123, %v6123
    %v6172 = vpack.c.bf16 %v6124, %v6124
    %v6173 = vpack.c.bf16 %v6125, %v6125
    %v6174 = vpack.c.bf16 %v6126, %v6126
    %v6175 = vpack.c.bf16 %v6127, %v6127
    %v6176 = vpack.c.bf16 %v6128, %v6128
    %v6177 = vpack.c.bf16 %v6129, %v6129
    %v6178 = vpack.c.bf16 %v6130, %v6130
    %v6179 = vpack.c.bf16 %v6131, %v6131
    %v6180 = vpack.c.bf16 %v6132, %v6132
    %v6181 = vpack.c.bf16 %v6133, %v6133
    %v6182 = vpack.c.bf16 %v6134, %v6134
    %v6183 = vpack.c.bf16 %v6135, %v6135
    %v6184 = vpack.c.bf16 %v6136, %v6136
    %v6185 = vpack.c.bf16 %v6137, %v6137
    %v6186 = vpack.c.bf16 %v6138, %v6138
    %v6187 = vpack.c.bf16 %v6139, %v6139
    %v6188 = vpack.c.bf16 %v6140, %v6140
    %v6189 = vpack.c.bf16 %v6141, %v6141
    %v6190 = vpack.c.bf16 %v6142, %v6142
    %v6191 = vpack.c.bf16 %v6143, %v6143
    %v6192 = vpack.c.bf16 %v6144, %v6144
    %v6193 = vpack.c.bf16 %v6145, %v6145
    %v6194 = vpack.c.bf16 %v6146, %v6146
    %v6195 = vpack.c.bf16 %v6147, %v6147
    %v6196 = vpack.c.bf16 %v6148, %v6148
    %v6197 = vpack.c.bf16 %v6149, %v6149
    %v6198 = vpack.c.bf16 %v6150, %v6150
    %v6199 = vpack.c.bf16 %v6151, %v6151
    %v6200 = vpack.c.bf16 %v6152, %v6152
    %v6201 = vpack.c.bf16 %v6153, %v6153
    %v6202 = vpack.c.bf16 %v6154, %v6154
    %v6203 = vpack.c.bf16 %v6155, %v6155
    %v6204 = vpack.c.bf16 %v6156, %v6156
    %v6205 = vpack.c.bf16 %v6157, %v6157
    %v6206 = vpack.c.bf16 %v4152, %v4152
    %v6207 = vpack.c.bf16 %v4154, %v4154
    %v6208 = vpack.c.bf16 %v4157, %v4157
    %v6209 = vpack.c.bf16 %v4159, %v4159
    %v6210 = vpack.c.bf16 %v4162, %v4162
    %v6211 = vpack.c.bf16 %v4164, %v4164
    %v6212 = vpack.c.bf16 %v4305, %v4305
    %v6213 = vpack.c.bf16 %v4307, %v4307
    %v6214 = vpack.c.bf16 %v4309, %v4309
    %v6215 = vpack.c.bf16 %v4311, %v4311
    %v6216 = vpack.c.bf16 %v4313, %v4313
    %v6217 = vpack.c.bf16 %v4315, %v4315
    %v6218 = vpack.c.bf16 %v4323, %v4323
    %v6219 = vpack.c.bf16 %v4325, %v4325
    %v6220 = vpack.c.bf16 %v4327, %v4327
    %v6221 = vpack.c.bf16 %v4329, %v4329
    %v6222 = vpack.c.bf16 %v4331, %v4331
    %v6223 = vpack.c.bf16 %v4333, %v4333
    %v6224 = vpack.c.bf16 %v4341, %v4341
    %v6225 = vpack.c.bf16 %v4343, %v4343
    %v6226 = vpack.c.bf16 %v4345, %v4345
    %v6227 = vpack.c.bf16 %v4347, %v4347
    %v6228 = vpack.c.bf16 %v4349, %v4349
    %v6229 = vpack.c.bf16 %v4351, %v4351
    %v6230 = vpack.c.bf16 %v4359, %v4359
    %v6231 = vpack.c.bf16 %v4361, %v4361
    %v6232 = vpack.c.bf16 %v4363, %v4363
    %v6233 = vpack.c.bf16 %v4365, %v4365
    %v6234 = vpack.c.bf16 %v4367, %v4367
    %v6235 = vpack.c.bf16 %v4369, %v4369
    %v6236 = vpack.c.bf16 %v4377, %v4377
    %v6237 = vpack.c.bf16 %v4379, %v4379
    %v6238 = vpack.c.bf16 %v4381, %v4381
    %v6239 = vpack.c.bf16 %v4383, %v4383
    %v6240 = vpack.c.bf16 %v4385, %v4385
    %v6241 = vpack.c.bf16 %v4387, %v4387
    %v6242 = vpack.c.bf16 %v4395, %v4395
    %v6243 = vpack.c.bf16 %v4397, %v4397
    %v6244 = vpack.c.bf16 %v4399, %v4399
    %v6245 = vpack.c.bf16 %v4401, %v4401
    %v6246 = vpack.c.bf16 %v4403, %v4403
    %v6247 = vpack.c.bf16 %v4405, %v4405
    %v6248 = vpack.c.bf16 %v4413, %v4413
    %v6249 = vpack.c.bf16 %v4415, %v4415
    %v6250 = vpack.c.bf16 %v4417, %v4417
    %v6251 = vpack.c.bf16 %v4419, %v4419
    %v6252 = vpack.c.bf16 %v4421, %v4421
    %v6253 = vpack.c.bf16 %v4423, %v4423
    %v6255 = vsel %vm604, %v6158, 0
    %v6258 = vsel %vm2379, %v6206, 0
    %6260 = vmatpush.bf16.msra.mxu0 0
    %6261 = vmatpush.bf16.msra.mxu0 0
    %6262 = vmatpush.bf16.msra.mxu0 0
    %6263 = vmatpush.bf16.msra.mxu0 0
    %6264 = vmatpush.bf16.msra.mxu0 0
    %6265 = vmatpush.bf16.msra.mxu0 0
    %6266 = vmatpush.bf16.msra.mxu0 0
    %6267 = vmatpush.bf16.msra.mxu0 %v6258
    %6268 = vmatmul.bf16.gmra.mxu0 %v6255
    %v6269 = vpop.f32.mrf.mxu0
    %v6270 = vadd.f32 0.0, %v6269
    %v6271 = vpop.f32.mrf.mxu0
    %6272 = vdwg.mxu0
    %v6274 = vsel %vm604, %v6159, 0
    %v6277 = vsel %vm2379, %v6207, 0
    %6279 = vmatpush.bf16.msra.mxu0 0
    %6280 = vmatpush.bf16.msra.mxu0 0
    %6281 = vmatpush.bf16.msra.mxu0 0
    %6282 = vmatpush.bf16.msra.mxu0 0
    %6283 = vmatpush.bf16.msra.mxu0 0
    %6284 = vmatpush.bf16.msra.mxu0 0
    %6285 = vmatpush.bf16.msra.mxu0 0
    %6286 = vmatpush.bf16.msra.mxu0 %v6277
    %6287 = vmatmul.bf16.gmra.mxu0 %v6274
    %v6288 = vpop.f32.mrf.mxu0
    %v6289 = vadd.f32 0.0, %v6288
    %v6290 = vpop.f32.mrf.mxu0
    %6291 = vdwg.mxu0
    %v6293 = vsel %vm604, %v6160, 0
    %v6296 = vsel %vm2379, %v6208, 0
    %6298 = vmatpush.bf16.msra.mxu0 0
    %6299 = vmatpush.bf16.msra.mxu0 0
    %6300 = vmatpush.bf16.msra.mxu0 0
    %6301 = vmatpush.bf16.msra.mxu0 0
    %6302 = vmatpush.bf16.msra.mxu0 0
    %6303 = vmatpush.bf16.msra.mxu0 0
    %6304 = vmatpush.bf16.msra.mxu0 0
    %6305 = vmatpush.bf16.msra.mxu0 %v6296
    %6306 = vmatmul.bf16.gmra.mxu0 %v6293
    %v6307 = vpop.f32.mrf.mxu0
    %v6308 = vadd.f32 0.0, %v6307
    %v6309 = vpop.f32.mrf.mxu0
    %6310 = vdwg.mxu0
    %v6312 = vsel %vm604, %v6161, 0
    %v6315 = vsel %vm2379, %v6209, 0
    %6317 = vmatpush.bf16.msra.mxu0 0
    %6318 = vmatpush.bf16.msra.mxu0 0
    %6319 = vmatpush.bf16.msra.mxu0 0
    %6320 = vmatpush.bf16.msra.mxu0 0
    %6321 = vmatpush.bf16.msra.mxu0 0
    %6322 = vmatpush.bf16.msra.mxu0 0
    %6323 = vmatpush.bf16.msra.mxu0 0
    %6324 = vmatpush.bf16.msra.mxu0 %v6315
    %6325 = vmatmul.bf16.gmra.mxu0 %v6312
    %v6326 = vpop.f32.mrf.mxu0
    %v6327 = vadd.f32 0.0, %v6326
    %v6328 = vpop.f32.mrf.mxu0
    %6329 = vdwg.mxu0
    %v6331 = vsel %vm604, %v6162, 0
    %v6334 = vsel %vm2379, %v6210, 0
    %6336 = vmatpush.bf16.msra.mxu0 0
    %6337 = vmatpush.bf16.msra.mxu0 0
    %6338 = vmatpush.bf16.msra.mxu0 0
    %6339 = vmatpush.bf16.msra.mxu0 0
    %6340 = vmatpush.bf16.msra.mxu0 0
    %6341 = vmatpush.bf16.msra.mxu0 0
    %6342 = vmatpush.bf16.msra.mxu0 0
    %6343 = vmatpush.bf16.msra.mxu0 %v6334
    %6344 = vmatmul.bf16.gmra.mxu0 %v6331
    %v6345 = vpop.f32.mrf.mxu0
    %v6346 = vadd.f32 0.0, %v6345
    %v6347 = vpop.f32.mrf.mxu0
    %6348 = vdwg.mxu0
    %v6350 = vsel %vm604, %v6163, 0
    %v6353 = vsel %vm2379, %v6211, 0
    %6355 = vmatpush.bf16.msra.mxu0 0
    %6356 = vmatpush.bf16.msra.mxu0 0
    %6357 = vmatpush.bf16.msra.mxu0 0
    %6358 = vmatpush.bf16.msra.mxu0 0
    %6359 = vmatpush.bf16.msra.mxu0 0
    %6360 = vmatpush.bf16.msra.mxu0 0
    %6361 = vmatpush.bf16.msra.mxu0 0
    %6362 = vmatpush.bf16.msra.mxu0 %v6353
    %6363 = vmatmul.bf16.gmra.mxu0 %v6350
    %v6364 = vpop.f32.mrf.mxu0
    %v6365 = vadd.f32 0.0, %v6364
    %v6366 = vpop.f32.mrf.mxu0
    %6367 = vdwg.mxu0
    %v6369 = vsel %vm604, %v6164, 0
    %v6372 = vsel %vm2379, %v6212, 0
    %6374 = vmatpush.bf16.msra.mxu0 0
    %6375 = vmatpush.bf16.msra.mxu0 0
    %6376 = vmatpush.bf16.msra.mxu0 0
    %6377 = vmatpush.bf16.msra.mxu0 0
    %6378 = vmatpush.bf16.msra.mxu0 0
    %6379 = vmatpush.bf16.msra.mxu0 0
    %6380 = vmatpush.bf16.msra.mxu0 0
    %6381 = vmatpush.bf16.msra.mxu0 %v6372
    %6382 = vmatmul.bf16.gmra.mxu0 %v6369
    %v6383 = vpop.f32.mrf.mxu0
    %v6384 = vadd.f32 0.0, %v6383
    %v6385 = vpop.f32.mrf.mxu0
    %6386 = vdwg.mxu0
    %v6388 = vsel %vm604, %v6165, 0
    %v6391 = vsel %vm2379, %v6213, 0
    %6393 = vmatpush.bf16.msra.mxu0 0
    %6394 = vmatpush.bf16.msra.mxu0 0
    %6395 = vmatpush.bf16.msra.mxu0 0
    %6396 = vmatpush.bf16.msra.mxu0 0
    %6397 = vmatpush.bf16.msra.mxu0 0
    %6398 = vmatpush.bf16.msra.mxu0 0
    %6399 = vmatpush.bf16.msra.mxu0 0
    %6400 = vmatpush.bf16.msra.mxu0 %v6391
    %6401 = vmatmul.bf16.gmra.mxu0 %v6388
    %v6402 = vpop.f32.mrf.mxu0
    %v6403 = vadd.f32 0.0, %v6402
    %v6404 = vpop.f32.mrf.mxu0
    %6405 = vdwg.mxu0
    %v6407 = vsel %vm604, %v6166, 0
    %v6410 = vsel %vm2379, %v6214, 0
    %6412 = vmatpush.bf16.msra.mxu0 0
    %6413 = vmatpush.bf16.msra.mxu0 0
    %6414 = vmatpush.bf16.msra.mxu0 0
    %6415 = vmatpush.bf16.msra.mxu0 0
    %6416 = vmatpush.bf16.msra.mxu0 0
    %6417 = vmatpush.bf16.msra.mxu0 0
    %6418 = vmatpush.bf16.msra.mxu0 0
    %6419 = vmatpush.bf16.msra.mxu0 %v6410
    %6420 = vmatmul.bf16.gmra.mxu0 %v6407
    %v6421 = vpop.f32.mrf.mxu0
    %v6422 = vadd.f32 0.0, %v6421
    %v6423 = vpop.f32.mrf.mxu0
    %6424 = vdwg.mxu0
    %v6426 = vsel %vm604, %v6167, 0
    %v6429 = vsel %vm2379, %v6215, 0
    %6431 = vmatpush.bf16.msra.mxu0 0
    %6432 = vmatpush.bf16.msra.mxu0 0
    %6433 = vmatpush.bf16.msra.mxu0 0
    %6434 = vmatpush.bf16.msra.mxu0 0
    %6435 = vmatpush.bf16.msra.mxu0 0
    %6436 = vmatpush.bf16.msra.mxu0 0
    %6437 = vmatpush.bf16.msra.mxu0 0
    %6438 = vmatpush.bf16.msra.mxu0 %v6429
    %6439 = vmatmul.bf16.gmra.mxu0 %v6426
    %v6440 = vpop.f32.mrf.mxu0
    %v6441 = vadd.f32 0.0, %v6440
    %v6442 = vpop.f32.mrf.mxu0
    %6443 = vdwg.mxu0
    %v6445 = vsel %vm604, %v6168, 0
    %v6448 = vsel %vm2379, %v6216, 0
    %6450 = vmatpush.bf16.msra.mxu0 0
    %6451 = vmatpush.bf16.msra.mxu0 0
    %6452 = vmatpush.bf16.msra.mxu0 0
    %6453 = vmatpush.bf16.msra.mxu0 0
    %6454 = vmatpush.bf16.msra.mxu0 0
    %6455 = vmatpush.bf16.msra.mxu0 0
    %6456 = vmatpush.bf16.msra.mxu0 0
    %6457 = vmatpush.bf16.msra.mxu0 %v6448
    %6458 = vmatmul.bf16.gmra.mxu0 %v6445
    %v6459 = vpop.f32.mrf.mxu0
    %v6460 = vadd.f32 0.0, %v6459
    %v6461 = vpop.f32.mrf.mxu0
    %6462 = vdwg.mxu0
    %v6464 = vsel %vm604, %v6169, 0
    %v6467 = vsel %vm2379, %v6217, 0
    %6469 = vmatpush.bf16.msra.mxu0 0
    %6470 = vmatpush.bf16.msra.mxu0 0
    %6471 = vmatpush.bf16.msra.mxu0 0
    %6472 = vmatpush.bf16.msra.mxu0 0
    %6473 = vmatpush.bf16.msra.mxu0 0
    %6474 = vmatpush.bf16.msra.mxu0 0
    %6475 = vmatpush.bf16.msra.mxu0 0
    %6476 = vmatpush.bf16.msra.mxu0 %v6467
    %6477 = vmatmul.bf16.gmra.mxu0 %v6464
    %v6478 = vpop.f32.mrf.mxu0
    %v6479 = vadd.f32 0.0, %v6478
    %v6480 = vpop.f32.mrf.mxu0
    %6481 = vdwg.mxu0
    %v6483 = vsel %vm604, %v6170, 0
    %v6486 = vsel %vm2379, %v6218, 0
    %6488 = vmatpush.bf16.msra.mxu0 0
    %6489 = vmatpush.bf16.msra.mxu0 0
    %6490 = vmatpush.bf16.msra.mxu0 0
    %6491 = vmatpush.bf16.msra.mxu0 0
    %6492 = vmatpush.bf16.msra.mxu0 0
    %6493 = vmatpush.bf16.msra.mxu0 0
    %6494 = vmatpush.bf16.msra.mxu0 0
    %6495 = vmatpush.bf16.msra.mxu0 %v6486
    %6496 = vmatmul.bf16.gmra.mxu0 %v6483
    %v6497 = vpop.f32.mrf.mxu0
    %v6498 = vadd.f32 0.0, %v6497
    %v6499 = vpop.f32.mrf.mxu0
    %6500 = vdwg.mxu0
    %v6502 = vsel %vm604, %v6171, 0
    %v6505 = vsel %vm2379, %v6219, 0
    %6507 = vmatpush.bf16.msra.mxu0 0
    %6508 = vmatpush.bf16.msra.mxu0 0
    %6509 = vmatpush.bf16.msra.mxu0 0
    %6510 = vmatpush.bf16.msra.mxu0 0
    %6511 = vmatpush.bf16.msra.mxu0 0
    %6512 = vmatpush.bf16.msra.mxu0 0
    %6513 = vmatpush.bf16.msra.mxu0 0
    %6514 = vmatpush.bf16.msra.mxu0 %v6505
    %6515 = vmatmul.bf16.gmra.mxu0 %v6502
    %v6516 = vpop.f32.mrf.mxu0
    %v6517 = vadd.f32 0.0, %v6516
    %v6518 = vpop.f32.mrf.mxu0
    %6519 = vdwg.mxu0
    %v6521 = vsel %vm604, %v6172, 0
    %v6524 = vsel %vm2379, %v6220, 0
    %6526 = vmatpush.bf16.msra.mxu0 0
    %6527 = vmatpush.bf16.msra.mxu0 0
    %6528 = vmatpush.bf16.msra.mxu0 0
    %6529 = vmatpush.bf16.msra.mxu0 0
    %6530 = vmatpush.bf16.msra.mxu0 0
    %6531 = vmatpush.bf16.msra.mxu0 0
    %6532 = vmatpush.bf16.msra.mxu0 0
    %6533 = vmatpush.bf16.msra.mxu0 %v6524
    %6534 = vmatmul.bf16.gmra.mxu0 %v6521
    %v6535 = vpop.f32.mrf.mxu0
    %v6536 = vadd.f32 0.0, %v6535
    %v6537 = vpop.f32.mrf.mxu0
    %6538 = vdwg.mxu0
    %v6540 = vsel %vm604, %v6173, 0
    %v6543 = vsel %vm2379, %v6221, 0
    %6545 = vmatpush.bf16.msra.mxu0 0
    %6546 = vmatpush.bf16.msra.mxu0 0
    %6547 = vmatpush.bf16.msra.mxu0 0
    %6548 = vmatpush.bf16.msra.mxu0 0
    %6549 = vmatpush.bf16.msra.mxu0 0
    %6550 = vmatpush.bf16.msra.mxu0 0
    %6551 = vmatpush.bf16.msra.mxu0 0
    %6552 = vmatpush.bf16.msra.mxu0 %v6543
    %6553 = vmatmul.bf16.gmra.mxu0 %v6540
    %v6554 = vpop.f32.mrf.mxu0
    %v6555 = vadd.f32 0.0, %v6554
    %v6556 = vpop.f32.mrf.mxu0
    %6557 = vdwg.mxu0
    %v6559 = vsel %vm604, %v6174, 0
    %v6562 = vsel %vm2379, %v6222, 0
    %6564 = vmatpush.bf16.msra.mxu0 0
    %6565 = vmatpush.bf16.msra.mxu0 0
    %6566 = vmatpush.bf16.msra.mxu0 0
    %6567 = vmatpush.bf16.msra.mxu0 0
    %6568 = vmatpush.bf16.msra.mxu0 0
    %6569 = vmatpush.bf16.msra.mxu0 0
    %6570 = vmatpush.bf16.msra.mxu0 0
    %6571 = vmatpush.bf16.msra.mxu0 %v6562
    %6572 = vmatmul.bf16.gmra.mxu0 %v6559
    %v6573 = vpop.f32.mrf.mxu0
    %v6574 = vadd.f32 0.0, %v6573
    %v6575 = vpop.f32.mrf.mxu0
    %6576 = vdwg.mxu0
    %v6578 = vsel %vm604, %v6175, 0
    %v6581 = vsel %vm2379, %v6223, 0
    %6583 = vmatpush.bf16.msra.mxu0 0
    %6584 = vmatpush.bf16.msra.mxu0 0
    %6585 = vmatpush.bf16.msra.mxu0 0
    %6586 = vmatpush.bf16.msra.mxu0 0
    %6587 = vmatpush.bf16.msra.mxu0 0
    %6588 = vmatpush.bf16.msra.mxu0 0
    %6589 = vmatpush.bf16.msra.mxu0 0
    %6590 = vmatpush.bf16.msra.mxu0 %v6581
    %6591 = vmatmul.bf16.gmra.mxu0 %v6578
    %v6592 = vpop.f32.mrf.mxu0
    %v6593 = vadd.f32 0.0, %v6592
    %v6594 = vpop.f32.mrf.mxu0
    %6595 = vdwg.mxu0
    %v6597 = vsel %vm604, %v6176, 0
    %v6600 = vsel %vm2379, %v6224, 0
    %6602 = vmatpush.bf16.msra.mxu0 0
    %6603 = vmatpush.bf16.msra.mxu0 0
    %6604 = vmatpush.bf16.msra.mxu0 0
    %6605 = vmatpush.bf16.msra.mxu0 0
    %6606 = vmatpush.bf16.msra.mxu0 0
    %6607 = vmatpush.bf16.msra.mxu0 0
    %6608 = vmatpush.bf16.msra.mxu0 0
    %6609 = vmatpush.bf16.msra.mxu0 %v6600
    %6610 = vmatmul.bf16.gmra.mxu0 %v6597
    %v6611 = vpop.f32.mrf.mxu0
    %v6612 = vadd.f32 0.0, %v6611
    %v6613 = vpop.f32.mrf.mxu0
    %6614 = vdwg.mxu0
    %v6616 = vsel %vm604, %v6177, 0
    %v6619 = vsel %vm2379, %v6225, 0
    %6621 = vmatpush.bf16.msra.mxu0 0
    %6622 = vmatpush.bf16.msra.mxu0 0
    %6623 = vmatpush.bf16.msra.mxu0 0
    %6624 = vmatpush.bf16.msra.mxu0 0
    %6625 = vmatpush.bf16.msra.mxu0 0
    %6626 = vmatpush.bf16.msra.mxu0 0
    %6627 = vmatpush.bf16.msra.mxu0 0
    %6628 = vmatpush.bf16.msra.mxu0 %v6619
    %6629 = vmatmul.bf16.gmra.mxu0 %v6616
    %v6630 = vpop.f32.mrf.mxu0
    %v6631 = vadd.f32 0.0, %v6630
    %v6632 = vpop.f32.mrf.mxu0
    %6633 = vdwg.mxu0
    %v6635 = vsel %vm604, %v6178, 0
    %v6638 = vsel %vm2379, %v6226, 0
    %6640 = vmatpush.bf16.msra.mxu0 0
    %6641 = vmatpush.bf16.msra.mxu0 0
    %6642 = vmatpush.bf16.msra.mxu0 0
    %6643 = vmatpush.bf16.msra.mxu0 0
    %6644 = vmatpush.bf16.msra.mxu0 0
    %6645 = vmatpush.bf16.msra.mxu0 0
    %6646 = vmatpush.bf16.msra.mxu0 0
    %6647 = vmatpush.bf16.msra.mxu0 %v6638
    %6648 = vmatmul.bf16.gmra.mxu0 %v6635
    %v6649 = vpop.f32.mrf.mxu0
    %v6650 = vadd.f32 0.0, %v6649
    %v6651 = vpop.f32.mrf.mxu0
    %6652 = vdwg.mxu0
    %v6654 = vsel %vm604, %v6179, 0
    %v6657 = vsel %vm2379, %v6227, 0
    %6659 = vmatpush.bf16.msra.mxu0 0
    %6660 = vmatpush.bf16.msra.mxu0 0
    %6661 = vmatpush.bf16.msra.mxu0 0
    %6662 = vmatpush.bf16.msra.mxu0 0
    %6663 = vmatpush.bf16.msra.mxu0 0
    %6664 = vmatpush.bf16.msra.mxu0 0
    %6665 = vmatpush.bf16.msra.mxu0 0
    %6666 = vmatpush.bf16.msra.mxu0 %v6657
    %6667 = vmatmul.bf16.gmra.mxu0 %v6654
    %v6668 = vpop.f32.mrf.mxu0
    %v6669 = vadd.f32 0.0, %v6668
    %v6670 = vpop.f32.mrf.mxu0
    %6671 = vdwg.mxu0
    %v6673 = vsel %vm604, %v6180, 0
    %v6676 = vsel %vm2379, %v6228, 0
    %6678 = vmatpush.bf16.msra.mxu0 0
    %6679 = vmatpush.bf16.msra.mxu0 0
    %6680 = vmatpush.bf16.msra.mxu0 0
    %6681 = vmatpush.bf16.msra.mxu0 0
    %6682 = vmatpush.bf16.msra.mxu0 0
    %6683 = vmatpush.bf16.msra.mxu0 0
    %6684 = vmatpush.bf16.msra.mxu0 0
    %6685 = vmatpush.bf16.msra.mxu0 %v6676
    %6686 = vmatmul.bf16.gmra.mxu0 %v6673
    %v6687 = vpop.f32.mrf.mxu0
    %v6688 = vadd.f32 0.0, %v6687
    %v6689 = vpop.f32.mrf.mxu0
    %6690 = vdwg.mxu0
    %v6692 = vsel %vm604, %v6181, 0
    %v6695 = vsel %vm2379, %v6229, 0
    %6697 = vmatpush.bf16.msra.mxu0 0
    %6698 = vmatpush.bf16.msra.mxu0 0
    %6699 = vmatpush.bf16.msra.mxu0 0
    %6700 = vmatpush.bf16.msra.mxu0 0
    %6701 = vmatpush.bf16.msra.mxu0 0
    %6702 = vmatpush.bf16.msra.mxu0 0
    %6703 = vmatpush.bf16.msra.mxu0 0
    %6704 = vmatpush.bf16.msra.mxu0 %v6695
    %6705 = vmatmul.bf16.gmra.mxu0 %v6692
    %v6706 = vpop.f32.mrf.mxu0
    %v6707 = vadd.f32 0.0, %v6706
    %v6708 = vpop.f32.mrf.mxu0
    %6709 = vdwg.mxu0
    %v6711 = vsel %vm604, %v6182, 0
    %v6714 = vsel %vm2379, %v6230, 0
    %6716 = vmatpush.bf16.msra.mxu0 0
    %6717 = vmatpush.bf16.msra.mxu0 0
    %6718 = vmatpush.bf16.msra.mxu0 0
    %6719 = vmatpush.bf16.msra.mxu0 0
    %6720 = vmatpush.bf16.msra.mxu0 0
    %6721 = vmatpush.bf16.msra.mxu0 0
    %6722 = vmatpush.bf16.msra.mxu0 0
    %6723 = vmatpush.bf16.msra.mxu0 %v6714
    %6724 = vmatmul.bf16.gmra.mxu0 %v6711
    %v6725 = vpop.f32.mrf.mxu0
    %v6726 = vadd.f32 0.0, %v6725
    %v6727 = vpop.f32.mrf.mxu0
    %6728 = vdwg.mxu0
    %v6730 = vsel %vm604, %v6183, 0
    %v6733 = vsel %vm2379, %v6231, 0
    %6735 = vmatpush.bf16.msra.mxu0 0
    %6736 = vmatpush.bf16.msra.mxu0 0
    %6737 = vmatpush.bf16.msra.mxu0 0
    %6738 = vmatpush.bf16.msra.mxu0 0
    %6739 = vmatpush.bf16.msra.mxu0 0
    %6740 = vmatpush.bf16.msra.mxu0 0
    %6741 = vmatpush.bf16.msra.mxu0 0
    %6742 = vmatpush.bf16.msra.mxu0 %v6733
    %6743 = vmatmul.bf16.gmra.mxu0 %v6730
    %v6744 = vpop.f32.mrf.mxu0
    %v6745 = vadd.f32 0.0, %v6744
    %v6746 = vpop.f32.mrf.mxu0
    %6747 = vdwg.mxu0
    %v6749 = vsel %vm604, %v6184, 0
    %v6752 = vsel %vm2379, %v6232, 0
    %6754 = vmatpush.bf16.msra.mxu0 0
    %6755 = vmatpush.bf16.msra.mxu0 0
    %6756 = vmatpush.bf16.msra.mxu0 0
    %6757 = vmatpush.bf16.msra.mxu0 0
    %6758 = vmatpush.bf16.msra.mxu0 0
    %6759 = vmatpush.bf16.msra.mxu0 0
    %6760 = vmatpush.bf16.msra.mxu0 0
    %6761 = vmatpush.bf16.msra.mxu0 %v6752
    %6762 = vmatmul.bf16.gmra.mxu0 %v6749
    %v6763 = vpop.f32.mrf.mxu0
    %v6764 = vadd.f32 0.0, %v6763
    %v6765 = vpop.f32.mrf.mxu0
    %6766 = vdwg.mxu0
    %v6768 = vsel %vm604, %v6185, 0
    %v6771 = vsel %vm2379, %v6233, 0
    %6773 = vmatpush.bf16.msra.mxu0 0
    %6774 = vmatpush.bf16.msra.mxu0 0
    %6775 = vmatpush.bf16.msra.mxu0 0
    %6776 = vmatpush.bf16.msra.mxu0 0
    %6777 = vmatpush.bf16.msra.mxu0 0
    %6778 = vmatpush.bf16.msra.mxu0 0
    %6779 = vmatpush.bf16.msra.mxu0 0
    %6780 = vmatpush.bf16.msra.mxu0 %v6771
    %6781 = vmatmul.bf16.gmra.mxu0 %v6768
    %v6782 = vpop.f32.mrf.mxu0
    %v6783 = vadd.f32 0.0, %v6782
    %v6784 = vpop.f32.mrf.mxu0
    %6785 = vdwg.mxu0
    %v6787 = vsel %vm604, %v6186, 0
    %v6790 = vsel %vm2379, %v6234, 0
    %6792 = vmatpush.bf16.msra.mxu0 0
    %6793 = vmatpush.bf16.msra.mxu0 0
    %6794 = vmatpush.bf16.msra.mxu0 0
    %6795 = vmatpush.bf16.msra.mxu0 0
    %6796 = vmatpush.bf16.msra.mxu0 0
    %6797 = vmatpush.bf16.msra.mxu0 0
    %6798 = vmatpush.bf16.msra.mxu0 0
    %6799 = vmatpush.bf16.msra.mxu0 %v6790
    %6800 = vmatmul.bf16.gmra.mxu0 %v6787
    %v6801 = vpop.f32.mrf.mxu0
    %v6802 = vadd.f32 0.0, %v6801
    %v6803 = vpop.f32.mrf.mxu0
    %6804 = vdwg.mxu0
    %v6806 = vsel %vm604, %v6187, 0
    %v6809 = vsel %vm2379, %v6235, 0
    %6811 = vmatpush.bf16.msra.mxu0 0
    %6812 = vmatpush.bf16.msra.mxu0 0
    %6813 = vmatpush.bf16.msra.mxu0 0
    %6814 = vmatpush.bf16.msra.mxu0 0
    %6815 = vmatpush.bf16.msra.mxu0 0
    %6816 = vmatpush.bf16.msra.mxu0 0
    %6817 = vmatpush.bf16.msra.mxu0 0
    %6818 = vmatpush.bf16.msra.mxu0 %v6809
    %6819 = vmatmul.bf16.gmra.mxu0 %v6806
    %v6820 = vpop.f32.mrf.mxu0
    %v6821 = vadd.f32 0.0, %v6820
    %v6822 = vpop.f32.mrf.mxu0
    %6823 = vdwg.mxu0
    %v6825 = vsel %vm604, %v6188, 0
    %v6828 = vsel %vm2379, %v6236, 0
    %6830 = vmatpush.bf16.msra.mxu0 0
    %6831 = vmatpush.bf16.msra.mxu0 0
    %6832 = vmatpush.bf16.msra.mxu0 0
    %6833 = vmatpush.bf16.msra.mxu0 0
    %6834 = vmatpush.bf16.msra.mxu0 0
    %6835 = vmatpush.bf16.msra.mxu0 0
    %6836 = vmatpush.bf16.msra.mxu0 0
    %6837 = vmatpush.bf16.msra.mxu0 %v6828
    %6838 = vmatmul.bf16.gmra.mxu0 %v6825
    %v6839 = vpop.f32.mrf.mxu0
    %v6840 = vadd.f32 0.0, %v6839
    %v6841 = vpop.f32.mrf.mxu0
    %6842 = vdwg.mxu0
    %v6844 = vsel %vm604, %v6189, 0
    %v6847 = vsel %vm2379, %v6237, 0
    %6849 = vmatpush.bf16.msra.mxu0 0
    %6850 = vmatpush.bf16.msra.mxu0 0
    %6851 = vmatpush.bf16.msra.mxu0 0
    %6852 = vmatpush.bf16.msra.mxu0 0
    %6853 = vmatpush.bf16.msra.mxu0 0
    %6854 = vmatpush.bf16.msra.mxu0 0
    %6855 = vmatpush.bf16.msra.mxu0 0
    %6856 = vmatpush.bf16.msra.mxu0 %v6847
    %6857 = vmatmul.bf16.gmra.mxu0 %v6844
    %v6858 = vpop.f32.mrf.mxu0
    %v6859 = vadd.f32 0.0, %v6858
    %v6860 = vpop.f32.mrf.mxu0
    %6861 = vdwg.mxu0
    %v6863 = vsel %vm604, %v6190, 0
    %v6866 = vsel %vm2379, %v6238, 0
    %6868 = vmatpush.bf16.msra.mxu0 0
    %6869 = vmatpush.bf16.msra.mxu0 0
    %6870 = vmatpush.bf16.msra.mxu0 0
    %6871 = vmatpush.bf16.msra.mxu0 0
    %6872 = vmatpush.bf16.msra.mxu0 0
    %6873 = vmatpush.bf16.msra.mxu0 0
    %6874 = vmatpush.bf16.msra.mxu0 0
    %6875 = vmatpush.bf16.msra.mxu0 %v6866
    %6876 = vmatmul.bf16.gmra.mxu0 %v6863
    %v6877 = vpop.f32.mrf.mxu0
    %v6878 = vadd.f32 0.0, %v6877
    %v6879 = vpop.f32.mrf.mxu0
    %6880 = vdwg.mxu0
    %v6882 = vsel %vm604, %v6191, 0
    %v6885 = vsel %vm2379, %v6239, 0
    %6887 = vmatpush.bf16.msra.mxu0 0
    %6888 = vmatpush.bf16.msra.mxu0 0
    %6889 = vmatpush.bf16.msra.mxu0 0
    %6890 = vmatpush.bf16.msra.mxu0 0
    %6891 = vmatpush.bf16.msra.mxu0 0
    %6892 = vmatpush.bf16.msra.mxu0 0
    %6893 = vmatpush.bf16.msra.mxu0 0
    %6894 = vmatpush.bf16.msra.mxu0 %v6885
    %6895 = vmatmul.bf16.gmra.mxu0 %v6882
    %v6896 = vpop.f32.mrf.mxu0
    %v6897 = vadd.f32 0.0, %v6896
    %v6898 = vpop.f32.mrf.mxu0
    %6899 = vdwg.mxu0
    %v6901 = vsel %vm604, %v6192, 0
    %v6904 = vsel %vm2379, %v6240, 0
    %6906 = vmatpush.bf16.msra.mxu0 0
    %6907 = vmatpush.bf16.msra.mxu0 0
    %6908 = vmatpush.bf16.msra.mxu0 0
    %6909 = vmatpush.bf16.msra.mxu0 0
    %6910 = vmatpush.bf16.msra.mxu0 0
    %6911 = vmatpush.bf16.msra.mxu0 0
    %6912 = vmatpush.bf16.msra.mxu0 0
    %6913 = vmatpush.bf16.msra.mxu0 %v6904
    %6914 = vmatmul.bf16.gmra.mxu0 %v6901
    %v6915 = vpop.f32.mrf.mxu0
    %v6916 = vadd.f32 0.0, %v6915
    %v6917 = vpop.f32.mrf.mxu0
    %6918 = vdwg.mxu0
    %v6920 = vsel %vm604, %v6193, 0
    %v6923 = vsel %vm2379, %v6241, 0
    %6925 = vmatpush.bf16.msra.mxu0 0
    %6926 = vmatpush.bf16.msra.mxu0 0
    %6927 = vmatpush.bf16.msra.mxu0 0
    %6928 = vmatpush.bf16.msra.mxu0 0
    %6929 = vmatpush.bf16.msra.mxu0 0
    %6930 = vmatpush.bf16.msra.mxu0 0
    %6931 = vmatpush.bf16.msra.mxu0 0
    %6932 = vmatpush.bf16.msra.mxu0 %v6923
    %6933 = vmatmul.bf16.gmra.mxu0 %v6920
    %v6934 = vpop.f32.mrf.mxu0
    %v6935 = vadd.f32 0.0, %v6934
    %v6936 = vpop.f32.mrf.mxu0
    %6937 = vdwg.mxu0
    %v6939 = vsel %vm604, %v6194, 0
    %v6942 = vsel %vm2379, %v6242, 0
    %6944 = vmatpush.bf16.msra.mxu0 0
    %6945 = vmatpush.bf16.msra.mxu0 0
    %6946 = vmatpush.bf16.msra.mxu0 0
    %6947 = vmatpush.bf16.msra.mxu0 0
    %6948 = vmatpush.bf16.msra.mxu0 0
    %6949 = vmatpush.bf16.msra.mxu0 0
    %6950 = vmatpush.bf16.msra.mxu0 0
    %6951 = vmatpush.bf16.msra.mxu0 %v6942
    %6952 = vmatmul.bf16.gmra.mxu0 %v6939
    %v6953 = vpop.f32.mrf.mxu0
    %v6954 = vadd.f32 0.0, %v6953
    %v6955 = vpop.f32.mrf.mxu0
    %6956 = vdwg.mxu0
    %v6958 = vsel %vm604, %v6195, 0
    %v6961 = vsel %vm2379, %v6243, 0
    %6963 = vmatpush.bf16.msra.mxu0 0
    %6964 = vmatpush.bf16.msra.mxu0 0
    %6965 = vmatpush.bf16.msra.mxu0 0
    %6966 = vmatpush.bf16.msra.mxu0 0
    %6967 = vmatpush.bf16.msra.mxu0 0
    %6968 = vmatpush.bf16.msra.mxu0 0
    %6969 = vmatpush.bf16.msra.mxu0 0
    %6970 = vmatpush.bf16.msra.mxu0 %v6961
    %6971 = vmatmul.bf16.gmra.mxu0 %v6958
    %v6972 = vpop.f32.mrf.mxu0
    %v6973 = vadd.f32 0.0, %v6972
    %v6974 = vpop.f32.mrf.mxu0
    %6975 = vdwg.mxu0
    %v6977 = vsel %vm604, %v6196, 0
    %v6980 = vsel %vm2379, %v6244, 0
    %6982 = vmatpush.bf16.msra.mxu0 0
    %6983 = vmatpush.bf16.msra.mxu0 0
    %6984 = vmatpush.bf16.msra.mxu0 0
    %6985 = vmatpush.bf16.msra.mxu0 0
    %6986 = vmatpush.bf16.msra.mxu0 0
    %6987 = vmatpush.bf16.msra.mxu0 0
    %6988 = vmatpush.bf16.msra.mxu0 0
    %6989 = vmatpush.bf16.msra.mxu0 %v6980
    %6990 = vmatmul.bf16.gmra.mxu0 %v6977
    %v6991 = vpop.f32.mrf.mxu0
    %v6992 = vadd.f32 0.0, %v6991
    %v6993 = vpop.f32.mrf.mxu0
    %6994 = vdwg.mxu0
    %v6996 = vsel %vm604, %v6197, 0
    %v6999 = vsel %vm2379, %v6245, 0
    %7001 = vmatpush.bf16.msra.mxu0 0
    %7002 = vmatpush.bf16.msra.mxu0 0
    %7003 = vmatpush.bf16.msra.mxu0 0
    %7004 = vmatpush.bf16.msra.mxu0 0
    %7005 = vmatpush.bf16.msra.mxu0 0
    %7006 = vmatpush.bf16.msra.mxu0 0
    %7007 = vmatpush.bf16.msra.mxu0 0
    %7008 = vmatpush.bf16.msra.mxu0 %v6999
    %7009 = vmatmul.bf16.gmra.mxu0 %v6996
    %v7010 = vpop.f32.mrf.mxu0
    %v7011 = vadd.f32 0.0, %v7010
    %v7012 = vpop.f32.mrf.mxu0
    %7013 = vdwg.mxu0
    %v7015 = vsel %vm604, %v6198, 0
    %v7018 = vsel %vm2379, %v6246, 0
    %7020 = vmatpush.bf16.msra.mxu0 0
    %7021 = vmatpush.bf16.msra.mxu0 0
    %7022 = vmatpush.bf16.msra.mxu0 0
    %7023 = vmatpush.bf16.msra.mxu0 0
    %7024 = vmatpush.bf16.msra.mxu0 0
    %7025 = vmatpush.bf16.msra.mxu0 0
    %7026 = vmatpush.bf16.msra.mxu0 0
    %7027 = vmatpush.bf16.msra.mxu0 %v7018
    %7028 = vmatmul.bf16.gmra.mxu0 %v7015
    %v7029 = vpop.f32.mrf.mxu0
    %v7030 = vadd.f32 0.0, %v7029
    %v7031 = vpop.f32.mrf.mxu0
    %7032 = vdwg.mxu0
    %v7034 = vsel %vm604, %v6199, 0
    %v7037 = vsel %vm2379, %v6247, 0
    %7039 = vmatpush.bf16.msra.mxu0 0
    %7040 = vmatpush.bf16.msra.mxu0 0
    %7041 = vmatpush.bf16.msra.mxu0 0
    %7042 = vmatpush.bf16.msra.mxu0 0
    %7043 = vmatpush.bf16.msra.mxu0 0
    %7044 = vmatpush.bf16.msra.mxu0 0
    %7045 = vmatpush.bf16.msra.mxu0 0
    %7046 = vmatpush.bf16.msra.mxu0 %v7037
    %7047 = vmatmul.bf16.gmra.mxu0 %v7034
    %v7048 = vpop.f32.mrf.mxu0
    %v7049 = vadd.f32 0.0, %v7048
    %v7050 = vpop.f32.mrf.mxu0
    %7051 = vdwg.mxu0
    %v7053 = vsel %vm604, %v6200, 0
    %v7056 = vsel %vm2379, %v6248, 0
    %7058 = vmatpush.bf16.msra.mxu0 0
    %7059 = vmatpush.bf16.msra.mxu0 0
    %7060 = vmatpush.bf16.msra.mxu0 0
    %7061 = vmatpush.bf16.msra.mxu0 0
    %7062 = vmatpush.bf16.msra.mxu0 0
    %7063 = vmatpush.bf16.msra.mxu0 0
    %7064 = vmatpush.bf16.msra.mxu0 0
    %7065 = vmatpush.bf16.msra.mxu0 %v7056
    %7066 = vmatmul.bf16.gmra.mxu0 %v7053
    %v7067 = vpop.f32.mrf.mxu0
    %v7068 = vadd.f32 0.0, %v7067
    %v7069 = vpop.f32.mrf.mxu0
    %7070 = vdwg.mxu0
    %v7072 = vsel %vm604, %v6201, 0
    %v7075 = vsel %vm2379, %v6249, 0
    %7077 = vmatpush.bf16.msra.mxu0 0
    %7078 = vmatpush.bf16.msra.mxu0 0
    %7079 = vmatpush.bf16.msra.mxu0 0
    %7080 = vmatpush.bf16.msra.mxu0 0
    %7081 = vmatpush.bf16.msra.mxu0 0
    %7082 = vmatpush.bf16.msra.mxu0 0
    %7083 = vmatpush.bf16.msra.mxu0 0
    %7084 = vmatpush.bf16.msra.mxu0 %v7075
    %7085 = vmatmul.bf16.gmra.mxu0 %v7072
    %v7086 = vpop.f32.mrf.mxu0
    %v7087 = vadd.f32 0.0, %v7086
    %v7088 = vpop.f32.mrf.mxu0
    %7089 = vdwg.mxu0
    %v7091 = vsel %vm604, %v6202, 0
    %v7094 = vsel %vm2379, %v6250, 0
    %7096 = vmatpush.bf16.msra.mxu0 0
    %7097 = vmatpush.bf16.msra.mxu0 0
    %7098 = vmatpush.bf16.msra.mxu0 0
    %7099 = vmatpush.bf16.msra.mxu0 0
    %7100 = vmatpush.bf16.msra.mxu0 0
    %7101 = vmatpush.bf16.msra.mxu0 0
    %7102 = vmatpush.bf16.msra.mxu0 0
    %7103 = vmatpush.bf16.msra.mxu0 %v7094
    %7104 = vmatmul.bf16.gmra.mxu0 %v7091
    %v7105 = vpop.f32.mrf.mxu0
    %v7106 = vadd.f32 0.0, %v7105
    %v7107 = vpop.f32.mrf.mxu0
    %7108 = vdwg.mxu0
    %v7110 = vsel %vm604, %v6203, 0
    %v7113 = vsel %vm2379, %v6251, 0
    %7115 = vmatpush.bf16.msra.mxu0 0
    %7116 = vmatpush.bf16.msra.mxu0 0
    %7117 = vmatpush.bf16.msra.mxu0 0
    %7118 = vmatpush.bf16.msra.mxu0 0
    %7119 = vmatpush.bf16.msra.mxu0 0
    %7120 = vmatpush.bf16.msra.mxu0 0
    %7121 = vmatpush.bf16.msra.mxu0 0
    %7122 = vmatpush.bf16.msra.mxu0 %v7113
    %7123 = vmatmul.bf16.gmra.mxu0 %v7110
    %v7124 = vpop.f32.mrf.mxu0
    %v7125 = vadd.f32 0.0, %v7124
    %v7126 = vpop.f32.mrf.mxu0
    %7127 = vdwg.mxu0
    %v7129 = vsel %vm604, %v6204, 0
    %v7132 = vsel %vm2379, %v6252, 0
    %7134 = vmatpush.bf16.msra.mxu0 0
    %7135 = vmatpush.bf16.msra.mxu0 0
    %7136 = vmatpush.bf16.msra.mxu0 0
    %7137 = vmatpush.bf16.msra.mxu0 0
    %7138 = vmatpush.bf16.msra.mxu0 0
    %7139 = vmatpush.bf16.msra.mxu0 0
    %7140 = vmatpush.bf16.msra.mxu0 0
    %7141 = vmatpush.bf16.msra.mxu0 %v7132
    %7142 = vmatmul.bf16.gmra.mxu0 %v7129
    %v7143 = vpop.f32.mrf.mxu0
    %v7144 = vadd.f32 0.0, %v7143
    %v7145 = vpop.f32.mrf.mxu0
    %7146 = vdwg.mxu0
    %v7148 = vsel %vm604, %v6205, 0
    %v7151 = vsel %vm2379, %v6253, 0
    %7153 = vmatpush.bf16.msra.mxu0 0
    %7154 = vmatpush.bf16.msra.mxu0 0
    %7155 = vmatpush.bf16.msra.mxu0 0
    %7156 = vmatpush.bf16.msra.mxu0 0
    %7157 = vmatpush.bf16.msra.mxu0 0
    %7158 = vmatpush.bf16.msra.mxu0 0
    %7159 = vmatpush.bf16.msra.mxu0 0
    %7160 = vmatpush.bf16.msra.mxu0 %v7151
    %7161 = vmatmul.bf16.gmra.mxu0 %v7148
    %v7162 = vpop.f32.mrf.mxu0
    %v7163 = vadd.f32 0.0, %v7162
    %v7164 = vpop.f32.mrf.mxu0
    %7165 = vdwg.mxu0
    %7172 = vrot.lane.b32.xlu0 %v6384, 8
    %v7173 = vpop.permute.xlu0 %7172
    %7174 = vrot.lane.b32.xlu0 %v6403, 8
    %v7175 = vpop.permute.xlu0 %7174
    %7176 = vrot.lane.b32.xlu0 %v6422, 8
    %v7177 = vpop.permute.xlu0 %7176
    %7178 = vrot.lane.b32.xlu0 %v6441, 8
    %v7179 = vpop.permute.xlu0 %7178
    %7180 = vrot.lane.b32.xlu0 %v6460, 8
    %v7181 = vpop.permute.xlu0 %7180
    %7182 = vrot.lane.b32.xlu0 %v6479, 8
    %v7183 = vpop.permute.xlu0 %7182
    %7196 = vrot.lane.b32.xlu0 %v6498, 16
    %v7197 = vpop.permute.xlu0 %7196
    %7198 = vrot.lane.b32.xlu0 %v6517, 16
    %v7199 = vpop.permute.xlu0 %7198
    %7200 = vrot.lane.b32.xlu0 %v6536, 16
    %v7201 = vpop.permute.xlu0 %7200
    %7202 = vrot.lane.b32.xlu0 %v6555, 16
    %v7203 = vpop.permute.xlu0 %7202
    %7204 = vrot.lane.b32.xlu0 %v6574, 16
    %v7205 = vpop.permute.xlu0 %7204
    %7206 = vrot.lane.b32.xlu0 %v6593, 16
    %v7207 = vpop.permute.xlu0 %7206
    %7220 = vrot.lane.b32.xlu0 %v6612, 24
    %v7221 = vpop.permute.xlu0 %7220
    %7222 = vrot.lane.b32.xlu0 %v6631, 24
    %v7223 = vpop.permute.xlu0 %7222
    %7224 = vrot.lane.b32.xlu0 %v6650, 24
    %v7225 = vpop.permute.xlu0 %7224
    %7226 = vrot.lane.b32.xlu0 %v6669, 24
    %v7227 = vpop.permute.xlu0 %7226
    %7228 = vrot.lane.b32.xlu0 %v6688, 24
    %v7229 = vpop.permute.xlu0 %7228
    %7230 = vrot.lane.b32.xlu0 %v6707, 24
    %v7231 = vpop.permute.xlu0 %7230
    %7244 = vrot.lane.b32.xlu0 %v6726, 32
    %v7245 = vpop.permute.xlu0 %7244
    %7246 = vrot.lane.b32.xlu0 %v6745, 32
    %v7247 = vpop.permute.xlu0 %7246
    %7248 = vrot.lane.b32.xlu0 %v6764, 32
    %v7249 = vpop.permute.xlu0 %7248
    %7250 = vrot.lane.b32.xlu0 %v6783, 32
    %v7251 = vpop.permute.xlu0 %7250
    %7252 = vrot.lane.b32.xlu0 %v6802, 32
    %v7253 = vpop.permute.xlu0 %7252
    %7254 = vrot.lane.b32.xlu0 %v6821, 32
    %v7255 = vpop.permute.xlu0 %7254
    %7268 = vrot.lane.b32.xlu0 %v6840, 40
    %v7269 = vpop.permute.xlu0 %7268
    %7270 = vrot.lane.b32.xlu0 %v6859, 40
    %v7271 = vpop.permute.xlu0 %7270
    %7272 = vrot.lane.b32.xlu0 %v6878, 40
    %v7273 = vpop.permute.xlu0 %7272
    %7274 = vrot.lane.b32.xlu0 %v6897, 40
    %v7275 = vpop.permute.xlu0 %7274
    %7276 = vrot.lane.b32.xlu0 %v6916, 40
    %v7277 = vpop.permute.xlu0 %7276
    %7278 = vrot.lane.b32.xlu0 %v6935, 40
    %v7279 = vpop.permute.xlu0 %7278
    %7292 = vrot.lane.b32.xlu0 %v6954, 48
    %v7293 = vpop.permute.xlu0 %7292
    %7294 = vrot.lane.b32.xlu0 %v6973, 48
    %v7295 = vpop.permute.xlu0 %7294
    %7296 = vrot.lane.b32.xlu0 %v6992, 48
    %v7297 = vpop.permute.xlu0 %7296
    %7298 = vrot.lane.b32.xlu0 %v7011, 48
    %v7299 = vpop.permute.xlu0 %7298
    %7300 = vrot.lane.b32.xlu0 %v7030, 48
    %v7301 = vpop.permute.xlu0 %7300
    %7302 = vrot.lane.b32.xlu0 %v7049, 48
    %v7303 = vpop.permute.xlu0 %7302
    %7316 = vrot.lane.b32.xlu0 %v7068, 56
    %v7317 = vpop.permute.xlu0 %7316
    %7318 = vrot.lane.b32.xlu0 %v7087, 56
    %v7319 = vpop.permute.xlu0 %7318
    %7320 = vrot.lane.b32.xlu0 %v7106, 56
    %v7321 = vpop.permute.xlu0 %7320
    %7322 = vrot.lane.b32.xlu0 %v7125, 56
    %v7323 = vpop.permute.xlu0 %7322
    %7324 = vrot.lane.b32.xlu0 %v7144, 56
    %v7325 = vpop.permute.xlu0 %7324
    %7326 = vrot.lane.b32.xlu0 %v7163, 56
    %v7327 = vpop.permute.xlu0 %7326
    %v7334 = vsel %vm604, %v6270, %v7173
    %v7335 = vsel %vm604, %v6289, %v7175
    %v7336 = vsel %vm604, %v6308, %v7177
    %v7337 = vsel %vm604, %v6327, %v7179
    %v7338 = vsel %vm604, %v6346, %v7181
    %v7339 = vsel %vm604, %v6365, %v7183
    %v7340 = vsel %vm3463, %v7334, %v7197
    %v7341 = vsel %vm3463, %v7335, %v7199
    %v7342 = vsel %vm3463, %v7336, %v7201
    %v7343 = vsel %vm3463, %v7337, %v7203
    %v7344 = vsel %vm3463, %v7338, %v7205
    %v7345 = vsel %vm3463, %v7339, %v7207
    %v7346 = vsel %vm3470, %v7340, %v7221
    %v7347 = vsel %vm3470, %v7341, %v7223
    %v7348 = vsel %vm3470, %v7342, %v7225
    %v7349 = vsel %vm3470, %v7343, %v7227
    %v7350 = vsel %vm3470, %v7344, %v7229
    %v7351 = vsel %vm3470, %v7345, %v7231
    %v7352 = vsel %vm3477, %v7346, %v7245
    %v7353 = vsel %vm3477, %v7347, %v7247
    %v7354 = vsel %vm3477, %v7348, %v7249
    %v7355 = vsel %vm3477, %v7349, %v7251
    %v7356 = vsel %vm3477, %v7350, %v7253
    %v7357 = vsel %vm3477, %v7351, %v7255
    %v7358 = vsel %vm3484, %v7352, %v7269
    %v7359 = vsel %vm3484, %v7353, %v7271
    %v7360 = vsel %vm3484, %v7354, %v7273
    %v7361 = vsel %vm3484, %v7355, %v7275
    %v7362 = vsel %vm3484, %v7356, %v7277
    %v7363 = vsel %vm3484, %v7357, %v7279
    %v7364 = vsel %vm3491, %v7358, %v7293
    %v7365 = vsel %vm3491, %v7359, %v7295
    %v7366 = vsel %vm3491, %v7360, %v7297
    %v7367 = vsel %vm3491, %v7361, %v7299
    %v7368 = vsel %vm3491, %v7362, %v7301
    %v7369 = vsel %vm3491, %v7363, %v7303
    %v7370 = vsel %vm3498, %v7364, %v7317
    %v7371 = vsel %vm3498, %v7365, %v7319
    %v7372 = vsel %vm3498, %v7366, %v7321
    %v7373 = vsel %vm3498, %v7367, %v7323
    %v7374 = vsel %vm3498, %v7368, %v7325
    %v7375 = vsel %vm3498, %v7369, %v7327
    %v7376 = vpack.c.bf16 %v7371, %v7370
    %v7377 = vpack.c.bf16 %v7373, %v7372
    %v7378 = vpack.c.bf16 %v7375, %v7374
    %s7379 = scalar_lea.vmem [#allocation2], 32
    %v7380 = vld [vmem:[%s7379] sm:$0xf]
    %v7381 = vld [vmem:[%s7379 + $0x4] sm:$0xf]
    %v7382 = vld [vmem:[%s7379 + $0x8] sm:$0xf]
    %v7383 = vld [vmem:[%s7379 + $0xc] sm:$0xf]
    %v7384 = vld [vmem:[%s7379 + $0x10] sm:$0xf]
    %v7385 = vld [vmem:[%s7379 + $0x14] sm:$0xf]
    %v7386 = vld [vmem:[%s7379 + $0x18] sm:$0xf]
    %v7387 = vld [vmem:[%s7379 + $0x1c] sm:$0xf]
    %s7388 = scalar_lea.vmem %s6, 1
    %v7389 = vld [vmem:[%s7388] sm:$0x1]
    %v7391 = vperm.slane %v7389, 0
    %v7401 = vunpack.c.l.b16 %v7380
    %v7402 = vunpack.c.l.b16 %v7381
    %v7403 = vunpack.c.l.b16 %v7382
    %v7404 = vunpack.c.l.b16 %v7383
    %v7405 = vunpack.c.l.b16 %v7384
    %v7406 = vunpack.c.l.b16 %v7385
    %v7407 = vunpack.c.l.b16 %v7386
    %v7408 = vunpack.c.l.b16 %v7387
    %v7409 = vpack.c.b16 %v7402, %v7401
    %v7410 = vpack.c.b16 %v7404, %v7403
    %v7411 = vpack.c.b16 %v7406, %v7405
    %v7412 = vpack.c.b16 %v7408, %v7407
    %v7418 = vsel %vm229, %v7376, 0
    %v7421 = vsel %vm229, %v7377, 0
    %v7424 = vsel %vm229, %v7378, 0
    %7426 = vmatpush.bf16.msra.mxu0 0
    %7427 = vmatpush.bf16.msra.mxu0 0
    %7428 = vmatpush.bf16.msra.mxu0 0
    %7429 = vmatpush.bf16.msra.mxu0 0
    %7430 = vmatpush.bf16.msra.mxu0 %v7412
    %7431 = vmatpush.bf16.msra.mxu0 %v7411
    %7432 = vmatpush.bf16.msra.mxu0 %v7410
    %7433 = vmatpush.bf16.msra.mxu0 %v7409
    %7434 = vmatmul.bf16.gmra.mxu0 %v7418
    %v7435 = vpop.f32.mrf.mxu0
    %v7436 = vadd.f32 %v7391, %v7435
    %v7437 = vpop.f32.mrf.mxu0
    %v7438 = vadd.f32 %v7391, %v7437
    %7439 = vmatmul.bf16.gmra.mxu0 %v7421
    %v7440 = vpop.f32.mrf.mxu0
    %v7441 = vadd.f32 %v7391, %v7440
    %v7442 = vpop.f32.mrf.mxu0
    %v7443 = vadd.f32 %v7391, %v7442
    %7444 = vmatmul.bf16.gmra.mxu0 %v7424
    %v7445 = vpop.f32.mrf.mxu0
    %v7446 = vadd.f32 %v7391, %v7445
    %v7447 = vpop.f32.mrf.mxu0
    %v7448 = vadd.f32 %v7391, %v7447
    %7449 = vdwg.mxu0
    %v7450 = vadd.f32 %v4044, %v7436
    %v7451 = vadd.f32 %v4045, %v7438
    %v7452 = vadd.f32 %v4046, %v7441
    %v7453 = vadd.f32 %v4047, %v7443
    %v7454 = vadd.f32 %v4048, %v7446
    %v7455 = vadd.f32 %v4049, %v7448
    %s7456 = scalar_lea.vmem %s11, 1
    %v7457 = vld [vmem:[%s7456] sm:$0x1]
    %s7458 = scalar_lea.vmem %s12, 1
    %v7459 = vld [vmem:[%s7458] sm:$0x1]
    %v7460 = vsel %vm229, %v7450, 0.0
    %7461 = vadd.xlane.f32.xlu0 %v7460
    %v7462 = vpop.xlane.xlu0 %7461
    %v7463 = vsel %vm229, %v7451, 0.0
    %7464 = vadd.xlane.f32.xlu0 %v7463
    %v7465 = vpop.xlane.xlu0 %7464
    %v7466 = vsel %vm229, %v7452, 0.0
    %7467 = vadd.xlane.f32.xlu0 %v7466
    %v7468 = vpop.xlane.xlu0 %7467
    %v7469 = vsel %vm229, %v7453, 0.0
    %7470 = vadd.xlane.f32.xlu0 %v7469
    %v7471 = vpop.xlane.xlu0 %7470
    %v7472 = vsel %vm229, %v7454, 0.0
    %7473 = vadd.xlane.f32.xlu0 %v7472
    %v7474 = vpop.xlane.xlu0 %7473
    %v7475 = vsel %vm229, %v7455, 0.0
    %7476 = vadd.xlane.f32.xlu0 %v7475
    %v7477 = vpop.xlane.xlu0 %7476
    %v7478 = vmul.f32 %v7462, %v3609
    %v7479 = vmul.f32 %v7465, %v3609
    %v7480 = vmul.f32 %v7468, %v3609
    %v7481 = vmul.f32 %v7471, %v3609
    %v7482 = vmul.f32 %v7474, %v3609
    %v7483 = vmul.f32 %v7477, %v3609
    %v7484 = vsub.f32 %v7450, %v7478
    %v7485 = vsub.f32 %v7451, %v7479
    %v7486 = vsub.f32 %v7452, %v7480
    %v7487 = vsub.f32 %v7453, %v7481
    %v7488 = vsub.f32 %v7454, %v7482
    %v7489 = vsub.f32 %v7455, %v7483
    %v7490 = vmul.f32 %v7484, %v7484
    %v7491 = vmul.f32 %v7485, %v7485
    %v7492 = vmul.f32 %v7486, %v7486
    %v7493 = vmul.f32 %v7487, %v7487
    %v7494 = vmul.f32 %v7488, %v7488
    %v7495 = vmul.f32 %v7489, %v7489
    %v7496 = vsel %vm229, %v7490, 0.0
    %7497 = vadd.xlane.f32.xlu0 %v7496
    %v7498 = vpop.xlane.xlu0 %7497
    %v7499 = vsel %vm229, %v7491, 0.0
    %7500 = vadd.xlane.f32.xlu0 %v7499
    %v7501 = vpop.xlane.xlu0 %7500
    %v7502 = vsel %vm229, %v7492, 0.0
    %7503 = vadd.xlane.f32.xlu0 %v7502
    %v7504 = vpop.xlane.xlu0 %7503
    %v7505 = vsel %vm229, %v7493, 0.0
    %7506 = vadd.xlane.f32.xlu0 %v7505
    %v7507 = vpop.xlane.xlu0 %7506
    %v7508 = vsel %vm229, %v7494, 0.0
    %7509 = vadd.xlane.f32.xlu0 %v7508
    %v7510 = vpop.xlane.xlu0 %7509
    %v7511 = vsel %vm229, %v7495, 0.0
    %7512 = vadd.xlane.f32.xlu0 %v7511
    %v7513 = vpop.xlane.xlu0 %7512
    %v7514 = vmul.f32 %v7498, %v3609
    %v7515 = vmul.f32 %v7501, %v3609
    %v7516 = vmul.f32 %v7504, %v3609
    %v7517 = vmul.f32 %v7507, %v3609
    %v7518 = vmul.f32 %v7510, %v3609
    %v7519 = vmul.f32 %v7513, %v3609
    %v7520 = vadd.f32 %v7514, 1e-05
    %v7521 = vadd.f32 %v7515, 1e-05
    %v7522 = vadd.f32 %v7516, 1e-05
    %v7523 = vadd.f32 %v7517, 1e-05
    %v7524 = vadd.f32 %v7518, 1e-05
    %v7525 = vadd.f32 %v7519, 1e-05
    %v7526 = vrsqrt.pop %v7520
    %v7527 = vmul.f32 %v7526, %v7520
    %v7528 = vmul.f32 %v7527, %v7526
    %v7529 = vmul.f32 0.5, %v7528
    %v7530 = vsub.f32 1.5, %v7529
    %v7531 = vmul.f32 %v7526, %v7530
    %vm7532 = vweird.f32 %v7520
    %vm7533 = vweird.f32 %v7526
    %vm7534 = vmor %vm7532, %vm7533
    %v7535 = vsel %vm7534, %v7526, %v7531
    %v7536 = vrsqrt.pop %v7521
    %v7537 = vmul.f32 %v7536, %v7521
    %v7538 = vmul.f32 %v7537, %v7536
    %v7539 = vmul.f32 0.5, %v7538
    %v7540 = vsub.f32 1.5, %v7539
    %v7541 = vmul.f32 %v7536, %v7540
    %vm7542 = vweird.f32 %v7521
    %vm7543 = vweird.f32 %v7536
    %vm7544 = vmor %vm7542, %vm7543
    %v7545 = vsel %vm7544, %v7536, %v7541
    %v7546 = vrsqrt.pop %v7522
    %v7547 = vmul.f32 %v7546, %v7522
    %v7548 = vmul.f32 %v7547, %v7546
    %v7549 = vmul.f32 0.5, %v7548
    %v7550 = vsub.f32 1.5, %v7549
    %v7551 = vmul.f32 %v7546, %v7550
    %vm7552 = vweird.f32 %v7522
    %vm7553 = vweird.f32 %v7546
    %vm7554 = vmor %vm7552, %vm7553
    %v7555 = vsel %vm7554, %v7546, %v7551
    %v7556 = vrsqrt.pop %v7523
    %v7557 = vmul.f32 %v7556, %v7523
    %v7558 = vmul.f32 %v7557, %v7556
    %v7559 = vmul.f32 0.5, %v7558
    %v7560 = vsub.f32 1.5, %v7559
    %v7561 = vmul.f32 %v7556, %v7560
    %vm7562 = vweird.f32 %v7523
    %vm7563 = vweird.f32 %v7556
    %vm7564 = vmor %vm7562, %vm7563
    %v7565 = vsel %vm7564, %v7556, %v7561
    %v7566 = vrsqrt.pop %v7524
    %v7567 = vmul.f32 %v7566, %v7524
    %v7568 = vmul.f32 %v7567, %v7566
    %v7569 = vmul.f32 0.5, %v7568
    %v7570 = vsub.f32 1.5, %v7569
    %v7571 = vmul.f32 %v7566, %v7570
    %vm7572 = vweird.f32 %v7524
    %vm7573 = vweird.f32 %v7566
    %vm7574 = vmor %vm7572, %vm7573
    %v7575 = vsel %vm7574, %v7566, %v7571
    %v7576 = vrsqrt.pop %v7525
    %v7577 = vmul.f32 %v7576, %v7525
    %v7578 = vmul.f32 %v7577, %v7576
    %v7579 = vmul.f32 0.5, %v7578
    %v7580 = vsub.f32 1.5, %v7579
    %v7581 = vmul.f32 %v7576, %v7580
    %vm7582 = vweird.f32 %v7525
    %vm7583 = vweird.f32 %v7576
    %vm7584 = vmor %vm7582, %vm7583
    %v7585 = vsel %vm7584, %v7576, %v7581
    %v7586 = vmul.f32 %v7484, %v7535
    %v7587 = vmul.f32 %v7485, %v7545
    %v7588 = vmul.f32 %v7486, %v7555
    %v7589 = vmul.f32 %v7487, %v7565
    %v7590 = vmul.f32 %v7488, %v7575
    %v7591 = vmul.f32 %v7489, %v7585
    %v7593 = vperm.slane %v7457, 0
    %v7595 = vmul.f32 %v7586, %v7593
    %v7596 = vmul.f32 %v7587, %v7593
    %v7597 = vmul.f32 %v7588, %v7593
    %v7598 = vmul.f32 %v7589, %v7593
    %v7599 = vmul.f32 %v7590, %v7593
    %v7600 = vmul.f32 %v7591, %v7593
    %v7602 = vperm.slane %v7459, 0
    %v7604 = vadd.f32 %v7595, %v7602
    %v7605 = vadd.f32 %v7596, %v7602
    %v7606 = vadd.f32 %v7597, %v7602
    %v7607 = vadd.f32 %v7598, %v7602
    %v7608 = vadd.f32 %v7599, %v7602
    %v7609 = vadd.f32 %v7600, %v7602
    %v7610 = vpack.c.bf16 %v7605, %v7604
    %v7611 = vpack.c.bf16 %v7607, %v7606
    %v7612 = vpack.c.bf16 %v7609, %v7608
    %s7613 = scalar_lea.vmem [#allocation4], 32
    %v7614 = vld [vmem:[%s7613] sm:$0xf]
    %v7615 = vld [vmem:[%s7613 + $0x4] sm:$0xf]
    %v7616 = vld [vmem:[%s7613 + $0x8] sm:$0xf]
    %v7617 = vld [vmem:[%s7613 + $0xc] sm:$0xf]
    %v7618 = vld [vmem:[%s7613 + $0x10] sm:$0xf]
    %v7619 = vld [vmem:[%s7613 + $0x14] sm:$0xf]
    %v7620 = vld [vmem:[%s7613 + $0x18] sm:$0xf]
    %v7621 = vld [vmem:[%s7613 + $0x1c] sm:$0xf]
    %s7622 = scalar_lea.vmem %s8, 1
    %v7623 = vld [vmem:[%s7622] sm:$0x1]
    %v7625 = vperm.slane %v7623, 0
    %v7635 = vunpack.c.l.b16 %v7614
    %v7636 = vunpack.c.l.b16 %v7615
    %v7637 = vunpack.c.l.b16 %v7616
    %v7638 = vunpack.c.l.b16 %v7617
    %v7639 = vunpack.c.l.b16 %v7618
    %v7640 = vunpack.c.l.b16 %v7619
    %v7641 = vunpack.c.l.b16 %v7620
    %v7642 = vunpack.c.l.b16 %v7621
    %v7643 = vpack.c.b16 %v7636, %v7635
    %v7644 = vpack.c.b16 %v7638, %v7637
    %v7645 = vpack.c.b16 %v7640, %v7639
    %v7646 = vpack.c.b16 %v7642, %v7641
    %v7652 = vsel %vm229, %v7610, 0
    %v7655 = vsel %vm229, %v7611, 0
    %v7658 = vsel %vm229, %v7612, 0
    %7660 = vmatpush.bf16.msra.mxu0 0
    %7661 = vmatpush.bf16.msra.mxu0 0
    %7662 = vmatpush.bf16.msra.mxu0 0
    %7663 = vmatpush.bf16.msra.mxu0 0
    %7664 = vmatpush.bf16.msra.mxu0 %v7646
    %7665 = vmatpush.bf16.msra.mxu0 %v7645
    %7666 = vmatpush.bf16.msra.mxu0 %v7644
    %7667 = vmatpush.bf16.msra.mxu0 %v7643
    %7668 = vmatmul.bf16.gmra.mxu0 %v7652
    %v7669 = vpop.f32.mrf.mxu0
    %v7670 = vadd.f32 %v7625, %v7669
    %v7671 = vpop.f32.mrf.mxu0
    %v7672 = vadd.f32 %v7625, %v7671
    %7673 = vmatmul.bf16.gmra.mxu0 %v7655
    %v7674 = vpop.f32.mrf.mxu0
    %v7675 = vadd.f32 %v7625, %v7674
    %v7676 = vpop.f32.mrf.mxu0
    %v7677 = vadd.f32 %v7625, %v7676
    %7678 = vmatmul.bf16.gmra.mxu0 %v7658
    %v7679 = vpop.f32.mrf.mxu0
    %v7680 = vadd.f32 %v7625, %v7679
    %v7681 = vpop.f32.mrf.mxu0
    %v7682 = vadd.f32 %v7625, %v7681
    %7683 = vdwg.mxu0
    %v7684 = vmax.f32 %v7670, 0.0
    %v7685 = vmax.f32 %v7672, 0.0
    %v7686 = vmax.f32 %v7675, 0.0
    %v7687 = vmax.f32 %v7677, 0.0
    %v7688 = vmax.f32 %v7680, 0.0
    %v7689 = vmax.f32 %v7682, 0.0
    %v7690 = vpack.c.bf16 %v7685, %v7684
    %v7691 = vpack.c.bf16 %v7687, %v7686
    %v7692 = vpack.c.bf16 %v7689, %v7688
    %s7693 = scalar_lea.vmem [#allocation6], 32
    %v7694 = vld [vmem:[%s7693] sm:$0xf]
    %v7695 = vld [vmem:[%s7693 + $0x4] sm:$0xf]
    %v7696 = vld [vmem:[%s7693 + $0x8] sm:$0xf]
    %v7697 = vld [vmem:[%s7693 + $0xc] sm:$0xf]
    %v7698 = vld [vmem:[%s7693 + $0x10] sm:$0xf]
    %v7699 = vld [vmem:[%s7693 + $0x14] sm:$0xf]
    %v7700 = vld [vmem:[%s7693 + $0x18] sm:$0xf]
    %v7701 = vld [vmem:[%s7693 + $0x1c] sm:$0xf]
    %s7702 = scalar_lea.vmem %s10, 1
    %v7703 = vld [vmem:[%s7702] sm:$0x1]
    %v7705 = vperm.slane %v7703, 0
    %v7715 = vunpack.c.l.b16 %v7694
    %v7716 = vunpack.c.l.b16 %v7695
    %v7717 = vunpack.c.l.b16 %v7696
    %v7718 = vunpack.c.l.b16 %v7697
    %v7719 = vunpack.c.l.b16 %v7698
    %v7720 = vunpack.c.l.b16 %v7699
    %v7721 = vunpack.c.l.b16 %v7700
    %v7722 = vunpack.c.l.b16 %v7701
    %v7723 = vpack.c.b16 %v7716, %v7715
    %v7724 = vpack.c.b16 %v7718, %v7717
    %v7725 = vpack.c.b16 %v7720, %v7719
    %v7726 = vpack.c.b16 %v7722, %v7721
    %v7732 = vsel %vm229, %v7690, 0
    %v7735 = vsel %vm229, %v7691, 0
    %v7738 = vsel %vm229, %v7692, 0
    %7740 = vmatpush.bf16.msra.mxu0 0
    %7741 = vmatpush.bf16.msra.mxu0 0
    %7742 = vmatpush.bf16.msra.mxu0 0
    %7743 = vmatpush.bf16.msra.mxu0 0
    %7744 = vmatpush.bf16.msra.mxu0 %v7726
    %7745 = vmatpush.bf16.msra.mxu0 %v7725
    %7746 = vmatpush.bf16.msra.mxu0 %v7724
    %7747 = vmatpush.bf16.msra.mxu0 %v7723
    %7748 = vmatmul.bf16.gmra.mxu0 %v7732
    %v7749 = vpop.f32.mrf.mxu0
    %v7750 = vadd.f32 %v7705, %v7749
    %v7751 = vpop.f32.mrf.mxu0
    %v7752 = vadd.f32 %v7705, %v7751
    %7753 = vmatmul.bf16.gmra.mxu0 %v7735
    %v7754 = vpop.f32.mrf.mxu0
    %v7755 = vadd.f32 %v7705, %v7754
    %v7756 = vpop.f32.mrf.mxu0
    %v7757 = vadd.f32 %v7705, %v7756
    %7758 = vmatmul.bf16.gmra.mxu0 %v7738
    %v7759 = vpop.f32.mrf.mxu0
    %v7760 = vadd.f32 %v7705, %v7759
    %v7761 = vpop.f32.mrf.mxu0
    %v7762 = vadd.f32 %v7705, %v7761
    %7763 = vdwg.mxu0
    %v7764 = vadd.f32 %v7604, %v7750
    %v7765 = vadd.f32 %v7605, %v7752
    %v7766 = vadd.f32 %v7606, %v7755
    %v7767 = vadd.f32 %v7607, %v7757
    %v7768 = vadd.f32 %v7608, %v7760
    %v7769 = vadd.f32 %v7609, %v7762
    %s7770 = scalar_lea.vmem %s13, 1
    %v7771 = vld [vmem:[%s7770] sm:$0x1]
    %s7772 = scalar_lea.vmem %s14, 1
    %v7773 = vld [vmem:[%s7772] sm:$0x1]
    %v7774 = vsel %vm229, %v7764, 0.0
    %7775 = vadd.xlane.f32.xlu0 %v7774
    %v7776 = vpop.xlane.xlu0 %7775
    %v7777 = vsel %vm229, %v7765, 0.0
    %7778 = vadd.xlane.f32.xlu0 %v7777
    %v7779 = vpop.xlane.xlu0 %7778
    %v7780 = vsel %vm229, %v7766, 0.0
    %7781 = vadd.xlane.f32.xlu0 %v7780
    %v7782 = vpop.xlane.xlu0 %7781
    %v7783 = vsel %vm229, %v7767, 0.0
    %7784 = vadd.xlane.f32.xlu0 %v7783
    %v7785 = vpop.xlane.xlu0 %7784
    %v7786 = vsel %vm229, %v7768, 0.0
    %7787 = vadd.xlane.f32.xlu0 %v7786
    %v7788 = vpop.xlane.xlu0 %7787
    %v7789 = vsel %vm229, %v7769, 0.0
    %7790 = vadd.xlane.f32.xlu0 %v7789
    %v7791 = vpop.xlane.xlu0 %7790
    %v7792 = vmul.f32 %v7776, %v3609
    %v7793 = vmul.f32 %v7779, %v3609
    %v7794 = vmul.f32 %v7782, %v3609
    %v7795 = vmul.f32 %v7785, %v3609
    %v7796 = vmul.f32 %v7788, %v3609
    %v7797 = vmul.f32 %v7791, %v3609
    %v7798 = vsub.f32 %v7764, %v7792
    %v7799 = vsub.f32 %v7765, %v7793
    %v7800 = vsub.f32 %v7766, %v7794
    %v7801 = vsub.f32 %v7767, %v7795
    %v7802 = vsub.f32 %v7768, %v7796
    %v7803 = vsub.f32 %v7769, %v7797
    %v7804 = vmul.f32 %v7798, %v7798
    %v7805 = vmul.f32 %v7799, %v7799
    %v7806 = vmul.f32 %v7800, %v7800
    %v7807 = vmul.f32 %v7801, %v7801
    %v7808 = vmul.f32 %v7802, %v7802
    %v7809 = vmul.f32 %v7803, %v7803
    %v7810 = vsel %vm229, %v7804, 0.0
    %7811 = vadd.xlane.f32.xlu0 %v7810
    %v7812 = vpop.xlane.xlu0 %7811
    %v7813 = vsel %vm229, %v7805, 0.0
    %7814 = vadd.xlane.f32.xlu0 %v7813
    %v7815 = vpop.xlane.xlu0 %7814
    %v7816 = vsel %vm229, %v7806, 0.0
    %7817 = vadd.xlane.f32.xlu0 %v7816
    %v7818 = vpop.xlane.xlu0 %7817
    %v7819 = vsel %vm229, %v7807, 0.0
    %7820 = vadd.xlane.f32.xlu0 %v7819
    %v7821 = vpop.xlane.xlu0 %7820
    %v7822 = vsel %vm229, %v7808, 0.0
    %7823 = vadd.xlane.f32.xlu0 %v7822
    %v7824 = vpop.xlane.xlu0 %7823
    %v7825 = vsel %vm229, %v7809, 0.0
    %7826 = vadd.xlane.f32.xlu0 %v7825
    %v7827 = vpop.xlane.xlu0 %7826
    %v7828 = vmul.f32 %v7812, %v3609
    %v7829 = vmul.f32 %v7815, %v3609
    %v7830 = vmul.f32 %v7818, %v3609
    %v7831 = vmul.f32 %v7821, %v3609
    %v7832 = vmul.f32 %v7824, %v3609
    %v7833 = vmul.f32 %v7827, %v3609
    %v7834 = vadd.f32 %v7828, 1e-05
    %v7835 = vadd.f32 %v7829, 1e-05
    %v7836 = vadd.f32 %v7830, 1e-05
    %v7837 = vadd.f32 %v7831, 1e-05
    %v7838 = vadd.f32 %v7832, 1e-05
    %v7839 = vadd.f32 %v7833, 1e-05
    %v7840 = vrsqrt.pop %v7834
    %v7841 = vmul.f32 %v7840, %v7834
    %v7842 = vmul.f32 %v7841, %v7840
    %v7843 = vmul.f32 0.5, %v7842
    %v7844 = vsub.f32 1.5, %v7843
    %v7845 = vmul.f32 %v7840, %v7844
    %vm7846 = vweird.f32 %v7834
    %vm7847 = vweird.f32 %v7840
    %vm7848 = vmor %vm7846, %vm7847
    %v7849 = vsel %vm7848, %v7840, %v7845
    %v7850 = vrsqrt.pop %v7835
    %v7851 = vmul.f32 %v7850, %v7835
    %v7852 = vmul.f32 %v7851, %v7850
    %v7853 = vmul.f32 0.5, %v7852
    %v7854 = vsub.f32 1.5, %v7853
    %v7855 = vmul.f32 %v7850, %v7854
    %vm7856 = vweird.f32 %v7835
    %vm7857 = vweird.f32 %v7850
    %vm7858 = vmor %vm7856, %vm7857
    %v7859 = vsel %vm7858, %v7850, %v7855
    %v7860 = vrsqrt.pop %v7836
    %v7861 = vmul.f32 %v7860, %v7836
    %v7862 = vmul.f32 %v7861, %v7860
    %v7863 = vmul.f32 0.5, %v7862
    %v7864 = vsub.f32 1.5, %v7863
    %v7865 = vmul.f32 %v7860, %v7864
    %vm7866 = vweird.f32 %v7836
    %vm7867 = vweird.f32 %v7860
    %vm7868 = vmor %vm7866, %vm7867
    %v7869 = vsel %vm7868, %v7860, %v7865
    %v7870 = vrsqrt.pop %v7837
    %v7871 = vmul.f32 %v7870, %v7837
    %v7872 = vmul.f32 %v7871, %v7870
    %v7873 = vmul.f32 0.5, %v7872
    %v7874 = vsub.f32 1.5, %v7873
    %v7875 = vmul.f32 %v7870, %v7874
    %vm7876 = vweird.f32 %v7837
    %vm7877 = vweird.f32 %v7870
    %vm7878 = vmor %vm7876, %vm7877
    %v7879 = vsel %vm7878, %v7870, %v7875
    %v7880 = vrsqrt.pop %v7838
    %v7881 = vmul.f32 %v7880, %v7838
    %v7882 = vmul.f32 %v7881, %v7880
    %v7883 = vmul.f32 0.5, %v7882
    %v7884 = vsub.f32 1.5, %v7883
    %v7885 = vmul.f32 %v7880, %v7884
    %vm7886 = vweird.f32 %v7838
    %vm7887 = vweird.f32 %v7880
    %vm7888 = vmor %vm7886, %vm7887
    %v7889 = vsel %vm7888, %v7880, %v7885
    %v7890 = vrsqrt.pop %v7839
    %v7891 = vmul.f32 %v7890, %v7839
    %v7892 = vmul.f32 %v7891, %v7890
    %v7893 = vmul.f32 0.5, %v7892
    %v7894 = vsub.f32 1.5, %v7893
    %v7895 = vmul.f32 %v7890, %v7894
    %vm7896 = vweird.f32 %v7839
    %vm7897 = vweird.f32 %v7890
    %vm7898 = vmor %vm7896, %vm7897
    %v7899 = vsel %vm7898, %v7890, %v7895
    %v7900 = vmul.f32 %v7798, %v7849
    %v7901 = vmul.f32 %v7799, %v7859
    %v7902 = vmul.f32 %v7800, %v7869
    %v7903 = vmul.f32 %v7801, %v7879
    %v7904 = vmul.f32 %v7802, %v7889
    %v7905 = vmul.f32 %v7803, %v7899
    %v7907 = vperm.slane %v7771, 0
    %v7909 = vmul.f32 %v7900, %v7907
    %v7910 = vmul.f32 %v7901, %v7907
    %v7911 = vmul.f32 %v7902, %v7907
    %v7912 = vmul.f32 %v7903, %v7907
    %v7913 = vmul.f32 %v7904, %v7907
    %v7914 = vmul.f32 %v7905, %v7907
    %v7916 = vperm.slane %v7773, 0
    %v7918 = vadd.f32 %v7909, %v7916
    %v7919 = vadd.f32 %v7910, %v7916
    %v7920 = vadd.f32 %v7911, %v7916
    %v7921 = vadd.f32 %v7912, %v7916
    %v7922 = vadd.f32 %v7913, %v7916
    %v7923 = vadd.f32 %v7914, %v7916
    %v7924 = vsel %vm229, %v7918, 0.0
    %v7925 = vrot.slane %v7924, 4
    %v7926 = vadd.f32 %v7924, %v7925
    %v7927 = vrot.slane %v7926, 2
    %v7928 = vadd.f32 %v7926, %v7927
    %v7929 = vrot.slane %v7928, 1
    %v7930 = vadd.f32 %v7928, %v7929
    %v7931 = vsel %vm229, %v7919, 0.0
    %v7932 = vrot.slane %v7931, 4
    %v7933 = vadd.f32 %v7931, %v7932
    %v7934 = vrot.slane %v7933, 2
    %v7935 = vadd.f32 %v7933, %v7934
    %v7936 = vrot.slane %v7935, 1
    %v7937 = vadd.f32 %v7935, %v7936
    %v7938 = vsel %vm229, %v7920, 0.0
    %v7939 = vrot.slane %v7938, 4
    %v7940 = vadd.f32 %v7938, %v7939
    %v7941 = vrot.slane %v7940, 2
    %v7942 = vadd.f32 %v7940, %v7941
    %v7943 = vrot.slane %v7942, 1
    %v7944 = vadd.f32 %v7942, %v7943
    %v7945 = vsel %vm229, %v7921, 0.0
    %v7946 = vrot.slane %v7945, 4
    %v7947 = vadd.f32 %v7945, %v7946
    %v7948 = vrot.slane %v7947, 2
    %v7949 = vadd.f32 %v7947, %v7948
    %v7950 = vrot.slane %v7949, 1
    %v7951 = vadd.f32 %v7949, %v7950
    %v7952 = vsel %vm229, %v7922, 0.0
    %v7953 = vrot.slane %v7952, 4
    %v7954 = vadd.f32 %v7952, %v7953
    %v7955 = vrot.slane %v7954, 2
    %v7956 = vadd.f32 %v7954, %v7955
    %v7957 = vrot.slane %v7956, 1
    %v7958 = vadd.f32 %v7956, %v7957
    %v7959 = vsel %vm229, %v7923, 0.0
    %v7960 = vrot.slane %v7959, 4
    %v7961 = vadd.f32 %v7959, %v7960
    %v7962 = vrot.slane %v7961, 2
    %v7963 = vadd.f32 %v7961, %v7962
    %v7964 = vrot.slane %v7963, 1
    %v7965 = vadd.f32 %v7963, %v7964
    %v7966 = vrcp.pop 8.0
    %v7967 = vmul.f32 8.0, %v7966
    %v7968 = vsub.f32 1.0, %v7967
    %v7969 = vmul.f32 %v7966, %v7968
    %v7970 = vadd.f32 %v7966, %v7969
    %vm7971 = vweird.f32 %v7966
    %v7972 = vsel %vm7971, %v7966, %v7970
    %v7973 = vmul.f32 %v7930, %v7972
    %v7974 = vmul.f32 %v7937, %v7972
    %v7975 = vmul.f32 %v7944, %v7972
    %v7976 = vmul.f32 %v7951, %v7972
    %v7977 = vmul.f32 %v7958, %v7972
    %v7978 = vmul.f32 %v7965, %v7972
    %v7979 = vpack.c.bf16 %v7973, %v7973
    %v7980 = vpack.c.bf16 %v7974, %v7974
    %v7981 = vpack.c.bf16 %v7975, %v7975
    %v7982 = vpack.c.bf16 %v7976, %v7976
    %v7983 = vpack.c.bf16 %v7977, %v7977
    %v7984 = vpack.c.bf16 %v7978, %v7978
    %v7985 = vld [vmem:[#allocation7] sm:$0xf]
    %v7986 = vld [vmem:[#allocation7 + $0x4] sm:$0xf]
    %v7987 = vld [vmem:[#allocation7 + $0x8] sm:$0xf]
    %v7988 = vld [vmem:[#allocation7 + $0xc] sm:$0xf]
    %v7989 = vld [vmem:[#allocation7 + $0x10] sm:$0xf]
    %v7990 = vld [vmem:[#allocation7 + $0x14] sm:$0xf]
    %v7991 = vld [vmem:[#allocation7 + $0x18] sm:$0xf]
    %v7992 = vld [vmem:[#allocation7 + $0x1c] sm:$0xf]
    %v7993 = vld [vmem:[%s16] sm:$0x1]
    %v7995 = vperm.slane %v7993, 0
    %v8003 = vunpack.c.l.b16 %v7979
    %v8004 = vunpack.c.l.b16 %v7980
    %v8005 = vunpack.c.l.b16 %v7981
    %v8006 = vunpack.c.l.b16 %v7982
    %v8007 = vunpack.c.l.b16 %v7983
    %v8008 = vunpack.c.l.b16 %v7984
    %vm8009 = vcmask 1041409
    %v8010 = vsel %vm8009, %v8004, %v8003
    %vm8011 = vcmask 1042434
    %v8012 = vsel %vm8011, %v8005, %v8010
    %vm8013 = vcmask 1043459
    %v8014 = vsel %vm8013, %v8006, %v8012
    %vm8015 = vcmask 1044484
    %v8016 = vsel %vm8015, %v8007, %v8014
    %vm8017 = vcmask 1045509
    %v8018 = vsel %vm8017, %v8008, %v8016
    %v8019 = vpack.c.b16 %v8018, %v8018
    %v8028 = vunpack.c.l.b16 %v7985
    %v8029 = vunpack.c.l.b16 %v7986
    %v8030 = vunpack.c.l.b16 %v7987
    %v8031 = vunpack.c.l.b16 %v7988
    %v8032 = vunpack.c.l.b16 %v7989
    %v8033 = vunpack.c.l.b16 %v7990
    %v8034 = vunpack.c.l.b16 %v7991
    %v8035 = vunpack.c.l.b16 %v7992
    %v8036 = vpack.c.b16 %v8029, %v8028
    %v8037 = vpack.c.b16 %v8031, %v8030
    %v8038 = vpack.c.b16 %v8033, %v8032
    %v8039 = vpack.c.b16 %v8035, %v8034
    %v8045 = vsel %vm229, %v8019, 0
    %8047 = vmatpush.bf16.msra.mxu0 0
    %8048 = vmatpush.bf16.msra.mxu0 0
    %8049 = vmatpush.bf16.msra.mxu0 0
    %8050 = vmatpush.bf16.msra.mxu0 0
    %8051 = vmatpush.bf16.msra.mxu0 %v8039
    %8052 = vmatpush.bf16.msra.mxu0 %v8038
    %8053 = vmatpush.bf16.msra.mxu0 %v8037
    %8054 = vmatpush.bf16.msra.mxu0 %v8036
    %8055 = vmatmul.bf16.gmra.mxu0 %v8045
    %v8056 = vpop.f32.mrf.mxu0
    %v8057 = vadd.f32 %v7995, %v8056
    %v8058 = vpop.f32.mrf.mxu0
    %8059 = vdwg.mxu0
    %v8060 = vmax.f32 %v8057, 0.0
    %8061 = vst [vmem:[%s17] sm:$0x3f] %v8060
    // Predicated region
    $region86: #{transformer_forward.1} parent=1 // pred_check
      _
    $region87: #{transformer_forward.1} parent=1 // pred_check_branch
      %8063 = sbr.rel (0) target = $region89
    $region88: #{transformer_forward.1} parent=1 // pred_region
      _
    $region89: #{transformer_forward.1} parent=1 // pred_fallthru
      _
    // Predicated region
    $region90: #{transformer_forward.1} parent=1 // pred_check
      _
    $region91: #{transformer_forward.1} parent=1 // pred_check_branch
      %8065 = sbr.rel (0) target = $region93
    $region92: #{transformer_forward.1} parent=1 // pred_region
      _
    $region93: #{transformer_forward.1} parent=1 // pred_fallthru
      _
    %8066 = vsyncpa [#allocation3], 1
    %8067 = vsyncpa [#allocation5], 1
    %8068 = vsyncpa [#allocation8], 1

</llo_original>
